<compile_context>
chip_gen: v7x
topology: tpu7x:2x2x1
jax: 0.10.0
libtpu: 0.0.40
codegen_flags: <defaults>
</compile_context>

<pallas_src>
import functools

import jax
import jax.numpy as jnp
from jax import lax
from jax.experimental import pallas as pl
from jax.experimental.pallas import tpu as pltpu


# ---------------------------------------------------------------------------
# Kernel: one grid step = (one batch element, one block of tq query rows).
# ---------------------------------------------------------------------------
def _block_kernel(x_ref,
                  g1_ref, be1_ref,
                  wqkv_ref, wp_ref, bp_ref,
                  g2_ref, be2_ref,
                  w1_ref, b1_ref,
                  w2_ref, b2_ref,
                  o_ref,
                  k_scr, v_scr,
                  *, n_head, head_size, tq):
    qi = pl.program_id(1)
    H, hs = n_head, head_size
    C = H * hs
    scale = C ** (-0.5)            # PyTorch reference scales by emb_dim**-0.5
    bf16 = jnp.bfloat16

    def layernorm(v, g, b):        # f32 statistics
        mu = jnp.mean(v, axis=-1, keepdims=True)
        var = jnp.mean((v - mu) ** 2, axis=-1, keepdims=True)
        return (v - mu) * lax.rsqrt(var + 1e-5) * g + b

    # ---- LayerNorm + fused QKV projection for this row block ---------------
    x_rows = x_ref[0]                                              # (tq, C) f32
    h1 = layernorm(x_rows, g1_ref[...], be1_ref[...]).astype(bf16)
    qkv = jnp.dot(h1, wqkv_ref[...],
                  preferred_element_type=jnp.float32)              # (tq, 3C) f32

    # Head split via 128-aligned static lane slices (hs is a multiple of 128).
    row_start = pl.multiple_of(qi * tq, tq)
    q_h = jnp.stack([qkv[:, h * hs:(h + 1) * hs].astype(bf16)
                     for h in range(H)], axis=0)                   # (H, tq, hs)
    k_h = jnp.stack([qkv[:, C + h * hs:C + (h + 1) * hs].astype(bf16)
                     for h in range(H)], axis=0)
    v_h = jnp.stack([qkv[:, 2 * C + h * hs:2 * C + (h + 1) * hs].astype(bf16)
                     for h in range(H)], axis=0)
    # Append this block's K/V to the persistent per-batch-element cache.
    k_scr[:, pl.ds(row_start, tq), :] = k_h
    v_scr[:, pl.ds(row_start, tq), :] = v_h

    # ---- causal attention: online softmax over kv tiles 0..qi --------------
    row_ids = qi * tq + lax.broadcasted_iota(jnp.int32, (tq, tq), 0)
    col_iota = lax.broadcasted_iota(jnp.int32, (tq, tq), 1)

    def kv_step(kvi, carry):
        m, l, acc = carry
        start = pl.multiple_of(kvi * tq, tq)
        k_t = k_scr[:, pl.ds(start, tq), :]                        # (H, tq, hs)
        v_t = v_scr[:, pl.ds(start, tq), :]
        s = jnp.einsum('hqd,hkd->hqk', q_h, k_t,
                       preferred_element_type=jnp.float32) * scale
        mask = row_ids >= (kvi * tq + col_iota)
        s = jnp.where(mask[None], s, -jnp.inf)
        m_new = jnp.maximum(m, jnp.max(s, axis=-1, keepdims=True))
        a = jnp.exp(m - m_new)
        p = jnp.exp(s - m_new)
        l_new = a * l + jnp.sum(p, axis=-1, keepdims=True)
        acc_new = a * acc + jnp.einsum('hqk,hkd->hqd', p.astype(bf16), v_t,
                                       preferred_element_type=jnp.float32)
        return m_new, l_new, acc_new

    m0 = jnp.full((H, tq, 1), -jnp.inf, jnp.float32)
    l0 = jnp.zeros((H, tq, 1), jnp.float32)
    acc0 = jnp.zeros((H, tq, hs), jnp.float32)
    m, l, acc = lax.fori_loop(0, qi + 1, kv_step, (m0, l0, acc0))

    attn = acc / l                                                 # exact normalize
    # Concatenate heads back onto lanes -> single (tq,C)x(C,C) projection.
    attn_c = jnp.concatenate([attn[h] for h in range(H)], axis=-1).astype(bf16)
    proj = jnp.dot(attn_c, wp_ref[...],
                   preferred_element_type=jnp.float32) + bp_ref[...]

    x1 = x_rows + proj                                             # residual 1 (f32)

    # ---- feed-forward -------------------------------------------------------
    h2 = layernorm(x1, g2_ref[...], be2_ref[...]).astype(bf16)
    ff = jnp.dot(h2, w1_ref[...],
                 preferred_element_type=jnp.float32) + b1_ref[...]
    ff = jnp.maximum(ff, 0.0).astype(bf16)
    ff = jnp.dot(ff, w2_ref[...],
                 preferred_element_type=jnp.float32) + b2_ref[...]

    o_ref[0] = x1 + ff                                             # residual 2


# ---------------------------------------------------------------------------
# VMEM budget derived from actual shapes (+ headroom), instead of a hardcode.
# ---------------------------------------------------------------------------
def _vmem_limit_bytes(T, C, n_head, tq, weights):
    hs = C // n_head
    w_bytes = sum(int(w.size) * w.dtype.itemsize for w in weights)
    io_bytes = 2 * (2 * tq * C * 4)              # x rows + out rows, double-buffered f32
    kv_bytes = 2 * n_head * T * hs * 2           # K + V bf16 scratch
    # live per-step intermediates (qkv, ffn hidden, scores/probs, attn acc), f32
    interm = 4 * (tq * 3 * C + tq * 4 * C
                  + 3 * n_head * tq * tq + 2 * n_head * tq * hs)
    total = 2 * w_bytes + io_bytes + kv_bytes + interm  # 2x: weights double-buffered
    return int(min(max(total + (16 << 20), 32 << 20), 100 << 20))


# ---------------------------------------------------------------------------
# Wrapper
# ---------------------------------------------------------------------------
def transformer_block(x, params, *, n_head, tq=None):
    B, T, C = x.shape
    assert C % n_head == 0
    head_size = C // n_head
    if tq is None:
        tq = min(T, 128)
    assert T % tq == 0

    kernel = functools.partial(_block_kernel, n_head=n_head,
                               head_size=head_size, tq=tq)

    weight_order = ["g1", "be1", "wqkv", "wp", "bp",
                    "g2", "be2", "w1", "b1", "w2", "b2"]
    weights = [params[k] for k in weight_order]

    def const_spec(shape):
        # Constant index map: weight block is DMA'd once and stays resident.
        return pl.BlockSpec(shape, lambda b, qi: tuple(0 for _ in shape))

    in_specs = [pl.BlockSpec((1, tq, C), lambda b, qi: (b, qi, 0))]  # query rows
    in_specs += [const_spec(w.shape) for w in weights]

    return pl.pallas_call(
        kernel,
        out_shape=jax.ShapeDtypeStruct((B, T, C), jnp.float32),
        grid_spec=pltpu.PrefetchScalarGridSpec(
            num_scalar_prefetch=0,
            grid=(B, T // tq),
            in_specs=in_specs,
            out_specs=pl.BlockSpec((1, tq, C), lambda b, qi: (b, qi, 0)),
            scratch_shapes=[
                pltpu.VMEM((n_head, T, head_size), jnp.bfloat16),  # K cache
                pltpu.VMEM((n_head, T, head_size), jnp.bfloat16),  # V cache
            ],
        ),
        compiler_params=pltpu.CompilerParams(
            # qi must remain sequential: K/V scratch is built incrementally.
            dimension_semantics=("parallel", "arbitrary"),
            vmem_limit_bytes=_vmem_limit_bytes(T, C, n_head, tq, weights),
        ),
    )(x, *weights)


# ---------------------------------------------------------------------------
# Pure-JAX reference mirroring the PyTorch forward (eval mode) with the same
# mixed precision as the kernel (bf16 matmul inputs, f32 accumulation).
# ---------------------------------------------------------------------------
def reference_block(x, params, *, n_head):
    B, T, C = x.shape
    hs = C // n_head
    bf16, f32 = jnp.bfloat16, jnp.float32

    def ln(v, g, b):
        mu = jnp.mean(v, axis=-1, keepdims=True)
        var = jnp.mean((v - mu) ** 2, axis=-1, keepdims=True)
        return (v - mu) / jnp.sqrt(var + 1e-5) * g + b

    h = ln(x, params["g1"], params["be1"]).astype(bf16)
    qkv = jnp.einsum('btc,cf->btf', h, params["wqkv"], preferred_element_type=f32)
    q, k, v = qkv[..., :C], qkv[..., C:2 * C], qkv[..., 2 * C:]

    def split(z):  # (B,T,C) -> (B,H,T,hs)
        return z.reshape(B, T, n_head, hs).transpose(0, 2, 1, 3).astype(bf16)

    q, k, v = split(q), split(k), split(v)
    wei = jnp.einsum('bhqd,bhkd->bhqk', q, k,
                     preferred_element_type=f32) * (C ** -0.5)
    mask = jnp.tril(jnp.ones((T, T), dtype=bool))
    wei = jnp.where(mask, wei, -jnp.inf)
    wei = jax.nn.softmax(wei, axis=-1)

    attn = jnp.einsum('bhqk,bhkd->bhqd', wei.astype(bf16), v,
                      preferred_element_type=f32)
    attn = attn.transpose(0, 2, 1, 3).reshape(B, T, C)
    proj = jnp.einsum('btc,cf->btf', attn.astype(bf16), params["wp"],
                      preferred_element_type=f32) + params["bp"]
    x1 = x + proj

    h2 = ln(x1, params["g2"], params["be2"]).astype(bf16)
    ff = jnp.einsum('btc,cf->btf', h2, params["w1"],
                    preferred_element_type=f32) + params["b1"]
    ff = jnp.maximum(ff, 0.0).astype(bf16)
    ff = jnp.einsum('btf,fc->btc', ff, params["w2"],
                    preferred_element_type=f32) + params["b2"]
    return x1 + ff


# ---------------------------------------------------------------------------
# Deterministic parameter init (shapes follow Block.__init__).  MXU weights
# bf16; LayerNorm params and biases f32.  Q/K/V are stored fused as (C, 3C)
# with each section's columns grouped per head; proj is (C, C).
# ---------------------------------------------------------------------------
def make_params(key, n_embd, n_head):
    C = n_embd
    ks = jax.random.split(key, 10)
    s = 0.05
    bf16 = jnp.bfloat16
    return {
        "g1": 1.0 + 0.1 * jax.random.normal(ks[0], (1, C), jnp.float32),
        "be1": 0.05 * jax.random.normal(ks[1], (1, C), jnp.float32),
        "g2": 1.0 + 0.1 * jax.random.normal(ks[2], (1, C), jnp.float32),
        "be2": 0.05 * jax.random.normal(ks[3], (1, C), jnp.float32),
        "wqkv": (s * jax.random.normal(ks[4], (C, 3 * C), jnp.float32)).astype(bf16),
        "wp": (s * jax.random.normal(ks[5], (C, C), jnp.float32)).astype(bf16),
        "bp": s * jax.random.normal(ks[6], (1, C), jnp.float32),
        "w1": (s * jax.random.normal(ks[7], (C, 4 * C), jnp.float32)).astype(bf16),
        "b1": s * jax.random.normal(ks[8], (1, 4 * C), jnp.float32),
        "w2": (s * jax.random.normal(ks[9], (4 * C, C), jnp.float32)).astype(bf16),
        "b2": jnp.zeros((1, C), jnp.float32),
    }


if __name__ == "__main__":
    # Small but lane/sublane-dense dims: C, head_size and tq are multiples of
    # 128; T = 256 exercises two row blocks (incremental K/V + online softmax).
    B, T, C, n_head = 2, 256, 256, 2          # block_size = T, head_size = 128
    tq = 128                                  # query-row tile (2 row blocks)

    key = jax.random.PRNGKey(0)
    kx, kp = jax.random.split(key)
    x = jax.random.normal(kx, (B, T, C), jnp.float32)
    params = make_params(kp, C, n_head)

    out = transformer_block(x, params, n_head=n_head, tq=tq)
    out = jax.block_until_ready(out)

    ref = reference_block(x, params, n_head=n_head)
    assert out.shape == (B, T, C)
    err = jnp.max(jnp.abs(out - ref))
    assert jnp.allclose(out, ref, rtol=5e-2, atol=5e-2), f"max err {err}"

    print("KERNEL_OK")
</pallas_src>

<mosaic_0001>
module attributes {stable_mosaic.version = 11 : i64} {
  func.func @_block_kernel(%arg0: i32, %arg1: i32, %arg2: memref<1x128x256xf32, #tpu.memory_space<vmem>>, %arg3: memref<1x256xf32, #tpu.memory_space<vmem>>, %arg4: memref<1x256xf32, #tpu.memory_space<vmem>>, %arg5: memref<256x768xbf16, #tpu.memory_space<vmem>>, %arg6: memref<256x256xbf16, #tpu.memory_space<vmem>>, %arg7: memref<1x256xf32, #tpu.memory_space<vmem>>, %arg8: memref<1x256xf32, #tpu.memory_space<vmem>>, %arg9: memref<1x256xf32, #tpu.memory_space<vmem>>, %arg10: memref<256x1024xbf16, #tpu.memory_space<vmem>>, %arg11: memref<1x1024xf32, #tpu.memory_space<vmem>>, %arg12: memref<1024x256xbf16, #tpu.memory_space<vmem>>, %arg13: memref<1x256xf32, #tpu.memory_space<vmem>>, %arg14: memref<1x128x256xf32, #tpu.memory_space<vmem>>, %arg15: memref<2x256x128xbf16, #tpu.memory_space<vmem>>, %arg16: memref<2x256x128xbf16, #tpu.memory_space<vmem>>) attributes {dimension_semantics = [#tpu.dimension_semantics<parallel>, #tpu.dimension_semantics<arbitrary>], iteration_bounds = array<i64: 2, 2>, scalar_prefetch = 0 : i64, scratch_operands = 2 : i64, tpu.core_type = #tpu.core_type<tc>, window_params = [{transform_indices = @transform_0, window_bounds = array<i64: 1, 128, 256>}, {pipeline_mode = #tpu.pipeline_mode<synchronous>, transform_indices = @transform_1, window_bounds = array<i64: 1, 256>}, {pipeline_mode = #tpu.pipeline_mode<synchronous>, transform_indices = @transform_2, window_bounds = array<i64: 1, 256>}, {pipeline_mode = #tpu.pipeline_mode<synchronous>, transform_indices = @transform_3, window_bounds = array<i64: 256, 768>}, {pipeline_mode = #tpu.pipeline_mode<synchronous>, transform_indices = @transform_4, window_bounds = array<i64: 256, 256>}, {pipeline_mode = #tpu.pipeline_mode<synchronous>, transform_indices = @transform_5, window_bounds = array<i64: 1, 256>}, {pipeline_mode = #tpu.pipeline_mode<synchronous>, transform_indices = @transform_6, window_bounds = array<i64: 1, 256>}, {pipeline_mode = #tpu.pipeline_mode<synchronous>, transform_indices = @transform_7, window_bounds = array<i64: 1, 256>}, {pipeline_mode = #tpu.pipeline_mode<synchronous>, transform_indices = @transform_8, window_bounds = array<i64: 256, 1024>}, {pipeline_mode = #tpu.pipeline_mode<synchronous>, transform_indices = @transform_9, window_bounds = array<i64: 1, 1024>}, {pipeline_mode = #tpu.pipeline_mode<synchronous>, transform_indices = @transform_10, window_bounds = array<i64: 1024, 256>}, {pipeline_mode = #tpu.pipeline_mode<synchronous>, transform_indices = @transform_11, window_bounds = array<i64: 1, 256>}, {transform_indices = @transform_12, window_bounds = array<i64: 1, 128, 256>}]} {
    %c0 = arith.constant 0 : index
    %c0_0 = arith.constant 0 : index
    %c0_1 = arith.constant 0 : index
    %0 = vector.load %arg2[%c0, %c0_0, %c0_1] : memref<1x128x256xf32, #tpu.memory_space<vmem>>, vector<1x128x256xf32>
    %1 = vector.shape_cast %0 : vector<1x128x256xf32> to vector<128x256xf32>
    %c0_2 = arith.constant 0 : index
    %c0_3 = arith.constant 0 : index
    %2 = vector.load %arg3[%c0_2, %c0_3] : memref<1x256xf32, #tpu.memory_space<vmem>>, vector<1x256xf32>
    %c0_4 = arith.constant 0 : index
    %c0_5 = arith.constant 0 : index
    %3 = vector.load %arg4[%c0_4, %c0_5] : memref<1x256xf32, #tpu.memory_space<vmem>>, vector<1x256xf32>
    %cst = arith.constant dense<0.000000e+00> : vector<128xf32>
    %4 = vector.multi_reduction <add>, %1, %cst [1] : vector<128x256xf32> to vector<128xf32>
    %5 = vector.shape_cast %4 : vector<128xf32> to vector<128x1xf32>
    %cst_6 = arith.constant 2.560000e+02 : f32
    %6 = vector.broadcast %cst_6 : f32 to vector<128x1xf32>
    %7 = arith.divf %5, %6 : vector<128x1xf32>
    %8 = vector.broadcast %7 : vector<128x1xf32> to vector<128x256xf32>
    %9 = arith.subf %1, %8 : vector<128x256xf32>
    %10 = arith.mulf %9, %9 : vector<128x256xf32>
    %cst_7 = arith.constant dense<0.000000e+00> : vector<128xf32>
    %11 = vector.multi_reduction <add>, %10, %cst_7 [1] : vector<128x256xf32> to vector<128xf32>
    %12 = vector.shape_cast %11 : vector<128xf32> to vector<128x1xf32>
    %cst_8 = arith.constant 2.560000e+02 : f32
    %13 = vector.broadcast %cst_8 : f32 to vector<128x1xf32>
    %14 = arith.divf %12, %13 : vector<128x1xf32>
    %15 = vector.broadcast %7 : vector<128x1xf32> to vector<128x256xf32>
    %16 = arith.subf %1, %15 : vector<128x256xf32>
    %cst_9 = arith.constant 9.99999974E-6 : f32
    %17 = vector.broadcast %cst_9 : f32 to vector<128x1xf32>
    %18 = arith.addf %14, %17 : vector<128x1xf32>
    %19 = math.rsqrt %18 : vector<128x1xf32>
    %20 = vector.broadcast %19 : vector<128x1xf32> to vector<128x256xf32>
    %21 = arith.mulf %16, %20 : vector<128x256xf32>
    %22 = vector.broadcast %2 : vector<1x256xf32> to vector<128x256xf32>
    %23 = arith.mulf %21, %22 : vector<128x256xf32>
    %24 = vector.broadcast %3 : vector<1x256xf32> to vector<128x256xf32>
    %25 = arith.addf %23, %24 : vector<128x256xf32>
    %26 = arith.truncf %25 : vector<128x256xf32> to vector<128x256xbf16>
    %c0_10 = arith.constant 0 : index
    %c0_11 = arith.constant 0 : index
    %27 = vector.load %arg5[%c0_10, %c0_11] : memref<256x768xbf16, #tpu.memory_space<vmem>>, vector<256x768xbf16>
    %cst_12 = arith.constant dense<0.000000e+00> : vector<128x768xf32>
    %28 = tpu.matmul %26, %27, %cst_12 {dimension_numbers = #tpu.dot_dimension_numbers<[1], [0], [0], [1], [0, 0, 1, 1], [], []>} : vector<128x256xbf16>, vector<256x768xbf16>, vector<128x768xf32> -> vector<128x768xf32>
    %c128_i32 = arith.constant 128 : i32
    %29 = arith.muli %arg1, %c128_i32 : i32
    %30 = tpu.assume_multiple %29, 128 : i32
    %31 = vector.extract_strided_slice %28 {offsets = [0, 0], sizes = [128, 128], strides = [1, 1]} : vector<128x768xf32> to vector<128x128xf32>
    %32 = arith.truncf %31 : vector<128x128xf32> to vector<128x128xbf16>
    %33 = vector.extract_strided_slice %28 {offsets = [0, 128], sizes = [128, 128], strides = [1, 1]} : vector<128x768xf32> to vector<128x128xf32>
    %34 = arith.truncf %33 : vector<128x128xf32> to vector<128x128xbf16>
    %35 = vector.shape_cast %32 : vector<128x128xbf16> to vector<1x128x128xbf16>
    %36 = vector.shape_cast %34 : vector<128x128xbf16> to vector<1x128x128xbf16>
    %37 = tpu.concatenate %35, %36 in 0 : vector<1x128x128xbf16>, vector<1x128x128xbf16> -> vector<2x128x128xbf16>
    %38 = vector.extract_strided_slice %28 {offsets = [0, 256], sizes = [128, 128], strides = [1, 1]} : vector<128x768xf32> to vector<128x128xf32>
    %39 = arith.truncf %38 : vector<128x128xf32> to vector<128x128xbf16>
    %40 = vector.extract_strided_slice %28 {offsets = [0, 384], sizes = [128, 128], strides = [1, 1]} : vector<128x768xf32> to vector<128x128xf32>
    %41 = arith.truncf %40 : vector<128x128xf32> to vector<128x128xbf16>
    %42 = vector.shape_cast %39 : vector<128x128xbf16> to vector<1x128x128xbf16>
    %43 = vector.shape_cast %41 : vector<128x128xbf16> to vector<1x128x128xbf16>
    %44 = tpu.concatenate %42, %43 in 0 : vector<1x128x128xbf16>, vector<1x128x128xbf16> -> vector<2x128x128xbf16>
    %45 = vector.extract_strided_slice %28 {offsets = [0, 512], sizes = [128, 128], strides = [1, 1]} : vector<128x768xf32> to vector<128x128xf32>
    %46 = arith.truncf %45 : vector<128x128xf32> to vector<128x128xbf16>
    %47 = vector.extract_strided_slice %28 {offsets = [0, 640], sizes = [128, 128], strides = [1, 1]} : vector<128x768xf32> to vector<128x128xf32>
    %48 = arith.truncf %47 : vector<128x128xf32> to vector<128x128xbf16>
    %49 = vector.shape_cast %46 : vector<128x128xbf16> to vector<1x128x128xbf16>
    %50 = vector.shape_cast %48 : vector<128x128xbf16> to vector<1x128x128xbf16>
    %51 = tpu.concatenate %49, %50 in 0 : vector<1x128x128xbf16>, vector<1x128x128xbf16> -> vector<2x128x128xbf16>
    %c0_13 = arith.constant 0 : index
    %52 = arith.index_cast %30 : i32 to index
    %c0_14 = arith.constant 0 : index
    %53 = vector.load %arg15[%c0_13, %52, %c0_14] : memref<2x256x128xbf16, #tpu.memory_space<vmem>>, vector<2x128x128xbf16>
    tpu.vector_store %arg15[%c0_13, %52, %c0_14], %44 {strides = array<i32>} : memref<2x256x128xbf16, #tpu.memory_space<vmem>>, vector<2x128x128xbf16>,
    %c0_15 = arith.constant 0 : index
    %54 = arith.index_cast %30 : i32 to index
    %c0_16 = arith.constant 0 : index
    %55 = vector.load %arg16[%c0_15, %54, %c0_16] : memref<2x256x128xbf16, #tpu.memory_space<vmem>>, vector<2x128x128xbf16>
    tpu.vector_store %arg16[%c0_15, %54, %c0_16], %51 {strides = array<i32>} : memref<2x256x128xbf16, #tpu.memory_space<vmem>>, vector<2x128x128xbf16>,
    %c128_i32_17 = arith.constant 128 : i32
    %56 = arith.muli %arg1, %c128_i32_17 : i32
    %57 = tpu.iota {dimensions = array<i32: 0>} : vector<128x128xi32>
    %58 = vector.broadcast %56 : i32 to vector<128x128xi32>
    %59 = arith.addi %58, %57 : vector<128x128xi32>
    %60 = tpu.iota {dimensions = array<i32: 1>} : vector<128x128xi32>
    %cst_18 = arith.constant 0xFF800000 : f32
    %61 = vector.broadcast %cst_18 : f32 to vector<2x128x1xf32>
    %cst_19 = arith.constant 0.000000e+00 : f32
    %62 = vector.broadcast %cst_19 : f32 to vector<2x128x1xf32>
    %cst_20 = arith.constant 0.000000e+00 : f32
    %63 = vector.broadcast %cst_20 : f32 to vector<2x128x128xf32>
    %c1_i32 = arith.constant 1 : i32
    %64 = arith.addi %arg1, %c1_i32 : i32
    %c0_i32 = arith.constant 0 : i32
    %65 = arith.subi %64, %c0_i32 : i32
    %66 = arith.addi %c0_i32, %65 : i32
    %c1_i32_21 = arith.constant 1 : i32
    %67:3 = scf.for %arg17 = %c0_i32 to %66 step %c1_i32_21 iter_args(%arg18 = %61, %arg19 = %62, %arg20 = %63) -> (vector<2x128x1xf32>, vector<2x128x1xf32>, vector<2x128x128xf32>)  : i32 {
      %c128_i32_50 = arith.constant 128 : i32
      %124 = arith.muli %arg17, %c128_i32_50 : i32
      %125 = tpu.assume_multiple %124, 128 : i32
      %c0_51 = arith.constant 0 : index
      %126 = arith.index_cast %125 : i32 to index
      %c0_52 = arith.constant 0 : index
      %127 = vector.load %arg15[%c0_51, %126, %c0_52] : memref<2x256x128xbf16, #tpu.memory_space<vmem>>, vector<2x128x128xbf16>
      %c0_53 = arith.constant 0 : index
      %128 = arith.index_cast %125 : i32 to index
      %c0_54 = arith.constant 0 : index
      %129 = vector.load %arg16[%c0_53, %128, %c0_54] : memref<2x256x128xbf16, #tpu.memory_space<vmem>>, vector<2x128x128xbf16>
      "tpu.trace_start"() <{level = 10 : i32, message = "hqd,hkd->hqk"}> : () -> ()
      %cst_55 = arith.constant dense<0.000000e+00> : vector<2x128x128xf32>
      %130 = tpu.matmul %37, %127, %cst_55 {dimension_numbers = #tpu.dot_dimension_numbers<[2], [2], [1], [1], [0, 0, 0, 1, 1, 1], [0], [0]>} : vector<2x128x128xbf16>, vector<2x128x128xbf16>, vector<2x128x128xf32> -> vector<2x128x128xf32>
      "tpu.trace_stop"() : () -> ()
      %cst_56 = arith.constant 6.250000e-02 : f32
      %131 = vector.broadcast %cst_56 : f32 to vector<2x128x128xf32>
      %132 = arith.mulf %130, %131 : vector<2x128x128xf32>
      %c128_i32_57 = arith.constant 128 : i32
      %133 = arith.muli %arg17, %c128_i32_57 : i32
      %134 = vector.broadcast %133 : i32 to vector<128x128xi32>
      %135 = arith.addi %134, %60 : vector<128x128xi32>
      %136 = arith.cmpi sge, %59, %135 : vector<128x128xi32>
      %137 = vector.shape_cast %136 : vector<128x128xi1> to vector<1x128x128xi1>
      %cst_58 = arith.constant 0xFF800000 : f32
      %138 = vector.shape_cast %137 : vector<1x128x128xi1> to vector<1x128x128xi1>
      %139 = vector.broadcast %138 : vector<1x128x128xi1> to vector<2x128x128xi1>
      %140 = vector.broadcast %cst_58 : f32 to vector<2x128x128xf32>
      %141 = arith.select %139, %132, %140 : vector<2x128x128xi1>, vector<2x128x128xf32>
      %cst_59 = arith.constant dense<0xFF800000> : vector<2x128xf32>
      %142 = vector.multi_reduction <maximumf>, %141, %cst_59 [2] : vector<2x128x128xf32> to vector<2x128xf32>
      %143 = vector.shape_cast %142 : vector<2x128xf32> to vector<2x128x1xf32>
      %144 = arith.maximumf %arg18, %143 : vector<2x128x1xf32>
      %145 = arith.subf %arg18, %144 : vector<2x128x1xf32>
      %146 = math.exp %145 : vector<2x128x1xf32>
      %147 = vector.broadcast %144 : vector<2x128x1xf32> to vector<2x128x128xf32>
      %148 = arith.subf %141, %147 : vector<2x128x128xf32>
      %149 = math.exp %148 : vector<2x128x128xf32>
      %150 = arith.mulf %146, %arg19 : vector<2x128x1xf32>
      %cst_60 = arith.constant dense<0.000000e+00> : vector<2x128xf32>
      %151 = vector.multi_reduction <add>, %149, %cst_60 [2] : vector<2x128x128xf32> to vector<2x128xf32>
      %152 = vector.shape_cast %151 : vector<2x128xf32> to vector<2x128x1xf32>
      %153 = arith.addf %150, %152 : vector<2x128x1xf32>
      %154 = vector.broadcast %146 : vector<2x128x1xf32> to vector<2x128x128xf32>
      %155 = arith.mulf %154, %arg20 : vector<2x128x128xf32>
      %156 = arith.truncf %149 : vector<2x128x128xf32> to vector<2x128x128xbf16>
      "tpu.trace_start"() <{level = 10 : i32, message = "hqk,hkd->hqd"}> : () -> ()
      %cst_61 = arith.constant dense<0.000000e+00> : vector<2x128x128xf32>
      %157 = tpu.matmul %156, %129, %cst_61 {dimension_numbers = #tpu.dot_dimension_numbers<[2], [1], [1], [2], [0, 0, 0, 1, 1, 2], [0], [0]>} : vector<2x128x128xbf16>, vector<2x128x128xbf16>, vector<2x128x128xf32> -> vector<2x128x128xf32>
      "tpu.trace_stop"() : () -> ()
      %158 = arith.addf %155, %157 : vector<2x128x128xf32>
      scf.yield %144, %153, %158 : vector<2x128x1xf32>, vector<2x128x1xf32>, vector<2x128x128xf32>
    }
    %68 = vector.broadcast %67#1 : vector<2x128x1xf32> to vector<2x128x128xf32>
    %69 = arith.divf %67#2, %68 : vector<2x128x128xf32>
    %70 = vector.extract_strided_slice %69 {offsets = [0, 0, 0], sizes = [1, 128, 128], strides = [1, 1, 1]} : vector<2x128x128xf32> to vector<1x128x128xf32>
    %71 = vector.shape_cast %70 : vector<1x128x128xf32> to vector<128x128xf32>
    %72 = vector.extract_strided_slice %69 {offsets = [1, 0, 0], sizes = [1, 128, 128], strides = [1, 1, 1]} : vector<2x128x128xf32> to vector<1x128x128xf32>
    %73 = vector.shape_cast %72 : vector<1x128x128xf32> to vector<128x128xf32>
    %74 = tpu.concatenate %71, %73 in 1 : vector<128x128xf32>, vector<128x128xf32> -> vector<128x256xf32>
    %75 = arith.truncf %74 : vector<128x256xf32> to vector<128x256xbf16>
    %c0_22 = arith.constant 0 : index
    %c0_23 = arith.constant 0 : index
    %76 = vector.load %arg6[%c0_22, %c0_23] : memref<256x256xbf16, #tpu.memory_space<vmem>>, vector<256x256xbf16>
    %cst_24 = arith.constant dense<0.000000e+00> : vector<128x256xf32>
    %77 = tpu.matmul %75, %76, %cst_24 {dimension_numbers = #tpu.dot_dimension_numbers<[1], [0], [0], [1], [0, 0, 1, 1], [], []>} : vector<128x256xbf16>, vector<256x256xbf16>, vector<128x256xf32> -> vector<128x256xf32>
    %c0_25 = arith.constant 0 : index
    %c0_26 = arith.constant 0 : index
    %78 = vector.load %arg7[%c0_25, %c0_26] : memref<1x256xf32, #tpu.memory_space<vmem>>, vector<1x256xf32>
    %79 = vector.broadcast %78 : vector<1x256xf32> to vector<128x256xf32>
    %80 = arith.addf %77, %79 : vector<128x256xf32>
    %81 = arith.addf %1, %80 : vector<128x256xf32>
    %c0_27 = arith.constant 0 : index
    %c0_28 = arith.constant 0 : index
    %82 = vector.load %arg8[%c0_27, %c0_28] : memref<1x256xf32, #tpu.memory_space<vmem>>, vector<1x256xf32>
    %c0_29 = arith.constant 0 : index
    %c0_30 = arith.constant 0 : index
    %83 = vector.load %arg9[%c0_29, %c0_30] : memref<1x256xf32, #tpu.memory_space<vmem>>, vector<1x256xf32>
    %cst_31 = arith.constant dense<0.000000e+00> : vector<128xf32>
    %84 = vector.multi_reduction <add>, %81, %cst_31 [1] : vector<128x256xf32> to vector<128xf32>
    %85 = vector.shape_cast %84 : vector<128xf32> to vector<128x1xf32>
    %cst_32 = arith.constant 2.560000e+02 : f32
    %86 = vector.broadcast %cst_32 : f32 to vector<128x1xf32>
    %87 = arith.divf %85, %86 : vector<128x1xf32>
    %88 = vector.broadcast %87 : vector<128x1xf32> to vector<128x256xf32>
    %89 = arith.subf %81, %88 : vector<128x256xf32>
    %90 = arith.mulf %89, %89 : vector<128x256xf32>
    %cst_33 = arith.constant dense<0.000000e+00> : vector<128xf32>
    %91 = vector.multi_reduction <add>, %90, %cst_33 [1] : vector<128x256xf32> to vector<128xf32>
    %92 = vector.shape_cast %91 : vector<128xf32> to vector<128x1xf32>
    %cst_34 = arith.constant 2.560000e+02 : f32
    %93 = vector.broadcast %cst_34 : f32 to vector<128x1xf32>
    %94 = arith.divf %92, %93 : vector<128x1xf32>
    %95 = vector.broadcast %87 : vector<128x1xf32> to vector<128x256xf32>
    %96 = arith.subf %81, %95 : vector<128x256xf32>
    %cst_35 = arith.constant 9.99999974E-6 : f32
    %97 = vector.broadcast %cst_35 : f32 to vector<128x1xf32>
    %98 = arith.addf %94, %97 : vector<128x1xf32>
    %99 = math.rsqrt %98 : vector<128x1xf32>
    %100 = vector.broadcast %99 : vector<128x1xf32> to vector<128x256xf32>
    %101 = arith.mulf %96, %100 : vector<128x256xf32>
    %102 = vector.broadcast %82 : vector<1x256xf32> to vector<128x256xf32>
    %103 = arith.mulf %101, %102 : vector<128x256xf32>
    %104 = vector.broadcast %83 : vector<1x256xf32> to vector<128x256xf32>
    %105 = arith.addf %103, %104 : vector<128x256xf32>
    %106 = arith.truncf %105 : vector<128x256xf32> to vector<128x256xbf16>
    %c0_36 = arith.constant 0 : index
    %c0_37 = arith.constant 0 : index
    %107 = vector.load %arg10[%c0_36, %c0_37] : memref<256x1024xbf16, #tpu.memory_space<vmem>>, vector<256x1024xbf16>
    %cst_38 = arith.constant dense<0.000000e+00> : vector<128x1024xf32>
    %108 = tpu.matmul %106, %107, %cst_38 {dimension_numbers = #tpu.dot_dimension_numbers<[1], [0], [0], [1], [0, 0, 1, 1], [], []>} : vector<128x256xbf16>, vector<256x1024xbf16>, vector<128x1024xf32> -> vector<128x1024xf32>
    %c0_39 = arith.constant 0 : index
    %c0_40 = arith.constant 0 : index
    %109 = vector.load %arg11[%c0_39, %c0_40] : memref<1x1024xf32, #tpu.memory_space<vmem>>, vector<1x1024xf32>
    %110 = vector.broadcast %109 : vector<1x1024xf32> to vector<128x1024xf32>
    %111 = arith.addf %108, %110 : vector<128x1024xf32>
    %cst_41 = arith.constant 0.000000e+00 : f32
    %112 = vector.broadcast %cst_41 : f32 to vector<128x1024xf32>
    %113 = arith.maximumf %111, %112 : vector<128x1024xf32>
    %114 = arith.truncf %113 : vector<128x1024xf32> to vector<128x1024xbf16>
    %c0_42 = arith.constant 0 : index
    %c0_43 = arith.constant 0 : index
    %115 = vector.load %arg12[%c0_42, %c0_43] : memref<1024x256xbf16, #tpu.memory_space<vmem>>, vector<1024x256xbf16>
    %cst_44 = arith.constant dense<0.000000e+00> : vector<128x256xf32>
    %116 = tpu.matmul %114, %115, %cst_44 {dimension_numbers = #tpu.dot_dimension_numbers<[1], [0], [0], [1], [0, 0, 1, 1], [], []>} : vector<128x1024xbf16>, vector<1024x256xbf16>, vector<128x256xf32> -> vector<128x256xf32>
    %c0_45 = arith.constant 0 : index
    %c0_46 = arith.constant 0 : index
    %117 = vector.load %arg13[%c0_45, %c0_46] : memref<1x256xf32, #tpu.memory_space<vmem>>, vector<1x256xf32>
    %118 = vector.broadcast %117 : vector<1x256xf32> to vector<128x256xf32>
    %119 = arith.addf %116, %118 : vector<128x256xf32>
    %120 = arith.addf %81, %119 : vector<128x256xf32>
    %c0_47 = arith.constant 0 : index
    %c0_48 = arith.constant 0 : index
    %c0_49 = arith.constant 0 : index
    %121 = vector.load %arg14[%c0_47, %c0_48, %c0_49] : memref<1x128x256xf32, #tpu.memory_space<vmem>>, vector<1x128x256xf32>
    %122 = vector.shape_cast %121 : vector<1x128x256xf32> to vector<128x256xf32>
    %123 = vector.shape_cast %120 : vector<128x256xf32> to vector<1x128x256xf32>
    tpu.vector_store %arg14[%c0_47, %c0_48, %c0_49], %123 {strides = array<i32>} : memref<1x128x256xf32, #tpu.memory_space<vmem>>, vector<1x128x256xf32>,
    return
  }
  func.func @transform_0(%arg0: i32, %arg1: i32) -> (i32, i32, i32) {
    %c0_i32 = arith.constant 0 : i32
    %c0_i32_0 = arith.constant 0 : i32
    return %arg0, %arg1, %c0_i32 : i32, i32, i32
  }
  func.func @transform_1(%arg0: i32, %arg1: i32) -> (i32, i32) {
    %c0_i32 = arith.constant 0 : i32
    %c0_i32_0 = arith.constant 0 : i32
    %c0_i32_1 = arith.constant 0 : i32
    return %c0_i32, %c0_i32_0 : i32, i32
  }
  func.func @transform_2(%arg0: i32, %arg1: i32) -> (i32, i32) {
    %c0_i32 = arith.constant 0 : i32
    %c0_i32_0 = arith.constant 0 : i32
    %c0_i32_1 = arith.constant 0 : i32
    return %c0_i32, %c0_i32_0 : i32, i32
  }
  func.func @transform_3(%arg0: i32, %arg1: i32) -> (i32, i32) {
    %c0_i32 = arith.constant 0 : i32
    %c0_i32_0 = arith.constant 0 : i32
    %c0_i32_1 = arith.constant 0 : i32
    return %c0_i32, %c0_i32_0 : i32, i32
  }
  func.func @transform_4(%arg0: i32, %arg1: i32) -> (i32, i32) {
    %c0_i32 = arith.constant 0 : i32
    %c0_i32_0 = arith.constant 0 : i32
    %c0_i32_1 = arith.constant 0 : i32
    return %c0_i32, %c0_i32_0 : i32, i32
  }
  func.func @transform_5(%arg0: i32, %arg1: i32) -> (i32, i32) {
    %c0_i32 = arith.constant 0 : i32
    %c0_i32_0 = arith.constant 0 : i32
    %c0_i32_1 = arith.constant 0 : i32
    return %c0_i32, %c0_i32_0 : i32, i32
  }
  func.func @transform_6(%arg0: i32, %arg1: i32) -> (i32, i32) {
    %c0_i32 = arith.constant 0 : i32
    %c0_i32_0 = arith.constant 0 : i32
    %c0_i32_1 = arith.constant 0 : i32
    return %c0_i32, %c0_i32_0 : i32, i32
  }
  func.func @transform_7(%arg0: i32, %arg1: i32) -> (i32, i32) {
    %c0_i32 = arith.constant 0 : i32
    %c0_i32_0 = arith.constant 0 : i32
    %c0_i32_1 = arith.constant 0 : i32
    return %c0_i32, %c0_i32_0 : i32, i32
  }
  func.func @transform_8(%arg0: i32, %arg1: i32) -> (i32, i32) {
    %c0_i32 = arith.constant 0 : i32
    %c0_i32_0 = arith.constant 0 : i32
    %c0_i32_1 = arith.constant 0 : i32
    return %c0_i32, %c0_i32_0 : i32, i32
  }
  func.func @transform_9(%arg0: i32, %arg1: i32) -> (i32, i32) {
    %c0_i32 = arith.constant 0 : i32
    %c0_i32_0 = arith.constant 0 : i32
    %c0_i32_1 = arith.constant 0 : i32
    return %c0_i32, %c0_i32_0 : i32, i32
  }
  func.func @transform_10(%arg0: i32, %arg1: i32) -> (i32, i32) {
    %c0_i32 = arith.constant 0 : i32
    %c0_i32_0 = arith.constant 0 : i32
    %c0_i32_1 = arith.constant 0 : i32
    return %c0_i32, %c0_i32_0 : i32, i32
  }
  func.func @transform_11(%arg0: i32, %arg1: i32) -> (i32, i32) {
    %c0_i32 = arith.constant 0 : i32
    %c0_i32_0 = arith.constant 0 : i32
    %c0_i32_1 = arith.constant 0 : i32
    return %c0_i32, %c0_i32_0 : i32, i32
  }
  func.func @transform_12(%arg0: i32, %arg1: i32) -> (i32, i32, i32) {
    %c0_i32 = arith.constant 0 : i32
    %c0_i32_0 = arith.constant 0 : i32
    return %arg0, %arg1, %c0_i32 : i32, i32, i32
  }
}

</mosaic_0001>

<llo_original>
// kernel: tpu_custom_call.1
$region0: #{tpu_custom_call.1}
  #allocation0 [shape = 'u32[]', space=smem, size = 0x4, offset = 0x4, fixed_abs, tag = 'smem constant byte address 0x4 - core index']
  #allocation1 [shape = 'u32[144,128]{1,0:T(1,128)}', space=vmem, size = 0x12000, scoped, tag = 'internal scratch']
  #allocation2 [shape = 'bf16[2,256,128]{2,1,0:T(16,128)(2,1)}', space=vmem, size = 0x20000, scoped, tag = 'scratch operand']
  #allocation3 [shape = 'bf16[2,256,128]{2,1,0:T(16,128)(2,1)}', space=vmem, size = 0x20000, scoped, tag = 'scratch operand']
  %s0 = inlined_call_operand.hbm [shape: f32[2,256,256], index: 0, kind: input, shape index: {}]
  %s1 = inlined_call_operand.vmem [shape: f32[1,256], index: 1, kind: input, shape index: {}]
  %s2 = inlined_call_operand.vmem [shape: f32[1,256], index: 2, kind: input, shape index: {}]
  %s3 = inlined_call_operand.hbm [shape: bf16[256,768], index: 3, kind: input, shape index: {}]
  %s4 = inlined_call_operand.hbm [shape: bf16[256,256], index: 4, kind: input, shape index: {}]
  %s5 = inlined_call_operand.vmem [shape: f32[1,256], index: 5, kind: input, shape index: {}]
  %s6 = inlined_call_operand.vmem [shape: f32[1,256], index: 6, kind: input, shape index: {}]
  %s7 = inlined_call_operand.vmem [shape: f32[1,256], index: 7, kind: input, shape index: {}]
  %s8 = inlined_call_operand.hbm [shape: bf16[256,1024], index: 8, kind: input, shape index: {}]
  %s9 = inlined_call_operand.vmem [shape: f32[1,1024], index: 9, kind: input, shape index: {}]
  %s10 = inlined_call_operand.hbm [shape: bf16[1024,256], index: 10, kind: input, shape index: {}]
  %s11 = inlined_call_operand.vmem [shape: f32[1,256], index: 11, kind: input, shape index: {}]
  %s12 = inlined_call_operand.hbm [shape: f32[2,256,256], index: 12, kind: output, shape index: {}]
  %s13 = sld [smem:[#allocation0]]
  $region108: #{tpu_custom_call.1} parent=0
    _
  %s15 = ssub.s32 1, %s13
  %s16 = scalar_select 0, %s15, %s13
  $region1: #{tpu_custom_call.1} parent=0
    #allocation4 [shape = 'u8[262144]{0}', space=vmem, size = 0x40000, scoped, tag = 'input window, operand 0']
    #allocation5 [shape = 's32[2]{0}', space=sflag, size = 0x8, scoped, tag = 'scoped memory for tpu_custom_call.1']
    #allocation6 [shape = 's32[2]{0}', space=sflag, size = 0x8, scoped, tag = 'scoped memory for tpu_custom_call.1']
    #allocation7 [shape = 'u8[393216]{0}', space=vmem, size = 0x60000, scoped, tag = 'input window, operand 3, single buffered']
    #allocation8 [shape = 's32[1]{0}', space=sflag, size = 0x4, scoped, tag = 'scoped memory for tpu_custom_call.1']
    #allocation9 [shape = 'u8[131072]{0}', space=vmem, size = 0x20000, scoped, tag = 'input window, operand 4, single buffered']
    #allocation10 [shape = 'u8[524288]{0}', space=vmem, size = 0x80000, scoped, tag = 'input window, operand 8, single buffered']
    #allocation11 [shape = 's32[1]{0}', space=sflag, size = 0x4, scoped, tag = 'scoped memory for tpu_custom_call.1']
    #allocation12 [shape = 'u8[524288]{0}', space=vmem, size = 0x80000, scoped, tag = 'input window, operand 10, single buffered']
    #allocation13 [shape = 'u8[262144]{0}', space=vmem, size = 0x40000, scoped, tag = 'output window, operand 0']
    %17 = vsyncpa [#allocation5], 0
    %s18 = scalar_lea.sflag [#allocation5], 1
    %19 = vsyncpa %s18, 0
    %20 = vsyncpa [#allocation8], 0
    %21 = vsyncpa [#allocation11], 0
    %22 = vsyncpa [#allocation6], 0
    %s23 = scalar_lea.sflag [#allocation6], 1
    %24 = vsyncpa %s23, 0
    loop: start=0, step=1, limit=6
    $region2: #{tpu_custom_call.1} parent=1 // loop_pre_header
      _
    $region3: #{tpu_custom_call.1} parent=1 // loop_header
      %s26 = sphi 0, %s30
      %p27 = scmp.ge.s32.totalorder %s26, 6
      %s33 = sphi 0, %s45
      %s34 = sphi 0, %s41
      %s35 = sphi 0, %s33
      %s36 = sphi 0, %s34
      %s37 = sphi 0, %s35
      %s38 = sphi 0, %s36
      %s50 = sphi 0, %s52
      %s53 = sphi 0, %s50
      %s54 = sphi 0, %s53
      %s70 = sphi 0, %s54
      %s74 = sphi 0, %s74
      %s76 = sphi 0, %s74
      %s77 = sphi 0, %s76
      %s91 = sphi 0, %s77
      %s95 = sphi 0, %s95
      %s97 = sphi 0, %s95
      %s98 = sphi 0, %s97
      %s112 = sphi 0, %s98
      %s116 = sphi 0, %s116
      %s118 = sphi 0, %s116
      %s119 = sphi 0, %s118
      %s133 = sphi 0, %s119
      %s137 = sphi 0, %s137
      %s139 = sphi 0, %s137
      %s140 = sphi 0, %s139
      %s154 = sphi 0, %s140
      %s158 = sphi 0, %s158
      %s160 = sphi 0, %s158
      %s161 = sphi 0, %s160
      %s175 = sphi 0, %s161
      %s179 = sphi 0, %s179
      %s181 = sphi 0, %s179
      %s182 = sphi 0, %s181
      %s196 = sphi 0, %s182
      %s200 = sphi 0, %s200
      %s202 = sphi 0, %s200
      %s203 = sphi 0, %s202
      %s217 = sphi 0, %s203
      %s221 = sphi 0, %s221
      %s223 = sphi 0, %s221
      %s224 = sphi 0, %s223
      %s238 = sphi 0, %s224
      %s242 = sphi 0, %s242
      %s244 = sphi 0, %s242
      %s245 = sphi 0, %s244
      %s259 = sphi 0, %s245
      %s263 = sphi 0, %s263
      %s265 = sphi 0, %s263
      %s266 = sphi 0, %s265
      %s280 = sphi 0, %s266
      %s284 = sphi 0, %s284
      %s286 = sphi 0, %s284
      %s287 = sphi 0, %s286
      %s301 = sphi 0, %s287
      %s309 = sphi 0, %s311
      %s312 = sphi 0, %s309
      %s313 = sphi 0, %s312
      %s329 = sphi 0, %s313
    $region4: #{tpu_custom_call.1} parent=1 // loop_header_branch
      %29 = sbr.rel (%p27) target = $region8
    $region5: #{tpu_custom_call.1} parent=1 // loop_body
      %s31 = ssub.s32 %s26, 1
      %s32 = ssub.s32 %s26, 2
      %s39 = sadd.s32 1, %s34
      %p40 = scmp.ge.s32.totalorder %s39, 2
      %s41 = scalar_select %p40, 0, %s39
      %s42 = sadd.s32 1, %s33
      %s43 = scalar_select %p40, %s42, %s33
      %p44 = scmp.ge.s32.totalorder %s43, 2
      %s45 = scalar_select %p44, 0, %s43
      %s46 = ssub.s32 %s33, %s45
      %s47 = ssub.s32 %s34, %s41
      %s48 = sor.u32 %s46, %s47
      %p49 = scmp.eq.s32.totalorder %s48, 0
      %s51 = sadd.s32 %s50, 1
      %s52 = scalar_select %p49, %s50, %s51
      %p55 = pneg %p49
      %p56 = scmp.eq.s32.totalorder %s26, 3
      %p57 = por %p55, %p56
      %p58 = scmp.ne.s32.totalorder %s50, %s53
      %p59 = scmp.eq.s32.totalorder %s26, 0
      %p60 = por %p58, %p59
      %p61 = scmp.ne.s32.totalorder %s50, %s53
      %p62 = scmp.eq.s32.totalorder %s31, 3
      %p63 = por %p61, %p62
      %p64 = scmp.ne.s32.totalorder %s53, %s54
      %p65 = scmp.eq.s32.totalorder %s31, 0
      %p66 = por %p64, %p65
      %p67 = scmp.ne.s32.totalorder %s53, %s54
      %p68 = scmp.eq.s32.totalorder %s32, 3
      %p69 = por %p67, %p68
      %p71 = scmp.ne.s32.totalorder %s54, %s70
      %p72 = scmp.eq.s32.totalorder %s32, 0
      %p73 = por %p71, %p72
      %s75 = sadd.s32 %s74, 1
      %p78 = scmp.eq.s32.totalorder %s26, 3
      %p79 = scmp.ne.s32.totalorder %s74, %s76
      %p80 = scmp.eq.s32.totalorder %s26, 0
      %p81 = por %p79, %p80
      %p82 = scmp.ne.s32.totalorder %s74, %s76
      %p83 = scmp.eq.s32.totalorder %s31, 3
      %p84 = por %p82, %p83
      %p85 = scmp.ne.s32.totalorder %s76, %s77
      %p86 = scmp.eq.s32.totalorder %s31, 0
      %p87 = por %p85, %p86
      %p88 = scmp.ne.s32.totalorder %s76, %s77
      %p89 = scmp.eq.s32.totalorder %s32, 3
      %p90 = por %p88, %p89
      %p92 = scmp.ne.s32.totalorder %s77, %s91
      %p93 = scmp.eq.s32.totalorder %s32, 0
      %p94 = por %p92, %p93
      %s96 = sadd.s32 %s95, 1
      %p99 = scmp.eq.s32.totalorder %s26, 3
      %p100 = scmp.ne.s32.totalorder %s95, %s97
      %p101 = scmp.eq.s32.totalorder %s26, 0
      %p102 = por %p100, %p101
      %p103 = scmp.ne.s32.totalorder %s95, %s97
      %p104 = scmp.eq.s32.totalorder %s31, 3
      %p105 = por %p103, %p104
      %p106 = scmp.ne.s32.totalorder %s97, %s98
      %p107 = scmp.eq.s32.totalorder %s31, 0
      %p108 = por %p106, %p107
      %p109 = scmp.ne.s32.totalorder %s97, %s98
      %p110 = scmp.eq.s32.totalorder %s32, 3
      %p111 = por %p109, %p110
      %p113 = scmp.ne.s32.totalorder %s98, %s112
      %p114 = scmp.eq.s32.totalorder %s32, 0
      %p115 = por %p113, %p114
      %s117 = sadd.s32 %s116, 1
      %p120 = scmp.eq.s32.totalorder %s26, 3
      %p121 = scmp.ne.s32.totalorder %s116, %s118
      %p122 = scmp.eq.s32.totalorder %s26, 0
      %p123 = por %p121, %p122
      %p124 = scmp.ne.s32.totalorder %s116, %s118
      %p125 = scmp.eq.s32.totalorder %s31, 3
      %p126 = por %p124, %p125
      %p127 = scmp.ne.s32.totalorder %s118, %s119
      %p128 = scmp.eq.s32.totalorder %s31, 0
      %p129 = por %p127, %p128
      %p130 = scmp.ne.s32.totalorder %s118, %s119
      %p131 = scmp.eq.s32.totalorder %s32, 3
      %p132 = por %p130, %p131
      %p134 = scmp.ne.s32.totalorder %s119, %s133
      %p135 = scmp.eq.s32.totalorder %s32, 0
      %p136 = por %p134, %p135
      %s138 = sadd.s32 %s137, 1
      %p141 = scmp.eq.s32.totalorder %s26, 3
      %p142 = scmp.ne.s32.totalorder %s137, %s139
      %p143 = scmp.eq.s32.totalorder %s26, 0
      %p144 = por %p142, %p143
      %p145 = scmp.ne.s32.totalorder %s137, %s139
      %p146 = scmp.eq.s32.totalorder %s31, 3
      %p147 = por %p145, %p146
      %p148 = scmp.ne.s32.totalorder %s139, %s140
      %p149 = scmp.eq.s32.totalorder %s31, 0
      %p150 = por %p148, %p149
      %p151 = scmp.ne.s32.totalorder %s139, %s140
      %p152 = scmp.eq.s32.totalorder %s32, 3
      %p153 = por %p151, %p152
      %p155 = scmp.ne.s32.totalorder %s140, %s154
      %p156 = scmp.eq.s32.totalorder %s32, 0
      %p157 = por %p155, %p156
      %s159 = sadd.s32 %s158, 1
      %p162 = scmp.eq.s32.totalorder %s26, 3
      %p163 = scmp.ne.s32.totalorder %s158, %s160
      %p164 = scmp.eq.s32.totalorder %s26, 0
      %p165 = por %p163, %p164
      %p166 = scmp.ne.s32.totalorder %s158, %s160
      %p167 = scmp.eq.s32.totalorder %s31, 3
      %p168 = por %p166, %p167
      %p169 = scmp.ne.s32.totalorder %s160, %s161
      %p170 = scmp.eq.s32.totalorder %s31, 0
      %p171 = por %p169, %p170
      %p172 = scmp.ne.s32.totalorder %s160, %s161
      %p173 = scmp.eq.s32.totalorder %s32, 3
      %p174 = por %p172, %p173
      %p176 = scmp.ne.s32.totalorder %s161, %s175
      %p177 = scmp.eq.s32.totalorder %s32, 0
      %p178 = por %p176, %p177
      %s180 = sadd.s32 %s179, 1
      %p183 = scmp.eq.s32.totalorder %s26, 3
      %p184 = scmp.ne.s32.totalorder %s179, %s181
      %p185 = scmp.eq.s32.totalorder %s26, 0
      %p186 = por %p184, %p185
      %p187 = scmp.ne.s32.totalorder %s179, %s181
      %p188 = scmp.eq.s32.totalorder %s31, 3
      %p189 = por %p187, %p188
      %p190 = scmp.ne.s32.totalorder %s181, %s182
      %p191 = scmp.eq.s32.totalorder %s31, 0
      %p192 = por %p190, %p191
      %p193 = scmp.ne.s32.totalorder %s181, %s182
      %p194 = scmp.eq.s32.totalorder %s32, 3
      %p195 = por %p193, %p194
      %p197 = scmp.ne.s32.totalorder %s182, %s196
      %p198 = scmp.eq.s32.totalorder %s32, 0
      %p199 = por %p197, %p198
      %s201 = sadd.s32 %s200, 1
      %p204 = scmp.eq.s32.totalorder %s26, 3
      %p205 = scmp.ne.s32.totalorder %s200, %s202
      %p206 = scmp.eq.s32.totalorder %s26, 0
      %p207 = por %p205, %p206
      %p208 = scmp.ne.s32.totalorder %s200, %s202
      %p209 = scmp.eq.s32.totalorder %s31, 3
      %p210 = por %p208, %p209
      %p211 = scmp.ne.s32.totalorder %s202, %s203
      %p212 = scmp.eq.s32.totalorder %s31, 0
      %p213 = por %p211, %p212
      %p214 = scmp.ne.s32.totalorder %s202, %s203
      %p215 = scmp.eq.s32.totalorder %s32, 3
      %p216 = por %p214, %p215
      %p218 = scmp.ne.s32.totalorder %s203, %s217
      %p219 = scmp.eq.s32.totalorder %s32, 0
      %p220 = por %p218, %p219
      %s222 = sadd.s32 %s221, 1
      %p225 = scmp.eq.s32.totalorder %s26, 3
      %p226 = scmp.ne.s32.totalorder %s221, %s223
      %p227 = scmp.eq.s32.totalorder %s26, 0
      %p228 = por %p226, %p227
      %p229 = scmp.ne.s32.totalorder %s221, %s223
      %p230 = scmp.eq.s32.totalorder %s31, 3
      %p231 = por %p229, %p230
      %p232 = scmp.ne.s32.totalorder %s223, %s224
      %p233 = scmp.eq.s32.totalorder %s31, 0
      %p234 = por %p232, %p233
      %p235 = scmp.ne.s32.totalorder %s223, %s224
      %p236 = scmp.eq.s32.totalorder %s32, 3
      %p237 = por %p235, %p236
      %p239 = scmp.ne.s32.totalorder %s224, %s238
      %p240 = scmp.eq.s32.totalorder %s32, 0
      %p241 = por %p239, %p240
      %s243 = sadd.s32 %s242, 1
      %p246 = scmp.eq.s32.totalorder %s26, 3
      %p247 = scmp.ne.s32.totalorder %s242, %s244
      %p248 = scmp.eq.s32.totalorder %s26, 0
      %p249 = por %p247, %p248
      %p250 = scmp.ne.s32.totalorder %s242, %s244
      %p251 = scmp.eq.s32.totalorder %s31, 3
      %p252 = por %p250, %p251
      %p253 = scmp.ne.s32.totalorder %s244, %s245
      %p254 = scmp.eq.s32.totalorder %s31, 0
      %p255 = por %p253, %p254
      %p256 = scmp.ne.s32.totalorder %s244, %s245
      %p257 = scmp.eq.s32.totalorder %s32, 3
      %p258 = por %p256, %p257
      %p260 = scmp.ne.s32.totalorder %s245, %s259
      %p261 = scmp.eq.s32.totalorder %s32, 0
      %p262 = por %p260, %p261
      %s264 = sadd.s32 %s263, 1
      %p267 = scmp.eq.s32.totalorder %s26, 3
      %p268 = scmp.ne.s32.totalorder %s263, %s265
      %p269 = scmp.eq.s32.totalorder %s26, 0
      %p270 = por %p268, %p269
      %p271 = scmp.ne.s32.totalorder %s263, %s265
      %p272 = scmp.eq.s32.totalorder %s31, 3
      %p273 = por %p271, %p272
      %p274 = scmp.ne.s32.totalorder %s265, %s266
      %p275 = scmp.eq.s32.totalorder %s31, 0
      %p276 = por %p274, %p275
      %p277 = scmp.ne.s32.totalorder %s265, %s266
      %p278 = scmp.eq.s32.totalorder %s32, 3
      %p279 = por %p277, %p278
      %p281 = scmp.ne.s32.totalorder %s266, %s280
      %p282 = scmp.eq.s32.totalorder %s32, 0
      %p283 = por %p281, %p282
      %s285 = sadd.s32 %s284, 1
      %p288 = scmp.eq.s32.totalorder %s26, 3
      %p289 = scmp.ne.s32.totalorder %s284, %s286
      %p290 = scmp.eq.s32.totalorder %s26, 0
      %p291 = por %p289, %p290
      %p292 = scmp.ne.s32.totalorder %s284, %s286
      %p293 = scmp.eq.s32.totalorder %s31, 3
      %p294 = por %p292, %p293
      %p295 = scmp.ne.s32.totalorder %s286, %s287
      %p296 = scmp.eq.s32.totalorder %s31, 0
      %p297 = por %p295, %p296
      %p298 = scmp.ne.s32.totalorder %s286, %s287
      %p299 = scmp.eq.s32.totalorder %s32, 3
      %p300 = por %p298, %p299
      %p302 = scmp.ne.s32.totalorder %s287, %s301
      %p303 = scmp.eq.s32.totalorder %s32, 0
      %p304 = por %p302, %p303
      %s305 = ssub.s32 %s33, %s45
      %s306 = ssub.s32 %s34, %s41
      %s307 = sor.u32 %s305, %s306
      %p308 = scmp.eq.s32.totalorder %s307, 0
      %s310 = sadd.s32 %s309, 1
      %s311 = scalar_select %p308, %s309, %s310
      %p314 = pneg %p308
      %p315 = scmp.eq.s32.totalorder %s26, 3
      %p316 = por %p314, %p315
      %p317 = scmp.ne.s32.totalorder %s309, %s312
      %p318 = scmp.eq.s32.totalorder %s26, 0
      %p319 = por %p317, %p318
      %p320 = scmp.ne.s32.totalorder %s309, %s312
      %p321 = scmp.eq.s32.totalorder %s31, 3
      %p322 = por %p320, %p321
      %p323 = scmp.ne.s32.totalorder %s312, %s313
      %p324 = scmp.eq.s32.totalorder %s31, 0
      %p325 = por %p323, %p324
      %p326 = scmp.ne.s32.totalorder %s312, %s313
      %p327 = scmp.eq.s32.totalorder %s32, 3
      %p328 = por %p326, %p327
      %p330 = scmp.ne.s32.totalorder %s313, %s329
      %p331 = scmp.eq.s32.totalorder %s32, 0
      %p332 = por %p330, %p331
      %p333 = scmp.le.s32.totalorder 1, %s26
      %p334 = scmp.lt.s32.totalorder %s26, 5
      %p335 = pnand %p333, %p334
      %p336 = pneg %p335
      // Predicated region
      $region9: #{tpu_custom_call.1} parent=5 // pred_check
        _
      $region10: #{tpu_custom_call.1} parent=5 // pred_check_branch
        %338 = sbr.rel (%p335) target = $region12
      $region11: #{tpu_custom_call.1} parent=5 // pred_region
        %s339 = ssub.s32 %s26, 1
        // Predicated region
        $region13: #{tpu_custom_call.1} parent=11 // pred_check
          %p340 = pneg %p87
        $region14: #{tpu_custom_call.1} parent=11 // pred_check_branch
          %342 = sbr.rel (%p340) target = $region16
        $region15: #{tpu_custom_call.1} parent=11 // pred_region
          _
        $region16: #{tpu_custom_call.1} parent=11 // pred_fallthru
          _
        // Predicated region
        $region17: #{tpu_custom_call.1} parent=11 // pred_check
          %p343 = pneg %p108
        $region18: #{tpu_custom_call.1} parent=11 // pred_check_branch
          %345 = sbr.rel (%p343) target = $region20
        $region19: #{tpu_custom_call.1} parent=11 // pred_region
          _
        $region20: #{tpu_custom_call.1} parent=11 // pred_fallthru
          _
        // Predicated region
        $region21: #{tpu_custom_call.1} parent=11 // pred_check
          %p346 = pneg %p129
        $region22: #{tpu_custom_call.1} parent=11 // pred_check_branch
          %348 = sbr.rel (%p346) target = $region24
        $region23: #{tpu_custom_call.1} parent=11 // pred_region
          %s350 = ssub.s32 12288, 12288
          %351 = vsyncadd [#allocation8], %s350
          %s352 = sshll.u32 [#allocation7], 4
          %s353 = int_to_ptr.vmem [resolvable:$true] %s352
          %358 = dma.hbm_to_vmem [thread:$0]  %s3, 12288, %s353, [#allocation8], 384, 384, 24
        $region24: #{tpu_custom_call.1} parent=11 // pred_fallthru
          _
        // Predicated region
        $region25: #{tpu_custom_call.1} parent=11 // pred_check
          %p359 = pneg %p150
        $region26: #{tpu_custom_call.1} parent=11 // pred_check_branch
          %361 = sbr.rel (%p359) target = $region28
        $region27: #{tpu_custom_call.1} parent=11 // pred_region
          %s363 = ssub.s32 4096, 4096
          %364 = vsyncadd [#allocation8], %s363
          %s365 = sshll.u32 [#allocation9], 4
          %s366 = int_to_ptr.vmem [resolvable:$true] %s365
          %371 = dma.hbm_to_vmem [thread:$0]  %s4, 4096, %s366, [#allocation8], 128, 128, 8
        $region28: #{tpu_custom_call.1} parent=11 // pred_fallthru
          _
        // Predicated region
        $region29: #{tpu_custom_call.1} parent=11 // pred_check
          %p372 = pneg %p171
        $region30: #{tpu_custom_call.1} parent=11 // pred_check_branch
          %374 = sbr.rel (%p372) target = $region32
        $region31: #{tpu_custom_call.1} parent=11 // pred_region
          _
        $region32: #{tpu_custom_call.1} parent=11 // pred_fallthru
          _
        // Predicated region
        $region33: #{tpu_custom_call.1} parent=11 // pred_check
          %p375 = pneg %p192
        $region34: #{tpu_custom_call.1} parent=11 // pred_check_branch
          %377 = sbr.rel (%p375) target = $region36
        $region35: #{tpu_custom_call.1} parent=11 // pred_region
          _
        $region36: #{tpu_custom_call.1} parent=11 // pred_fallthru
          _
        // Predicated region
        $region37: #{tpu_custom_call.1} parent=11 // pred_check
          %p378 = pneg %p213
        $region38: #{tpu_custom_call.1} parent=11 // pred_check_branch
          %380 = sbr.rel (%p378) target = $region40
        $region39: #{tpu_custom_call.1} parent=11 // pred_region
          _
        $region40: #{tpu_custom_call.1} parent=11 // pred_fallthru
          _
        // Predicated region
        $region41: #{tpu_custom_call.1} parent=11 // pred_check
          %p381 = pneg %p234
        $region42: #{tpu_custom_call.1} parent=11 // pred_check_branch
          %383 = sbr.rel (%p381) target = $region44
        $region43: #{tpu_custom_call.1} parent=11 // pred_region
          %s385 = ssub.s32 16384, 16384
          %386 = vsyncadd [#allocation11], %s385
          %s387 = sshll.u32 [#allocation10], 4
          %s388 = int_to_ptr.vmem [resolvable:$true] %s387
          %393 = dma.hbm_to_vmem [thread:$0]  %s8, 16384, %s388, [#allocation11], 512, 512, 32
        $region44: #{tpu_custom_call.1} parent=11 // pred_fallthru
          _
        // Predicated region
        $region45: #{tpu_custom_call.1} parent=11 // pred_check
          %p394 = pneg %p255
        $region46: #{tpu_custom_call.1} parent=11 // pred_check_branch
          %396 = sbr.rel (%p394) target = $region48
        $region47: #{tpu_custom_call.1} parent=11 // pred_region
          _
        $region48: #{tpu_custom_call.1} parent=11 // pred_fallthru
          _
        // Predicated region
        $region49: #{tpu_custom_call.1} parent=11 // pred_check
          %p397 = pneg %p276
        $region50: #{tpu_custom_call.1} parent=11 // pred_check_branch
          %399 = sbr.rel (%p397) target = $region52
        $region51: #{tpu_custom_call.1} parent=11 // pred_region
          %s401 = ssub.s32 16384, 16384
          %402 = vsyncadd [#allocation11], %s401
          %s403 = sshll.u32 [#allocation12], 4
          %s404 = int_to_ptr.vmem [resolvable:$true] %s403
          %409 = dma.hbm_to_vmem [thread:$0]  %s10, 16384, %s404, [#allocation11], 128, 128, 8
        $region52: #{tpu_custom_call.1} parent=11 // pred_fallthru
          _
        // Predicated region
        $region53: #{tpu_custom_call.1} parent=11 // pred_check
          %p410 = pneg %p297
        $region54: #{tpu_custom_call.1} parent=11 // pred_check_branch
          %412 = sbr.rel (%p410) target = $region56
        $region55: #{tpu_custom_call.1} parent=11 // pred_region
          _
        $region56: #{tpu_custom_call.1} parent=11 // pred_fallthru
          _
      $region12: #{tpu_custom_call.1} parent=5 // pred_fallthru
        _
      %p413 = scmp.lt.s32.totalorder %s26, 4
      // Predicated region
      $region57: #{tpu_custom_call.1} parent=5 // pred_check
        %p414 = pneg %p413
      $region58: #{tpu_custom_call.1} parent=5 // pred_check_branch
        %416 = sbr.rel (%p414) target = $region60
      $region59: #{tpu_custom_call.1} parent=5 // pred_region
        // Predicated region
        $region61: #{tpu_custom_call.1} parent=59 // pred_check
          %p417 = pneg %p60
        $region62: #{tpu_custom_call.1} parent=59 // pred_check_branch
          %419 = sbr.rel (%p417) target = $region64
        $region63: #{tpu_custom_call.1} parent=59 // pred_region
          %s420 = sand.u32 %s50, 1
          %s421 = scalar_lea.sflag [#allocation5], %s420
          %s422 = sand.u32 %s50, 1
          %s423 = smul.addr %s422, 256
          %s424 = scalar_lea.vmem [#allocation4], %s423
          %s425 = smul.u32 16, %s34
          %s427 = ssub.s32 4096, 4096
          %428 = vsyncadd %s421, %s427
          %s429 = smul.addr %s425, 2
          %s430 = smul.addr %s33, 64
          %s431 = sadd.s32 %s429, %s430
          %s432 = smul.addr %s431, 128
          %s433 = scalar_lea.hbm %s0, %s432
          %s434 = sshll.u32 %s424, 4
          %s435 = int_to_ptr.vmem [resolvable:$true] %s434
          %440 = dma.hbm_to_vmem [thread:$0]  %s433, 4096, %s435, %s421, 256, 256, 16
        $region64: #{tpu_custom_call.1} parent=59 // pred_fallthru
          _
      $region60: #{tpu_custom_call.1} parent=5 // pred_fallthru
        _
      %p441 = scmp.le.s32.totalorder 1, %s26
      %p442 = scmp.lt.s32.totalorder %s26, 5
      %p443 = pnand %p441, %p442
      %p444 = pneg %p443
      // Predicated region
      $region65: #{tpu_custom_call.1} parent=5 // pred_check
        _
      $region66: #{tpu_custom_call.1} parent=5 // pred_check_branch
        %446 = sbr.rel (%p443) target = $region68
      $region67: #{tpu_custom_call.1} parent=5 // pred_region
        %s447 = ssub.s32 %s26, 1
        %s448 = sand.u32 %s53, 1
        %s449 = scalar_lea.sflag [#allocation5], %s448
        %s450 = sand.u32 %s53, 1
        %s451 = smul.addr %s450, 256
        %s452 = scalar_lea.vmem [#allocation4], %s451
        // Predicated region
        $region69: #{tpu_custom_call.1} parent=67 // pred_check
          %p453 = pneg %p66
        $region70: #{tpu_custom_call.1} parent=67 // pred_check_branch
          %455 = sbr.rel (%p453) target = $region72
        $region71: #{tpu_custom_call.1} parent=67 // pred_region
          %456 = dma.done %s449, 4096
        $region72: #{tpu_custom_call.1} parent=67 // pred_fallthru
          _
        // Predicated region
        $region73: #{tpu_custom_call.1} parent=67 // pred_check
          %p457 = pneg %p129
        $region74: #{tpu_custom_call.1} parent=67 // pred_check_branch
          %459 = sbr.rel (%p457) target = $region76
        $region75: #{tpu_custom_call.1} parent=67 // pred_region
          %460 = dma.done [#allocation8], 12288
        $region76: #{tpu_custom_call.1} parent=67 // pred_fallthru
          _
        // Predicated region
        $region77: #{tpu_custom_call.1} parent=67 // pred_check
          %p461 = pneg %p150
        $region78: #{tpu_custom_call.1} parent=67 // pred_check_branch
          %463 = sbr.rel (%p461) target = $region80
        $region79: #{tpu_custom_call.1} parent=67 // pred_region
          %464 = dma.done [#allocation8], 4096
        $region80: #{tpu_custom_call.1} parent=67 // pred_fallthru
          _
        // Predicated region
        $region81: #{tpu_custom_call.1} parent=67 // pred_check
          %p465 = pneg %p234
        $region82: #{tpu_custom_call.1} parent=67 // pred_check_branch
          %467 = sbr.rel (%p465) target = $region84
        $region83: #{tpu_custom_call.1} parent=67 // pred_region
          %468 = dma.done [#allocation11], 16384
        $region84: #{tpu_custom_call.1} parent=67 // pred_fallthru
          _
        // Predicated region
        $region85: #{tpu_custom_call.1} parent=67 // pred_check
          %p469 = pneg %p276
        $region86: #{tpu_custom_call.1} parent=67 // pred_check_branch
          %471 = sbr.rel (%p469) target = $region88
        $region87: #{tpu_custom_call.1} parent=67 // pred_region
          %472 = dma.done [#allocation11], 16384
        $region88: #{tpu_custom_call.1} parent=67 // pred_fallthru
          _
        %s473 = sand.u32 %s53, 1
        %s474 = scalar_lea.sflag [#allocation5], %s473
        %s475 = sand.u32 %s53, 1
        %s476 = smul.addr %s475, 256
        %s477 = scalar_lea.vmem [#allocation4], %s476
        %p478 = pneg %p66
        %p479 = pneg %p63
        %p480 = pneg %p87
        %p481 = pneg %p84
        %p482 = pneg %p108
        %p483 = pneg %p105
        %p484 = pneg %p129
        %p485 = pneg %p126
        %p486 = pneg %p150
        %p487 = pneg %p147
        %p488 = pneg %p171
        %p489 = pneg %p168
        %p490 = pneg %p192
        %p491 = pneg %p189
        %p492 = pneg %p213
        %p493 = pneg %p210
        %p494 = pneg %p234
        %p495 = pneg %p231
        %p496 = pneg %p255
        %p497 = pneg %p252
        %p498 = pneg %p276
        %p499 = pneg %p273
        %p500 = pneg %p297
        %p501 = pneg %p294
        %p502 = pneg %p325
        %p503 = pneg %p322
        %s504 = sand.u32 %s312, 1
        %s505 = scalar_lea.sflag [#allocation6], %s504
        %s506 = sand.u32 %s312, 1
        %s507 = smul.addr %s506, 256
        %s508 = scalar_lea.vmem [#allocation13], %s507
        %s509 = smul.u32 16, %s36
        %s510 = smul.u32 16, %s36
        %v512 = vld [vmem:[%s452] sm:$0xff]
        %v513 = vld [vmem:[%s452 + $0x8] sm:$0xff]
        %v514 = vld [vmem:[%s452 + $0x10] sm:$0xff]
        %v515 = vld [vmem:[%s452 + $0x18] sm:$0xff]
        %v516 = vld [vmem:[%s452 + $0x20] sm:$0xff]
        %v517 = vld [vmem:[%s452 + $0x28] sm:$0xff]
        %v518 = vld [vmem:[%s452 + $0x30] sm:$0xff]
        %v519 = vld [vmem:[%s452 + $0x38] sm:$0xff]
        %v520 = vld [vmem:[%s452 + $0x40] sm:$0xff]
        %v521 = vld [vmem:[%s452 + $0x48] sm:$0xff]
        %v522 = vld [vmem:[%s452 + $0x50] sm:$0xff]
        %v523 = vld [vmem:[%s452 + $0x58] sm:$0xff]
        %v524 = vld [vmem:[%s452 + $0x60] sm:$0xff]
        %v525 = vld [vmem:[%s452 + $0x68] sm:$0xff]
        %v526 = vld [vmem:[%s452 + $0x70] sm:$0xff]
        %v527 = vld [vmem:[%s452 + $0x78] sm:$0xff]
        %v528 = vld [vmem:[%s452 + $0x80] sm:$0xff]
        %v529 = vld [vmem:[%s452 + $0x88] sm:$0xff]
        %v530 = vld [vmem:[%s452 + $0x90] sm:$0xff]
        %v531 = vld [vmem:[%s452 + $0x98] sm:$0xff]
        %v532 = vld [vmem:[%s452 + $0xa0] sm:$0xff]
        %v533 = vld [vmem:[%s452 + $0xa8] sm:$0xff]
        %v534 = vld [vmem:[%s452 + $0xb0] sm:$0xff]
        %v535 = vld [vmem:[%s452 + $0xb8] sm:$0xff]
        %v536 = vld [vmem:[%s452 + $0xc0] sm:$0xff]
        %v537 = vld [vmem:[%s452 + $0xc8] sm:$0xff]
        %v538 = vld [vmem:[%s452 + $0xd0] sm:$0xff]
        %v539 = vld [vmem:[%s452 + $0xd8] sm:$0xff]
        %v540 = vld [vmem:[%s452 + $0xe0] sm:$0xff]
        %v541 = vld [vmem:[%s452 + $0xe8] sm:$0xff]
        %v542 = vld [vmem:[%s452 + $0xf0] sm:$0xff]
        %v543 = vld [vmem:[%s452 + $0xf8] sm:$0xff]
        %v544 = vld [vmem:[%s1] sm:$0x3]
        %v545 = vld [vmem:[%s2] sm:$0x3]
        %v546 = vadd.f32 %v512, %v513
        %547 = vadd.xlane.f32.xlu0 %v546
        %v548 = vpop.xlane.xlu0 %547
        %v549 = vadd.f32 %v514, %v515
        %550 = vadd.xlane.f32.xlu0 %v549
        %v551 = vpop.xlane.xlu0 %550
        %v552 = vadd.f32 %v516, %v517
        %553 = vadd.xlane.f32.xlu0 %v552
        %v554 = vpop.xlane.xlu0 %553
        %v555 = vadd.f32 %v518, %v519
        %556 = vadd.xlane.f32.xlu0 %v555
        %v557 = vpop.xlane.xlu0 %556
        %v558 = vadd.f32 %v520, %v521
        %559 = vadd.xlane.f32.xlu0 %v558
        %v560 = vpop.xlane.xlu0 %559
        %v561 = vadd.f32 %v522, %v523
        %562 = vadd.xlane.f32.xlu0 %v561
        %v563 = vpop.xlane.xlu0 %562
        %v564 = vadd.f32 %v524, %v525
        %565 = vadd.xlane.f32.xlu0 %v564
        %v566 = vpop.xlane.xlu0 %565
        %v567 = vadd.f32 %v526, %v527
        %568 = vadd.xlane.f32.xlu0 %v567
        %v569 = vpop.xlane.xlu0 %568
        %v570 = vadd.f32 %v528, %v529
        %571 = vadd.xlane.f32.xlu0 %v570
        %v572 = vpop.xlane.xlu0 %571
        %v573 = vadd.f32 %v530, %v531
        %574 = vadd.xlane.f32.xlu0 %v573
        %v575 = vpop.xlane.xlu0 %574
        %v576 = vadd.f32 %v532, %v533
        %577 = vadd.xlane.f32.xlu0 %v576
        %v578 = vpop.xlane.xlu0 %577
        %v579 = vadd.f32 %v534, %v535
        %580 = vadd.xlane.f32.xlu0 %v579
        %v581 = vpop.xlane.xlu0 %580
        %v582 = vadd.f32 %v536, %v537
        %583 = vadd.xlane.f32.xlu0 %v582
        %v584 = vpop.xlane.xlu0 %583
        %v585 = vadd.f32 %v538, %v539
        %586 = vadd.xlane.f32.xlu0 %v585
        %v587 = vpop.xlane.xlu0 %586
        %v588 = vadd.f32 %v540, %v541
        %589 = vadd.xlane.f32.xlu0 %v588
        %v590 = vpop.xlane.xlu0 %589
        %v591 = vadd.f32 %v542, %v543
        %592 = vadd.xlane.f32.xlu0 %v591
        %v593 = vpop.xlane.xlu0 %592
        %v594 = vrcp.pop 256.0
        %v595 = vmul.f32 %v548, %v594
        %v596 = vmul.f32 %v551, %v594
        %v597 = vmul.f32 %v554, %v594
        %v598 = vmul.f32 %v557, %v594
        %v599 = vmul.f32 %v560, %v594
        %v600 = vmul.f32 %v563, %v594
        %v601 = vmul.f32 %v566, %v594
        %v602 = vmul.f32 %v569, %v594
        %v603 = vmul.f32 %v572, %v594
        %v604 = vmul.f32 %v575, %v594
        %v605 = vmul.f32 %v578, %v594
        %v606 = vmul.f32 %v581, %v594
        %v607 = vmul.f32 %v584, %v594
        %v608 = vmul.f32 %v587, %v594
        %v609 = vmul.f32 %v590, %v594
        %v610 = vmul.f32 %v593, %v594
        %v611 = vsub.f32 %v512, %v595
        %v612 = vsub.f32 %v513, %v595
        %v613 = vsub.f32 %v514, %v596
        %v614 = vsub.f32 %v515, %v596
        %v615 = vsub.f32 %v516, %v597
        %v616 = vsub.f32 %v517, %v597
        %v617 = vsub.f32 %v518, %v598
        %v618 = vsub.f32 %v519, %v598
        %v619 = vsub.f32 %v520, %v599
        %v620 = vsub.f32 %v521, %v599
        %v621 = vsub.f32 %v522, %v600
        %v622 = vsub.f32 %v523, %v600
        %v623 = vsub.f32 %v524, %v601
        %v624 = vsub.f32 %v525, %v601
        %v625 = vsub.f32 %v526, %v602
        %v626 = vsub.f32 %v527, %v602
        %v627 = vsub.f32 %v528, %v603
        %v628 = vsub.f32 %v529, %v603
        %v629 = vsub.f32 %v530, %v604
        %v630 = vsub.f32 %v531, %v604
        %v631 = vsub.f32 %v532, %v605
        %v632 = vsub.f32 %v533, %v605
        %v633 = vsub.f32 %v534, %v606
        %v634 = vsub.f32 %v535, %v606
        %v635 = vsub.f32 %v536, %v607
        %v636 = vsub.f32 %v537, %v607
        %v637 = vsub.f32 %v538, %v608
        %v638 = vsub.f32 %v539, %v608
        %v639 = vsub.f32 %v540, %v609
        %v640 = vsub.f32 %v541, %v609
        %v641 = vsub.f32 %v542, %v610
        %v642 = vsub.f32 %v543, %v610
        %v643 = vmul.f32 %v611, %v611
        %v644 = vmul.f32 %v612, %v612
        %v645 = vmul.f32 %v613, %v613
        %v646 = vmul.f32 %v614, %v614
        %v647 = vmul.f32 %v615, %v615
        %v648 = vmul.f32 %v616, %v616
        %v649 = vmul.f32 %v617, %v617
        %v650 = vmul.f32 %v618, %v618
        %v651 = vmul.f32 %v619, %v619
        %v652 = vmul.f32 %v620, %v620
        %v653 = vmul.f32 %v621, %v621
        %v654 = vmul.f32 %v622, %v622
        %v655 = vmul.f32 %v623, %v623
        %v656 = vmul.f32 %v624, %v624
        %v657 = vmul.f32 %v625, %v625
        %v658 = vmul.f32 %v626, %v626
        %v659 = vmul.f32 %v627, %v627
        %v660 = vmul.f32 %v628, %v628
        %v661 = vmul.f32 %v629, %v629
        %v662 = vmul.f32 %v630, %v630
        %v663 = vmul.f32 %v631, %v631
        %v664 = vmul.f32 %v632, %v632
        %v665 = vmul.f32 %v633, %v633
        %v666 = vmul.f32 %v634, %v634
        %v667 = vmul.f32 %v635, %v635
        %v668 = vmul.f32 %v636, %v636
        %v669 = vmul.f32 %v637, %v637
        %v670 = vmul.f32 %v638, %v638
        %v671 = vmul.f32 %v639, %v639
        %v672 = vmul.f32 %v640, %v640
        %v673 = vmul.f32 %v641, %v641
        %v674 = vmul.f32 %v642, %v642
        %v675 = vadd.f32 %v643, %v644
        %676 = vadd.xlane.f32.xlu0 %v675
        %v677 = vpop.xlane.xlu0 %676
        %v678 = vadd.f32 %v645, %v646
        %679 = vadd.xlane.f32.xlu0 %v678
        %v680 = vpop.xlane.xlu0 %679
        %v681 = vadd.f32 %v647, %v648
        %682 = vadd.xlane.f32.xlu0 %v681
        %v683 = vpop.xlane.xlu0 %682
        %v684 = vadd.f32 %v649, %v650
        %685 = vadd.xlane.f32.xlu0 %v684
        %v686 = vpop.xlane.xlu0 %685
        %v687 = vadd.f32 %v651, %v652
        %688 = vadd.xlane.f32.xlu0 %v687
        %v689 = vpop.xlane.xlu0 %688
        %v690 = vadd.f32 %v653, %v654
        %691 = vadd.xlane.f32.xlu0 %v690
        %v692 = vpop.xlane.xlu0 %691
        %v693 = vadd.f32 %v655, %v656
        %694 = vadd.xlane.f32.xlu0 %v693
        %v695 = vpop.xlane.xlu0 %694
        %v696 = vadd.f32 %v657, %v658
        %697 = vadd.xlane.f32.xlu0 %v696
        %v698 = vpop.xlane.xlu0 %697
        %v699 = vadd.f32 %v659, %v660
        %700 = vadd.xlane.f32.xlu0 %v699
        %v701 = vpop.xlane.xlu0 %700
        %v702 = vadd.f32 %v661, %v662
        %703 = vadd.xlane.f32.xlu0 %v702
        %v704 = vpop.xlane.xlu0 %703
        %v705 = vadd.f32 %v663, %v664
        %706 = vadd.xlane.f32.xlu0 %v705
        %v707 = vpop.xlane.xlu0 %706
        %v708 = vadd.f32 %v665, %v666
        %709 = vadd.xlane.f32.xlu0 %v708
        %v710 = vpop.xlane.xlu0 %709
        %v711 = vadd.f32 %v667, %v668
        %712 = vadd.xlane.f32.xlu0 %v711
        %v713 = vpop.xlane.xlu0 %712
        %v714 = vadd.f32 %v669, %v670
        %715 = vadd.xlane.f32.xlu0 %v714
        %v716 = vpop.xlane.xlu0 %715
        %v717 = vadd.f32 %v671, %v672
        %718 = vadd.xlane.f32.xlu0 %v717
        %v719 = vpop.xlane.xlu0 %718
        %v720 = vadd.f32 %v673, %v674
        %721 = vadd.xlane.f32.xlu0 %v720
        %v722 = vpop.xlane.xlu0 %721
        %v723 = vmul.f32 %v677, %v594
        %v724 = vmul.f32 %v680, %v594
        %v725 = vmul.f32 %v683, %v594
        %v726 = vmul.f32 %v686, %v594
        %v727 = vmul.f32 %v689, %v594
        %v728 = vmul.f32 %v692, %v594
        %v729 = vmul.f32 %v695, %v594
        %v730 = vmul.f32 %v698, %v594
        %v731 = vmul.f32 %v701, %v594
        %v732 = vmul.f32 %v704, %v594
        %v733 = vmul.f32 %v707, %v594
        %v734 = vmul.f32 %v710, %v594
        %v735 = vmul.f32 %v713, %v594
        %v736 = vmul.f32 %v716, %v594
        %v737 = vmul.f32 %v719, %v594
        %v738 = vmul.f32 %v722, %v594
        %v739 = vadd.f32 %v723, 1e-05
        %v740 = vadd.f32 %v724, 1e-05
        %v741 = vadd.f32 %v725, 1e-05
        %v742 = vadd.f32 %v726, 1e-05
        %v743 = vadd.f32 %v727, 1e-05
        %v744 = vadd.f32 %v728, 1e-05
        %v745 = vadd.f32 %v729, 1e-05
        %v746 = vadd.f32 %v730, 1e-05
        %v747 = vadd.f32 %v731, 1e-05
        %v748 = vadd.f32 %v732, 1e-05
        %v749 = vadd.f32 %v733, 1e-05
        %v750 = vadd.f32 %v734, 1e-05
        %v751 = vadd.f32 %v735, 1e-05
        %v752 = vadd.f32 %v736, 1e-05
        %v753 = vadd.f32 %v737, 1e-05
        %v754 = vadd.f32 %v738, 1e-05
        %v755 = vrsqrt.pop %v739
        %v756 = vrsqrt.pop %v740
        %v757 = vrsqrt.pop %v741
        %v758 = vrsqrt.pop %v742
        %v759 = vrsqrt.pop %v743
        %v760 = vrsqrt.pop %v744
        %v761 = vrsqrt.pop %v745
        %v762 = vrsqrt.pop %v746
        %v763 = vrsqrt.pop %v747
        %v764 = vrsqrt.pop %v748
        %v765 = vrsqrt.pop %v749
        %v766 = vrsqrt.pop %v750
        %v767 = vrsqrt.pop %v751
        %v768 = vrsqrt.pop %v752
        %v769 = vrsqrt.pop %v753
        %v770 = vrsqrt.pop %v754
        %v771 = vmul.f32 %v611, %v755
        %v772 = vmul.f32 %v612, %v755
        %v773 = vmul.f32 %v613, %v756
        %v774 = vmul.f32 %v614, %v756
        %v775 = vmul.f32 %v615, %v757
        %v776 = vmul.f32 %v616, %v757
        %v777 = vmul.f32 %v617, %v758
        %v778 = vmul.f32 %v618, %v758
        %v779 = vmul.f32 %v619, %v759
        %v780 = vmul.f32 %v620, %v759
        %v781 = vmul.f32 %v621, %v760
        %v782 = vmul.f32 %v622, %v760
        %v783 = vmul.f32 %v623, %v761
        %v784 = vmul.f32 %v624, %v761
        %v785 = vmul.f32 %v625, %v762
        %v786 = vmul.f32 %v626, %v762
        %v787 = vmul.f32 %v627, %v763
        %v788 = vmul.f32 %v628, %v763
        %v789 = vmul.f32 %v629, %v764
        %v790 = vmul.f32 %v630, %v764
        %v791 = vmul.f32 %v631, %v765
        %v792 = vmul.f32 %v632, %v765
        %v793 = vmul.f32 %v633, %v766
        %v794 = vmul.f32 %v634, %v766
        %v795 = vmul.f32 %v635, %v767
        %v796 = vmul.f32 %v636, %v767
        %v797 = vmul.f32 %v637, %v768
        %v798 = vmul.f32 %v638, %v768
        %v799 = vmul.f32 %v639, %v769
        %v800 = vmul.f32 %v640, %v769
        %v801 = vmul.f32 %v641, %v770
        %v802 = vmul.f32 %v642, %v770
        %v804 = vlaneseq
        %v805 = vshrl.u32 %v804, 7
        %v806 = vsub.s32 0, %v805
        %v807 = vrot.slane %v544, %v806
        %v808 = vlaneseq
        %v809 = vshrl.u32 %v808, 7
        %v810 = vsub.s32 1, %v809
        %v811 = vrot.slane %v544, %v810
        %v814 = vmul.f32 %v771, %v807
        %v815 = vmul.f32 %v772, %v811
        %v816 = vmul.f32 %v773, %v807
        %v817 = vmul.f32 %v774, %v811
        %v818 = vmul.f32 %v775, %v807
        %v819 = vmul.f32 %v776, %v811
        %v820 = vmul.f32 %v777, %v807
        %v821 = vmul.f32 %v778, %v811
        %v822 = vmul.f32 %v779, %v807
        %v823 = vmul.f32 %v780, %v811
        %v824 = vmul.f32 %v781, %v807
        %v825 = vmul.f32 %v782, %v811
        %v826 = vmul.f32 %v783, %v807
        %v827 = vmul.f32 %v784, %v811
        %v828 = vmul.f32 %v785, %v807
        %v829 = vmul.f32 %v786, %v811
        %v830 = vmul.f32 %v787, %v807
        %v831 = vmul.f32 %v788, %v811
        %v832 = vmul.f32 %v789, %v807
        %v833 = vmul.f32 %v790, %v811
        %v834 = vmul.f32 %v791, %v807
        %v835 = vmul.f32 %v792, %v811
        %v836 = vmul.f32 %v793, %v807
        %v837 = vmul.f32 %v794, %v811
        %v838 = vmul.f32 %v795, %v807
        %v839 = vmul.f32 %v796, %v811
        %v840 = vmul.f32 %v797, %v807
        %v841 = vmul.f32 %v798, %v811
        %v842 = vmul.f32 %v799, %v807
        %v843 = vmul.f32 %v800, %v811
        %v844 = vmul.f32 %v801, %v807
        %v845 = vmul.f32 %v802, %v811
        %v847 = vlaneseq
        %v848 = vshrl.u32 %v847, 7
        %v849 = vsub.s32 0, %v848
        %v850 = vrot.slane %v545, %v849
        %v851 = vlaneseq
        %v852 = vshrl.u32 %v851, 7
        %v853 = vsub.s32 1, %v852
        %v854 = vrot.slane %v545, %v853
        %v857 = vadd.f32 %v814, %v850
        %v858 = vadd.f32 %v815, %v854
        %v859 = vadd.f32 %v816, %v850
        %v860 = vadd.f32 %v817, %v854
        %v861 = vadd.f32 %v818, %v850
        %v862 = vadd.f32 %v819, %v854
        %v863 = vadd.f32 %v820, %v850
        %v864 = vadd.f32 %v821, %v854
        %v865 = vadd.f32 %v822, %v850
        %v866 = vadd.f32 %v823, %v854
        %v867 = vadd.f32 %v824, %v850
        %v868 = vadd.f32 %v825, %v854
        %v869 = vadd.f32 %v826, %v850
        %v870 = vadd.f32 %v827, %v854
        %v871 = vadd.f32 %v828, %v850
        %v872 = vadd.f32 %v829, %v854
        %v873 = vadd.f32 %v830, %v850
        %v874 = vadd.f32 %v831, %v854
        %v875 = vadd.f32 %v832, %v850
        %v876 = vadd.f32 %v833, %v854
        %v877 = vadd.f32 %v834, %v850
        %v878 = vadd.f32 %v835, %v854
        %v879 = vadd.f32 %v836, %v850
        %v880 = vadd.f32 %v837, %v854
        %v881 = vadd.f32 %v838, %v850
        %v882 = vadd.f32 %v839, %v854
        %v883 = vadd.f32 %v840, %v850
        %v884 = vadd.f32 %v841, %v854
        %v885 = vadd.f32 %v842, %v850
        %v886 = vadd.f32 %v843, %v854
        %v887 = vadd.f32 %v844, %v850
        %v888 = vadd.f32 %v845, %v854
        %v889 = vpack.c.bf16 %v859, %v857
        %v890 = vpack.c.bf16 %v860, %v858
        %v891 = vpack.c.bf16 %v863, %v861
        %v892 = vpack.c.bf16 %v864, %v862
        %v893 = vpack.c.bf16 %v867, %v865
        %v894 = vpack.c.bf16 %v868, %v866
        %v895 = vpack.c.bf16 %v871, %v869
        %v896 = vpack.c.bf16 %v872, %v870
        %v897 = vpack.c.bf16 %v875, %v873
        %v898 = vpack.c.bf16 %v876, %v874
        %v899 = vpack.c.bf16 %v879, %v877
        %v900 = vpack.c.bf16 %v880, %v878
        %v901 = vpack.c.bf16 %v883, %v881
        %v902 = vpack.c.bf16 %v884, %v882
        %v903 = vpack.c.bf16 %v887, %v885
        %v904 = vpack.c.bf16 %v888, %v886
        %v905 = vld [vmem:[#allocation7] sm:$0xff]
        %v906 = vld [vmem:[#allocation7 + $0x8] sm:$0xff]
        %v907 = vld [vmem:[#allocation7 + $0x10] sm:$0xff]
        %v908 = vld [vmem:[#allocation7 + $0x18] sm:$0xff]
        %v909 = vld [vmem:[#allocation7 + $0x20] sm:$0xff]
        %v910 = vld [vmem:[#allocation7 + $0x28] sm:$0xff]
        %v911 = vld [vmem:[#allocation7 + $0x30] sm:$0xff]
        %v912 = vld [vmem:[#allocation7 + $0x38] sm:$0xff]
        %v913 = vld [vmem:[#allocation7 + $0x40] sm:$0xff]
        %v914 = vld [vmem:[#allocation7 + $0x48] sm:$0xff]
        %v915 = vld [vmem:[#allocation7 + $0x50] sm:$0xff]
        %v916 = vld [vmem:[#allocation7 + $0x58] sm:$0xff]
        %v917 = vld [vmem:[#allocation7 + $0x60] sm:$0xff]
        %v918 = vld [vmem:[#allocation7 + $0x68] sm:$0xff]
        %v919 = vld [vmem:[#allocation7 + $0x70] sm:$0xff]
        %v920 = vld [vmem:[#allocation7 + $0x78] sm:$0xff]
        %v921 = vld [vmem:[#allocation7 + $0x80] sm:$0xff]
        %v922 = vld [vmem:[#allocation7 + $0x88] sm:$0xff]
        %v923 = vld [vmem:[#allocation7 + $0x90] sm:$0xff]
        %v924 = vld [vmem:[#allocation7 + $0x98] sm:$0xff]
        %v925 = vld [vmem:[#allocation7 + $0xa0] sm:$0xff]
        %v926 = vld [vmem:[#allocation7 + $0xa8] sm:$0xff]
        %v927 = vld [vmem:[#allocation7 + $0xb0] sm:$0xff]
        %v928 = vld [vmem:[#allocation7 + $0xb8] sm:$0xff]
        %v929 = vld [vmem:[#allocation7 + $0xc0] sm:$0xff]
        %v930 = vld [vmem:[#allocation7 + $0xc8] sm:$0xff]
        %v931 = vld [vmem:[#allocation7 + $0xd0] sm:$0xff]
        %v932 = vld [vmem:[#allocation7 + $0xd8] sm:$0xff]
        %v933 = vld [vmem:[#allocation7 + $0xe0] sm:$0xff]
        %v934 = vld [vmem:[#allocation7 + $0xe8] sm:$0xff]
        %v935 = vld [vmem:[#allocation7 + $0xf0] sm:$0xff]
        %v936 = vld [vmem:[#allocation7 + $0xf8] sm:$0xff]
        %v937 = vld [vmem:[#allocation7 + $0x100] sm:$0xff]
        %v938 = vld [vmem:[#allocation7 + $0x108] sm:$0xff]
        %v939 = vld [vmem:[#allocation7 + $0x110] sm:$0xff]
        %v940 = vld [vmem:[#allocation7 + $0x118] sm:$0xff]
        %v941 = vld [vmem:[#allocation7 + $0x120] sm:$0xff]
        %v942 = vld [vmem:[#allocation7 + $0x128] sm:$0xff]
        %v943 = vld [vmem:[#allocation7 + $0x130] sm:$0xff]
        %v944 = vld [vmem:[#allocation7 + $0x138] sm:$0xff]
        %v945 = vld [vmem:[#allocation7 + $0x140] sm:$0xff]
        %v946 = vld [vmem:[#allocation7 + $0x148] sm:$0xff]
        %v947 = vld [vmem:[#allocation7 + $0x150] sm:$0xff]
        %v948 = vld [vmem:[#allocation7 + $0x158] sm:$0xff]
        %v949 = vld [vmem:[#allocation7 + $0x160] sm:$0xff]
        %v950 = vld [vmem:[#allocation7 + $0x168] sm:$0xff]
        %v951 = vld [vmem:[#allocation7 + $0x170] sm:$0xff]
        %v952 = vld [vmem:[#allocation7 + $0x178] sm:$0xff]
        %v953 = vld [vmem:[#allocation7 + $0x180] sm:$0xff]
        %v954 = vld [vmem:[#allocation7 + $0x188] sm:$0xff]
        %v955 = vld [vmem:[#allocation7 + $0x190] sm:$0xff]
        %v956 = vld [vmem:[#allocation7 + $0x198] sm:$0xff]
        %v957 = vld [vmem:[#allocation7 + $0x1a0] sm:$0xff]
        %v958 = vld [vmem:[#allocation7 + $0x1a8] sm:$0xff]
        %v959 = vld [vmem:[#allocation7 + $0x1b0] sm:$0xff]
        %v960 = vld [vmem:[#allocation7 + $0x1b8] sm:$0xff]
        %v961 = vld [vmem:[#allocation7 + $0x1c0] sm:$0xff]
        %v962 = vld [vmem:[#allocation7 + $0x1c8] sm:$0xff]
        %v963 = vld [vmem:[#allocation7 + $0x1d0] sm:$0xff]
        %v964 = vld [vmem:[#allocation7 + $0x1d8] sm:$0xff]
        %v965 = vld [vmem:[#allocation7 + $0x1e0] sm:$0xff]
        %v966 = vld [vmem:[#allocation7 + $0x1e8] sm:$0xff]
        %v967 = vld [vmem:[#allocation7 + $0x1f0] sm:$0xff]
        %v968 = vld [vmem:[#allocation7 + $0x1f8] sm:$0xff]
        %v969 = vld [vmem:[#allocation7 + $0x200] sm:$0xff]
        %v970 = vld [vmem:[#allocation7 + $0x208] sm:$0xff]
        %v971 = vld [vmem:[#allocation7 + $0x210] sm:$0xff]
        %v972 = vld [vmem:[#allocation7 + $0x218] sm:$0xff]
        %v973 = vld [vmem:[#allocation7 + $0x220] sm:$0xff]
        %v974 = vld [vmem:[#allocation7 + $0x228] sm:$0xff]
        %v975 = vld [vmem:[#allocation7 + $0x230] sm:$0xff]
        %v976 = vld [vmem:[#allocation7 + $0x238] sm:$0xff]
        %v977 = vld [vmem:[#allocation7 + $0x240] sm:$0xff]
        %v978 = vld [vmem:[#allocation7 + $0x248] sm:$0xff]
        %v979 = vld [vmem:[#allocation7 + $0x250] sm:$0xff]
        %v980 = vld [vmem:[#allocation7 + $0x258] sm:$0xff]
        %v981 = vld [vmem:[#allocation7 + $0x260] sm:$0xff]
        %v982 = vld [vmem:[#allocation7 + $0x268] sm:$0xff]
        %v983 = vld [vmem:[#allocation7 + $0x270] sm:$0xff]
        %v984 = vld [vmem:[#allocation7 + $0x278] sm:$0xff]
        %v985 = vld [vmem:[#allocation7 + $0x280] sm:$0xff]
        %v986 = vld [vmem:[#allocation7 + $0x288] sm:$0xff]
        %v987 = vld [vmem:[#allocation7 + $0x290] sm:$0xff]
        %v988 = vld [vmem:[#allocation7 + $0x298] sm:$0xff]
        %v989 = vld [vmem:[#allocation7 + $0x2a0] sm:$0xff]
        %v990 = vld [vmem:[#allocation7 + $0x2a8] sm:$0xff]
        %v991 = vld [vmem:[#allocation7 + $0x2b0] sm:$0xff]
        %v992 = vld [vmem:[#allocation7 + $0x2b8] sm:$0xff]
        %v993 = vld [vmem:[#allocation7 + $0x2c0] sm:$0xff]
        %v994 = vld [vmem:[#allocation7 + $0x2c8] sm:$0xff]
        %v995 = vld [vmem:[#allocation7 + $0x2d0] sm:$0xff]
        %v996 = vld [vmem:[#allocation7 + $0x2d8] sm:$0xff]
        %v997 = vld [vmem:[#allocation7 + $0x2e0] sm:$0xff]
        %v998 = vld [vmem:[#allocation7 + $0x2e8] sm:$0xff]
        %v999 = vld [vmem:[#allocation7 + $0x2f0] sm:$0xff]
        %v1000 = vld [vmem:[#allocation7 + $0x2f8] sm:$0xff]
        %v1097 = vunpack.c.l.b16 %v905
        %v1098 = vunpack.c.h.b16 %v905
        %v1099 = vunpack.c.l.b16 %v906
        %v1100 = vunpack.c.h.b16 %v906
        %v1101 = vunpack.c.l.b16 %v907
        %v1102 = vunpack.c.h.b16 %v907
        %v1103 = vunpack.c.l.b16 %v908
        %v1104 = vunpack.c.h.b16 %v908
        %v1105 = vunpack.c.l.b16 %v909
        %v1106 = vunpack.c.h.b16 %v909
        %v1107 = vunpack.c.l.b16 %v910
        %v1108 = vunpack.c.h.b16 %v910
        %v1109 = vunpack.c.l.b16 %v911
        %v1110 = vunpack.c.h.b16 %v911
        %v1111 = vunpack.c.l.b16 %v912
        %v1112 = vunpack.c.h.b16 %v912
        %v1113 = vunpack.c.l.b16 %v913
        %v1114 = vunpack.c.h.b16 %v913
        %v1115 = vunpack.c.l.b16 %v914
        %v1116 = vunpack.c.h.b16 %v914
        %v1117 = vunpack.c.l.b16 %v915
        %v1118 = vunpack.c.h.b16 %v915
        %v1119 = vunpack.c.l.b16 %v916
        %v1120 = vunpack.c.h.b16 %v916
        %v1121 = vunpack.c.l.b16 %v917
        %v1122 = vunpack.c.h.b16 %v917
        %v1123 = vunpack.c.l.b16 %v918
        %v1124 = vunpack.c.h.b16 %v918
        %v1125 = vunpack.c.l.b16 %v919
        %v1126 = vunpack.c.h.b16 %v919
        %v1127 = vunpack.c.l.b16 %v920
        %v1128 = vunpack.c.h.b16 %v920
        %v1129 = vunpack.c.l.b16 %v921
        %v1130 = vunpack.c.h.b16 %v921
        %v1131 = vunpack.c.l.b16 %v922
        %v1132 = vunpack.c.h.b16 %v922
        %v1133 = vunpack.c.l.b16 %v923
        %v1134 = vunpack.c.h.b16 %v923
        %v1135 = vunpack.c.l.b16 %v924
        %v1136 = vunpack.c.h.b16 %v924
        %v1137 = vunpack.c.l.b16 %v925
        %v1138 = vunpack.c.h.b16 %v925
        %v1139 = vunpack.c.l.b16 %v926
        %v1140 = vunpack.c.h.b16 %v926
        %v1141 = vunpack.c.l.b16 %v927
        %v1142 = vunpack.c.h.b16 %v927
        %v1143 = vunpack.c.l.b16 %v928
        %v1144 = vunpack.c.h.b16 %v928
        %v1145 = vunpack.c.l.b16 %v929
        %v1146 = vunpack.c.h.b16 %v929
        %v1147 = vunpack.c.l.b16 %v930
        %v1148 = vunpack.c.h.b16 %v930
        %v1149 = vunpack.c.l.b16 %v931
        %v1150 = vunpack.c.h.b16 %v931
        %v1151 = vunpack.c.l.b16 %v932
        %v1152 = vunpack.c.h.b16 %v932
        %v1153 = vunpack.c.l.b16 %v933
        %v1154 = vunpack.c.h.b16 %v933
        %v1155 = vunpack.c.l.b16 %v934
        %v1156 = vunpack.c.h.b16 %v934
        %v1157 = vunpack.c.l.b16 %v935
        %v1158 = vunpack.c.h.b16 %v935
        %v1159 = vunpack.c.l.b16 %v936
        %v1160 = vunpack.c.h.b16 %v936
        %v1161 = vunpack.c.l.b16 %v937
        %v1162 = vunpack.c.h.b16 %v937
        %v1163 = vunpack.c.l.b16 %v938
        %v1164 = vunpack.c.h.b16 %v938
        %v1165 = vunpack.c.l.b16 %v939
        %v1166 = vunpack.c.h.b16 %v939
        %v1167 = vunpack.c.l.b16 %v940
        %v1168 = vunpack.c.h.b16 %v940
        %v1169 = vunpack.c.l.b16 %v941
        %v1170 = vunpack.c.h.b16 %v941
        %v1171 = vunpack.c.l.b16 %v942
        %v1172 = vunpack.c.h.b16 %v942
        %v1173 = vunpack.c.l.b16 %v943
        %v1174 = vunpack.c.h.b16 %v943
        %v1175 = vunpack.c.l.b16 %v944
        %v1176 = vunpack.c.h.b16 %v944
        %v1177 = vunpack.c.l.b16 %v945
        %v1178 = vunpack.c.h.b16 %v945
        %v1179 = vunpack.c.l.b16 %v946
        %v1180 = vunpack.c.h.b16 %v946
        %v1181 = vunpack.c.l.b16 %v947
        %v1182 = vunpack.c.h.b16 %v947
        %v1183 = vunpack.c.l.b16 %v948
        %v1184 = vunpack.c.h.b16 %v948
        %v1185 = vunpack.c.l.b16 %v949
        %v1186 = vunpack.c.h.b16 %v949
        %v1187 = vunpack.c.l.b16 %v950
        %v1188 = vunpack.c.h.b16 %v950
        %v1189 = vunpack.c.l.b16 %v951
        %v1190 = vunpack.c.h.b16 %v951
        %v1191 = vunpack.c.l.b16 %v952
        %v1192 = vunpack.c.h.b16 %v952
        %v1193 = vunpack.c.l.b16 %v953
        %v1194 = vunpack.c.h.b16 %v953
        %v1195 = vunpack.c.l.b16 %v954
        %v1196 = vunpack.c.h.b16 %v954
        %v1197 = vunpack.c.l.b16 %v955
        %v1198 = vunpack.c.h.b16 %v955
        %v1199 = vunpack.c.l.b16 %v956
        %v1200 = vunpack.c.h.b16 %v956
        %v1201 = vunpack.c.l.b16 %v957
        %v1202 = vunpack.c.h.b16 %v957
        %v1203 = vunpack.c.l.b16 %v958
        %v1204 = vunpack.c.h.b16 %v958
        %v1205 = vunpack.c.l.b16 %v959
        %v1206 = vunpack.c.h.b16 %v959
        %v1207 = vunpack.c.l.b16 %v960
        %v1208 = vunpack.c.h.b16 %v960
        %v1209 = vunpack.c.l.b16 %v961
        %v1210 = vunpack.c.h.b16 %v961
        %v1211 = vunpack.c.l.b16 %v962
        %v1212 = vunpack.c.h.b16 %v962
        %v1213 = vunpack.c.l.b16 %v963
        %v1214 = vunpack.c.h.b16 %v963
        %v1215 = vunpack.c.l.b16 %v964
        %v1216 = vunpack.c.h.b16 %v964
        %v1217 = vunpack.c.l.b16 %v965
        %v1218 = vunpack.c.h.b16 %v965
        %v1219 = vunpack.c.l.b16 %v966
        %v1220 = vunpack.c.h.b16 %v966
        %v1221 = vunpack.c.l.b16 %v967
        %v1222 = vunpack.c.h.b16 %v967
        %v1223 = vunpack.c.l.b16 %v968
        %v1224 = vunpack.c.h.b16 %v968
        %v1225 = vunpack.c.l.b16 %v969
        %v1226 = vunpack.c.h.b16 %v969
        %v1227 = vunpack.c.l.b16 %v970
        %v1228 = vunpack.c.h.b16 %v970
        %v1229 = vunpack.c.l.b16 %v971
        %v1230 = vunpack.c.h.b16 %v971
        %v1231 = vunpack.c.l.b16 %v972
        %v1232 = vunpack.c.h.b16 %v972
        %v1233 = vunpack.c.l.b16 %v973
        %v1234 = vunpack.c.h.b16 %v973
        %v1235 = vunpack.c.l.b16 %v974
        %v1236 = vunpack.c.h.b16 %v974
        %v1237 = vunpack.c.l.b16 %v975
        %v1238 = vunpack.c.h.b16 %v975
        %v1239 = vunpack.c.l.b16 %v976
        %v1240 = vunpack.c.h.b16 %v976
        %v1241 = vunpack.c.l.b16 %v977
        %v1242 = vunpack.c.h.b16 %v977
        %v1243 = vunpack.c.l.b16 %v978
        %v1244 = vunpack.c.h.b16 %v978
        %v1245 = vunpack.c.l.b16 %v979
        %v1246 = vunpack.c.h.b16 %v979
        %v1247 = vunpack.c.l.b16 %v980
        %v1248 = vunpack.c.h.b16 %v980
        %v1249 = vunpack.c.l.b16 %v981
        %v1250 = vunpack.c.h.b16 %v981
        %v1251 = vunpack.c.l.b16 %v982
        %v1252 = vunpack.c.h.b16 %v982
        %v1253 = vunpack.c.l.b16 %v983
        %v1254 = vunpack.c.h.b16 %v983
        %v1255 = vunpack.c.l.b16 %v984
        %v1256 = vunpack.c.h.b16 %v984
        %v1257 = vunpack.c.l.b16 %v985
        %v1258 = vunpack.c.h.b16 %v985
        %v1259 = vunpack.c.l.b16 %v986
        %v1260 = vunpack.c.h.b16 %v986
        %v1261 = vunpack.c.l.b16 %v987
        %v1262 = vunpack.c.h.b16 %v987
        %v1263 = vunpack.c.l.b16 %v988
        %v1264 = vunpack.c.h.b16 %v988
        %v1265 = vunpack.c.l.b16 %v989
        %v1266 = vunpack.c.h.b16 %v989
        %v1267 = vunpack.c.l.b16 %v990
        %v1268 = vunpack.c.h.b16 %v990
        %v1269 = vunpack.c.l.b16 %v991
        %v1270 = vunpack.c.h.b16 %v991
        %v1271 = vunpack.c.l.b16 %v992
        %v1272 = vunpack.c.h.b16 %v992
        %v1273 = vunpack.c.l.b16 %v993
        %v1274 = vunpack.c.h.b16 %v993
        %v1275 = vunpack.c.l.b16 %v994
        %v1276 = vunpack.c.h.b16 %v994
        %v1277 = vunpack.c.l.b16 %v995
        %v1278 = vunpack.c.h.b16 %v995
        %v1279 = vunpack.c.l.b16 %v996
        %v1280 = vunpack.c.h.b16 %v996
        %v1281 = vunpack.c.l.b16 %v997
        %v1282 = vunpack.c.h.b16 %v997
        %v1283 = vunpack.c.l.b16 %v998
        %v1284 = vunpack.c.h.b16 %v998
        %v1285 = vunpack.c.l.b16 %v999
        %v1286 = vunpack.c.h.b16 %v999
        %v1287 = vunpack.c.l.b16 %v1000
        %v1288 = vunpack.c.h.b16 %v1000
        %v1289 = vpack.c.b16 %v1103, %v1097
        %v1290 = vpack.c.b16 %v1104, %v1098
        %v1291 = vpack.c.b16 %v1105, %v1099
        %v1292 = vpack.c.b16 %v1106, %v1100
        %v1293 = vpack.c.b16 %v1107, %v1101
        %v1294 = vpack.c.b16 %v1108, %v1102
        %v1295 = vpack.c.b16 %v1115, %v1109
        %v1296 = vpack.c.b16 %v1116, %v1110
        %v1297 = vpack.c.b16 %v1117, %v1111
        %v1298 = vpack.c.b16 %v1118, %v1112
        %v1299 = vpack.c.b16 %v1119, %v1113
        %v1300 = vpack.c.b16 %v1120, %v1114
        %v1301 = vpack.c.b16 %v1127, %v1121
        %v1302 = vpack.c.b16 %v1128, %v1122
        %v1303 = vpack.c.b16 %v1129, %v1123
        %v1304 = vpack.c.b16 %v1130, %v1124
        %v1305 = vpack.c.b16 %v1131, %v1125
        %v1306 = vpack.c.b16 %v1132, %v1126
        %v1307 = vpack.c.b16 %v1139, %v1133
        %v1308 = vpack.c.b16 %v1140, %v1134
        %v1309 = vpack.c.b16 %v1141, %v1135
        %v1310 = vpack.c.b16 %v1142, %v1136
        %v1311 = vpack.c.b16 %v1143, %v1137
        %v1312 = vpack.c.b16 %v1144, %v1138
        %v1313 = vpack.c.b16 %v1151, %v1145
        %v1314 = vpack.c.b16 %v1152, %v1146
        %v1315 = vpack.c.b16 %v1153, %v1147
        %v1316 = vpack.c.b16 %v1154, %v1148
        %v1317 = vpack.c.b16 %v1155, %v1149
        %v1318 = vpack.c.b16 %v1156, %v1150
        %v1319 = vpack.c.b16 %v1163, %v1157
        %v1320 = vpack.c.b16 %v1164, %v1158
        %v1321 = vpack.c.b16 %v1165, %v1159
        %v1322 = vpack.c.b16 %v1166, %v1160
        %v1323 = vpack.c.b16 %v1167, %v1161
        %v1324 = vpack.c.b16 %v1168, %v1162
        %v1325 = vpack.c.b16 %v1175, %v1169
        %v1326 = vpack.c.b16 %v1176, %v1170
        %v1327 = vpack.c.b16 %v1177, %v1171
        %v1328 = vpack.c.b16 %v1178, %v1172
        %v1329 = vpack.c.b16 %v1179, %v1173
        %v1330 = vpack.c.b16 %v1180, %v1174
        %v1331 = vpack.c.b16 %v1187, %v1181
        %v1332 = vpack.c.b16 %v1188, %v1182
        %v1333 = vpack.c.b16 %v1189, %v1183
        %v1334 = vpack.c.b16 %v1190, %v1184
        %v1335 = vpack.c.b16 %v1191, %v1185
        %v1336 = vpack.c.b16 %v1192, %v1186
        %v1337 = vpack.c.b16 %v1199, %v1193
        %v1338 = vpack.c.b16 %v1200, %v1194
        %v1339 = vpack.c.b16 %v1201, %v1195
        %v1340 = vpack.c.b16 %v1202, %v1196
        %v1341 = vpack.c.b16 %v1203, %v1197
        %v1342 = vpack.c.b16 %v1204, %v1198
        %v1343 = vpack.c.b16 %v1211, %v1205
        %v1344 = vpack.c.b16 %v1212, %v1206
        %v1345 = vpack.c.b16 %v1213, %v1207
        %v1346 = vpack.c.b16 %v1214, %v1208
        %v1347 = vpack.c.b16 %v1215, %v1209
        %v1348 = vpack.c.b16 %v1216, %v1210
        %v1349 = vpack.c.b16 %v1223, %v1217
        %v1350 = vpack.c.b16 %v1224, %v1218
        %v1351 = vpack.c.b16 %v1225, %v1219
        %v1352 = vpack.c.b16 %v1226, %v1220
        %v1353 = vpack.c.b16 %v1227, %v1221
        %v1354 = vpack.c.b16 %v1228, %v1222
        %v1355 = vpack.c.b16 %v1235, %v1229
        %v1356 = vpack.c.b16 %v1236, %v1230
        %v1357 = vpack.c.b16 %v1237, %v1231
        %v1358 = vpack.c.b16 %v1238, %v1232
        %v1359 = vpack.c.b16 %v1239, %v1233
        %v1360 = vpack.c.b16 %v1240, %v1234
        %v1361 = vpack.c.b16 %v1247, %v1241
        %v1362 = vpack.c.b16 %v1248, %v1242
        %v1363 = vpack.c.b16 %v1249, %v1243
        %v1364 = vpack.c.b16 %v1250, %v1244
        %v1365 = vpack.c.b16 %v1251, %v1245
        %v1366 = vpack.c.b16 %v1252, %v1246
        %v1367 = vpack.c.b16 %v1259, %v1253
        %v1368 = vpack.c.b16 %v1260, %v1254
        %v1369 = vpack.c.b16 %v1261, %v1255
        %v1370 = vpack.c.b16 %v1262, %v1256
        %v1371 = vpack.c.b16 %v1263, %v1257
        %v1372 = vpack.c.b16 %v1264, %v1258
        %v1373 = vpack.c.b16 %v1271, %v1265
        %v1374 = vpack.c.b16 %v1272, %v1266
        %v1375 = vpack.c.b16 %v1273, %v1267
        %v1376 = vpack.c.b16 %v1274, %v1268
        %v1377 = vpack.c.b16 %v1275, %v1269
        %v1378 = vpack.c.b16 %v1276, %v1270
        %v1379 = vpack.c.b16 %v1283, %v1277
        %v1380 = vpack.c.b16 %v1284, %v1278
        %v1381 = vpack.c.b16 %v1285, %v1279
        %v1382 = vpack.c.b16 %v1286, %v1280
        %v1383 = vpack.c.b16 %v1287, %v1281
        %v1384 = vpack.c.b16 %v1288, %v1282
        %1481 = vmatprep.subr.bf16.mxu0 %v1290
        %1482 = vmatpush1.bf16.msra.mxu0 %v1289
        %1483 = vmatprep.subr.bf16.mxu0 %v1296
        %1484 = vmatpush1.bf16.msra.mxu0 %v1295
        %1485 = vmatprep.subr.bf16.mxu0 %v1302
        %1486 = vmatpush1.bf16.msra.mxu0 %v1301
        %1487 = vmatprep.subr.bf16.mxu0 %v1308
        %1488 = vmatpush1.bf16.msra.mxu0 %v1307
        %1489 = vmatprep.subr.bf16.mxu0 %v1314
        %1490 = vmatpush1.bf16.msra.mxu0 %v1313
        %1491 = vmatprep.subr.bf16.mxu0 %v1320
        %1492 = vmatpush1.bf16.msra.mxu0 %v1319
        %1493 = vmatprep.subr.bf16.mxu0 %v1326
        %1494 = vmatpush1.bf16.msra.mxu0 %v1325
        %1495 = vmatprep.subr.bf16.mxu0 %v1332
        %1496 = vmatpush1.bf16.msra.mxu0 %v1331
        %1497 = vmatprep.subr.bf16.mxu0 %v1338
        %1498 = vmatpush1.bf16.msra.mxu0 %v1337
        %1499 = vmatprep.subr.bf16.mxu0 %v1344
        %1500 = vmatpush1.bf16.msra.mxu0 %v1343
        %1501 = vmatprep.subr.bf16.mxu0 %v1350
        %1502 = vmatpush1.bf16.msra.mxu0 %v1349
        %1503 = vmatprep.subr.bf16.mxu0 %v1356
        %1504 = vmatpush1.bf16.msra.mxu0 %v1355
        %1505 = vmatprep.subr.bf16.mxu0 %v1362
        %1506 = vmatpush1.bf16.msra.mxu0 %v1361
        %1507 = vmatprep.subr.bf16.mxu0 %v1368
        %1508 = vmatpush1.bf16.msra.mxu0 %v1367
        %1509 = vmatprep.subr.bf16.mxu0 %v1374
        %1510 = vmatpush1.bf16.msra.mxu0 %v1373
        %1511 = vmatprep.subr.bf16.mxu0 %v1380
        %1512 = vmatpush1.bf16.msra.mxu0 %v1379
        %1513 = vmatprep.mubr.bf16.mxu0 %v890
        %1514 = vmatmul.mubr.bf16.gmra.mrb[0].mxu0 %v889
        %v1515 = vpop.f32.mrb[0].mxu0
        %v1516 = vadd.f32 0.0, %v1515
        %v1517 = vpop.f32.mrb[0].mxu0
        %v1518 = vadd.f32 0.0, %v1517
        %v1519 = vpop.f32.mrb[0].mxu0
        %v1520 = vadd.f32 0.0, %v1519
        %v1521 = vpop.f32.mrb[0].mxu0
        %v1522 = vadd.f32 0.0, %v1521
        %1523 = vmatprep.mubr.bf16.mxu0 %v892
        %1524 = vmatmul.mubr.bf16.gmra.mrb[0].mxu0 %v891
        %v1525 = vpop.f32.mrb[0].mxu0
        %v1526 = vadd.f32 0.0, %v1525
        %v1527 = vpop.f32.mrb[0].mxu0
        %v1528 = vadd.f32 0.0, %v1527
        %v1529 = vpop.f32.mrb[0].mxu0
        %v1530 = vadd.f32 0.0, %v1529
        %v1531 = vpop.f32.mrb[0].mxu0
        %v1532 = vadd.f32 0.0, %v1531
        %1533 = vmatprep.mubr.bf16.mxu0 %v894
        %1534 = vmatmul.mubr.bf16.gmra.mrb[0].mxu0 %v893
        %v1535 = vpop.f32.mrb[0].mxu0
        %v1536 = vadd.f32 0.0, %v1535
        %v1537 = vpop.f32.mrb[0].mxu0
        %v1538 = vadd.f32 0.0, %v1537
        %v1539 = vpop.f32.mrb[0].mxu0
        %v1540 = vadd.f32 0.0, %v1539
        %v1541 = vpop.f32.mrb[0].mxu0
        %v1542 = vadd.f32 0.0, %v1541
        %1543 = vmatprep.mubr.bf16.mxu0 %v896
        %1544 = vmatmul.mubr.bf16.gmra.mrb[0].mxu0 %v895
        %v1545 = vpop.f32.mrb[0].mxu0
        %v1546 = vadd.f32 0.0, %v1545
        %v1547 = vpop.f32.mrb[0].mxu0
        %v1548 = vadd.f32 0.0, %v1547
        %v1549 = vpop.f32.mrb[0].mxu0
        %v1550 = vadd.f32 0.0, %v1549
        %v1551 = vpop.f32.mrb[0].mxu0
        %v1552 = vadd.f32 0.0, %v1551
        %1553 = vmatprep.mubr.bf16.mxu0 %v898
        %1554 = vmatmul.mubr.bf16.gmra.mrb[0].mxu0 %v897
        %v1555 = vpop.f32.mrb[0].mxu0
        %v1556 = vadd.f32 0.0, %v1555
        %v1557 = vpop.f32.mrb[0].mxu0
        %v1558 = vadd.f32 0.0, %v1557
        %v1559 = vpop.f32.mrb[0].mxu0
        %v1560 = vadd.f32 0.0, %v1559
        %v1561 = vpop.f32.mrb[0].mxu0
        %v1562 = vadd.f32 0.0, %v1561
        %1563 = vmatprep.mubr.bf16.mxu0 %v900
        %1564 = vmatmul.mubr.bf16.gmra.mrb[0].mxu0 %v899
        %v1565 = vpop.f32.mrb[0].mxu0
        %v1566 = vadd.f32 0.0, %v1565
        %v1567 = vpop.f32.mrb[0].mxu0
        %v1568 = vadd.f32 0.0, %v1567
        %v1569 = vpop.f32.mrb[0].mxu0
        %v1570 = vadd.f32 0.0, %v1569
        %v1571 = vpop.f32.mrb[0].mxu0
        %v1572 = vadd.f32 0.0, %v1571
        %1573 = vmatprep.mubr.bf16.mxu0 %v902
        %1574 = vmatmul.mubr.bf16.gmra.mrb[0].mxu0 %v901
        %v1575 = vpop.f32.mrb[0].mxu0
        %v1576 = vadd.f32 0.0, %v1575
        %v1577 = vpop.f32.mrb[0].mxu0
        %v1578 = vadd.f32 0.0, %v1577
        %v1579 = vpop.f32.mrb[0].mxu0
        %v1580 = vadd.f32 0.0, %v1579
        %v1581 = vpop.f32.mrb[0].mxu0
        %v1582 = vadd.f32 0.0, %v1581
        %1583 = vmatprep.mubr.bf16.mxu0 %v904
        %1584 = vmatmul.mubr.bf16.gmra.mrb[0].mxu0 %v903
        %v1585 = vpop.f32.mrb[0].mxu0
        %v1586 = vadd.f32 0.0, %v1585
        %v1587 = vpop.f32.mrb[0].mxu0
        %v1588 = vadd.f32 0.0, %v1587
        %v1589 = vpop.f32.mrb[0].mxu0
        %v1590 = vadd.f32 0.0, %v1589
        %v1591 = vpop.f32.mrb[0].mxu0
        %v1592 = vadd.f32 0.0, %v1591
        %1593 = vdwg.mxu0
        %1594 = vmatprep.subr.bf16.mxu0 %v1292
        %1595 = vmatpush1.bf16.msra.mxu0 %v1291
        %1596 = vmatprep.subr.bf16.mxu0 %v1298
        %1597 = vmatpush1.bf16.msra.mxu0 %v1297
        %1598 = vmatprep.subr.bf16.mxu0 %v1304
        %1599 = vmatpush1.bf16.msra.mxu0 %v1303
        %1600 = vmatprep.subr.bf16.mxu0 %v1310
        %1601 = vmatpush1.bf16.msra.mxu0 %v1309
        %1602 = vmatprep.subr.bf16.mxu0 %v1316
        %1603 = vmatpush1.bf16.msra.mxu0 %v1315
        %1604 = vmatprep.subr.bf16.mxu0 %v1322
        %1605 = vmatpush1.bf16.msra.mxu0 %v1321
        %1606 = vmatprep.subr.bf16.mxu0 %v1328
        %1607 = vmatpush1.bf16.msra.mxu0 %v1327
        %1608 = vmatprep.subr.bf16.mxu0 %v1334
        %1609 = vmatpush1.bf16.msra.mxu0 %v1333
        %1610 = vmatprep.subr.bf16.mxu0 %v1340
        %1611 = vmatpush1.bf16.msra.mxu0 %v1339
        %1612 = vmatprep.subr.bf16.mxu0 %v1346
        %1613 = vmatpush1.bf16.msra.mxu0 %v1345
        %1614 = vmatprep.subr.bf16.mxu0 %v1352
        %1615 = vmatpush1.bf16.msra.mxu0 %v1351
        %1616 = vmatprep.subr.bf16.mxu0 %v1358
        %1617 = vmatpush1.bf16.msra.mxu0 %v1357
        %1618 = vmatprep.subr.bf16.mxu0 %v1364
        %1619 = vmatpush1.bf16.msra.mxu0 %v1363
        %1620 = vmatprep.subr.bf16.mxu0 %v1370
        %1621 = vmatpush1.bf16.msra.mxu0 %v1369
        %1622 = vmatprep.subr.bf16.mxu0 %v1376
        %1623 = vmatpush1.bf16.msra.mxu0 %v1375
        %1624 = vmatprep.subr.bf16.mxu0 %v1382
        %1625 = vmatpush1.bf16.msra.mxu0 %v1381
        %1626 = vmatprep.mubr.bf16.mxu0 %v890
        %1627 = vmatmul.mubr.bf16.gmra.mrb[0].mxu0 %v889
        %v1628 = vpop.f32.mrb[0].mxu0
        %v1629 = vadd.f32 0.0, %v1628
        %v1630 = vpop.f32.mrb[0].mxu0
        %v1631 = vadd.f32 0.0, %v1630
        %v1632 = vpop.f32.mrb[0].mxu0
        %v1633 = vadd.f32 0.0, %v1632
        %v1634 = vpop.f32.mrb[0].mxu0
        %v1635 = vadd.f32 0.0, %v1634
        %1636 = vmatprep.mubr.bf16.mxu0 %v892
        %1637 = vmatmul.mubr.bf16.gmra.mrb[0].mxu0 %v891
        %v1638 = vpop.f32.mrb[0].mxu0
        %v1639 = vadd.f32 0.0, %v1638
        %v1640 = vpop.f32.mrb[0].mxu0
        %v1641 = vadd.f32 0.0, %v1640
        %v1642 = vpop.f32.mrb[0].mxu0
        %v1643 = vadd.f32 0.0, %v1642
        %v1644 = vpop.f32.mrb[0].mxu0
        %v1645 = vadd.f32 0.0, %v1644
        %1646 = vmatprep.mubr.bf16.mxu0 %v894
        %1647 = vmatmul.mubr.bf16.gmra.mrb[0].mxu0 %v893
        %v1648 = vpop.f32.mrb[0].mxu0
        %v1649 = vadd.f32 0.0, %v1648
        %v1650 = vpop.f32.mrb[0].mxu0
        %v1651 = vadd.f32 0.0, %v1650
        %v1652 = vpop.f32.mrb[0].mxu0
        %v1653 = vadd.f32 0.0, %v1652
        %v1654 = vpop.f32.mrb[0].mxu0
        %v1655 = vadd.f32 0.0, %v1654
        %1656 = vmatprep.mubr.bf16.mxu0 %v896
        %1657 = vmatmul.mubr.bf16.gmra.mrb[0].mxu0 %v895
        %v1658 = vpop.f32.mrb[0].mxu0
        %v1659 = vadd.f32 0.0, %v1658
        %v1660 = vpop.f32.mrb[0].mxu0
        %v1661 = vadd.f32 0.0, %v1660
        %v1662 = vpop.f32.mrb[0].mxu0
        %v1663 = vadd.f32 0.0, %v1662
        %v1664 = vpop.f32.mrb[0].mxu0
        %v1665 = vadd.f32 0.0, %v1664
        %1666 = vmatprep.mubr.bf16.mxu0 %v898
        %1667 = vmatmul.mubr.bf16.gmra.mrb[0].mxu0 %v897
        %v1668 = vpop.f32.mrb[0].mxu0
        %v1669 = vadd.f32 0.0, %v1668
        %v1670 = vpop.f32.mrb[0].mxu0
        %v1671 = vadd.f32 0.0, %v1670
        %v1672 = vpop.f32.mrb[0].mxu0
        %v1673 = vadd.f32 0.0, %v1672
        %v1674 = vpop.f32.mrb[0].mxu0
        %v1675 = vadd.f32 0.0, %v1674
        %1676 = vmatprep.mubr.bf16.mxu0 %v900
        %1677 = vmatmul.mubr.bf16.gmra.mrb[0].mxu0 %v899
        %v1678 = vpop.f32.mrb[0].mxu0
        %v1679 = vadd.f32 0.0, %v1678
        %v1680 = vpop.f32.mrb[0].mxu0
        %v1681 = vadd.f32 0.0, %v1680
        %v1682 = vpop.f32.mrb[0].mxu0
        %v1683 = vadd.f32 0.0, %v1682
        %v1684 = vpop.f32.mrb[0].mxu0
        %v1685 = vadd.f32 0.0, %v1684
        %1686 = vmatprep.mubr.bf16.mxu0 %v902
        %1687 = vmatmul.mubr.bf16.gmra.mrb[0].mxu0 %v901
        %v1688 = vpop.f32.mrb[0].mxu0
        %v1689 = vadd.f32 0.0, %v1688
        %v1690 = vpop.f32.mrb[0].mxu0
        %v1691 = vadd.f32 0.0, %v1690
        %v1692 = vpop.f32.mrb[0].mxu0
        %v1693 = vadd.f32 0.0, %v1692
        %v1694 = vpop.f32.mrb[0].mxu0
        %v1695 = vadd.f32 0.0, %v1694
        %1696 = vmatprep.mubr.bf16.mxu0 %v904
        %1697 = vmatmul.mubr.bf16.gmra.mrb[0].mxu0 %v903
        %v1698 = vpop.f32.mrb[0].mxu0
        %v1699 = vadd.f32 0.0, %v1698
        %v1700 = vpop.f32.mrb[0].mxu0
        %v1701 = vadd.f32 0.0, %v1700
        %v1702 = vpop.f32.mrb[0].mxu0
        %v1703 = vadd.f32 0.0, %v1702
        %v1704 = vpop.f32.mrb[0].mxu0
        %v1705 = vadd.f32 0.0, %v1704
        %1706 = vdwg.mxu0
        %1707 = vmatprep.subr.bf16.mxu0 %v1294
        %1708 = vmatpush1.bf16.msra.mxu0 %v1293
        %1709 = vmatprep.subr.bf16.mxu0 %v1300
        %1710 = vmatpush1.bf16.msra.mxu0 %v1299
        %1711 = vmatprep.subr.bf16.mxu0 %v1306
        %1712 = vmatpush1.bf16.msra.mxu0 %v1305
        %1713 = vmatprep.subr.bf16.mxu0 %v1312
        %1714 = vmatpush1.bf16.msra.mxu0 %v1311
        %1715 = vmatprep.subr.bf16.mxu0 %v1318
        %1716 = vmatpush1.bf16.msra.mxu0 %v1317
        %1717 = vmatprep.subr.bf16.mxu0 %v1324
        %1718 = vmatpush1.bf16.msra.mxu0 %v1323
        %1719 = vmatprep.subr.bf16.mxu0 %v1330
        %1720 = vmatpush1.bf16.msra.mxu0 %v1329
        %1721 = vmatprep.subr.bf16.mxu0 %v1336
        %1722 = vmatpush1.bf16.msra.mxu0 %v1335
        %1723 = vmatprep.subr.bf16.mxu0 %v1342
        %1724 = vmatpush1.bf16.msra.mxu0 %v1341
        %1725 = vmatprep.subr.bf16.mxu0 %v1348
        %1726 = vmatpush1.bf16.msra.mxu0 %v1347
        %1727 = vmatprep.subr.bf16.mxu0 %v1354
        %1728 = vmatpush1.bf16.msra.mxu0 %v1353
        %1729 = vmatprep.subr.bf16.mxu0 %v1360
        %1730 = vmatpush1.bf16.msra.mxu0 %v1359
        %1731 = vmatprep.subr.bf16.mxu0 %v1366
        %1732 = vmatpush1.bf16.msra.mxu0 %v1365
        %1733 = vmatprep.subr.bf16.mxu0 %v1372
        %1734 = vmatpush1.bf16.msra.mxu0 %v1371
        %1735 = vmatprep.subr.bf16.mxu0 %v1378
        %1736 = vmatpush1.bf16.msra.mxu0 %v1377
        %1737 = vmatprep.subr.bf16.mxu0 %v1384
        %1738 = vmatpush1.bf16.msra.mxu0 %v1383
        %1739 = vmatprep.mubr.bf16.mxu0 %v890
        %1740 = vmatmul.mubr.bf16.gmra.mrb[0].mxu0 %v889
        %v1741 = vpop.f32.mrb[0].mxu0
        %v1742 = vadd.f32 0.0, %v1741
        %v1743 = vpop.f32.mrb[0].mxu0
        %v1744 = vadd.f32 0.0, %v1743
        %v1745 = vpop.f32.mrb[0].mxu0
        %v1746 = vadd.f32 0.0, %v1745
        %v1747 = vpop.f32.mrb[0].mxu0
        %v1748 = vadd.f32 0.0, %v1747
        %1749 = vmatprep.mubr.bf16.mxu0 %v892
        %1750 = vmatmul.mubr.bf16.gmra.mrb[0].mxu0 %v891
        %v1751 = vpop.f32.mrb[0].mxu0
        %v1752 = vadd.f32 0.0, %v1751
        %v1753 = vpop.f32.mrb[0].mxu0
        %v1754 = vadd.f32 0.0, %v1753
        %v1755 = vpop.f32.mrb[0].mxu0
        %v1756 = vadd.f32 0.0, %v1755
        %v1757 = vpop.f32.mrb[0].mxu0
        %v1758 = vadd.f32 0.0, %v1757
        %1759 = vmatprep.mubr.bf16.mxu0 %v894
        %1760 = vmatmul.mubr.bf16.gmra.mrb[0].mxu0 %v893
        %v1761 = vpop.f32.mrb[0].mxu0
        %v1762 = vadd.f32 0.0, %v1761
        %v1763 = vpop.f32.mrb[0].mxu0
        %v1764 = vadd.f32 0.0, %v1763
        %v1765 = vpop.f32.mrb[0].mxu0
        %v1766 = vadd.f32 0.0, %v1765
        %v1767 = vpop.f32.mrb[0].mxu0
        %v1768 = vadd.f32 0.0, %v1767
        %1769 = vmatprep.mubr.bf16.mxu0 %v896
        %1770 = vmatmul.mubr.bf16.gmra.mrb[0].mxu0 %v895
        %v1771 = vpop.f32.mrb[0].mxu0
        %v1772 = vadd.f32 0.0, %v1771
        %v1773 = vpop.f32.mrb[0].mxu0
        %v1774 = vadd.f32 0.0, %v1773
        %v1775 = vpop.f32.mrb[0].mxu0
        %v1776 = vadd.f32 0.0, %v1775
        %v1777 = vpop.f32.mrb[0].mxu0
        %v1778 = vadd.f32 0.0, %v1777
        %1779 = vmatprep.mubr.bf16.mxu0 %v898
        %1780 = vmatmul.mubr.bf16.gmra.mrb[0].mxu0 %v897
        %v1781 = vpop.f32.mrb[0].mxu0
        %v1782 = vadd.f32 0.0, %v1781
        %v1783 = vpop.f32.mrb[0].mxu0
        %v1784 = vadd.f32 0.0, %v1783
        %v1785 = vpop.f32.mrb[0].mxu0
        %v1786 = vadd.f32 0.0, %v1785
        %v1787 = vpop.f32.mrb[0].mxu0
        %v1788 = vadd.f32 0.0, %v1787
        %1789 = vmatprep.mubr.bf16.mxu0 %v900
        %1790 = vmatmul.mubr.bf16.gmra.mrb[0].mxu0 %v899
        %v1791 = vpop.f32.mrb[0].mxu0
        %v1792 = vadd.f32 0.0, %v1791
        %v1793 = vpop.f32.mrb[0].mxu0
        %v1794 = vadd.f32 0.0, %v1793
        %v1795 = vpop.f32.mrb[0].mxu0
        %v1796 = vadd.f32 0.0, %v1795
        %v1797 = vpop.f32.mrb[0].mxu0
        %v1798 = vadd.f32 0.0, %v1797
        %1799 = vmatprep.mubr.bf16.mxu0 %v902
        %1800 = vmatmul.mubr.bf16.gmra.mrb[0].mxu0 %v901
        %v1801 = vpop.f32.mrb[0].mxu0
        %v1802 = vadd.f32 0.0, %v1801
        %v1803 = vpop.f32.mrb[0].mxu0
        %v1804 = vadd.f32 0.0, %v1803
        %v1805 = vpop.f32.mrb[0].mxu0
        %v1806 = vadd.f32 0.0, %v1805
        %v1807 = vpop.f32.mrb[0].mxu0
        %v1808 = vadd.f32 0.0, %v1807
        %1809 = vmatprep.mubr.bf16.mxu0 %v904
        %1810 = vmatmul.mubr.bf16.gmra.mrb[0].mxu0 %v903
        %v1811 = vpop.f32.mrb[0].mxu0
        %v1812 = vadd.f32 0.0, %v1811
        %v1813 = vpop.f32.mrb[0].mxu0
        %v1814 = vadd.f32 0.0, %v1813
        %v1815 = vpop.f32.mrb[0].mxu0
        %v1816 = vadd.f32 0.0, %v1815
        %v1817 = vpop.f32.mrb[0].mxu0
        %v1818 = vadd.f32 0.0, %v1817
        %1819 = vdwg.mxu0
        %s1820 = smul.u32 %s36, 128
        %v1821 = vpack.c.bf16 %v1520, %v1516
        %v1822 = vpack.c.bf16 %v1530, %v1526
        %v1823 = vpack.c.bf16 %v1540, %v1536
        %v1824 = vpack.c.bf16 %v1550, %v1546
        %v1825 = vpack.c.bf16 %v1560, %v1556
        %v1826 = vpack.c.bf16 %v1570, %v1566
        %v1827 = vpack.c.bf16 %v1580, %v1576
        %v1828 = vpack.c.bf16 %v1590, %v1586
        %v1829 = vpack.c.bf16 %v1522, %v1518
        %v1830 = vpack.c.bf16 %v1532, %v1528
        %v1831 = vpack.c.bf16 %v1542, %v1538
        %v1832 = vpack.c.bf16 %v1552, %v1548
        %v1833 = vpack.c.bf16 %v1562, %v1558
        %v1834 = vpack.c.bf16 %v1572, %v1568
        %v1835 = vpack.c.bf16 %v1582, %v1578
        %v1836 = vpack.c.bf16 %v1592, %v1588
        %v1837 = vpack.c.bf16 %v1633, %v1629
        %v1838 = vpack.c.bf16 %v1643, %v1639
        %v1839 = vpack.c.bf16 %v1653, %v1649
        %v1840 = vpack.c.bf16 %v1663, %v1659
        %v1841 = vpack.c.bf16 %v1673, %v1669
        %v1842 = vpack.c.bf16 %v1683, %v1679
        %v1843 = vpack.c.bf16 %v1693, %v1689
        %v1844 = vpack.c.bf16 %v1703, %v1699
        %v1845 = vpack.c.bf16 %v1635, %v1631
        %v1846 = vpack.c.bf16 %v1645, %v1641
        %v1847 = vpack.c.bf16 %v1655, %v1651
        %v1848 = vpack.c.bf16 %v1665, %v1661
        %v1849 = vpack.c.bf16 %v1675, %v1671
        %v1850 = vpack.c.bf16 %v1685, %v1681
        %v1851 = vpack.c.bf16 %v1695, %v1691
        %v1852 = vpack.c.bf16 %v1705, %v1701
        %v1853 = vpack.c.bf16 %v1746, %v1742
        %v1854 = vpack.c.bf16 %v1756, %v1752
        %v1855 = vpack.c.bf16 %v1766, %v1762
        %v1856 = vpack.c.bf16 %v1776, %v1772
        %v1857 = vpack.c.bf16 %v1786, %v1782
        %v1858 = vpack.c.bf16 %v1796, %v1792
        %v1859 = vpack.c.bf16 %v1806, %v1802
        %v1860 = vpack.c.bf16 %v1816, %v1812
        %v1861 = vpack.c.bf16 %v1748, %v1744
        %v1862 = vpack.c.bf16 %v1758, %v1754
        %v1863 = vpack.c.bf16 %v1768, %v1764
        %v1864 = vpack.c.bf16 %v1778, %v1774
        %v1865 = vpack.c.bf16 %v1788, %v1784
        %v1866 = vpack.c.bf16 %v1798, %v1794
        %v1867 = vpack.c.bf16 %v1808, %v1804
        %v1868 = vpack.c.bf16 %v1818, %v1814
        %s1869 = sshra.s32 %s1820, 4
        %s1870 = sand.u32 %s1820, 15
        %s1871 = smul.addr %s1869, 8
        %s1872 = scalar_lea.vmem [#allocation2], %s1871
        %1873 = vst [vmem:[%s1872] sm:$0xff] %v1837
        %1874 = vst [vmem:[%s1872 + $0x8] sm:$0xff] %v1838
        %1875 = vst [vmem:[%s1872 + $0x10] sm:$0xff] %v1839
        %1876 = vst [vmem:[%s1872 + $0x18] sm:$0xff] %v1840
        %1877 = vst [vmem:[%s1872 + $0x20] sm:$0xff] %v1841
        %1878 = vst [vmem:[%s1872 + $0x28] sm:$0xff] %v1842
        %1879 = vst [vmem:[%s1872 + $0x30] sm:$0xff] %v1843
        %1880 = vst [vmem:[%s1872 + $0x38] sm:$0xff] %v1844
        %1881 = vst [vmem:[%s1872 + $0x80] sm:$0xff] %v1845
        %1882 = vst [vmem:[%s1872 + $0x88] sm:$0xff] %v1846
        %1883 = vst [vmem:[%s1872 + $0x90] sm:$0xff] %v1847
        %1884 = vst [vmem:[%s1872 + $0x98] sm:$0xff] %v1848
        %1885 = vst [vmem:[%s1872 + $0xa0] sm:$0xff] %v1849
        %1886 = vst [vmem:[%s1872 + $0xa8] sm:$0xff] %v1850
        %1887 = vst [vmem:[%s1872 + $0xb0] sm:$0xff] %v1851
        %1888 = vst [vmem:[%s1872 + $0xb8] sm:$0xff] %v1852
        %s1889 = smul.addr %s1869, 8
        %s1890 = scalar_lea.vmem [#allocation3], %s1889
        %1891 = vst [vmem:[%s1890] sm:$0xff] %v1853
        %1892 = vst [vmem:[%s1890 + $0x8] sm:$0xff] %v1854
        %1893 = vst [vmem:[%s1890 + $0x10] sm:$0xff] %v1855
        %1894 = vst [vmem:[%s1890 + $0x18] sm:$0xff] %v1856
        %1895 = vst [vmem:[%s1890 + $0x20] sm:$0xff] %v1857
        %1896 = vst [vmem:[%s1890 + $0x28] sm:$0xff] %v1858
        %1897 = vst [vmem:[%s1890 + $0x30] sm:$0xff] %v1859
        %1898 = vst [vmem:[%s1890 + $0x38] sm:$0xff] %v1860
        %1899 = vst [vmem:[%s1890 + $0x80] sm:$0xff] %v1861
        %1900 = vst [vmem:[%s1890 + $0x88] sm:$0xff] %v1862
        %1901 = vst [vmem:[%s1890 + $0x90] sm:$0xff] %v1863
        %1902 = vst [vmem:[%s1890 + $0x98] sm:$0xff] %v1864
        %1903 = vst [vmem:[%s1890 + $0xa0] sm:$0xff] %v1865
        %1904 = vst [vmem:[%s1890 + $0xa8] sm:$0xff] %v1866
        %1905 = vst [vmem:[%s1890 + $0xb0] sm:$0xff] %v1867
        %1906 = vst [vmem:[%s1890 + $0xb8] sm:$0xff] %v1868
        %v1907 = vlaneseq
        %v1908 = vshrl.u32 %v1907, 7
        %v1909 = vadd.s32 %v1908, 8
        %v1910 = vadd.s32 %v1908, 16
        %v1911 = vadd.s32 %v1908, 24
        %v1912 = vadd.s32 %v1908, 32
        %v1913 = vadd.s32 %v1908, 40
        %v1914 = vadd.s32 %v1908, 48
        %v1915 = vadd.s32 %v1908, 56
        %v1916 = vadd.s32 %v1908, 64
        %v1917 = vadd.s32 %v1908, 72
        %v1918 = vadd.s32 %v1908, 80
        %v1919 = vadd.s32 %v1908, 88
        %v1920 = vadd.s32 %v1908, 96
        %v1921 = vadd.s32 %v1908, 104
        %v1922 = vadd.s32 %v1908, 112
        %v1923 = vadd.s32 %v1908, 120
        %v1924 = vstv %s1820
        %v1925 = vadd.s32 %v1924, %v1908
        %v1926 = vadd.s32 %v1924, %v1909
        %v1927 = vadd.s32 %v1924, %v1910
        %v1928 = vadd.s32 %v1924, %v1911
        %v1929 = vadd.s32 %v1924, %v1912
        %v1930 = vadd.s32 %v1924, %v1913
        %v1931 = vadd.s32 %v1924, %v1914
        %v1932 = vadd.s32 %v1924, %v1915
        %v1933 = vadd.s32 %v1924, %v1916
        %v1934 = vadd.s32 %v1924, %v1917
        %v1935 = vadd.s32 %v1924, %v1918
        %v1936 = vadd.s32 %v1924, %v1919
        %v1937 = vadd.s32 %v1924, %v1920
        %v1938 = vadd.s32 %v1924, %v1921
        %v1939 = vadd.s32 %v1924, %v1922
        %v1940 = vadd.s32 %v1924, %v1923
        %v1941 = vlaneseq
        %v1942 = vand.u32 %v1941, 127
        %s1943 = sadd.s32 %s36, 1
        // While loop
        $region89: #{tpu_custom_call.1} parent=67 // loop_pre_header
          _
        $region90: #{tpu_custom_call.1} parent=67 // loop_header
          %s1945 = sphi 0, %s1947
          %p1946 = scmp.ge.s32.totalorder %s1945, %s1943
          %v1950 = vphi -inf, %v2457
          %v1951 = vphi -inf, %v2458
          %v1952 = vphi -inf, %v2459
          %v1953 = vphi -inf, %v2460
          %v1954 = vphi -inf, %v2461
          %v1955 = vphi -inf, %v2462
          %v1956 = vphi -inf, %v2463
          %v1957 = vphi -inf, %v2464
          %v1958 = vphi -inf, %v2465
          %v1959 = vphi -inf, %v2466
          %v1960 = vphi -inf, %v2467
          %v1961 = vphi -inf, %v2468
          %v1962 = vphi -inf, %v2469
          %v1963 = vphi -inf, %v2470
          %v1964 = vphi -inf, %v2471
          %v1965 = vphi -inf, %v2472
          %v1966 = vphi -inf, %v2473
          %v1967 = vphi -inf, %v2474
          %v1968 = vphi -inf, %v2475
          %v1969 = vphi -inf, %v2476
          %v1970 = vphi -inf, %v2477
          %v1971 = vphi -inf, %v2478
          %v1972 = vphi -inf, %v2479
          %v1973 = vphi -inf, %v2480
          %v1974 = vphi -inf, %v2481
          %v1975 = vphi -inf, %v2482
          %v1976 = vphi -inf, %v2483
          %v1977 = vphi -inf, %v2484
          %v1978 = vphi -inf, %v2485
          %v1979 = vphi -inf, %v2486
          %v1980 = vphi -inf, %v2487
          %v1981 = vphi -inf, %v2488
          %v1982 = vphi 0.0, %v2777
          %v1983 = vphi 0.0, %v2778
          %v1984 = vphi 0.0, %v2779
          %v1985 = vphi 0.0, %v2780
          %v1986 = vphi 0.0, %v2781
          %v1987 = vphi 0.0, %v2782
          %v1988 = vphi 0.0, %v2783
          %v1989 = vphi 0.0, %v2784
          %v1990 = vphi 0.0, %v2785
          %v1991 = vphi 0.0, %v2786
          %v1992 = vphi 0.0, %v2787
          %v1993 = vphi 0.0, %v2788
          %v1994 = vphi 0.0, %v2789
          %v1995 = vphi 0.0, %v2790
          %v1996 = vphi 0.0, %v2791
          %v1997 = vphi 0.0, %v2792
          %v1998 = vphi 0.0, %v2793
          %v1999 = vphi 0.0, %v2794
          %v2000 = vphi 0.0, %v2795
          %v2001 = vphi 0.0, %v2796
          %v2002 = vphi 0.0, %v2797
          %v2003 = vphi 0.0, %v2798
          %v2004 = vphi 0.0, %v2799
          %v2005 = vphi 0.0, %v2800
          %v2006 = vphi 0.0, %v2801
          %v2007 = vphi 0.0, %v2802
          %v2008 = vphi 0.0, %v2803
          %v2009 = vphi 0.0, %v2804
          %v2010 = vphi 0.0, %v2805
          %v2011 = vphi 0.0, %v2806
          %v2012 = vphi 0.0, %v2807
          %v2013 = vphi 0.0, %v2808
          %v2014 = vphi 0.0, %v3051
          %v2015 = vphi 0.0, %v3052
          %v2016 = vphi 0.0, %v3053
          %v2017 = vphi 0.0, %v3054
          %v2018 = vphi 0.0, %v3055
          %v2019 = vphi 0.0, %v3056
          %v2020 = vphi 0.0, %v3057
          %v2021 = vphi 0.0, %v3058
          %v2022 = vphi 0.0, %v3059
          %v2023 = vphi 0.0, %v3060
          %v2024 = vphi 0.0, %v3061
          %v2025 = vphi 0.0, %v3062
          %v2026 = vphi 0.0, %v3063
          %v2027 = vphi 0.0, %v3064
          %v2028 = vphi 0.0, %v3065
          %v2029 = vphi 0.0, %v3066
          %v2030 = vphi 0.0, %v3067
          %v2031 = vphi 0.0, %v3068
          %v2032 = vphi 0.0, %v3069
          %v2033 = vphi 0.0, %v3070
          %v2034 = vphi 0.0, %v3071
          %v2035 = vphi 0.0, %v3072
          %v2036 = vphi 0.0, %v3073
          %v2037 = vphi 0.0, %v3074
          %v2038 = vphi 0.0, %v3075
          %v2039 = vphi 0.0, %v3076
          %v2040 = vphi 0.0, %v3077
          %v2041 = vphi 0.0, %v3078
          %v2042 = vphi 0.0, %v3079
          %v2043 = vphi 0.0, %v3080
          %v2044 = vphi 0.0, %v3081
          %v2045 = vphi 0.0, %v3082
        $region91: #{tpu_custom_call.1} parent=67 // loop_header_branch
          %1949 = sbr.rel (%p1946) target = $region95
        $region92: #{tpu_custom_call.1} parent=67 // loop_body
          %s2046 = smul.u32 %s1945, 128
          %s2047 = sshra.s32 %s2046, 4
          %s2048 = sand.u32 %s2046, 15
          %s2049 = smul.addr %s2047, 8
          %s2050 = scalar_lea.vmem [#allocation2], %s2049
          %v2051 = vld [vmem:[%s2050] sm:$0xff]
          %v2052 = vld [vmem:[%s2050 + $0x8] sm:$0xff]
          %v2053 = vld [vmem:[%s2050 + $0x10] sm:$0xff]
          %v2054 = vld [vmem:[%s2050 + $0x18] sm:$0xff]
          %v2055 = vld [vmem:[%s2050 + $0x20] sm:$0xff]
          %v2056 = vld [vmem:[%s2050 + $0x28] sm:$0xff]
          %v2057 = vld [vmem:[%s2050 + $0x30] sm:$0xff]
          %v2058 = vld [vmem:[%s2050 + $0x38] sm:$0xff]
          %v2059 = vld [vmem:[%s2050 + $0x80] sm:$0xff]
          %v2060 = vld [vmem:[%s2050 + $0x88] sm:$0xff]
          %v2061 = vld [vmem:[%s2050 + $0x90] sm:$0xff]
          %v2062 = vld [vmem:[%s2050 + $0x98] sm:$0xff]
          %v2063 = vld [vmem:[%s2050 + $0xa0] sm:$0xff]
          %v2064 = vld [vmem:[%s2050 + $0xa8] sm:$0xff]
          %v2065 = vld [vmem:[%s2050 + $0xb0] sm:$0xff]
          %v2066 = vld [vmem:[%s2050 + $0xb8] sm:$0xff]
          %s2067 = smul.addr %s2047, 8
          %s2068 = scalar_lea.vmem [#allocation3], %s2067
          %v2069 = vld [vmem:[%s2068] sm:$0xff]
          %v2070 = vld [vmem:[%s2068 + $0x8] sm:$0xff]
          %v2071 = vld [vmem:[%s2068 + $0x10] sm:$0xff]
          %v2072 = vld [vmem:[%s2068 + $0x18] sm:$0xff]
          %v2073 = vld [vmem:[%s2068 + $0x20] sm:$0xff]
          %v2074 = vld [vmem:[%s2068 + $0x28] sm:$0xff]
          %v2075 = vld [vmem:[%s2068 + $0x30] sm:$0xff]
          %v2076 = vld [vmem:[%s2068 + $0x38] sm:$0xff]
          %v2077 = vld [vmem:[%s2068 + $0x80] sm:$0xff]
          %v2078 = vld [vmem:[%s2068 + $0x88] sm:$0xff]
          %v2079 = vld [vmem:[%s2068 + $0x90] sm:$0xff]
          %v2080 = vld [vmem:[%s2068 + $0x98] sm:$0xff]
          %v2081 = vld [vmem:[%s2068 + $0xa0] sm:$0xff]
          %v2082 = vld [vmem:[%s2068 + $0xa8] sm:$0xff]
          %v2083 = vld [vmem:[%s2068 + $0xb0] sm:$0xff]
          %v2084 = vld [vmem:[%s2068 + $0xb8] sm:$0xff]
          %2085 = vmatprep.subr.bf16.mxu0 0
          %2086 = vmatpush1.bf16.xpose.msra.mxu0 %v2051
          %2087 = vmatprep.subr.bf16.mxu0 0
          %2088 = vmatpush1.bf16.xpose.msra.mxu0 %v2052
          %2089 = vmatprep.subr.bf16.mxu0 0
          %2090 = vmatpush1.bf16.xpose.msra.mxu0 %v2053
          %2091 = vmatprep.subr.bf16.mxu0 0
          %2092 = vmatpush1.bf16.xpose.msra.mxu0 %v2054
          %2093 = vmatprep.subr.bf16.mxu0 0
          %2094 = vmatpush1.bf16.xpose.msra.mxu0 %v2055
          %2095 = vmatprep.subr.bf16.mxu0 0
          %2096 = vmatpush1.bf16.xpose.msra.mxu0 %v2056
          %2097 = vmatprep.subr.bf16.mxu0 0
          %2098 = vmatpush1.bf16.xpose.msra.mxu0 %v2057
          %2099 = vmatprep.subr.bf16.mxu0 0
          %2100 = vmatpush1.bf16.xpose.msra.mxu0 %v2058
          %2101 = vmatprep.subr.bf16.mxu0 0
          %2102 = vmatpush1.bf16.xpose.msra.mxu0 0
          %2103 = vmatprep.subr.bf16.mxu0 0
          %2104 = vmatpush1.bf16.xpose.msra.mxu0 0
          %2105 = vmatprep.subr.bf16.mxu0 0
          %2106 = vmatpush1.bf16.xpose.msra.mxu0 0
          %2107 = vmatprep.subr.bf16.mxu0 0
          %2108 = vmatpush1.bf16.xpose.msra.mxu0 0
          %2109 = vmatprep.subr.bf16.mxu0 0
          %2110 = vmatpush1.bf16.xpose.msra.mxu0 0
          %2111 = vmatprep.subr.bf16.mxu0 0
          %2112 = vmatpush1.bf16.xpose.msra.mxu0 0
          %2113 = vmatprep.subr.bf16.mxu0 0
          %2114 = vmatpush1.bf16.xpose.msra.mxu0 0
          %2115 = vmatprep.subr.bf16.mxu0 0
          %2116 = vmatpush1.bf16.xpose.msra.mxu0 0
          %2117 = vmatprep.mubr.bf16.mxu0 0
          %2118 = vmatmul.mubr.bf16.gmra.mrb[0].mxu0 %v1821
          %v2119 = vpop.f32.mrb[0].mxu0
          %v2120 = vadd.f32 0.0, %v2119
          %v2121 = vpop.f32.mrb[0].mxu0
          %v2122 = vpop.f32.mrb[0].mxu0
          %v2123 = vadd.f32 0.0, %v2122
          %v2124 = vpop.f32.mrb[0].mxu0
          %2125 = vmatprep.mubr.bf16.mxu0 0
          %2126 = vmatmul.mubr.bf16.gmra.mrb[0].mxu0 %v1822
          %v2127 = vpop.f32.mrb[0].mxu0
          %v2128 = vadd.f32 0.0, %v2127
          %v2129 = vpop.f32.mrb[0].mxu0
          %v2130 = vpop.f32.mrb[0].mxu0
          %v2131 = vadd.f32 0.0, %v2130
          %v2132 = vpop.f32.mrb[0].mxu0
          %2133 = vmatprep.mubr.bf16.mxu0 0
          %2134 = vmatmul.mubr.bf16.gmra.mrb[0].mxu0 %v1823
          %v2135 = vpop.f32.mrb[0].mxu0
          %v2136 = vadd.f32 0.0, %v2135
          %v2137 = vpop.f32.mrb[0].mxu0
          %v2138 = vpop.f32.mrb[0].mxu0
          %v2139 = vadd.f32 0.0, %v2138
          %v2140 = vpop.f32.mrb[0].mxu0
          %2141 = vmatprep.mubr.bf16.mxu0 0
          %2142 = vmatmul.mubr.bf16.gmra.mrb[0].mxu0 %v1824
          %v2143 = vpop.f32.mrb[0].mxu0
          %v2144 = vadd.f32 0.0, %v2143
          %v2145 = vpop.f32.mrb[0].mxu0
          %v2146 = vpop.f32.mrb[0].mxu0
          %v2147 = vadd.f32 0.0, %v2146
          %v2148 = vpop.f32.mrb[0].mxu0
          %2149 = vmatprep.mubr.bf16.mxu0 0
          %2150 = vmatmul.mubr.bf16.gmra.mrb[0].mxu0 %v1825
          %v2151 = vpop.f32.mrb[0].mxu0
          %v2152 = vadd.f32 0.0, %v2151
          %v2153 = vpop.f32.mrb[0].mxu0
          %v2154 = vpop.f32.mrb[0].mxu0
          %v2155 = vadd.f32 0.0, %v2154
          %v2156 = vpop.f32.mrb[0].mxu0
          %2157 = vmatprep.mubr.bf16.mxu0 0
          %2158 = vmatmul.mubr.bf16.gmra.mrb[0].mxu0 %v1826
          %v2159 = vpop.f32.mrb[0].mxu0
          %v2160 = vadd.f32 0.0, %v2159
          %v2161 = vpop.f32.mrb[0].mxu0
          %v2162 = vpop.f32.mrb[0].mxu0
          %v2163 = vadd.f32 0.0, %v2162
          %v2164 = vpop.f32.mrb[0].mxu0
          %2165 = vmatprep.mubr.bf16.mxu0 0
          %2166 = vmatmul.mubr.bf16.gmra.mrb[0].mxu0 %v1827
          %v2167 = vpop.f32.mrb[0].mxu0
          %v2168 = vadd.f32 0.0, %v2167
          %v2169 = vpop.f32.mrb[0].mxu0
          %v2170 = vpop.f32.mrb[0].mxu0
          %v2171 = vadd.f32 0.0, %v2170
          %v2172 = vpop.f32.mrb[0].mxu0
          %2173 = vmatprep.mubr.bf16.mxu0 0
          %2174 = vmatmul.mubr.bf16.gmra.mrb[0].mxu0 %v1828
          %v2175 = vpop.f32.mrb[0].mxu0
          %v2176 = vadd.f32 0.0, %v2175
          %v2177 = vpop.f32.mrb[0].mxu0
          %v2178 = vpop.f32.mrb[0].mxu0
          %v2179 = vadd.f32 0.0, %v2178
          %v2180 = vpop.f32.mrb[0].mxu0
          %2181 = vdwg.mxu0
          %2182 = vmatprep.subr.bf16.mxu0 0
          %2183 = vmatpush1.bf16.xpose.msra.mxu0 %v2059
          %2184 = vmatprep.subr.bf16.mxu0 0
          %2185 = vmatpush1.bf16.xpose.msra.mxu0 %v2060
          %2186 = vmatprep.subr.bf16.mxu0 0
          %2187 = vmatpush1.bf16.xpose.msra.mxu0 %v2061
          %2188 = vmatprep.subr.bf16.mxu0 0
          %2189 = vmatpush1.bf16.xpose.msra.mxu0 %v2062
          %2190 = vmatprep.subr.bf16.mxu0 0
          %2191 = vmatpush1.bf16.xpose.msra.mxu0 %v2063
          %2192 = vmatprep.subr.bf16.mxu0 0
          %2193 = vmatpush1.bf16.xpose.msra.mxu0 %v2064
          %2194 = vmatprep.subr.bf16.mxu0 0
          %2195 = vmatpush1.bf16.xpose.msra.mxu0 %v2065
          %2196 = vmatprep.subr.bf16.mxu0 0
          %2197 = vmatpush1.bf16.xpose.msra.mxu0 %v2066
          %2198 = vmatprep.subr.bf16.mxu0 0
          %2199 = vmatpush1.bf16.xpose.msra.mxu0 0
          %2200 = vmatprep.subr.bf16.mxu0 0
          %2201 = vmatpush1.bf16.xpose.msra.mxu0 0
          %2202 = vmatprep.subr.bf16.mxu0 0
          %2203 = vmatpush1.bf16.xpose.msra.mxu0 0
          %2204 = vmatprep.subr.bf16.mxu0 0
          %2205 = vmatpush1.bf16.xpose.msra.mxu0 0
          %2206 = vmatprep.subr.bf16.mxu0 0
          %2207 = vmatpush1.bf16.xpose.msra.mxu0 0
          %2208 = vmatprep.subr.bf16.mxu0 0
          %2209 = vmatpush1.bf16.xpose.msra.mxu0 0
          %2210 = vmatprep.subr.bf16.mxu0 0
          %2211 = vmatpush1.bf16.xpose.msra.mxu0 0
          %2212 = vmatprep.subr.bf16.mxu0 0
          %2213 = vmatpush1.bf16.xpose.msra.mxu0 0
          %2214 = vmatprep.mubr.bf16.mxu0 0
          %2215 = vmatmul.mubr.bf16.gmra.mrb[0].mxu0 %v1829
          %v2216 = vpop.f32.mrb[0].mxu0
          %v2217 = vadd.f32 0.0, %v2216
          %v2218 = vpop.f32.mrb[0].mxu0
          %v2219 = vpop.f32.mrb[0].mxu0
          %v2220 = vadd.f32 0.0, %v2219
          %v2221 = vpop.f32.mrb[0].mxu0
          %2222 = vmatprep.mubr.bf16.mxu0 0
          %2223 = vmatmul.mubr.bf16.gmra.mrb[0].mxu0 %v1830
          %v2224 = vpop.f32.mrb[0].mxu0
          %v2225 = vadd.f32 0.0, %v2224
          %v2226 = vpop.f32.mrb[0].mxu0
          %v2227 = vpop.f32.mrb[0].mxu0
          %v2228 = vadd.f32 0.0, %v2227
          %v2229 = vpop.f32.mrb[0].mxu0
          %2230 = vmatprep.mubr.bf16.mxu0 0
          %2231 = vmatmul.mubr.bf16.gmra.mrb[0].mxu0 %v1831
          %v2232 = vpop.f32.mrb[0].mxu0
          %v2233 = vadd.f32 0.0, %v2232
          %v2234 = vpop.f32.mrb[0].mxu0
          %v2235 = vpop.f32.mrb[0].mxu0
          %v2236 = vadd.f32 0.0, %v2235
          %v2237 = vpop.f32.mrb[0].mxu0
          %2238 = vmatprep.mubr.bf16.mxu0 0
          %2239 = vmatmul.mubr.bf16.gmra.mrb[0].mxu0 %v1832
          %v2240 = vpop.f32.mrb[0].mxu0
          %v2241 = vadd.f32 0.0, %v2240
          %v2242 = vpop.f32.mrb[0].mxu0
          %v2243 = vpop.f32.mrb[0].mxu0
          %v2244 = vadd.f32 0.0, %v2243
          %v2245 = vpop.f32.mrb[0].mxu0
          %2246 = vmatprep.mubr.bf16.mxu0 0
          %2247 = vmatmul.mubr.bf16.gmra.mrb[0].mxu0 %v1833
          %v2248 = vpop.f32.mrb[0].mxu0
          %v2249 = vadd.f32 0.0, %v2248
          %v2250 = vpop.f32.mrb[0].mxu0
          %v2251 = vpop.f32.mrb[0].mxu0
          %v2252 = vadd.f32 0.0, %v2251
          %v2253 = vpop.f32.mrb[0].mxu0
          %2254 = vmatprep.mubr.bf16.mxu0 0
          %2255 = vmatmul.mubr.bf16.gmra.mrb[0].mxu0 %v1834
          %v2256 = vpop.f32.mrb[0].mxu0
          %v2257 = vadd.f32 0.0, %v2256
          %v2258 = vpop.f32.mrb[0].mxu0
          %v2259 = vpop.f32.mrb[0].mxu0
          %v2260 = vadd.f32 0.0, %v2259
          %v2261 = vpop.f32.mrb[0].mxu0
          %2262 = vmatprep.mubr.bf16.mxu0 0
          %2263 = vmatmul.mubr.bf16.gmra.mrb[0].mxu0 %v1835
          %v2264 = vpop.f32.mrb[0].mxu0
          %v2265 = vadd.f32 0.0, %v2264
          %v2266 = vpop.f32.mrb[0].mxu0
          %v2267 = vpop.f32.mrb[0].mxu0
          %v2268 = vadd.f32 0.0, %v2267
          %v2269 = vpop.f32.mrb[0].mxu0
          %2270 = vmatprep.mubr.bf16.mxu0 0
          %2271 = vmatmul.mubr.bf16.gmra.mrb[0].mxu0 %v1836
          %v2272 = vpop.f32.mrb[0].mxu0
          %v2273 = vadd.f32 0.0, %v2272
          %v2274 = vpop.f32.mrb[0].mxu0
          %v2275 = vpop.f32.mrb[0].mxu0
          %v2276 = vadd.f32 0.0, %v2275
          %v2277 = vpop.f32.mrb[0].mxu0
          %2278 = vdwg.mxu0
          %v2279 = vmul.f32 %v2120, 0.0625
          %v2280 = vmul.f32 %v2123, 0.0625
          %v2281 = vmul.f32 %v2128, 0.0625
          %v2282 = vmul.f32 %v2131, 0.0625
          %v2283 = vmul.f32 %v2136, 0.0625
          %v2284 = vmul.f32 %v2139, 0.0625
          %v2285 = vmul.f32 %v2144, 0.0625
          %v2286 = vmul.f32 %v2147, 0.0625
          %v2287 = vmul.f32 %v2152, 0.0625
          %v2288 = vmul.f32 %v2155, 0.0625
          %v2289 = vmul.f32 %v2160, 0.0625
          %v2290 = vmul.f32 %v2163, 0.0625
          %v2291 = vmul.f32 %v2168, 0.0625
          %v2292 = vmul.f32 %v2171, 0.0625
          %v2293 = vmul.f32 %v2176, 0.0625
          %v2294 = vmul.f32 %v2179, 0.0625
          %v2295 = vmul.f32 %v2217, 0.0625
          %v2296 = vmul.f32 %v2220, 0.0625
          %v2297 = vmul.f32 %v2225, 0.0625
          %v2298 = vmul.f32 %v2228, 0.0625
          %v2299 = vmul.f32 %v2233, 0.0625
          %v2300 = vmul.f32 %v2236, 0.0625
          %v2301 = vmul.f32 %v2241, 0.0625
          %v2302 = vmul.f32 %v2244, 0.0625
          %v2303 = vmul.f32 %v2249, 0.0625
          %v2304 = vmul.f32 %v2252, 0.0625
          %v2305 = vmul.f32 %v2257, 0.0625
          %v2306 = vmul.f32 %v2260, 0.0625
          %v2307 = vmul.f32 %v2265, 0.0625
          %v2308 = vmul.f32 %v2268, 0.0625
          %v2309 = vmul.f32 %v2273, 0.0625
          %v2310 = vmul.f32 %v2276, 0.0625
          %v2311 = vstv %s2046
          %v2312 = vadd.s32 %v2311, %v1942
          %vm2313 = vcmp.ge.s32.totalorder %v1925, %v2312
          %vm2314 = vcmp.ge.s32.totalorder %v1926, %v2312
          %vm2315 = vcmp.ge.s32.totalorder %v1927, %v2312
          %vm2316 = vcmp.ge.s32.totalorder %v1928, %v2312
          %vm2317 = vcmp.ge.s32.totalorder %v1929, %v2312
          %vm2318 = vcmp.ge.s32.totalorder %v1930, %v2312
          %vm2319 = vcmp.ge.s32.totalorder %v1931, %v2312
          %vm2320 = vcmp.ge.s32.totalorder %v1932, %v2312
          %vm2321 = vcmp.ge.s32.totalorder %v1933, %v2312
          %vm2322 = vcmp.ge.s32.totalorder %v1934, %v2312
          %vm2323 = vcmp.ge.s32.totalorder %v1935, %v2312
          %vm2324 = vcmp.ge.s32.totalorder %v1936, %v2312
          %vm2325 = vcmp.ge.s32.totalorder %v1937, %v2312
          %vm2326 = vcmp.ge.s32.totalorder %v1938, %v2312
          %vm2327 = vcmp.ge.s32.totalorder %v1939, %v2312
          %vm2328 = vcmp.ge.s32.totalorder %v1940, %v2312
          %v2329 = vsel %vm2313, 1, 0
          %v2330 = vsel %vm2314, 1, 0
          %v2331 = vsel %vm2315, 1, 0
          %v2332 = vsel %vm2316, 1, 0
          %v2333 = vsel %vm2317, 1, 0
          %v2334 = vsel %vm2318, 1, 0
          %v2335 = vsel %vm2319, 1, 0
          %v2336 = vsel %vm2320, 1, 0
          %v2337 = vsel %vm2321, 1, 0
          %v2338 = vsel %vm2322, 1, 0
          %v2339 = vsel %vm2323, 1, 0
          %v2340 = vsel %vm2324, 1, 0
          %v2341 = vsel %vm2325, 1, 0
          %v2342 = vsel %vm2326, 1, 0
          %v2343 = vsel %vm2327, 1, 0
          %v2344 = vsel %vm2328, 1, 0
          %vm2345 = vcmp.eq.s32.totalorder %v2329, 1
          %vm2346 = vcmp.eq.s32.totalorder %v2330, 1
          %vm2347 = vcmp.eq.s32.totalorder %v2331, 1
          %vm2348 = vcmp.eq.s32.totalorder %v2332, 1
          %vm2349 = vcmp.eq.s32.totalorder %v2333, 1
          %vm2350 = vcmp.eq.s32.totalorder %v2334, 1
          %vm2351 = vcmp.eq.s32.totalorder %v2335, 1
          %vm2352 = vcmp.eq.s32.totalorder %v2336, 1
          %vm2353 = vcmp.eq.s32.totalorder %v2337, 1
          %vm2354 = vcmp.eq.s32.totalorder %v2338, 1
          %vm2355 = vcmp.eq.s32.totalorder %v2339, 1
          %vm2356 = vcmp.eq.s32.totalorder %v2340, 1
          %vm2357 = vcmp.eq.s32.totalorder %v2341, 1
          %vm2358 = vcmp.eq.s32.totalorder %v2342, 1
          %vm2359 = vcmp.eq.s32.totalorder %v2343, 1
          %vm2360 = vcmp.eq.s32.totalorder %v2344, 1
          %v2361 = vsel %vm2345, %v2279, -inf
          %v2362 = vsel %vm2346, %v2280, -inf
          %v2363 = vsel %vm2347, %v2281, -inf
          %v2364 = vsel %vm2348, %v2282, -inf
          %v2365 = vsel %vm2349, %v2283, -inf
          %v2366 = vsel %vm2350, %v2284, -inf
          %v2367 = vsel %vm2351, %v2285, -inf
          %v2368 = vsel %vm2352, %v2286, -inf
          %v2369 = vsel %vm2353, %v2287, -inf
          %v2370 = vsel %vm2354, %v2288, -inf
          %v2371 = vsel %vm2355, %v2289, -inf
          %v2372 = vsel %vm2356, %v2290, -inf
          %v2373 = vsel %vm2357, %v2291, -inf
          %v2374 = vsel %vm2358, %v2292, -inf
          %v2375 = vsel %vm2359, %v2293, -inf
          %v2376 = vsel %vm2360, %v2294, -inf
          %v2377 = vsel %vm2345, %v2295, -inf
          %v2378 = vsel %vm2346, %v2296, -inf
          %v2379 = vsel %vm2347, %v2297, -inf
          %v2380 = vsel %vm2348, %v2298, -inf
          %v2381 = vsel %vm2349, %v2299, -inf
          %v2382 = vsel %vm2350, %v2300, -inf
          %v2383 = vsel %vm2351, %v2301, -inf
          %v2384 = vsel %vm2352, %v2302, -inf
          %v2385 = vsel %vm2353, %v2303, -inf
          %v2386 = vsel %vm2354, %v2304, -inf
          %v2387 = vsel %vm2355, %v2305, -inf
          %v2388 = vsel %vm2356, %v2306, -inf
          %v2389 = vsel %vm2357, %v2307, -inf
          %v2390 = vsel %vm2358, %v2308, -inf
          %v2391 = vsel %vm2359, %v2309, -inf
          %v2392 = vsel %vm2360, %v2310, -inf
          %2393 = vmax.xlane.f32.xlu0 %v2361
          %v2394 = vpop.xlane.xlu0 %2393
          %2395 = vmax.xlane.f32.xlu0 %v2362
          %v2396 = vpop.xlane.xlu0 %2395
          %2397 = vmax.xlane.f32.xlu0 %v2363
          %v2398 = vpop.xlane.xlu0 %2397
          %2399 = vmax.xlane.f32.xlu0 %v2364
          %v2400 = vpop.xlane.xlu0 %2399
          %2401 = vmax.xlane.f32.xlu0 %v2365
          %v2402 = vpop.xlane.xlu0 %2401
          %2403 = vmax.xlane.f32.xlu0 %v2366
          %v2404 = vpop.xlane.xlu0 %2403
          %2405 = vmax.xlane.f32.xlu0 %v2367
          %v2406 = vpop.xlane.xlu0 %2405
          %2407 = vmax.xlane.f32.xlu0 %v2368
          %v2408 = vpop.xlane.xlu0 %2407
          %2409 = vmax.xlane.f32.xlu0 %v2369
          %v2410 = vpop.xlane.xlu0 %2409
          %2411 = vmax.xlane.f32.xlu0 %v2370
          %v2412 = vpop.xlane.xlu0 %2411
          %2413 = vmax.xlane.f32.xlu0 %v2371
          %v2414 = vpop.xlane.xlu0 %2413
          %2415 = vmax.xlane.f32.xlu0 %v2372
          %v2416 = vpop.xlane.xlu0 %2415
          %2417 = vmax.xlane.f32.xlu0 %v2373
          %v2418 = vpop.xlane.xlu0 %2417
          %2419 = vmax.xlane.f32.xlu0 %v2374
          %v2420 = vpop.xlane.xlu0 %2419
          %2421 = vmax.xlane.f32.xlu0 %v2375
          %v2422 = vpop.xlane.xlu0 %2421
          %2423 = vmax.xlane.f32.xlu0 %v2376
          %v2424 = vpop.xlane.xlu0 %2423
          %2425 = vmax.xlane.f32.xlu0 %v2377
          %v2426 = vpop.xlane.xlu0 %2425
          %2427 = vmax.xlane.f32.xlu0 %v2378
          %v2428 = vpop.xlane.xlu0 %2427
          %2429 = vmax.xlane.f32.xlu0 %v2379
          %v2430 = vpop.xlane.xlu0 %2429
          %2431 = vmax.xlane.f32.xlu0 %v2380
          %v2432 = vpop.xlane.xlu0 %2431
          %2433 = vmax.xlane.f32.xlu0 %v2381
          %v2434 = vpop.xlane.xlu0 %2433
          %2435 = vmax.xlane.f32.xlu0 %v2382
          %v2436 = vpop.xlane.xlu0 %2435
          %2437 = vmax.xlane.f32.xlu0 %v2383
          %v2438 = vpop.xlane.xlu0 %2437
          %2439 = vmax.xlane.f32.xlu0 %v2384
          %v2440 = vpop.xlane.xlu0 %2439
          %2441 = vmax.xlane.f32.xlu0 %v2385
          %v2442 = vpop.xlane.xlu0 %2441
          %2443 = vmax.xlane.f32.xlu0 %v2386
          %v2444 = vpop.xlane.xlu0 %2443
          %2445 = vmax.xlane.f32.xlu0 %v2387
          %v2446 = vpop.xlane.xlu0 %2445
          %2447 = vmax.xlane.f32.xlu0 %v2388
          %v2448 = vpop.xlane.xlu0 %2447
          %2449 = vmax.xlane.f32.xlu0 %v2389
          %v2450 = vpop.xlane.xlu0 %2449
          %2451 = vmax.xlane.f32.xlu0 %v2390
          %v2452 = vpop.xlane.xlu0 %2451
          %2453 = vmax.xlane.f32.xlu0 %v2391
          %v2454 = vpop.xlane.xlu0 %2453
          %2455 = vmax.xlane.f32.xlu0 %v2392
          %v2456 = vpop.xlane.xlu0 %2455
          %v2457 = vmax.f32 %v1950, %v2394
          %v2458 = vmax.f32 %v1951, %v2396
          %v2459 = vmax.f32 %v1952, %v2398
          %v2460 = vmax.f32 %v1953, %v2400
          %v2461 = vmax.f32 %v1954, %v2402
          %v2462 = vmax.f32 %v1955, %v2404
          %v2463 = vmax.f32 %v1956, %v2406
          %v2464 = vmax.f32 %v1957, %v2408
          %v2465 = vmax.f32 %v1958, %v2410
          %v2466 = vmax.f32 %v1959, %v2412
          %v2467 = vmax.f32 %v1960, %v2414
          %v2468 = vmax.f32 %v1961, %v2416
          %v2469 = vmax.f32 %v1962, %v2418
          %v2470 = vmax.f32 %v1963, %v2420
          %v2471 = vmax.f32 %v1964, %v2422
          %v2472 = vmax.f32 %v1965, %v2424
          %v2473 = vmax.f32 %v1966, %v2426
          %v2474 = vmax.f32 %v1967, %v2428
          %v2475 = vmax.f32 %v1968, %v2430
          %v2476 = vmax.f32 %v1969, %v2432
          %v2477 = vmax.f32 %v1970, %v2434
          %v2478 = vmax.f32 %v1971, %v2436
          %v2479 = vmax.f32 %v1972, %v2438
          %v2480 = vmax.f32 %v1973, %v2440
          %v2481 = vmax.f32 %v1974, %v2442
          %v2482 = vmax.f32 %v1975, %v2444
          %v2483 = vmax.f32 %v1976, %v2446
          %v2484 = vmax.f32 %v1977, %v2448
          %v2485 = vmax.f32 %v1978, %v2450
          %v2486 = vmax.f32 %v1979, %v2452
          %v2487 = vmax.f32 %v1980, %v2454
          %v2488 = vmax.f32 %v1981, %v2456
          %v2489 = vsub.f32 %v1950, %v2457
          %v2490 = vsub.f32 %v1951, %v2458
          %v2491 = vsub.f32 %v1952, %v2459
          %v2492 = vsub.f32 %v1953, %v2460
          %v2493 = vsub.f32 %v1954, %v2461
          %v2494 = vsub.f32 %v1955, %v2462
          %v2495 = vsub.f32 %v1956, %v2463
          %v2496 = vsub.f32 %v1957, %v2464
          %v2497 = vsub.f32 %v1958, %v2465
          %v2498 = vsub.f32 %v1959, %v2466
          %v2499 = vsub.f32 %v1960, %v2467
          %v2500 = vsub.f32 %v1961, %v2468
          %v2501 = vsub.f32 %v1962, %v2469
          %v2502 = vsub.f32 %v1963, %v2470
          %v2503 = vsub.f32 %v1964, %v2471
          %v2504 = vsub.f32 %v1965, %v2472
          %v2505 = vsub.f32 %v1966, %v2473
          %v2506 = vsub.f32 %v1967, %v2474
          %v2507 = vsub.f32 %v1968, %v2475
          %v2508 = vsub.f32 %v1969, %v2476
          %v2509 = vsub.f32 %v1970, %v2477
          %v2510 = vsub.f32 %v1971, %v2478
          %v2511 = vsub.f32 %v1972, %v2479
          %v2512 = vsub.f32 %v1973, %v2480
          %v2513 = vsub.f32 %v1974, %v2481
          %v2514 = vsub.f32 %v1975, %v2482
          %v2515 = vsub.f32 %v1976, %v2483
          %v2516 = vsub.f32 %v1977, %v2484
          %v2517 = vsub.f32 %v1978, %v2485
          %v2518 = vsub.f32 %v1979, %v2486
          %v2519 = vsub.f32 %v1980, %v2487
          %v2520 = vsub.f32 %v1981, %v2488
          %v2521 = vmul.f32 %v2489, 1.442695
          %v2522 = vpow.pop %v2521
          %v2523 = vmul.f32 %v2490, 1.442695
          %v2524 = vpow.pop %v2523
          %v2525 = vmul.f32 %v2491, 1.442695
          %v2526 = vpow.pop %v2525
          %v2527 = vmul.f32 %v2492, 1.442695
          %v2528 = vpow.pop %v2527
          %v2529 = vmul.f32 %v2493, 1.442695
          %v2530 = vpow.pop %v2529
          %v2531 = vmul.f32 %v2494, 1.442695
          %v2532 = vpow.pop %v2531
          %v2533 = vmul.f32 %v2495, 1.442695
          %v2534 = vpow.pop %v2533
          %v2535 = vmul.f32 %v2496, 1.442695
          %v2536 = vpow.pop %v2535
          %v2537 = vmul.f32 %v2497, 1.442695
          %v2538 = vpow.pop %v2537
          %v2539 = vmul.f32 %v2498, 1.442695
          %v2540 = vpow.pop %v2539
          %v2541 = vmul.f32 %v2499, 1.442695
          %v2542 = vpow.pop %v2541
          %v2543 = vmul.f32 %v2500, 1.442695
          %v2544 = vpow.pop %v2543
          %v2545 = vmul.f32 %v2501, 1.442695
          %v2546 = vpow.pop %v2545
          %v2547 = vmul.f32 %v2502, 1.442695
          %v2548 = vpow.pop %v2547
          %v2549 = vmul.f32 %v2503, 1.442695
          %v2550 = vpow.pop %v2549
          %v2551 = vmul.f32 %v2504, 1.442695
          %v2552 = vpow.pop %v2551
          %v2553 = vmul.f32 %v2505, 1.442695
          %v2554 = vpow.pop %v2553
          %v2555 = vmul.f32 %v2506, 1.442695
          %v2556 = vpow.pop %v2555
          %v2557 = vmul.f32 %v2507, 1.442695
          %v2558 = vpow.pop %v2557
          %v2559 = vmul.f32 %v2508, 1.442695
          %v2560 = vpow.pop %v2559
          %v2561 = vmul.f32 %v2509, 1.442695
          %v2562 = vpow.pop %v2561
          %v2563 = vmul.f32 %v2510, 1.442695
          %v2564 = vpow.pop %v2563
          %v2565 = vmul.f32 %v2511, 1.442695
          %v2566 = vpow.pop %v2565
          %v2567 = vmul.f32 %v2512, 1.442695
          %v2568 = vpow.pop %v2567
          %v2569 = vmul.f32 %v2513, 1.442695
          %v2570 = vpow.pop %v2569
          %v2571 = vmul.f32 %v2514, 1.442695
          %v2572 = vpow.pop %v2571
          %v2573 = vmul.f32 %v2515, 1.442695
          %v2574 = vpow.pop %v2573
          %v2575 = vmul.f32 %v2516, 1.442695
          %v2576 = vpow.pop %v2575
          %v2577 = vmul.f32 %v2517, 1.442695
          %v2578 = vpow.pop %v2577
          %v2579 = vmul.f32 %v2518, 1.442695
          %v2580 = vpow.pop %v2579
          %v2581 = vmul.f32 %v2519, 1.442695
          %v2582 = vpow.pop %v2581
          %v2583 = vmul.f32 %v2520, 1.442695
          %v2584 = vpow.pop %v2583
          %v2585 = vsub.f32 %v2361, %v2457
          %v2586 = vsub.f32 %v2362, %v2458
          %v2587 = vsub.f32 %v2363, %v2459
          %v2588 = vsub.f32 %v2364, %v2460
          %v2589 = vsub.f32 %v2365, %v2461
          %v2590 = vsub.f32 %v2366, %v2462
          %v2591 = vsub.f32 %v2367, %v2463
          %v2592 = vsub.f32 %v2368, %v2464
          %v2593 = vsub.f32 %v2369, %v2465
          %v2594 = vsub.f32 %v2370, %v2466
          %v2595 = vsub.f32 %v2371, %v2467
          %v2596 = vsub.f32 %v2372, %v2468
          %v2597 = vsub.f32 %v2373, %v2469
          %v2598 = vsub.f32 %v2374, %v2470
          %v2599 = vsub.f32 %v2375, %v2471
          %v2600 = vsub.f32 %v2376, %v2472
          %v2601 = vsub.f32 %v2377, %v2473
          %v2602 = vsub.f32 %v2378, %v2474
          %v2603 = vsub.f32 %v2379, %v2475
          %v2604 = vsub.f32 %v2380, %v2476
          %v2605 = vsub.f32 %v2381, %v2477
          %v2606 = vsub.f32 %v2382, %v2478
          %v2607 = vsub.f32 %v2383, %v2479
          %v2608 = vsub.f32 %v2384, %v2480
          %v2609 = vsub.f32 %v2385, %v2481
          %v2610 = vsub.f32 %v2386, %v2482
          %v2611 = vsub.f32 %v2387, %v2483
          %v2612 = vsub.f32 %v2388, %v2484
          %v2613 = vsub.f32 %v2389, %v2485
          %v2614 = vsub.f32 %v2390, %v2486
          %v2615 = vsub.f32 %v2391, %v2487
          %v2616 = vsub.f32 %v2392, %v2488
          %v2617 = vmul.f32 %v2585, 1.442695
          %v2618 = vpow.pop %v2617
          %v2619 = vmul.f32 %v2586, 1.442695
          %v2620 = vpow.pop %v2619
          %v2621 = vmul.f32 %v2587, 1.442695
          %v2622 = vpow.pop %v2621
          %v2623 = vmul.f32 %v2588, 1.442695
          %v2624 = vpow.pop %v2623
          %v2625 = vmul.f32 %v2589, 1.442695
          %v2626 = vpow.pop %v2625
          %v2627 = vmul.f32 %v2590, 1.442695
          %v2628 = vpow.pop %v2627
          %v2629 = vmul.f32 %v2591, 1.442695
          %v2630 = vpow.pop %v2629
          %v2631 = vmul.f32 %v2592, 1.442695
          %v2632 = vpow.pop %v2631
          %v2633 = vmul.f32 %v2593, 1.442695
          %v2634 = vpow.pop %v2633
          %v2635 = vmul.f32 %v2594, 1.442695
          %v2636 = vpow.pop %v2635
          %v2637 = vmul.f32 %v2595, 1.442695
          %v2638 = vpow.pop %v2637
          %v2639 = vmul.f32 %v2596, 1.442695
          %v2640 = vpow.pop %v2639
          %v2641 = vmul.f32 %v2597, 1.442695
          %v2642 = vpow.pop %v2641
          %v2643 = vmul.f32 %v2598, 1.442695
          %v2644 = vpow.pop %v2643
          %v2645 = vmul.f32 %v2599, 1.442695
          %v2646 = vpow.pop %v2645
          %v2647 = vmul.f32 %v2600, 1.442695
          %v2648 = vpow.pop %v2647
          %v2649 = vmul.f32 %v2601, 1.442695
          %v2650 = vpow.pop %v2649
          %v2651 = vmul.f32 %v2602, 1.442695
          %v2652 = vpow.pop %v2651
          %v2653 = vmul.f32 %v2603, 1.442695
          %v2654 = vpow.pop %v2653
          %v2655 = vmul.f32 %v2604, 1.442695
          %v2656 = vpow.pop %v2655
          %v2657 = vmul.f32 %v2605, 1.442695
          %v2658 = vpow.pop %v2657
          %v2659 = vmul.f32 %v2606, 1.442695
          %v2660 = vpow.pop %v2659
          %v2661 = vmul.f32 %v2607, 1.442695
          %v2662 = vpow.pop %v2661
          %v2663 = vmul.f32 %v2608, 1.442695
          %v2664 = vpow.pop %v2663
          %v2665 = vmul.f32 %v2609, 1.442695
          %v2666 = vpow.pop %v2665
          %v2667 = vmul.f32 %v2610, 1.442695
          %v2668 = vpow.pop %v2667
          %v2669 = vmul.f32 %v2611, 1.442695
          %v2670 = vpow.pop %v2669
          %v2671 = vmul.f32 %v2612, 1.442695
          %v2672 = vpow.pop %v2671
          %v2673 = vmul.f32 %v2613, 1.442695
          %v2674 = vpow.pop %v2673
          %v2675 = vmul.f32 %v2614, 1.442695
          %v2676 = vpow.pop %v2675
          %v2677 = vmul.f32 %v2615, 1.442695
          %v2678 = vpow.pop %v2677
          %v2679 = vmul.f32 %v2616, 1.442695
          %v2680 = vpow.pop %v2679
          %v2681 = vmul.f32 %v2522, %v1982
          %v2682 = vmul.f32 %v2524, %v1983
          %v2683 = vmul.f32 %v2526, %v1984
          %v2684 = vmul.f32 %v2528, %v1985
          %v2685 = vmul.f32 %v2530, %v1986
          %v2686 = vmul.f32 %v2532, %v1987
          %v2687 = vmul.f32 %v2534, %v1988
          %v2688 = vmul.f32 %v2536, %v1989
          %v2689 = vmul.f32 %v2538, %v1990
          %v2690 = vmul.f32 %v2540, %v1991
          %v2691 = vmul.f32 %v2542, %v1992
          %v2692 = vmul.f32 %v2544, %v1993
          %v2693 = vmul.f32 %v2546, %v1994
          %v2694 = vmul.f32 %v2548, %v1995
          %v2695 = vmul.f32 %v2550, %v1996
          %v2696 = vmul.f32 %v2552, %v1997
          %v2697 = vmul.f32 %v2554, %v1998
          %v2698 = vmul.f32 %v2556, %v1999
          %v2699 = vmul.f32 %v2558, %v2000
          %v2700 = vmul.f32 %v2560, %v2001
          %v2701 = vmul.f32 %v2562, %v2002
          %v2702 = vmul.f32 %v2564, %v2003
          %v2703 = vmul.f32 %v2566, %v2004
          %v2704 = vmul.f32 %v2568, %v2005
          %v2705 = vmul.f32 %v2570, %v2006
          %v2706 = vmul.f32 %v2572, %v2007
          %v2707 = vmul.f32 %v2574, %v2008
          %v2708 = vmul.f32 %v2576, %v2009
          %v2709 = vmul.f32 %v2578, %v2010
          %v2710 = vmul.f32 %v2580, %v2011
          %v2711 = vmul.f32 %v2582, %v2012
          %v2712 = vmul.f32 %v2584, %v2013
          %2713 = vadd.xlane.f32.xlu0 %v2618
          %v2714 = vpop.xlane.xlu0 %2713
          %2715 = vadd.xlane.f32.xlu0 %v2620
          %v2716 = vpop.xlane.xlu0 %2715
          %2717 = vadd.xlane.f32.xlu0 %v2622
          %v2718 = vpop.xlane.xlu0 %2717
          %2719 = vadd.xlane.f32.xlu0 %v2624
          %v2720 = vpop.xlane.xlu0 %2719
          %2721 = vadd.xlane.f32.xlu0 %v2626
          %v2722 = vpop.xlane.xlu0 %2721
          %2723 = vadd.xlane.f32.xlu0 %v2628
          %v2724 = vpop.xlane.xlu0 %2723
          %2725 = vadd.xlane.f32.xlu0 %v2630
          %v2726 = vpop.xlane.xlu0 %2725
          %2727 = vadd.xlane.f32.xlu0 %v2632
          %v2728 = vpop.xlane.xlu0 %2727
          %2729 = vadd.xlane.f32.xlu0 %v2634
          %v2730 = vpop.xlane.xlu0 %2729
          %2731 = vadd.xlane.f32.xlu0 %v2636
          %v2732 = vpop.xlane.xlu0 %2731
          %2733 = vadd.xlane.f32.xlu0 %v2638
          %v2734 = vpop.xlane.xlu0 %2733
          %2735 = vadd.xlane.f32.xlu0 %v2640
          %v2736 = vpop.xlane.xlu0 %2735
          %2737 = vadd.xlane.f32.xlu0 %v2642
          %v2738 = vpop.xlane.xlu0 %2737
          %2739 = vadd.xlane.f32.xlu0 %v2644
          %v2740 = vpop.xlane.xlu0 %2739
          %2741 = vadd.xlane.f32.xlu0 %v2646
          %v2742 = vpop.xlane.xlu0 %2741
          %2743 = vadd.xlane.f32.xlu0 %v2648
          %v2744 = vpop.xlane.xlu0 %2743
          %2745 = vadd.xlane.f32.xlu0 %v2650
          %v2746 = vpop.xlane.xlu0 %2745
          %2747 = vadd.xlane.f32.xlu0 %v2652
          %v2748 = vpop.xlane.xlu0 %2747
          %2749 = vadd.xlane.f32.xlu0 %v2654
          %v2750 = vpop.xlane.xlu0 %2749
          %2751 = vadd.xlane.f32.xlu0 %v2656
          %v2752 = vpop.xlane.xlu0 %2751
          %2753 = vadd.xlane.f32.xlu0 %v2658
          %v2754 = vpop.xlane.xlu0 %2753
          %2755 = vadd.xlane.f32.xlu0 %v2660
          %v2756 = vpop.xlane.xlu0 %2755
          %2757 = vadd.xlane.f32.xlu0 %v2662
          %v2758 = vpop.xlane.xlu0 %2757
          %2759 = vadd.xlane.f32.xlu0 %v2664
          %v2760 = vpop.xlane.xlu0 %2759
          %2761 = vadd.xlane.f32.xlu0 %v2666
          %v2762 = vpop.xlane.xlu0 %2761
          %2763 = vadd.xlane.f32.xlu0 %v2668
          %v2764 = vpop.xlane.xlu0 %2763
          %2765 = vadd.xlane.f32.xlu0 %v2670
          %v2766 = vpop.xlane.xlu0 %2765
          %2767 = vadd.xlane.f32.xlu0 %v2672
          %v2768 = vpop.xlane.xlu0 %2767
          %2769 = vadd.xlane.f32.xlu0 %v2674
          %v2770 = vpop.xlane.xlu0 %2769
          %2771 = vadd.xlane.f32.xlu0 %v2676
          %v2772 = vpop.xlane.xlu0 %2771
          %2773 = vadd.xlane.f32.xlu0 %v2678
          %v2774 = vpop.xlane.xlu0 %2773
          %2775 = vadd.xlane.f32.xlu0 %v2680
          %v2776 = vpop.xlane.xlu0 %2775
          %v2777 = vadd.f32 %v2681, %v2714
          %v2778 = vadd.f32 %v2682, %v2716
          %v2779 = vadd.f32 %v2683, %v2718
          %v2780 = vadd.f32 %v2684, %v2720
          %v2781 = vadd.f32 %v2685, %v2722
          %v2782 = vadd.f32 %v2686, %v2724
          %v2783 = vadd.f32 %v2687, %v2726
          %v2784 = vadd.f32 %v2688, %v2728
          %v2785 = vadd.f32 %v2689, %v2730
          %v2786 = vadd.f32 %v2690, %v2732
          %v2787 = vadd.f32 %v2691, %v2734
          %v2788 = vadd.f32 %v2692, %v2736
          %v2789 = vadd.f32 %v2693, %v2738
          %v2790 = vadd.f32 %v2694, %v2740
          %v2791 = vadd.f32 %v2695, %v2742
          %v2792 = vadd.f32 %v2696, %v2744
          %v2793 = vadd.f32 %v2697, %v2746
          %v2794 = vadd.f32 %v2698, %v2748
          %v2795 = vadd.f32 %v2699, %v2750
          %v2796 = vadd.f32 %v2700, %v2752
          %v2797 = vadd.f32 %v2701, %v2754
          %v2798 = vadd.f32 %v2702, %v2756
          %v2799 = vadd.f32 %v2703, %v2758
          %v2800 = vadd.f32 %v2704, %v2760
          %v2801 = vadd.f32 %v2705, %v2762
          %v2802 = vadd.f32 %v2706, %v2764
          %v2803 = vadd.f32 %v2707, %v2766
          %v2804 = vadd.f32 %v2708, %v2768
          %v2805 = vadd.f32 %v2709, %v2770
          %v2806 = vadd.f32 %v2710, %v2772
          %v2807 = vadd.f32 %v2711, %v2774
          %v2808 = vadd.f32 %v2712, %v2776
          %v2809 = vmul.f32 %v2522, %v2014
          %v2810 = vmul.f32 %v2524, %v2015
          %v2811 = vmul.f32 %v2526, %v2016
          %v2812 = vmul.f32 %v2528, %v2017
          %v2813 = vmul.f32 %v2530, %v2018
          %v2814 = vmul.f32 %v2532, %v2019
          %v2815 = vmul.f32 %v2534, %v2020
          %v2816 = vmul.f32 %v2536, %v2021
          %v2817 = vmul.f32 %v2538, %v2022
          %v2818 = vmul.f32 %v2540, %v2023
          %v2819 = vmul.f32 %v2542, %v2024
          %v2820 = vmul.f32 %v2544, %v2025
          %v2821 = vmul.f32 %v2546, %v2026
          %v2822 = vmul.f32 %v2548, %v2027
          %v2823 = vmul.f32 %v2550, %v2028
          %v2824 = vmul.f32 %v2552, %v2029
          %v2825 = vmul.f32 %v2554, %v2030
          %v2826 = vmul.f32 %v2556, %v2031
          %v2827 = vmul.f32 %v2558, %v2032
          %v2828 = vmul.f32 %v2560, %v2033
          %v2829 = vmul.f32 %v2562, %v2034
          %v2830 = vmul.f32 %v2564, %v2035
          %v2831 = vmul.f32 %v2566, %v2036
          %v2832 = vmul.f32 %v2568, %v2037
          %v2833 = vmul.f32 %v2570, %v2038
          %v2834 = vmul.f32 %v2572, %v2039
          %v2835 = vmul.f32 %v2574, %v2040
          %v2836 = vmul.f32 %v2576, %v2041
          %v2837 = vmul.f32 %v2578, %v2042
          %v2838 = vmul.f32 %v2580, %v2043
          %v2839 = vmul.f32 %v2582, %v2044
          %v2840 = vmul.f32 %v2584, %v2045
          %v2841 = vpack.c.bf16 %v2620, %v2618
          %v2842 = vpack.c.bf16 %v2624, %v2622
          %v2843 = vpack.c.bf16 %v2628, %v2626
          %v2844 = vpack.c.bf16 %v2632, %v2630
          %v2845 = vpack.c.bf16 %v2636, %v2634
          %v2846 = vpack.c.bf16 %v2640, %v2638
          %v2847 = vpack.c.bf16 %v2644, %v2642
          %v2848 = vpack.c.bf16 %v2648, %v2646
          %v2849 = vpack.c.bf16 %v2652, %v2650
          %v2850 = vpack.c.bf16 %v2656, %v2654
          %v2851 = vpack.c.bf16 %v2660, %v2658
          %v2852 = vpack.c.bf16 %v2664, %v2662
          %v2853 = vpack.c.bf16 %v2668, %v2666
          %v2854 = vpack.c.bf16 %v2672, %v2670
          %v2855 = vpack.c.bf16 %v2676, %v2674
          %v2856 = vpack.c.bf16 %v2680, %v2678
          %2857 = vmatprep.subr.bf16.mxu0 0
          %2858 = vmatpush1.bf16.msra.mxu0 %v2069
          %2859 = vmatprep.subr.bf16.mxu0 0
          %2860 = vmatpush1.bf16.msra.mxu0 %v2070
          %2861 = vmatprep.subr.bf16.mxu0 0
          %2862 = vmatpush1.bf16.msra.mxu0 %v2071
          %2863 = vmatprep.subr.bf16.mxu0 0
          %2864 = vmatpush1.bf16.msra.mxu0 %v2072
          %2865 = vmatprep.subr.bf16.mxu0 0
          %2866 = vmatpush1.bf16.msra.mxu0 %v2073
          %2867 = vmatprep.subr.bf16.mxu0 0
          %2868 = vmatpush1.bf16.msra.mxu0 %v2074
          %2869 = vmatprep.subr.bf16.mxu0 0
          %2870 = vmatpush1.bf16.msra.mxu0 %v2075
          %2871 = vmatprep.subr.bf16.mxu0 0
          %2872 = vmatpush1.bf16.msra.mxu0 %v2076
          %2873 = vmatprep.subr.bf16.mxu0 0
          %2874 = vmatpush1.bf16.msra.mxu0 0
          %2875 = vmatprep.subr.bf16.mxu0 0
          %2876 = vmatpush1.bf16.msra.mxu0 0
          %2877 = vmatprep.subr.bf16.mxu0 0
          %2878 = vmatpush1.bf16.msra.mxu0 0
          %2879 = vmatprep.subr.bf16.mxu0 0
          %2880 = vmatpush1.bf16.msra.mxu0 0
          %2881 = vmatprep.subr.bf16.mxu0 0
          %2882 = vmatpush1.bf16.msra.mxu0 0
          %2883 = vmatprep.subr.bf16.mxu0 0
          %2884 = vmatpush1.bf16.msra.mxu0 0
          %2885 = vmatprep.subr.bf16.mxu0 0
          %2886 = vmatpush1.bf16.msra.mxu0 0
          %2887 = vmatprep.subr.bf16.mxu0 0
          %2888 = vmatpush1.bf16.msra.mxu0 0
          %2889 = vmatprep.mubr.bf16.mxu0 0
          %2890 = vmatmul.mubr.bf16.gmra.mrb[0].mxu0 %v2841
          %v2891 = vpop.f32.mrb[0].mxu0
          %v2892 = vadd.f32 0.0, %v2891
          %v2893 = vpop.f32.mrb[0].mxu0
          %v2894 = vpop.f32.mrb[0].mxu0
          %v2895 = vadd.f32 0.0, %v2894
          %v2896 = vpop.f32.mrb[0].mxu0
          %2897 = vmatprep.mubr.bf16.mxu0 0
          %2898 = vmatmul.mubr.bf16.gmra.mrb[0].mxu0 %v2842
          %v2899 = vpop.f32.mrb[0].mxu0
          %v2900 = vadd.f32 0.0, %v2899
          %v2901 = vpop.f32.mrb[0].mxu0
          %v2902 = vpop.f32.mrb[0].mxu0
          %v2903 = vadd.f32 0.0, %v2902
          %v2904 = vpop.f32.mrb[0].mxu0
          %2905 = vmatprep.mubr.bf16.mxu0 0
          %2906 = vmatmul.mubr.bf16.gmra.mrb[0].mxu0 %v2843
          %v2907 = vpop.f32.mrb[0].mxu0
          %v2908 = vadd.f32 0.0, %v2907
          %v2909 = vpop.f32.mrb[0].mxu0
          %v2910 = vpop.f32.mrb[0].mxu0
          %v2911 = vadd.f32 0.0, %v2910
          %v2912 = vpop.f32.mrb[0].mxu0
          %2913 = vmatprep.mubr.bf16.mxu0 0
          %2914 = vmatmul.mubr.bf16.gmra.mrb[0].mxu0 %v2844
          %v2915 = vpop.f32.mrb[0].mxu0
          %v2916 = vadd.f32 0.0, %v2915
          %v2917 = vpop.f32.mrb[0].mxu0
          %v2918 = vpop.f32.mrb[0].mxu0
          %v2919 = vadd.f32 0.0, %v2918
          %v2920 = vpop.f32.mrb[0].mxu0
          %2921 = vmatprep.mubr.bf16.mxu0 0
          %2922 = vmatmul.mubr.bf16.gmra.mrb[0].mxu0 %v2845
          %v2923 = vpop.f32.mrb[0].mxu0
          %v2924 = vadd.f32 0.0, %v2923
          %v2925 = vpop.f32.mrb[0].mxu0
          %v2926 = vpop.f32.mrb[0].mxu0
          %v2927 = vadd.f32 0.0, %v2926
          %v2928 = vpop.f32.mrb[0].mxu0
          %2929 = vmatprep.mubr.bf16.mxu0 0
          %2930 = vmatmul.mubr.bf16.gmra.mrb[0].mxu0 %v2846
          %v2931 = vpop.f32.mrb[0].mxu0
          %v2932 = vadd.f32 0.0, %v2931
          %v2933 = vpop.f32.mrb[0].mxu0
          %v2934 = vpop.f32.mrb[0].mxu0
          %v2935 = vadd.f32 0.0, %v2934
          %v2936 = vpop.f32.mrb[0].mxu0
          %2937 = vmatprep.mubr.bf16.mxu0 0
          %2938 = vmatmul.mubr.bf16.gmra.mrb[0].mxu0 %v2847
          %v2939 = vpop.f32.mrb[0].mxu0
          %v2940 = vadd.f32 0.0, %v2939
          %v2941 = vpop.f32.mrb[0].mxu0
          %v2942 = vpop.f32.mrb[0].mxu0
          %v2943 = vadd.f32 0.0, %v2942
          %v2944 = vpop.f32.mrb[0].mxu0
          %2945 = vmatprep.mubr.bf16.mxu0 0
          %2946 = vmatmul.mubr.bf16.gmra.mrb[0].mxu0 %v2848
          %v2947 = vpop.f32.mrb[0].mxu0
          %v2948 = vadd.f32 0.0, %v2947
          %v2949 = vpop.f32.mrb[0].mxu0
          %v2950 = vpop.f32.mrb[0].mxu0
          %v2951 = vadd.f32 0.0, %v2950
          %v2952 = vpop.f32.mrb[0].mxu0
          %2953 = vdwg.mxu0
          %2954 = vmatprep.subr.bf16.mxu0 0
          %2955 = vmatpush1.bf16.msra.mxu0 %v2077
          %2956 = vmatprep.subr.bf16.mxu0 0
          %2957 = vmatpush1.bf16.msra.mxu0 %v2078
          %2958 = vmatprep.subr.bf16.mxu0 0
          %2959 = vmatpush1.bf16.msra.mxu0 %v2079
          %2960 = vmatprep.subr.bf16.mxu0 0
          %2961 = vmatpush1.bf16.msra.mxu0 %v2080
          %2962 = vmatprep.subr.bf16.mxu0 0
          %2963 = vmatpush1.bf16.msra.mxu0 %v2081
          %2964 = vmatprep.subr.bf16.mxu0 0
          %2965 = vmatpush1.bf16.msra.mxu0 %v2082
          %2966 = vmatprep.subr.bf16.mxu0 0
          %2967 = vmatpush1.bf16.msra.mxu0 %v2083
          %2968 = vmatprep.subr.bf16.mxu0 0
          %2969 = vmatpush1.bf16.msra.mxu0 %v2084
          %2970 = vmatprep.subr.bf16.mxu0 0
          %2971 = vmatpush1.bf16.msra.mxu0 0
          %2972 = vmatprep.subr.bf16.mxu0 0
          %2973 = vmatpush1.bf16.msra.mxu0 0
          %2974 = vmatprep.subr.bf16.mxu0 0
          %2975 = vmatpush1.bf16.msra.mxu0 0
          %2976 = vmatprep.subr.bf16.mxu0 0
          %2977 = vmatpush1.bf16.msra.mxu0 0
          %2978 = vmatprep.subr.bf16.mxu0 0
          %2979 = vmatpush1.bf16.msra.mxu0 0
          %2980 = vmatprep.subr.bf16.mxu0 0
          %2981 = vmatpush1.bf16.msra.mxu0 0
          %2982 = vmatprep.subr.bf16.mxu0 0
          %2983 = vmatpush1.bf16.msra.mxu0 0
          %2984 = vmatprep.subr.bf16.mxu0 0
          %2985 = vmatpush1.bf16.msra.mxu0 0
          %2986 = vmatprep.mubr.bf16.mxu0 0
          %2987 = vmatmul.mubr.bf16.gmra.mrb[0].mxu0 %v2849
          %v2988 = vpop.f32.mrb[0].mxu0
          %v2989 = vadd.f32 0.0, %v2988
          %v2990 = vpop.f32.mrb[0].mxu0
          %v2991 = vpop.f32.mrb[0].mxu0
          %v2992 = vadd.f32 0.0, %v2991
          %v2993 = vpop.f32.mrb[0].mxu0
          %2994 = vmatprep.mubr.bf16.mxu0 0
          %2995 = vmatmul.mubr.bf16.gmra.mrb[0].mxu0 %v2850
          %v2996 = vpop.f32.mrb[0].mxu0
          %v2997 = vadd.f32 0.0, %v2996
          %v2998 = vpop.f32.mrb[0].mxu0
          %v2999 = vpop.f32.mrb[0].mxu0
          %v3000 = vadd.f32 0.0, %v2999
          %v3001 = vpop.f32.mrb[0].mxu0
          %3002 = vmatprep.mubr.bf16.mxu0 0
          %3003 = vmatmul.mubr.bf16.gmra.mrb[0].mxu0 %v2851
          %v3004 = vpop.f32.mrb[0].mxu0
          %v3005 = vadd.f32 0.0, %v3004
          %v3006 = vpop.f32.mrb[0].mxu0
          %v3007 = vpop.f32.mrb[0].mxu0
          %v3008 = vadd.f32 0.0, %v3007
          %v3009 = vpop.f32.mrb[0].mxu0
          %3010 = vmatprep.mubr.bf16.mxu0 0
          %3011 = vmatmul.mubr.bf16.gmra.mrb[0].mxu0 %v2852
          %v3012 = vpop.f32.mrb[0].mxu0
          %v3013 = vadd.f32 0.0, %v3012
          %v3014 = vpop.f32.mrb[0].mxu0
          %v3015 = vpop.f32.mrb[0].mxu0
          %v3016 = vadd.f32 0.0, %v3015
          %v3017 = vpop.f32.mrb[0].mxu0
          %3018 = vmatprep.mubr.bf16.mxu0 0
          %3019 = vmatmul.mubr.bf16.gmra.mrb[0].mxu0 %v2853
          %v3020 = vpop.f32.mrb[0].mxu0
          %v3021 = vadd.f32 0.0, %v3020
          %v3022 = vpop.f32.mrb[0].mxu0
          %v3023 = vpop.f32.mrb[0].mxu0
          %v3024 = vadd.f32 0.0, %v3023
          %v3025 = vpop.f32.mrb[0].mxu0
          %3026 = vmatprep.mubr.bf16.mxu0 0
          %3027 = vmatmul.mubr.bf16.gmra.mrb[0].mxu0 %v2854
          %v3028 = vpop.f32.mrb[0].mxu0
          %v3029 = vadd.f32 0.0, %v3028
          %v3030 = vpop.f32.mrb[0].mxu0
          %v3031 = vpop.f32.mrb[0].mxu0
          %v3032 = vadd.f32 0.0, %v3031
          %v3033 = vpop.f32.mrb[0].mxu0
          %3034 = vmatprep.mubr.bf16.mxu0 0
          %3035 = vmatmul.mubr.bf16.gmra.mrb[0].mxu0 %v2855
          %v3036 = vpop.f32.mrb[0].mxu0
          %v3037 = vadd.f32 0.0, %v3036
          %v3038 = vpop.f32.mrb[0].mxu0
          %v3039 = vpop.f32.mrb[0].mxu0
          %v3040 = vadd.f32 0.0, %v3039
          %v3041 = vpop.f32.mrb[0].mxu0
          %3042 = vmatprep.mubr.bf16.mxu0 0
          %3043 = vmatmul.mubr.bf16.gmra.mrb[0].mxu0 %v2856
          %v3044 = vpop.f32.mrb[0].mxu0
          %v3045 = vadd.f32 0.0, %v3044
          %v3046 = vpop.f32.mrb[0].mxu0
          %v3047 = vpop.f32.mrb[0].mxu0
          %v3048 = vadd.f32 0.0, %v3047
          %v3049 = vpop.f32.mrb[0].mxu0
          %3050 = vdwg.mxu0
          %v3051 = vadd.f32 %v2809, %v2892
          %v3052 = vadd.f32 %v2810, %v2895
          %v3053 = vadd.f32 %v2811, %v2900
          %v3054 = vadd.f32 %v2812, %v2903
          %v3055 = vadd.f32 %v2813, %v2908
          %v3056 = vadd.f32 %v2814, %v2911
          %v3057 = vadd.f32 %v2815, %v2916
          %v3058 = vadd.f32 %v2816, %v2919
          %v3059 = vadd.f32 %v2817, %v2924
          %v3060 = vadd.f32 %v2818, %v2927
          %v3061 = vadd.f32 %v2819, %v2932
          %v3062 = vadd.f32 %v2820, %v2935
          %v3063 = vadd.f32 %v2821, %v2940
          %v3064 = vadd.f32 %v2822, %v2943
          %v3065 = vadd.f32 %v2823, %v2948
          %v3066 = vadd.f32 %v2824, %v2951
          %v3067 = vadd.f32 %v2825, %v2989
          %v3068 = vadd.f32 %v2826, %v2992
          %v3069 = vadd.f32 %v2827, %v2997
          %v3070 = vadd.f32 %v2828, %v3000
          %v3071 = vadd.f32 %v2829, %v3005
          %v3072 = vadd.f32 %v2830, %v3008
          %v3073 = vadd.f32 %v2831, %v3013
          %v3074 = vadd.f32 %v2832, %v3016
          %v3075 = vadd.f32 %v2833, %v3021
          %v3076 = vadd.f32 %v2834, %v3024
          %v3077 = vadd.f32 %v2835, %v3029
          %v3078 = vadd.f32 %v2836, %v3032
          %v3079 = vadd.f32 %v2837, %v3037
          %v3080 = vadd.f32 %v2838, %v3040
          %v3081 = vadd.f32 %v2839, %v3045
          %v3082 = vadd.f32 %v2840, %v3048
        $region93: #{tpu_custom_call.1} parent=67 // loop_footer
          %s1947 = sadd.s32 %s1945, 1
        $region94: #{tpu_custom_call.1} parent=67 // loop_footer_branch
          %1944 = sbr.rel target = $region90
        $region95: #{tpu_custom_call.1} parent=67 // loop_exit
          _
        %v3083 = vrcp.pop %v1982
        %v3084 = vmul.f32 %v2014, %v3083
        %v3085 = vrcp.pop %v1983
        %v3086 = vmul.f32 %v2015, %v3085
        %v3087 = vrcp.pop %v1984
        %v3088 = vmul.f32 %v2016, %v3087
        %v3089 = vrcp.pop %v1985
        %v3090 = vmul.f32 %v2017, %v3089
        %v3091 = vrcp.pop %v1986
        %v3092 = vmul.f32 %v2018, %v3091
        %v3093 = vrcp.pop %v1987
        %v3094 = vmul.f32 %v2019, %v3093
        %v3095 = vrcp.pop %v1988
        %v3096 = vmul.f32 %v2020, %v3095
        %v3097 = vrcp.pop %v1989
        %v3098 = vmul.f32 %v2021, %v3097
        %v3099 = vrcp.pop %v1990
        %v3100 = vmul.f32 %v2022, %v3099
        %v3101 = vrcp.pop %v1991
        %v3102 = vmul.f32 %v2023, %v3101
        %v3103 = vrcp.pop %v1992
        %v3104 = vmul.f32 %v2024, %v3103
        %v3105 = vrcp.pop %v1993
        %v3106 = vmul.f32 %v2025, %v3105
        %v3107 = vrcp.pop %v1994
        %v3108 = vmul.f32 %v2026, %v3107
        %v3109 = vrcp.pop %v1995
        %v3110 = vmul.f32 %v2027, %v3109
        %v3111 = vrcp.pop %v1996
        %v3112 = vmul.f32 %v2028, %v3111
        %v3113 = vrcp.pop %v1997
        %v3114 = vmul.f32 %v2029, %v3113
        %v3115 = vrcp.pop %v1998
        %v3116 = vmul.f32 %v2030, %v3115
        %v3117 = vrcp.pop %v1999
        %v3118 = vmul.f32 %v2031, %v3117
        %v3119 = vrcp.pop %v2000
        %v3120 = vmul.f32 %v2032, %v3119
        %v3121 = vrcp.pop %v2001
        %v3122 = vmul.f32 %v2033, %v3121
        %v3123 = vrcp.pop %v2002
        %v3124 = vmul.f32 %v2034, %v3123
        %v3125 = vrcp.pop %v2003
        %v3126 = vmul.f32 %v2035, %v3125
        %v3127 = vrcp.pop %v2004
        %v3128 = vmul.f32 %v2036, %v3127
        %v3129 = vrcp.pop %v2005
        %v3130 = vmul.f32 %v2037, %v3129
        %v3131 = vrcp.pop %v2006
        %v3132 = vmul.f32 %v2038, %v3131
        %v3133 = vrcp.pop %v2007
        %v3134 = vmul.f32 %v2039, %v3133
        %v3135 = vrcp.pop %v2008
        %v3136 = vmul.f32 %v2040, %v3135
        %v3137 = vrcp.pop %v2009
        %v3138 = vmul.f32 %v2041, %v3137
        %v3139 = vrcp.pop %v2010
        %v3140 = vmul.f32 %v2042, %v3139
        %v3141 = vrcp.pop %v2011
        %v3142 = vmul.f32 %v2043, %v3141
        %v3143 = vrcp.pop %v2012
        %v3144 = vmul.f32 %v2044, %v3143
        %v3145 = vrcp.pop %v2013
        %v3146 = vmul.f32 %v2045, %v3145
        %v3147 = vpack.c.bf16 %v3086, %v3084
        %v3148 = vpack.c.bf16 %v3118, %v3116
        %v3149 = vpack.c.bf16 %v3090, %v3088
        %v3150 = vpack.c.bf16 %v3122, %v3120
        %v3151 = vpack.c.bf16 %v3094, %v3092
        %v3152 = vpack.c.bf16 %v3126, %v3124
        %v3153 = vpack.c.bf16 %v3098, %v3096
        %v3154 = vpack.c.bf16 %v3130, %v3128
        %v3155 = vpack.c.bf16 %v3102, %v3100
        %v3156 = vpack.c.bf16 %v3134, %v3132
        %v3157 = vpack.c.bf16 %v3106, %v3104
        %v3158 = vpack.c.bf16 %v3138, %v3136
        %v3159 = vpack.c.bf16 %v3110, %v3108
        %v3160 = vpack.c.bf16 %v3142, %v3140
        %v3161 = vpack.c.bf16 %v3114, %v3112
        %v3162 = vpack.c.bf16 %v3146, %v3144
        %v3163 = vld [vmem:[#allocation9] sm:$0xff]
        %v3164 = vld [vmem:[#allocation9 + $0x8] sm:$0xff]
        %v3165 = vld [vmem:[#allocation9 + $0x10] sm:$0xff]
        %v3166 = vld [vmem:[#allocation9 + $0x18] sm:$0xff]
        %v3167 = vld [vmem:[#allocation9 + $0x20] sm:$0xff]
        %v3168 = vld [vmem:[#allocation9 + $0x28] sm:$0xff]
        %v3169 = vld [vmem:[#allocation9 + $0x30] sm:$0xff]
        %v3170 = vld [vmem:[#allocation9 + $0x38] sm:$0xff]
        %v3171 = vld [vmem:[#allocation9 + $0x40] sm:$0xff]
        %v3172 = vld [vmem:[#allocation9 + $0x48] sm:$0xff]
        %v3173 = vld [vmem:[#allocation9 + $0x50] sm:$0xff]
        %v3174 = vld [vmem:[#allocation9 + $0x58] sm:$0xff]
        %v3175 = vld [vmem:[#allocation9 + $0x60] sm:$0xff]
        %v3176 = vld [vmem:[#allocation9 + $0x68] sm:$0xff]
        %v3177 = vld [vmem:[#allocation9 + $0x70] sm:$0xff]
        %v3178 = vld [vmem:[#allocation9 + $0x78] sm:$0xff]
        %v3179 = vld [vmem:[#allocation9 + $0x80] sm:$0xff]
        %v3180 = vld [vmem:[#allocation9 + $0x88] sm:$0xff]
        %v3181 = vld [vmem:[#allocation9 + $0x90] sm:$0xff]
        %v3182 = vld [vmem:[#allocation9 + $0x98] sm:$0xff]
        %v3183 = vld [vmem:[#allocation9 + $0xa0] sm:$0xff]
        %v3184 = vld [vmem:[#allocation9 + $0xa8] sm:$0xff]
        %v3185 = vld [vmem:[#allocation9 + $0xb0] sm:$0xff]
        %v3186 = vld [vmem:[#allocation9 + $0xb8] sm:$0xff]
        %v3187 = vld [vmem:[#allocation9 + $0xc0] sm:$0xff]
        %v3188 = vld [vmem:[#allocation9 + $0xc8] sm:$0xff]
        %v3189 = vld [vmem:[#allocation9 + $0xd0] sm:$0xff]
        %v3190 = vld [vmem:[#allocation9 + $0xd8] sm:$0xff]
        %v3191 = vld [vmem:[#allocation9 + $0xe0] sm:$0xff]
        %v3192 = vld [vmem:[#allocation9 + $0xe8] sm:$0xff]
        %v3193 = vld [vmem:[#allocation9 + $0xf0] sm:$0xff]
        %v3194 = vld [vmem:[#allocation9 + $0xf8] sm:$0xff]
        %v3195 = vld [vmem:[%s5] sm:$0x3]
        %v3197 = vlaneseq
        %v3198 = vshrl.u32 %v3197, 7
        %v3199 = vsub.s32 0, %v3198
        %v3200 = vrot.slane %v3195, %v3199
        %v3201 = vlaneseq
        %v3202 = vshrl.u32 %v3201, 7
        %v3203 = vsub.s32 1, %v3202
        %v3204 = vrot.slane %v3195, %v3203
        %v3239 = vunpack.c.l.b16 %v3163
        %v3240 = vunpack.c.h.b16 %v3163
        %v3241 = vunpack.c.l.b16 %v3164
        %v3242 = vunpack.c.h.b16 %v3164
        %v3243 = vunpack.c.l.b16 %v3165
        %v3244 = vunpack.c.h.b16 %v3165
        %v3245 = vunpack.c.l.b16 %v3166
        %v3246 = vunpack.c.h.b16 %v3166
        %v3247 = vunpack.c.l.b16 %v3167
        %v3248 = vunpack.c.h.b16 %v3167
        %v3249 = vunpack.c.l.b16 %v3168
        %v3250 = vunpack.c.h.b16 %v3168
        %v3251 = vunpack.c.l.b16 %v3169
        %v3252 = vunpack.c.h.b16 %v3169
        %v3253 = vunpack.c.l.b16 %v3170
        %v3254 = vunpack.c.h.b16 %v3170
        %v3255 = vunpack.c.l.b16 %v3171
        %v3256 = vunpack.c.h.b16 %v3171
        %v3257 = vunpack.c.l.b16 %v3172
        %v3258 = vunpack.c.h.b16 %v3172
        %v3259 = vunpack.c.l.b16 %v3173
        %v3260 = vunpack.c.h.b16 %v3173
        %v3261 = vunpack.c.l.b16 %v3174
        %v3262 = vunpack.c.h.b16 %v3174
        %v3263 = vunpack.c.l.b16 %v3175
        %v3264 = vunpack.c.h.b16 %v3175
        %v3265 = vunpack.c.l.b16 %v3176
        %v3266 = vunpack.c.h.b16 %v3176
        %v3267 = vunpack.c.l.b16 %v3177
        %v3268 = vunpack.c.h.b16 %v3177
        %v3269 = vunpack.c.l.b16 %v3178
        %v3270 = vunpack.c.h.b16 %v3178
        %v3271 = vunpack.c.l.b16 %v3179
        %v3272 = vunpack.c.h.b16 %v3179
        %v3273 = vunpack.c.l.b16 %v3180
        %v3274 = vunpack.c.h.b16 %v3180
        %v3275 = vunpack.c.l.b16 %v3181
        %v3276 = vunpack.c.h.b16 %v3181
        %v3277 = vunpack.c.l.b16 %v3182
        %v3278 = vunpack.c.h.b16 %v3182
        %v3279 = vunpack.c.l.b16 %v3183
        %v3280 = vunpack.c.h.b16 %v3183
        %v3281 = vunpack.c.l.b16 %v3184
        %v3282 = vunpack.c.h.b16 %v3184
        %v3283 = vunpack.c.l.b16 %v3185
        %v3284 = vunpack.c.h.b16 %v3185
        %v3285 = vunpack.c.l.b16 %v3186
        %v3286 = vunpack.c.h.b16 %v3186
        %v3287 = vunpack.c.l.b16 %v3187
        %v3288 = vunpack.c.h.b16 %v3187
        %v3289 = vunpack.c.l.b16 %v3188
        %v3290 = vunpack.c.h.b16 %v3188
        %v3291 = vunpack.c.l.b16 %v3189
        %v3292 = vunpack.c.h.b16 %v3189
        %v3293 = vunpack.c.l.b16 %v3190
        %v3294 = vunpack.c.h.b16 %v3190
        %v3295 = vunpack.c.l.b16 %v3191
        %v3296 = vunpack.c.h.b16 %v3191
        %v3297 = vunpack.c.l.b16 %v3192
        %v3298 = vunpack.c.h.b16 %v3192
        %v3299 = vunpack.c.l.b16 %v3193
        %v3300 = vunpack.c.h.b16 %v3193
        %v3301 = vunpack.c.l.b16 %v3194
        %v3302 = vunpack.c.h.b16 %v3194
        %v3303 = vpack.c.b16 %v3241, %v3239
        %v3304 = vpack.c.b16 %v3242, %v3240
        %v3305 = vpack.c.b16 %v3245, %v3243
        %v3306 = vpack.c.b16 %v3246, %v3244
        %v3307 = vpack.c.b16 %v3249, %v3247
        %v3308 = vpack.c.b16 %v3250, %v3248
        %v3309 = vpack.c.b16 %v3253, %v3251
        %v3310 = vpack.c.b16 %v3254, %v3252
        %v3311 = vpack.c.b16 %v3257, %v3255
        %v3312 = vpack.c.b16 %v3258, %v3256
        %v3313 = vpack.c.b16 %v3261, %v3259
        %v3314 = vpack.c.b16 %v3262, %v3260
        %v3315 = vpack.c.b16 %v3265, %v3263
        %v3316 = vpack.c.b16 %v3266, %v3264
        %v3317 = vpack.c.b16 %v3269, %v3267
        %v3318 = vpack.c.b16 %v3270, %v3268
        %v3319 = vpack.c.b16 %v3273, %v3271
        %v3320 = vpack.c.b16 %v3274, %v3272
        %v3321 = vpack.c.b16 %v3277, %v3275
        %v3322 = vpack.c.b16 %v3278, %v3276
        %v3323 = vpack.c.b16 %v3281, %v3279
        %v3324 = vpack.c.b16 %v3282, %v3280
        %v3325 = vpack.c.b16 %v3285, %v3283
        %v3326 = vpack.c.b16 %v3286, %v3284
        %v3327 = vpack.c.b16 %v3289, %v3287
        %v3328 = vpack.c.b16 %v3290, %v3288
        %v3329 = vpack.c.b16 %v3293, %v3291
        %v3330 = vpack.c.b16 %v3294, %v3292
        %v3331 = vpack.c.b16 %v3297, %v3295
        %v3332 = vpack.c.b16 %v3298, %v3296
        %v3333 = vpack.c.b16 %v3301, %v3299
        %v3334 = vpack.c.b16 %v3302, %v3300
        %3367 = vmatprep.subr.bf16.mxu0 %v3304
        %3368 = vmatpush1.bf16.msra.mxu0 %v3303
        %3369 = vmatprep.subr.bf16.mxu0 %v3306
        %3370 = vmatpush1.bf16.msra.mxu0 %v3305
        %3371 = vmatprep.subr.bf16.mxu0 %v3308
        %3372 = vmatpush1.bf16.msra.mxu0 %v3307
        %3373 = vmatprep.subr.bf16.mxu0 %v3310
        %3374 = vmatpush1.bf16.msra.mxu0 %v3309
        %3375 = vmatprep.subr.bf16.mxu0 %v3312
        %3376 = vmatpush1.bf16.msra.mxu0 %v3311
        %3377 = vmatprep.subr.bf16.mxu0 %v3314
        %3378 = vmatpush1.bf16.msra.mxu0 %v3313
        %3379 = vmatprep.subr.bf16.mxu0 %v3316
        %3380 = vmatpush1.bf16.msra.mxu0 %v3315
        %3381 = vmatprep.subr.bf16.mxu0 %v3318
        %3382 = vmatpush1.bf16.msra.mxu0 %v3317
        %3383 = vmatprep.subr.bf16.mxu0 %v3320
        %3384 = vmatpush1.bf16.msra.mxu0 %v3319
        %3385 = vmatprep.subr.bf16.mxu0 %v3322
        %3386 = vmatpush1.bf16.msra.mxu0 %v3321
        %3387 = vmatprep.subr.bf16.mxu0 %v3324
        %3388 = vmatpush1.bf16.msra.mxu0 %v3323
        %3389 = vmatprep.subr.bf16.mxu0 %v3326
        %3390 = vmatpush1.bf16.msra.mxu0 %v3325
        %3391 = vmatprep.subr.bf16.mxu0 %v3328
        %3392 = vmatpush1.bf16.msra.mxu0 %v3327
        %3393 = vmatprep.subr.bf16.mxu0 %v3330
        %3394 = vmatpush1.bf16.msra.mxu0 %v3329
        %3395 = vmatprep.subr.bf16.mxu0 %v3332
        %3396 = vmatpush1.bf16.msra.mxu0 %v3331
        %3397 = vmatprep.subr.bf16.mxu0 %v3334
        %3398 = vmatpush1.bf16.msra.mxu0 %v3333
        %3399 = vmatprep.mubr.bf16.mxu0 %v3148
        %3400 = vmatmul.mubr.bf16.gmra.mrb[0].mxu0 %v3147
        %v3401 = vpop.f32.mrb[0].mxu0
        %v3402 = vadd.f32 %v3200, %v3401
        %v3403 = vpop.f32.mrb[0].mxu0
        %v3404 = vadd.f32 %v3204, %v3403
        %v3405 = vpop.f32.mrb[0].mxu0
        %v3406 = vadd.f32 %v3200, %v3405
        %v3407 = vpop.f32.mrb[0].mxu0
        %v3408 = vadd.f32 %v3204, %v3407
        %3409 = vmatprep.mubr.bf16.mxu0 %v3150
        %3410 = vmatmul.mubr.bf16.gmra.mrb[0].mxu0 %v3149
        %v3411 = vpop.f32.mrb[0].mxu0
        %v3412 = vadd.f32 %v3200, %v3411
        %v3413 = vpop.f32.mrb[0].mxu0
        %v3414 = vadd.f32 %v3204, %v3413
        %v3415 = vpop.f32.mrb[0].mxu0
        %v3416 = vadd.f32 %v3200, %v3415
        %v3417 = vpop.f32.mrb[0].mxu0
        %v3418 = vadd.f32 %v3204, %v3417
        %3419 = vmatprep.mubr.bf16.mxu0 %v3152
        %3420 = vmatmul.mubr.bf16.gmra.mrb[0].mxu0 %v3151
        %v3421 = vpop.f32.mrb[0].mxu0
        %v3422 = vadd.f32 %v3200, %v3421
        %v3423 = vpop.f32.mrb[0].mxu0
        %v3424 = vadd.f32 %v3204, %v3423
        %v3425 = vpop.f32.mrb[0].mxu0
        %v3426 = vadd.f32 %v3200, %v3425
        %v3427 = vpop.f32.mrb[0].mxu0
        %v3428 = vadd.f32 %v3204, %v3427
        %3429 = vmatprep.mubr.bf16.mxu0 %v3154
        %3430 = vmatmul.mubr.bf16.gmra.mrb[0].mxu0 %v3153
        %v3431 = vpop.f32.mrb[0].mxu0
        %v3432 = vadd.f32 %v3200, %v3431
        %v3433 = vpop.f32.mrb[0].mxu0
        %v3434 = vadd.f32 %v3204, %v3433
        %v3435 = vpop.f32.mrb[0].mxu0
        %v3436 = vadd.f32 %v3200, %v3435
        %v3437 = vpop.f32.mrb[0].mxu0
        %v3438 = vadd.f32 %v3204, %v3437
        %3439 = vmatprep.mubr.bf16.mxu0 %v3156
        %3440 = vmatmul.mubr.bf16.gmra.mrb[0].mxu0 %v3155
        %v3441 = vpop.f32.mrb[0].mxu0
        %v3442 = vadd.f32 %v3200, %v3441
        %v3443 = vpop.f32.mrb[0].mxu0
        %v3444 = vadd.f32 %v3204, %v3443
        %v3445 = vpop.f32.mrb[0].mxu0
        %v3446 = vadd.f32 %v3200, %v3445
        %v3447 = vpop.f32.mrb[0].mxu0
        %v3448 = vadd.f32 %v3204, %v3447
        %3449 = vmatprep.mubr.bf16.mxu0 %v3158
        %3450 = vmatmul.mubr.bf16.gmra.mrb[0].mxu0 %v3157
        %v3451 = vpop.f32.mrb[0].mxu0
        %v3452 = vadd.f32 %v3200, %v3451
        %v3453 = vpop.f32.mrb[0].mxu0
        %v3454 = vadd.f32 %v3204, %v3453
        %v3455 = vpop.f32.mrb[0].mxu0
        %v3456 = vadd.f32 %v3200, %v3455
        %v3457 = vpop.f32.mrb[0].mxu0
        %v3458 = vadd.f32 %v3204, %v3457
        %3459 = vmatprep.mubr.bf16.mxu0 %v3160
        %3460 = vmatmul.mubr.bf16.gmra.mrb[0].mxu0 %v3159
        %v3461 = vpop.f32.mrb[0].mxu0
        %v3462 = vadd.f32 %v3200, %v3461
        %v3463 = vpop.f32.mrb[0].mxu0
        %v3464 = vadd.f32 %v3204, %v3463
        %v3465 = vpop.f32.mrb[0].mxu0
        %v3466 = vadd.f32 %v3200, %v3465
        %v3467 = vpop.f32.mrb[0].mxu0
        %v3468 = vadd.f32 %v3204, %v3467
        %3469 = vmatprep.mubr.bf16.mxu0 %v3162
        %3470 = vmatmul.mubr.bf16.gmra.mrb[0].mxu0 %v3161
        %v3471 = vpop.f32.mrb[0].mxu0
        %v3472 = vadd.f32 %v3200, %v3471
        %v3473 = vpop.f32.mrb[0].mxu0
        %v3474 = vadd.f32 %v3204, %v3473
        %v3475 = vpop.f32.mrb[0].mxu0
        %v3476 = vadd.f32 %v3200, %v3475
        %v3477 = vpop.f32.mrb[0].mxu0
        %v3478 = vadd.f32 %v3204, %v3477
        %3479 = vdwg.mxu0
        %v3480 = vadd.f32 %v512, %v3402
        %v3481 = vadd.f32 %v513, %v3404
        %v3482 = vadd.f32 %v514, %v3406
        %v3483 = vadd.f32 %v515, %v3408
        %v3484 = vadd.f32 %v516, %v3412
        %v3485 = vadd.f32 %v517, %v3414
        %v3486 = vadd.f32 %v518, %v3416
        %v3487 = vadd.f32 %v519, %v3418
        %v3488 = vadd.f32 %v520, %v3422
        %v3489 = vadd.f32 %v521, %v3424
        %v3490 = vadd.f32 %v522, %v3426
        %v3491 = vadd.f32 %v523, %v3428
        %v3492 = vadd.f32 %v524, %v3432
        %v3493 = vadd.f32 %v525, %v3434
        %v3494 = vadd.f32 %v526, %v3436
        %v3495 = vadd.f32 %v527, %v3438
        %v3496 = vadd.f32 %v528, %v3442
        %v3497 = vadd.f32 %v529, %v3444
        %v3498 = vadd.f32 %v530, %v3446
        %v3499 = vadd.f32 %v531, %v3448
        %v3500 = vadd.f32 %v532, %v3452
        %v3501 = vadd.f32 %v533, %v3454
        %v3502 = vadd.f32 %v534, %v3456
        %v3503 = vadd.f32 %v535, %v3458
        %v3504 = vadd.f32 %v536, %v3462
        %v3505 = vadd.f32 %v537, %v3464
        %v3506 = vadd.f32 %v538, %v3466
        %v3507 = vadd.f32 %v539, %v3468
        %v3508 = vadd.f32 %v540, %v3472
        %v3509 = vadd.f32 %v541, %v3474
        %v3510 = vadd.f32 %v542, %v3476
        %v3511 = vadd.f32 %v543, %v3478
        %v3512 = vld [vmem:[%s6] sm:$0x3]
        %v3513 = vld [vmem:[%s7] sm:$0x3]
        %v3514 = vadd.f32 %v3480, %v3481
        %3515 = vadd.xlane.f32.xlu0 %v3514
        %v3516 = vpop.xlane.xlu0 %3515
        %v3517 = vadd.f32 %v3482, %v3483
        %3518 = vadd.xlane.f32.xlu0 %v3517
        %v3519 = vpop.xlane.xlu0 %3518
        %v3520 = vadd.f32 %v3484, %v3485
        %3521 = vadd.xlane.f32.xlu0 %v3520
        %v3522 = vpop.xlane.xlu0 %3521
        %v3523 = vadd.f32 %v3486, %v3487
        %3524 = vadd.xlane.f32.xlu0 %v3523
        %v3525 = vpop.xlane.xlu0 %3524
        %v3526 = vadd.f32 %v3488, %v3489
        %3527 = vadd.xlane.f32.xlu0 %v3526
        %v3528 = vpop.xlane.xlu0 %3527
        %v3529 = vadd.f32 %v3490, %v3491
        %3530 = vadd.xlane.f32.xlu0 %v3529
        %v3531 = vpop.xlane.xlu0 %3530
        %v3532 = vadd.f32 %v3492, %v3493
        %3533 = vadd.xlane.f32.xlu0 %v3532
        %v3534 = vpop.xlane.xlu0 %3533
        %v3535 = vadd.f32 %v3494, %v3495
        %3536 = vadd.xlane.f32.xlu0 %v3535
        %v3537 = vpop.xlane.xlu0 %3536
        %v3538 = vadd.f32 %v3496, %v3497
        %3539 = vadd.xlane.f32.xlu0 %v3538
        %v3540 = vpop.xlane.xlu0 %3539
        %v3541 = vadd.f32 %v3498, %v3499
        %3542 = vadd.xlane.f32.xlu0 %v3541
        %v3543 = vpop.xlane.xlu0 %3542
        %v3544 = vadd.f32 %v3500, %v3501
        %3545 = vadd.xlane.f32.xlu0 %v3544
        %v3546 = vpop.xlane.xlu0 %3545
        %v3547 = vadd.f32 %v3502, %v3503
        %3548 = vadd.xlane.f32.xlu0 %v3547
        %v3549 = vpop.xlane.xlu0 %3548
        %v3550 = vadd.f32 %v3504, %v3505
        %3551 = vadd.xlane.f32.xlu0 %v3550
        %v3552 = vpop.xlane.xlu0 %3551
        %v3553 = vadd.f32 %v3506, %v3507
        %3554 = vadd.xlane.f32.xlu0 %v3553
        %v3555 = vpop.xlane.xlu0 %3554
        %v3556 = vadd.f32 %v3508, %v3509
        %3557 = vadd.xlane.f32.xlu0 %v3556
        %v3558 = vpop.xlane.xlu0 %3557
        %v3559 = vadd.f32 %v3510, %v3511
        %3560 = vadd.xlane.f32.xlu0 %v3559
        %v3561 = vpop.xlane.xlu0 %3560
        %v3562 = vmul.f32 %v3516, %v594
        %v3563 = vmul.f32 %v3519, %v594
        %v3564 = vmul.f32 %v3522, %v594
        %v3565 = vmul.f32 %v3525, %v594
        %v3566 = vmul.f32 %v3528, %v594
        %v3567 = vmul.f32 %v3531, %v594
        %v3568 = vmul.f32 %v3534, %v594
        %v3569 = vmul.f32 %v3537, %v594
        %v3570 = vmul.f32 %v3540, %v594
        %v3571 = vmul.f32 %v3543, %v594
        %v3572 = vmul.f32 %v3546, %v594
        %v3573 = vmul.f32 %v3549, %v594
        %v3574 = vmul.f32 %v3552, %v594
        %v3575 = vmul.f32 %v3555, %v594
        %v3576 = vmul.f32 %v3558, %v594
        %v3577 = vmul.f32 %v3561, %v594
        %v3578 = vsub.f32 %v3480, %v3562
        %v3579 = vsub.f32 %v3481, %v3562
        %v3580 = vsub.f32 %v3482, %v3563
        %v3581 = vsub.f32 %v3483, %v3563
        %v3582 = vsub.f32 %v3484, %v3564
        %v3583 = vsub.f32 %v3485, %v3564
        %v3584 = vsub.f32 %v3486, %v3565
        %v3585 = vsub.f32 %v3487, %v3565
        %v3586 = vsub.f32 %v3488, %v3566
        %v3587 = vsub.f32 %v3489, %v3566
        %v3588 = vsub.f32 %v3490, %v3567
        %v3589 = vsub.f32 %v3491, %v3567
        %v3590 = vsub.f32 %v3492, %v3568
        %v3591 = vsub.f32 %v3493, %v3568
        %v3592 = vsub.f32 %v3494, %v3569
        %v3593 = vsub.f32 %v3495, %v3569
        %v3594 = vsub.f32 %v3496, %v3570
        %v3595 = vsub.f32 %v3497, %v3570
        %v3596 = vsub.f32 %v3498, %v3571
        %v3597 = vsub.f32 %v3499, %v3571
        %v3598 = vsub.f32 %v3500, %v3572
        %v3599 = vsub.f32 %v3501, %v3572
        %v3600 = vsub.f32 %v3502, %v3573
        %v3601 = vsub.f32 %v3503, %v3573
        %v3602 = vsub.f32 %v3504, %v3574
        %v3603 = vsub.f32 %v3505, %v3574
        %v3604 = vsub.f32 %v3506, %v3575
        %v3605 = vsub.f32 %v3507, %v3575
        %v3606 = vsub.f32 %v3508, %v3576
        %v3607 = vsub.f32 %v3509, %v3576
        %v3608 = vsub.f32 %v3510, %v3577
        %v3609 = vsub.f32 %v3511, %v3577
        %v3610 = vmul.f32 %v3578, %v3578
        %v3611 = vmul.f32 %v3579, %v3579
        %v3612 = vmul.f32 %v3580, %v3580
        %v3613 = vmul.f32 %v3581, %v3581
        %v3614 = vmul.f32 %v3582, %v3582
        %v3615 = vmul.f32 %v3583, %v3583
        %v3616 = vmul.f32 %v3584, %v3584
        %v3617 = vmul.f32 %v3585, %v3585
        %v3618 = vmul.f32 %v3586, %v3586
        %v3619 = vmul.f32 %v3587, %v3587
        %v3620 = vmul.f32 %v3588, %v3588
        %v3621 = vmul.f32 %v3589, %v3589
        %v3622 = vmul.f32 %v3590, %v3590
        %v3623 = vmul.f32 %v3591, %v3591
        %v3624 = vmul.f32 %v3592, %v3592
        %v3625 = vmul.f32 %v3593, %v3593
        %v3626 = vmul.f32 %v3594, %v3594
        %v3627 = vmul.f32 %v3595, %v3595
        %v3628 = vmul.f32 %v3596, %v3596
        %v3629 = vmul.f32 %v3597, %v3597
        %v3630 = vmul.f32 %v3598, %v3598
        %v3631 = vmul.f32 %v3599, %v3599
        %v3632 = vmul.f32 %v3600, %v3600
        %v3633 = vmul.f32 %v3601, %v3601
        %v3634 = vmul.f32 %v3602, %v3602
        %v3635 = vmul.f32 %v3603, %v3603
        %v3636 = vmul.f32 %v3604, %v3604
        %v3637 = vmul.f32 %v3605, %v3605
        %v3638 = vmul.f32 %v3606, %v3606
        %v3639 = vmul.f32 %v3607, %v3607
        %v3640 = vmul.f32 %v3608, %v3608
        %v3641 = vmul.f32 %v3609, %v3609
        %v3642 = vadd.f32 %v3610, %v3611
        %3643 = vadd.xlane.f32.xlu0 %v3642
        %v3644 = vpop.xlane.xlu0 %3643
        %v3645 = vadd.f32 %v3612, %v3613
        %3646 = vadd.xlane.f32.xlu0 %v3645
        %v3647 = vpop.xlane.xlu0 %3646
        %v3648 = vadd.f32 %v3614, %v3615
        %3649 = vadd.xlane.f32.xlu0 %v3648
        %v3650 = vpop.xlane.xlu0 %3649
        %v3651 = vadd.f32 %v3616, %v3617
        %3652 = vadd.xlane.f32.xlu0 %v3651
        %v3653 = vpop.xlane.xlu0 %3652
        %v3654 = vadd.f32 %v3618, %v3619
        %3655 = vadd.xlane.f32.xlu0 %v3654
        %v3656 = vpop.xlane.xlu0 %3655
        %v3657 = vadd.f32 %v3620, %v3621
        %3658 = vadd.xlane.f32.xlu0 %v3657
        %v3659 = vpop.xlane.xlu0 %3658
        %v3660 = vadd.f32 %v3622, %v3623
        %3661 = vadd.xlane.f32.xlu0 %v3660
        %v3662 = vpop.xlane.xlu0 %3661
        %v3663 = vadd.f32 %v3624, %v3625
        %3664 = vadd.xlane.f32.xlu0 %v3663
        %v3665 = vpop.xlane.xlu0 %3664
        %v3666 = vadd.f32 %v3626, %v3627
        %3667 = vadd.xlane.f32.xlu0 %v3666
        %v3668 = vpop.xlane.xlu0 %3667
        %v3669 = vadd.f32 %v3628, %v3629
        %3670 = vadd.xlane.f32.xlu0 %v3669
        %v3671 = vpop.xlane.xlu0 %3670
        %v3672 = vadd.f32 %v3630, %v3631
        %3673 = vadd.xlane.f32.xlu0 %v3672
        %v3674 = vpop.xlane.xlu0 %3673
        %v3675 = vadd.f32 %v3632, %v3633
        %3676 = vadd.xlane.f32.xlu0 %v3675
        %v3677 = vpop.xlane.xlu0 %3676
        %v3678 = vadd.f32 %v3634, %v3635
        %3679 = vadd.xlane.f32.xlu0 %v3678
        %v3680 = vpop.xlane.xlu0 %3679
        %v3681 = vadd.f32 %v3636, %v3637
        %3682 = vadd.xlane.f32.xlu0 %v3681
        %v3683 = vpop.xlane.xlu0 %3682
        %v3684 = vadd.f32 %v3638, %v3639
        %3685 = vadd.xlane.f32.xlu0 %v3684
        %v3686 = vpop.xlane.xlu0 %3685
        %v3687 = vadd.f32 %v3640, %v3641
        %3688 = vadd.xlane.f32.xlu0 %v3687
        %v3689 = vpop.xlane.xlu0 %3688
        %v3690 = vmul.f32 %v3644, %v594
        %v3691 = vmul.f32 %v3647, %v594
        %v3692 = vmul.f32 %v3650, %v594
        %v3693 = vmul.f32 %v3653, %v594
        %v3694 = vmul.f32 %v3656, %v594
        %v3695 = vmul.f32 %v3659, %v594
        %v3696 = vmul.f32 %v3662, %v594
        %v3697 = vmul.f32 %v3665, %v594
        %v3698 = vmul.f32 %v3668, %v594
        %v3699 = vmul.f32 %v3671, %v594
        %v3700 = vmul.f32 %v3674, %v594
        %v3701 = vmul.f32 %v3677, %v594
        %v3702 = vmul.f32 %v3680, %v594
        %v3703 = vmul.f32 %v3683, %v594
        %v3704 = vmul.f32 %v3686, %v594
        %v3705 = vmul.f32 %v3689, %v594
        %v3706 = vadd.f32 %v3690, 1e-05
        %v3707 = vadd.f32 %v3691, 1e-05
        %v3708 = vadd.f32 %v3692, 1e-05
        %v3709 = vadd.f32 %v3693, 1e-05
        %v3710 = vadd.f32 %v3694, 1e-05
        %v3711 = vadd.f32 %v3695, 1e-05
        %v3712 = vadd.f32 %v3696, 1e-05
        %v3713 = vadd.f32 %v3697, 1e-05
        %v3714 = vadd.f32 %v3698, 1e-05
        %v3715 = vadd.f32 %v3699, 1e-05
        %v3716 = vadd.f32 %v3700, 1e-05
        %v3717 = vadd.f32 %v3701, 1e-05
        %v3718 = vadd.f32 %v3702, 1e-05
        %v3719 = vadd.f32 %v3703, 1e-05
        %v3720 = vadd.f32 %v3704, 1e-05
        %v3721 = vadd.f32 %v3705, 1e-05
        %v3722 = vrsqrt.pop %v3706
        %v3723 = vrsqrt.pop %v3707
        %v3724 = vrsqrt.pop %v3708
        %v3725 = vrsqrt.pop %v3709
        %v3726 = vrsqrt.pop %v3710
        %v3727 = vrsqrt.pop %v3711
        %v3728 = vrsqrt.pop %v3712
        %v3729 = vrsqrt.pop %v3713
        %v3730 = vrsqrt.pop %v3714
        %v3731 = vrsqrt.pop %v3715
        %v3732 = vrsqrt.pop %v3716
        %v3733 = vrsqrt.pop %v3717
        %v3734 = vrsqrt.pop %v3718
        %v3735 = vrsqrt.pop %v3719
        %v3736 = vrsqrt.pop %v3720
        %v3737 = vrsqrt.pop %v3721
        %v3738 = vmul.f32 %v3578, %v3722
        %v3739 = vmul.f32 %v3579, %v3722
        %v3740 = vmul.f32 %v3580, %v3723
        %v3741 = vmul.f32 %v3581, %v3723
        %v3742 = vmul.f32 %v3582, %v3724
        %v3743 = vmul.f32 %v3583, %v3724
        %v3744 = vmul.f32 %v3584, %v3725
        %v3745 = vmul.f32 %v3585, %v3725
        %v3746 = vmul.f32 %v3586, %v3726
        %v3747 = vmul.f32 %v3587, %v3726
        %v3748 = vmul.f32 %v3588, %v3727
        %v3749 = vmul.f32 %v3589, %v3727
        %v3750 = vmul.f32 %v3590, %v3728
        %v3751 = vmul.f32 %v3591, %v3728
        %v3752 = vmul.f32 %v3592, %v3729
        %v3753 = vmul.f32 %v3593, %v3729
        %v3754 = vmul.f32 %v3594, %v3730
        %v3755 = vmul.f32 %v3595, %v3730
        %v3756 = vmul.f32 %v3596, %v3731
        %v3757 = vmul.f32 %v3597, %v3731
        %v3758 = vmul.f32 %v3598, %v3732
        %v3759 = vmul.f32 %v3599, %v3732
        %v3760 = vmul.f32 %v3600, %v3733
        %v3761 = vmul.f32 %v3601, %v3733
        %v3762 = vmul.f32 %v3602, %v3734
        %v3763 = vmul.f32 %v3603, %v3734
        %v3764 = vmul.f32 %v3604, %v3735
        %v3765 = vmul.f32 %v3605, %v3735
        %v3766 = vmul.f32 %v3606, %v3736
        %v3767 = vmul.f32 %v3607, %v3736
        %v3768 = vmul.f32 %v3608, %v3737
        %v3769 = vmul.f32 %v3609, %v3737
        %v3771 = vlaneseq
        %v3772 = vshrl.u32 %v3771, 7
        %v3773 = vsub.s32 0, %v3772
        %v3774 = vrot.slane %v3512, %v3773
        %v3775 = vlaneseq
        %v3776 = vshrl.u32 %v3775, 7
        %v3777 = vsub.s32 1, %v3776
        %v3778 = vrot.slane %v3512, %v3777
        %v3781 = vmul.f32 %v3738, %v3774
        %v3782 = vmul.f32 %v3739, %v3778
        %v3783 = vmul.f32 %v3740, %v3774
        %v3784 = vmul.f32 %v3741, %v3778
        %v3785 = vmul.f32 %v3742, %v3774
        %v3786 = vmul.f32 %v3743, %v3778
        %v3787 = vmul.f32 %v3744, %v3774
        %v3788 = vmul.f32 %v3745, %v3778
        %v3789 = vmul.f32 %v3746, %v3774
        %v3790 = vmul.f32 %v3747, %v3778
        %v3791 = vmul.f32 %v3748, %v3774
        %v3792 = vmul.f32 %v3749, %v3778
        %v3793 = vmul.f32 %v3750, %v3774
        %v3794 = vmul.f32 %v3751, %v3778
        %v3795 = vmul.f32 %v3752, %v3774
        %v3796 = vmul.f32 %v3753, %v3778
        %v3797 = vmul.f32 %v3754, %v3774
        %v3798 = vmul.f32 %v3755, %v3778
        %v3799 = vmul.f32 %v3756, %v3774
        %v3800 = vmul.f32 %v3757, %v3778
        %v3801 = vmul.f32 %v3758, %v3774
        %v3802 = vmul.f32 %v3759, %v3778
        %v3803 = vmul.f32 %v3760, %v3774
        %v3804 = vmul.f32 %v3761, %v3778
        %v3805 = vmul.f32 %v3762, %v3774
        %v3806 = vmul.f32 %v3763, %v3778
        %v3807 = vmul.f32 %v3764, %v3774
        %v3808 = vmul.f32 %v3765, %v3778
        %v3809 = vmul.f32 %v3766, %v3774
        %v3810 = vmul.f32 %v3767, %v3778
        %v3811 = vmul.f32 %v3768, %v3774
        %v3812 = vmul.f32 %v3769, %v3778
        %v3814 = vlaneseq
        %v3815 = vshrl.u32 %v3814, 7
        %v3816 = vsub.s32 0, %v3815
        %v3817 = vrot.slane %v3513, %v3816
        %v3818 = vlaneseq
        %v3819 = vshrl.u32 %v3818, 7
        %v3820 = vsub.s32 1, %v3819
        %v3821 = vrot.slane %v3513, %v3820
        %v3824 = vadd.f32 %v3781, %v3817
        %v3825 = vadd.f32 %v3782, %v3821
        %v3826 = vadd.f32 %v3783, %v3817
        %v3827 = vadd.f32 %v3784, %v3821
        %v3828 = vadd.f32 %v3785, %v3817
        %v3829 = vadd.f32 %v3786, %v3821
        %v3830 = vadd.f32 %v3787, %v3817
        %v3831 = vadd.f32 %v3788, %v3821
        %v3832 = vadd.f32 %v3789, %v3817
        %v3833 = vadd.f32 %v3790, %v3821
        %v3834 = vadd.f32 %v3791, %v3817
        %v3835 = vadd.f32 %v3792, %v3821
        %v3836 = vadd.f32 %v3793, %v3817
        %v3837 = vadd.f32 %v3794, %v3821
        %v3838 = vadd.f32 %v3795, %v3817
        %v3839 = vadd.f32 %v3796, %v3821
        %v3840 = vadd.f32 %v3797, %v3817
        %v3841 = vadd.f32 %v3798, %v3821
        %v3842 = vadd.f32 %v3799, %v3817
        %v3843 = vadd.f32 %v3800, %v3821
        %v3844 = vadd.f32 %v3801, %v3817
        %v3845 = vadd.f32 %v3802, %v3821
        %v3846 = vadd.f32 %v3803, %v3817
        %v3847 = vadd.f32 %v3804, %v3821
        %v3848 = vadd.f32 %v3805, %v3817
        %v3849 = vadd.f32 %v3806, %v3821
        %v3850 = vadd.f32 %v3807, %v3817
        %v3851 = vadd.f32 %v3808, %v3821
        %v3852 = vadd.f32 %v3809, %v3817
        %v3853 = vadd.f32 %v3810, %v3821
        %v3854 = vadd.f32 %v3811, %v3817
        %v3855 = vadd.f32 %v3812, %v3821
        %v3856 = vpack.c.bf16 %v3826, %v3824
        %v3857 = vpack.c.bf16 %v3827, %v3825
        %v3858 = vpack.c.bf16 %v3830, %v3828
        %v3859 = vpack.c.bf16 %v3831, %v3829
        %v3860 = vpack.c.bf16 %v3834, %v3832
        %v3861 = vpack.c.bf16 %v3835, %v3833
        %v3862 = vpack.c.bf16 %v3838, %v3836
        %v3863 = vpack.c.bf16 %v3839, %v3837
        %v3864 = vpack.c.bf16 %v3842, %v3840
        %v3865 = vpack.c.bf16 %v3843, %v3841
        %v3866 = vpack.c.bf16 %v3846, %v3844
        %v3867 = vpack.c.bf16 %v3847, %v3845
        %v3868 = vpack.c.bf16 %v3850, %v3848
        %v3869 = vpack.c.bf16 %v3851, %v3849
        %v3870 = vpack.c.bf16 %v3854, %v3852
        %v3871 = vpack.c.bf16 %v3855, %v3853
        %v3872 = vld [vmem:[#allocation10] sm:$0xff]
        %v3873 = vld [vmem:[#allocation10 + $0x8] sm:$0xff]
        %v3874 = vld [vmem:[#allocation10 + $0x10] sm:$0xff]
        %v3875 = vld [vmem:[#allocation10 + $0x18] sm:$0xff]
        %v3876 = vld [vmem:[#allocation10 + $0x20] sm:$0xff]
        %v3877 = vld [vmem:[#allocation10 + $0x28] sm:$0xff]
        %v3878 = vld [vmem:[#allocation10 + $0x30] sm:$0xff]
        %v3879 = vld [vmem:[#allocation10 + $0x38] sm:$0xff]
        %v3880 = vld [vmem:[#allocation10 + $0x40] sm:$0xff]
        %v3881 = vld [vmem:[#allocation10 + $0x48] sm:$0xff]
        %v3882 = vld [vmem:[#allocation10 + $0x50] sm:$0xff]
        %v3883 = vld [vmem:[#allocation10 + $0x58] sm:$0xff]
        %v3884 = vld [vmem:[#allocation10 + $0x60] sm:$0xff]
        %v3885 = vld [vmem:[#allocation10 + $0x68] sm:$0xff]
        %v3886 = vld [vmem:[#allocation10 + $0x70] sm:$0xff]
        %v3887 = vld [vmem:[#allocation10 + $0x78] sm:$0xff]
        %v3888 = vld [vmem:[#allocation10 + $0x80] sm:$0xff]
        %v3889 = vld [vmem:[#allocation10 + $0x88] sm:$0xff]
        %v3890 = vld [vmem:[#allocation10 + $0x90] sm:$0xff]
        %v3891 = vld [vmem:[#allocation10 + $0x98] sm:$0xff]
        %v3892 = vld [vmem:[#allocation10 + $0xa0] sm:$0xff]
        %v3893 = vld [vmem:[#allocation10 + $0xa8] sm:$0xff]
        %v3894 = vld [vmem:[#allocation10 + $0xb0] sm:$0xff]
        %v3895 = vld [vmem:[#allocation10 + $0xb8] sm:$0xff]
        %v3896 = vld [vmem:[#allocation10 + $0xc0] sm:$0xff]
        %v3897 = vld [vmem:[#allocation10 + $0xc8] sm:$0xff]
        %v3898 = vld [vmem:[#allocation10 + $0xd0] sm:$0xff]
        %v3899 = vld [vmem:[#allocation10 + $0xd8] sm:$0xff]
        %v3900 = vld [vmem:[#allocation10 + $0xe0] sm:$0xff]
        %v3901 = vld [vmem:[#allocation10 + $0xe8] sm:$0xff]
        %v3902 = vld [vmem:[#allocation10 + $0xf0] sm:$0xff]
        %v3903 = vld [vmem:[#allocation10 + $0xf8] sm:$0xff]
        %v3904 = vld [vmem:[#allocation10 + $0x100] sm:$0xff]
        %v3905 = vld [vmem:[#allocation10 + $0x108] sm:$0xff]
        %v3906 = vld [vmem:[#allocation10 + $0x110] sm:$0xff]
        %v3907 = vld [vmem:[#allocation10 + $0x118] sm:$0xff]
        %v3908 = vld [vmem:[#allocation10 + $0x120] sm:$0xff]
        %v3909 = vld [vmem:[#allocation10 + $0x128] sm:$0xff]
        %v3910 = vld [vmem:[#allocation10 + $0x130] sm:$0xff]
        %v3911 = vld [vmem:[#allocation10 + $0x138] sm:$0xff]
        %v3912 = vld [vmem:[#allocation10 + $0x140] sm:$0xff]
        %v3913 = vld [vmem:[#allocation10 + $0x148] sm:$0xff]
        %v3914 = vld [vmem:[#allocation10 + $0x150] sm:$0xff]
        %v3915 = vld [vmem:[#allocation10 + $0x158] sm:$0xff]
        %v3916 = vld [vmem:[#allocation10 + $0x160] sm:$0xff]
        %v3917 = vld [vmem:[#allocation10 + $0x168] sm:$0xff]
        %v3918 = vld [vmem:[#allocation10 + $0x170] sm:$0xff]
        %v3919 = vld [vmem:[#allocation10 + $0x178] sm:$0xff]
        %v3920 = vld [vmem:[#allocation10 + $0x180] sm:$0xff]
        %v3921 = vld [vmem:[#allocation10 + $0x188] sm:$0xff]
        %v3922 = vld [vmem:[#allocation10 + $0x190] sm:$0xff]
        %v3923 = vld [vmem:[#allocation10 + $0x198] sm:$0xff]
        %v3924 = vld [vmem:[#allocation10 + $0x1a0] sm:$0xff]
        %v3925 = vld [vmem:[#allocation10 + $0x1a8] sm:$0xff]
        %v3926 = vld [vmem:[#allocation10 + $0x1b0] sm:$0xff]
        %v3927 = vld [vmem:[#allocation10 + $0x1b8] sm:$0xff]
        %v3928 = vld [vmem:[#allocation10 + $0x1c0] sm:$0xff]
        %v3929 = vld [vmem:[#allocation10 + $0x1c8] sm:$0xff]
        %v3930 = vld [vmem:[#allocation10 + $0x1d0] sm:$0xff]
        %v3931 = vld [vmem:[#allocation10 + $0x1d8] sm:$0xff]
        %v3932 = vld [vmem:[#allocation10 + $0x1e0] sm:$0xff]
        %v3933 = vld [vmem:[#allocation10 + $0x1e8] sm:$0xff]
        %v3934 = vld [vmem:[#allocation10 + $0x1f0] sm:$0xff]
        %v3935 = vld [vmem:[#allocation10 + $0x1f8] sm:$0xff]
        %v3936 = vld [vmem:[#allocation10 + $0x200] sm:$0xff]
        %v3937 = vld [vmem:[#allocation10 + $0x208] sm:$0xff]
        %v3938 = vld [vmem:[#allocation10 + $0x210] sm:$0xff]
        %v3939 = vld [vmem:[#allocation10 + $0x218] sm:$0xff]
        %v3940 = vld [vmem:[#allocation10 + $0x220] sm:$0xff]
        %v3941 = vld [vmem:[#allocation10 + $0x228] sm:$0xff]
        %v3942 = vld [vmem:[#allocation10 + $0x230] sm:$0xff]
        %v3943 = vld [vmem:[#allocation10 + $0x238] sm:$0xff]
        %v3944 = vld [vmem:[#allocation10 + $0x240] sm:$0xff]
        %v3945 = vld [vmem:[#allocation10 + $0x248] sm:$0xff]
        %v3946 = vld [vmem:[#allocation10 + $0x250] sm:$0xff]
        %v3947 = vld [vmem:[#allocation10 + $0x258] sm:$0xff]
        %v3948 = vld [vmem:[#allocation10 + $0x260] sm:$0xff]
        %v3949 = vld [vmem:[#allocation10 + $0x268] sm:$0xff]
        %v3950 = vld [vmem:[#allocation10 + $0x270] sm:$0xff]
        %v3951 = vld [vmem:[#allocation10 + $0x278] sm:$0xff]
        %v3952 = vld [vmem:[#allocation10 + $0x280] sm:$0xff]
        %v3953 = vld [vmem:[#allocation10 + $0x288] sm:$0xff]
        %v3954 = vld [vmem:[#allocation10 + $0x290] sm:$0xff]
        %v3955 = vld [vmem:[#allocation10 + $0x298] sm:$0xff]
        %v3956 = vld [vmem:[#allocation10 + $0x2a0] sm:$0xff]
        %v3957 = vld [vmem:[#allocation10 + $0x2a8] sm:$0xff]
        %v3958 = vld [vmem:[#allocation10 + $0x2b0] sm:$0xff]
        %v3959 = vld [vmem:[#allocation10 + $0x2b8] sm:$0xff]
        %v3960 = vld [vmem:[#allocation10 + $0x2c0] sm:$0xff]
        %v3961 = vld [vmem:[#allocation10 + $0x2c8] sm:$0xff]
        %v3962 = vld [vmem:[#allocation10 + $0x2d0] sm:$0xff]
        %v3963 = vld [vmem:[#allocation10 + $0x2d8] sm:$0xff]
        %v3964 = vld [vmem:[#allocation10 + $0x2e0] sm:$0xff]
        %v3965 = vld [vmem:[#allocation10 + $0x2e8] sm:$0xff]
        %v3966 = vld [vmem:[#allocation10 + $0x2f0] sm:$0xff]
        %v3967 = vld [vmem:[#allocation10 + $0x2f8] sm:$0xff]
        %v3968 = vld [vmem:[#allocation10 + $0x300] sm:$0xff]
        %v3969 = vld [vmem:[#allocation10 + $0x308] sm:$0xff]
        %v3970 = vld [vmem:[#allocation10 + $0x310] sm:$0xff]
        %v3971 = vld [vmem:[#allocation10 + $0x318] sm:$0xff]
        %v3972 = vld [vmem:[#allocation10 + $0x320] sm:$0xff]
        %v3973 = vld [vmem:[#allocation10 + $0x328] sm:$0xff]
        %v3974 = vld [vmem:[#allocation10 + $0x330] sm:$0xff]
        %v3975 = vld [vmem:[#allocation10 + $0x338] sm:$0xff]
        %v3976 = vld [vmem:[#allocation10 + $0x340] sm:$0xff]
        %v3977 = vld [vmem:[#allocation10 + $0x348] sm:$0xff]
        %v3978 = vld [vmem:[#allocation10 + $0x350] sm:$0xff]
        %v3979 = vld [vmem:[#allocation10 + $0x358] sm:$0xff]
        %v3980 = vld [vmem:[#allocation10 + $0x360] sm:$0xff]
        %v3981 = vld [vmem:[#allocation10 + $0x368] sm:$0xff]
        %v3982 = vld [vmem:[#allocation10 + $0x370] sm:$0xff]
        %v3983 = vld [vmem:[#allocation10 + $0x378] sm:$0xff]
        %v3984 = vld [vmem:[#allocation10 + $0x380] sm:$0xff]
        %v3985 = vld [vmem:[#allocation10 + $0x388] sm:$0xff]
        %v3986 = vld [vmem:[#allocation10 + $0x390] sm:$0xff]
        %v3987 = vld [vmem:[#allocation10 + $0x398] sm:$0xff]
        %v3988 = vld [vmem:[#allocation10 + $0x3a0] sm:$0xff]
        %v3989 = vld [vmem:[#allocation10 + $0x3a8] sm:$0xff]
        %v3990 = vld [vmem:[#allocation10 + $0x3b0] sm:$0xff]
        %v3991 = vld [vmem:[#allocation10 + $0x3b8] sm:$0xff]
        %v3992 = vld [vmem:[#allocation10 + $0x3c0] sm:$0xff]
        %v3993 = vld [vmem:[#allocation10 + $0x3c8] sm:$0xff]
        %v3994 = vld [vmem:[#allocation10 + $0x3d0] sm:$0xff]
        %v3995 = vld [vmem:[#allocation10 + $0x3d8] sm:$0xff]
        %v3996 = vld [vmem:[#allocation10 + $0x3e0] sm:$0xff]
        %v3997 = vld [vmem:[#allocation10 + $0x3e8] sm:$0xff]
        %v3998 = vld [vmem:[#allocation10 + $0x3f0] sm:$0xff]
        %v3999 = vld [vmem:[#allocation10 + $0x3f8] sm:$0xff]
        %v4000 = vld [vmem:[%s9] sm:$0xff]
        %v4002 = vlaneseq
        %v4003 = vshrl.u32 %v4002, 7
        %v4004 = vsub.s32 0, %v4003
        %v4005 = vrot.slane %v4000, %v4004
        %v4006 = vlaneseq
        %v4007 = vshrl.u32 %v4006, 7
        %v4008 = vsub.s32 1, %v4007
        %v4009 = vrot.slane %v4000, %v4008
        %v4010 = vlaneseq
        %v4011 = vshrl.u32 %v4010, 7
        %v4012 = vsub.s32 2, %v4011
        %v4013 = vrot.slane %v4000, %v4012
        %v4014 = vlaneseq
        %v4015 = vshrl.u32 %v4014, 7
        %v4016 = vsub.s32 3, %v4015
        %v4017 = vrot.slane %v4000, %v4016
        %v4018 = vlaneseq
        %v4019 = vshrl.u32 %v4018, 7
        %v4020 = vsub.s32 4, %v4019
        %v4021 = vrot.slane %v4000, %v4020
        %v4022 = vlaneseq
        %v4023 = vshrl.u32 %v4022, 7
        %v4024 = vsub.s32 5, %v4023
        %v4025 = vrot.slane %v4000, %v4024
        %v4026 = vlaneseq
        %v4027 = vshrl.u32 %v4026, 7
        %v4028 = vsub.s32 6, %v4027
        %v4029 = vrot.slane %v4000, %v4028
        %v4030 = vlaneseq
        %v4031 = vshrl.u32 %v4030, 7
        %v4032 = vsub.s32 7, %v4031
        %v4033 = vrot.slane %v4000, %v4032
        %v4170 = vunpack.c.l.b16 %v3872
        %v4171 = vunpack.c.h.b16 %v3872
        %v4172 = vunpack.c.l.b16 %v3873
        %v4173 = vunpack.c.h.b16 %v3873
        %v4174 = vunpack.c.l.b16 %v3874
        %v4175 = vunpack.c.h.b16 %v3874
        %v4176 = vunpack.c.l.b16 %v3875
        %v4177 = vunpack.c.h.b16 %v3875
        %v4178 = vunpack.c.l.b16 %v3876
        %v4179 = vunpack.c.h.b16 %v3876
        %v4180 = vunpack.c.l.b16 %v3877
        %v4181 = vunpack.c.h.b16 %v3877
        %v4182 = vunpack.c.l.b16 %v3878
        %v4183 = vunpack.c.h.b16 %v3878
        %v4184 = vunpack.c.l.b16 %v3879
        %v4185 = vunpack.c.h.b16 %v3879
        %v4186 = vunpack.c.l.b16 %v3880
        %v4187 = vunpack.c.h.b16 %v3880
        %v4188 = vunpack.c.l.b16 %v3881
        %v4189 = vunpack.c.h.b16 %v3881
        %v4190 = vunpack.c.l.b16 %v3882
        %v4191 = vunpack.c.h.b16 %v3882
        %v4192 = vunpack.c.l.b16 %v3883
        %v4193 = vunpack.c.h.b16 %v3883
        %v4194 = vunpack.c.l.b16 %v3884
        %v4195 = vunpack.c.h.b16 %v3884
        %v4196 = vunpack.c.l.b16 %v3885
        %v4197 = vunpack.c.h.b16 %v3885
        %v4198 = vunpack.c.l.b16 %v3886
        %v4199 = vunpack.c.h.b16 %v3886
        %v4200 = vunpack.c.l.b16 %v3887
        %v4201 = vunpack.c.h.b16 %v3887
        %v4202 = vunpack.c.l.b16 %v3888
        %v4203 = vunpack.c.h.b16 %v3888
        %v4204 = vunpack.c.l.b16 %v3889
        %v4205 = vunpack.c.h.b16 %v3889
        %v4206 = vunpack.c.l.b16 %v3890
        %v4207 = vunpack.c.h.b16 %v3890
        %v4208 = vunpack.c.l.b16 %v3891
        %v4209 = vunpack.c.h.b16 %v3891
        %v4210 = vunpack.c.l.b16 %v3892
        %v4211 = vunpack.c.h.b16 %v3892
        %v4212 = vunpack.c.l.b16 %v3893
        %v4213 = vunpack.c.h.b16 %v3893
        %v4214 = vunpack.c.l.b16 %v3894
        %v4215 = vunpack.c.h.b16 %v3894
        %v4216 = vunpack.c.l.b16 %v3895
        %v4217 = vunpack.c.h.b16 %v3895
        %v4218 = vunpack.c.l.b16 %v3896
        %v4219 = vunpack.c.h.b16 %v3896
        %v4220 = vunpack.c.l.b16 %v3897
        %v4221 = vunpack.c.h.b16 %v3897
        %v4222 = vunpack.c.l.b16 %v3898
        %v4223 = vunpack.c.h.b16 %v3898
        %v4224 = vunpack.c.l.b16 %v3899
        %v4225 = vunpack.c.h.b16 %v3899
        %v4226 = vunpack.c.l.b16 %v3900
        %v4227 = vunpack.c.h.b16 %v3900
        %v4228 = vunpack.c.l.b16 %v3901
        %v4229 = vunpack.c.h.b16 %v3901
        %v4230 = vunpack.c.l.b16 %v3902
        %v4231 = vunpack.c.h.b16 %v3902
        %v4232 = vunpack.c.l.b16 %v3903
        %v4233 = vunpack.c.h.b16 %v3903
        %v4234 = vunpack.c.l.b16 %v3904
        %v4235 = vunpack.c.h.b16 %v3904
        %v4236 = vunpack.c.l.b16 %v3905
        %v4237 = vunpack.c.h.b16 %v3905
        %v4238 = vunpack.c.l.b16 %v3906
        %v4239 = vunpack.c.h.b16 %v3906
        %v4240 = vunpack.c.l.b16 %v3907
        %v4241 = vunpack.c.h.b16 %v3907
        %v4242 = vunpack.c.l.b16 %v3908
        %v4243 = vunpack.c.h.b16 %v3908
        %v4244 = vunpack.c.l.b16 %v3909
        %v4245 = vunpack.c.h.b16 %v3909
        %v4246 = vunpack.c.l.b16 %v3910
        %v4247 = vunpack.c.h.b16 %v3910
        %v4248 = vunpack.c.l.b16 %v3911
        %v4249 = vunpack.c.h.b16 %v3911
        %v4250 = vunpack.c.l.b16 %v3912
        %v4251 = vunpack.c.h.b16 %v3912
        %v4252 = vunpack.c.l.b16 %v3913
        %v4253 = vunpack.c.h.b16 %v3913
        %v4254 = vunpack.c.l.b16 %v3914
        %v4255 = vunpack.c.h.b16 %v3914
        %v4256 = vunpack.c.l.b16 %v3915
        %v4257 = vunpack.c.h.b16 %v3915
        %v4258 = vunpack.c.l.b16 %v3916
        %v4259 = vunpack.c.h.b16 %v3916
        %v4260 = vunpack.c.l.b16 %v3917
        %v4261 = vunpack.c.h.b16 %v3917
        %v4262 = vunpack.c.l.b16 %v3918
        %v4263 = vunpack.c.h.b16 %v3918
        %v4264 = vunpack.c.l.b16 %v3919
        %v4265 = vunpack.c.h.b16 %v3919
        %v4266 = vunpack.c.l.b16 %v3920
        %v4267 = vunpack.c.h.b16 %v3920
        %v4268 = vunpack.c.l.b16 %v3921
        %v4269 = vunpack.c.h.b16 %v3921
        %v4270 = vunpack.c.l.b16 %v3922
        %v4271 = vunpack.c.h.b16 %v3922
        %v4272 = vunpack.c.l.b16 %v3923
        %v4273 = vunpack.c.h.b16 %v3923
        %v4274 = vunpack.c.l.b16 %v3924
        %v4275 = vunpack.c.h.b16 %v3924
        %v4276 = vunpack.c.l.b16 %v3925
        %v4277 = vunpack.c.h.b16 %v3925
        %v4278 = vunpack.c.l.b16 %v3926
        %v4279 = vunpack.c.h.b16 %v3926
        %v4280 = vunpack.c.l.b16 %v3927
        %v4281 = vunpack.c.h.b16 %v3927
        %v4282 = vunpack.c.l.b16 %v3928
        %v4283 = vunpack.c.h.b16 %v3928
        %v4284 = vunpack.c.l.b16 %v3929
        %v4285 = vunpack.c.h.b16 %v3929
        %v4286 = vunpack.c.l.b16 %v3930
        %v4287 = vunpack.c.h.b16 %v3930
        %v4288 = vunpack.c.l.b16 %v3931
        %v4289 = vunpack.c.h.b16 %v3931
        %v4290 = vunpack.c.l.b16 %v3932
        %v4291 = vunpack.c.h.b16 %v3932
        %v4292 = vunpack.c.l.b16 %v3933
        %v4293 = vunpack.c.h.b16 %v3933
        %v4294 = vunpack.c.l.b16 %v3934
        %v4295 = vunpack.c.h.b16 %v3934
        %v4296 = vunpack.c.l.b16 %v3935
        %v4297 = vunpack.c.h.b16 %v3935
        %v4298 = vunpack.c.l.b16 %v3936
        %v4299 = vunpack.c.h.b16 %v3936
        %v4300 = vunpack.c.l.b16 %v3937
        %v4301 = vunpack.c.h.b16 %v3937
        %v4302 = vunpack.c.l.b16 %v3938
        %v4303 = vunpack.c.h.b16 %v3938
        %v4304 = vunpack.c.l.b16 %v3939
        %v4305 = vunpack.c.h.b16 %v3939
        %v4306 = vunpack.c.l.b16 %v3940
        %v4307 = vunpack.c.h.b16 %v3940
        %v4308 = vunpack.c.l.b16 %v3941
        %v4309 = vunpack.c.h.b16 %v3941
        %v4310 = vunpack.c.l.b16 %v3942
        %v4311 = vunpack.c.h.b16 %v3942
        %v4312 = vunpack.c.l.b16 %v3943
        %v4313 = vunpack.c.h.b16 %v3943
        %v4314 = vunpack.c.l.b16 %v3944
        %v4315 = vunpack.c.h.b16 %v3944
        %v4316 = vunpack.c.l.b16 %v3945
        %v4317 = vunpack.c.h.b16 %v3945
        %v4318 = vunpack.c.l.b16 %v3946
        %v4319 = vunpack.c.h.b16 %v3946
        %v4320 = vunpack.c.l.b16 %v3947
        %v4321 = vunpack.c.h.b16 %v3947
        %v4322 = vunpack.c.l.b16 %v3948
        %v4323 = vunpack.c.h.b16 %v3948
        %v4324 = vunpack.c.l.b16 %v3949
        %v4325 = vunpack.c.h.b16 %v3949
        %v4326 = vunpack.c.l.b16 %v3950
        %v4327 = vunpack.c.h.b16 %v3950
        %v4328 = vunpack.c.l.b16 %v3951
        %v4329 = vunpack.c.h.b16 %v3951
        %v4330 = vunpack.c.l.b16 %v3952
        %v4331 = vunpack.c.h.b16 %v3952
        %v4332 = vunpack.c.l.b16 %v3953
        %v4333 = vunpack.c.h.b16 %v3953
        %v4334 = vunpack.c.l.b16 %v3954
        %v4335 = vunpack.c.h.b16 %v3954
        %v4336 = vunpack.c.l.b16 %v3955
        %v4337 = vunpack.c.h.b16 %v3955
        %v4338 = vunpack.c.l.b16 %v3956
        %v4339 = vunpack.c.h.b16 %v3956
        %v4340 = vunpack.c.l.b16 %v3957
        %v4341 = vunpack.c.h.b16 %v3957
        %v4342 = vunpack.c.l.b16 %v3958
        %v4343 = vunpack.c.h.b16 %v3958
        %v4344 = vunpack.c.l.b16 %v3959
        %v4345 = vunpack.c.h.b16 %v3959
        %v4346 = vunpack.c.l.b16 %v3960
        %v4347 = vunpack.c.h.b16 %v3960
        %v4348 = vunpack.c.l.b16 %v3961
        %v4349 = vunpack.c.h.b16 %v3961
        %v4350 = vunpack.c.l.b16 %v3962
        %v4351 = vunpack.c.h.b16 %v3962
        %v4352 = vunpack.c.l.b16 %v3963
        %v4353 = vunpack.c.h.b16 %v3963
        %v4354 = vunpack.c.l.b16 %v3964
        %v4355 = vunpack.c.h.b16 %v3964
        %v4356 = vunpack.c.l.b16 %v3965
        %v4357 = vunpack.c.h.b16 %v3965
        %v4358 = vunpack.c.l.b16 %v3966
        %v4359 = vunpack.c.h.b16 %v3966
        %v4360 = vunpack.c.l.b16 %v3967
        %v4361 = vunpack.c.h.b16 %v3967
        %v4362 = vunpack.c.l.b16 %v3968
        %v4363 = vunpack.c.h.b16 %v3968
        %v4364 = vunpack.c.l.b16 %v3969
        %v4365 = vunpack.c.h.b16 %v3969
        %v4366 = vunpack.c.l.b16 %v3970
        %v4367 = vunpack.c.h.b16 %v3970
        %v4368 = vunpack.c.l.b16 %v3971
        %v4369 = vunpack.c.h.b16 %v3971
        %v4370 = vunpack.c.l.b16 %v3972
        %v4371 = vunpack.c.h.b16 %v3972
        %v4372 = vunpack.c.l.b16 %v3973
        %v4373 = vunpack.c.h.b16 %v3973
        %v4374 = vunpack.c.l.b16 %v3974
        %v4375 = vunpack.c.h.b16 %v3974
        %v4376 = vunpack.c.l.b16 %v3975
        %v4377 = vunpack.c.h.b16 %v3975
        %v4378 = vunpack.c.l.b16 %v3976
        %v4379 = vunpack.c.h.b16 %v3976
        %v4380 = vunpack.c.l.b16 %v3977
        %v4381 = vunpack.c.h.b16 %v3977
        %v4382 = vunpack.c.l.b16 %v3978
        %v4383 = vunpack.c.h.b16 %v3978
        %v4384 = vunpack.c.l.b16 %v3979
        %v4385 = vunpack.c.h.b16 %v3979
        %v4386 = vunpack.c.l.b16 %v3980
        %v4387 = vunpack.c.h.b16 %v3980
        %v4388 = vunpack.c.l.b16 %v3981
        %v4389 = vunpack.c.h.b16 %v3981
        %v4390 = vunpack.c.l.b16 %v3982
        %v4391 = vunpack.c.h.b16 %v3982
        %v4392 = vunpack.c.l.b16 %v3983
        %v4393 = vunpack.c.h.b16 %v3983
        %v4394 = vunpack.c.l.b16 %v3984
        %v4395 = vunpack.c.h.b16 %v3984
        %v4396 = vunpack.c.l.b16 %v3985
        %v4397 = vunpack.c.h.b16 %v3985
        %v4398 = vunpack.c.l.b16 %v3986
        %v4399 = vunpack.c.h.b16 %v3986
        %v4400 = vunpack.c.l.b16 %v3987
        %v4401 = vunpack.c.h.b16 %v3987
        %v4402 = vunpack.c.l.b16 %v3988
        %v4403 = vunpack.c.h.b16 %v3988
        %v4404 = vunpack.c.l.b16 %v3989
        %v4405 = vunpack.c.h.b16 %v3989
        %v4406 = vunpack.c.l.b16 %v3990
        %v4407 = vunpack.c.h.b16 %v3990
        %v4408 = vunpack.c.l.b16 %v3991
        %v4409 = vunpack.c.h.b16 %v3991
        %v4410 = vunpack.c.l.b16 %v3992
        %v4411 = vunpack.c.h.b16 %v3992
        %v4412 = vunpack.c.l.b16 %v3993
        %v4413 = vunpack.c.h.b16 %v3993
        %v4414 = vunpack.c.l.b16 %v3994
        %v4415 = vunpack.c.h.b16 %v3994
        %v4416 = vunpack.c.l.b16 %v3995
        %v4417 = vunpack.c.h.b16 %v3995
        %v4418 = vunpack.c.l.b16 %v3996
        %v4419 = vunpack.c.h.b16 %v3996
        %v4420 = vunpack.c.l.b16 %v3997
        %v4421 = vunpack.c.h.b16 %v3997
        %v4422 = vunpack.c.l.b16 %v3998
        %v4423 = vunpack.c.h.b16 %v3998
        %v4424 = vunpack.c.l.b16 %v3999
        %v4425 = vunpack.c.h.b16 %v3999
        %v4426 = vpack.c.b16 %v4178, %v4170
        %v4427 = vpack.c.b16 %v4179, %v4171
        %v4428 = vpack.c.b16 %v4180, %v4172
        %v4429 = vpack.c.b16 %v4181, %v4173
        %v4430 = vpack.c.b16 %v4182, %v4174
        %v4431 = vpack.c.b16 %v4183, %v4175
        %v4432 = vpack.c.b16 %v4184, %v4176
        %v4433 = vpack.c.b16 %v4185, %v4177
        %v4434 = vpack.c.b16 %v4194, %v4186
        %v4435 = vpack.c.b16 %v4195, %v4187
        %v4436 = vpack.c.b16 %v4196, %v4188
        %v4437 = vpack.c.b16 %v4197, %v4189
        %v4438 = vpack.c.b16 %v4198, %v4190
        %v4439 = vpack.c.b16 %v4199, %v4191
        %v4440 = vpack.c.b16 %v4200, %v4192
        %v4441 = vpack.c.b16 %v4201, %v4193
        %v4442 = vpack.c.b16 %v4210, %v4202
        %v4443 = vpack.c.b16 %v4211, %v4203
        %v4444 = vpack.c.b16 %v4212, %v4204
        %v4445 = vpack.c.b16 %v4213, %v4205
        %v4446 = vpack.c.b16 %v4214, %v4206
        %v4447 = vpack.c.b16 %v4215, %v4207
        %v4448 = vpack.c.b16 %v4216, %v4208
        %v4449 = vpack.c.b16 %v4217, %v4209
        %v4450 = vpack.c.b16 %v4226, %v4218
        %v4451 = vpack.c.b16 %v4227, %v4219
        %v4452 = vpack.c.b16 %v4228, %v4220
        %v4453 = vpack.c.b16 %v4229, %v4221
        %v4454 = vpack.c.b16 %v4230, %v4222
        %v4455 = vpack.c.b16 %v4231, %v4223
        %v4456 = vpack.c.b16 %v4232, %v4224
        %v4457 = vpack.c.b16 %v4233, %v4225
        %v4458 = vpack.c.b16 %v4242, %v4234
        %v4459 = vpack.c.b16 %v4243, %v4235
        %v4460 = vpack.c.b16 %v4244, %v4236
        %v4461 = vpack.c.b16 %v4245, %v4237
        %v4462 = vpack.c.b16 %v4246, %v4238
        %v4463 = vpack.c.b16 %v4247, %v4239
        %v4464 = vpack.c.b16 %v4248, %v4240
        %v4465 = vpack.c.b16 %v4249, %v4241
        %v4466 = vpack.c.b16 %v4258, %v4250
        %v4467 = vpack.c.b16 %v4259, %v4251
        %v4468 = vpack.c.b16 %v4260, %v4252
        %v4469 = vpack.c.b16 %v4261, %v4253
        %v4470 = vpack.c.b16 %v4262, %v4254
        %v4471 = vpack.c.b16 %v4263, %v4255
        %v4472 = vpack.c.b16 %v4264, %v4256
        %v4473 = vpack.c.b16 %v4265, %v4257
        %v4474 = vpack.c.b16 %v4274, %v4266
        %v4475 = vpack.c.b16 %v4275, %v4267
        %v4476 = vpack.c.b16 %v4276, %v4268
        %v4477 = vpack.c.b16 %v4277, %v4269
        %v4478 = vpack.c.b16 %v4278, %v4270
        %v4479 = vpack.c.b16 %v4279, %v4271
        %v4480 = vpack.c.b16 %v4280, %v4272
        %v4481 = vpack.c.b16 %v4281, %v4273
        %v4482 = vpack.c.b16 %v4290, %v4282
        %v4483 = vpack.c.b16 %v4291, %v4283
        %v4484 = vpack.c.b16 %v4292, %v4284
        %v4485 = vpack.c.b16 %v4293, %v4285
        %v4486 = vpack.c.b16 %v4294, %v4286
        %v4487 = vpack.c.b16 %v4295, %v4287
        %v4488 = vpack.c.b16 %v4296, %v4288
        %v4489 = vpack.c.b16 %v4297, %v4289
        %v4490 = vpack.c.b16 %v4306, %v4298
        %v4491 = vpack.c.b16 %v4307, %v4299
        %v4492 = vpack.c.b16 %v4308, %v4300
        %v4493 = vpack.c.b16 %v4309, %v4301
        %v4494 = vpack.c.b16 %v4310, %v4302
        %v4495 = vpack.c.b16 %v4311, %v4303
        %v4496 = vpack.c.b16 %v4312, %v4304
        %v4497 = vpack.c.b16 %v4313, %v4305
        %v4498 = vpack.c.b16 %v4322, %v4314
        %v4499 = vpack.c.b16 %v4323, %v4315
        %v4500 = vpack.c.b16 %v4324, %v4316
        %v4501 = vpack.c.b16 %v4325, %v4317
        %v4502 = vpack.c.b16 %v4326, %v4318
        %v4503 = vpack.c.b16 %v4327, %v4319
        %v4504 = vpack.c.b16 %v4328, %v4320
        %v4505 = vpack.c.b16 %v4329, %v4321
        %v4506 = vpack.c.b16 %v4338, %v4330
        %v4507 = vpack.c.b16 %v4339, %v4331
        %v4508 = vpack.c.b16 %v4340, %v4332
        %v4509 = vpack.c.b16 %v4341, %v4333
        %v4510 = vpack.c.b16 %v4342, %v4334
        %v4511 = vpack.c.b16 %v4343, %v4335
        %v4512 = vpack.c.b16 %v4344, %v4336
        %v4513 = vpack.c.b16 %v4345, %v4337
        %v4514 = vpack.c.b16 %v4354, %v4346
        %v4515 = vpack.c.b16 %v4355, %v4347
        %v4516 = vpack.c.b16 %v4356, %v4348
        %v4517 = vpack.c.b16 %v4357, %v4349
        %v4518 = vpack.c.b16 %v4358, %v4350
        %v4519 = vpack.c.b16 %v4359, %v4351
        %v4520 = vpack.c.b16 %v4360, %v4352
        %v4521 = vpack.c.b16 %v4361, %v4353
        %v4522 = vpack.c.b16 %v4370, %v4362
        %v4523 = vpack.c.b16 %v4371, %v4363
        %v4524 = vpack.c.b16 %v4372, %v4364
        %v4525 = vpack.c.b16 %v4373, %v4365
        %v4526 = vpack.c.b16 %v4374, %v4366
        %v4527 = vpack.c.b16 %v4375, %v4367
        %v4528 = vpack.c.b16 %v4376, %v4368
        %v4529 = vpack.c.b16 %v4377, %v4369
        %v4530 = vpack.c.b16 %v4386, %v4378
        %v4531 = vpack.c.b16 %v4387, %v4379
        %v4532 = vpack.c.b16 %v4388, %v4380
        %v4533 = vpack.c.b16 %v4389, %v4381
        %v4534 = vpack.c.b16 %v4390, %v4382
        %v4535 = vpack.c.b16 %v4391, %v4383
        %v4536 = vpack.c.b16 %v4392, %v4384
        %v4537 = vpack.c.b16 %v4393, %v4385
        %v4538 = vpack.c.b16 %v4402, %v4394
        %v4539 = vpack.c.b16 %v4403, %v4395
        %v4540 = vpack.c.b16 %v4404, %v4396
        %v4541 = vpack.c.b16 %v4405, %v4397
        %v4542 = vpack.c.b16 %v4406, %v4398
        %v4543 = vpack.c.b16 %v4407, %v4399
        %v4544 = vpack.c.b16 %v4408, %v4400
        %v4545 = vpack.c.b16 %v4409, %v4401
        %v4546 = vpack.c.b16 %v4418, %v4410
        %v4547 = vpack.c.b16 %v4419, %v4411
        %v4548 = vpack.c.b16 %v4420, %v4412
        %v4549 = vpack.c.b16 %v4421, %v4413
        %v4550 = vpack.c.b16 %v4422, %v4414
        %v4551 = vpack.c.b16 %v4423, %v4415
        %v4552 = vpack.c.b16 %v4424, %v4416
        %v4553 = vpack.c.b16 %v4425, %v4417
        %4682 = vmatprep.subr.bf16.mxu0 %v4427
        %4683 = vmatpush1.bf16.msra.mxu0 %v4426
        %4684 = vmatprep.subr.bf16.mxu0 %v4435
        %4685 = vmatpush1.bf16.msra.mxu0 %v4434
        %4686 = vmatprep.subr.bf16.mxu0 %v4443
        %4687 = vmatpush1.bf16.msra.mxu0 %v4442
        %4688 = vmatprep.subr.bf16.mxu0 %v4451
        %4689 = vmatpush1.bf16.msra.mxu0 %v4450
        %4690 = vmatprep.subr.bf16.mxu0 %v4459
        %4691 = vmatpush1.bf16.msra.mxu0 %v4458
        %4692 = vmatprep.subr.bf16.mxu0 %v4467
        %4693 = vmatpush1.bf16.msra.mxu0 %v4466
        %4694 = vmatprep.subr.bf16.mxu0 %v4475
        %4695 = vmatpush1.bf16.msra.mxu0 %v4474
        %4696 = vmatprep.subr.bf16.mxu0 %v4483
        %4697 = vmatpush1.bf16.msra.mxu0 %v4482
        %4698 = vmatprep.subr.bf16.mxu0 %v4491
        %4699 = vmatpush1.bf16.msra.mxu0 %v4490
        %4700 = vmatprep.subr.bf16.mxu0 %v4499
        %4701 = vmatpush1.bf16.msra.mxu0 %v4498
        %4702 = vmatprep.subr.bf16.mxu0 %v4507
        %4703 = vmatpush1.bf16.msra.mxu0 %v4506
        %4704 = vmatprep.subr.bf16.mxu0 %v4515
        %4705 = vmatpush1.bf16.msra.mxu0 %v4514
        %4706 = vmatprep.subr.bf16.mxu0 %v4523
        %4707 = vmatpush1.bf16.msra.mxu0 %v4522
        %4708 = vmatprep.subr.bf16.mxu0 %v4531
        %4709 = vmatpush1.bf16.msra.mxu0 %v4530
        %4710 = vmatprep.subr.bf16.mxu0 %v4539
        %4711 = vmatpush1.bf16.msra.mxu0 %v4538
        %4712 = vmatprep.subr.bf16.mxu0 %v4547
        %4713 = vmatpush1.bf16.msra.mxu0 %v4546
        %4714 = vmatprep.mubr.bf16.mxu0 %v3857
        %4715 = vmatmul.mubr.bf16.gmra.mrb[0].mxu0 %v3856
        %v4716 = vpop.f32.mrb[0].mxu0
        %v4717 = vadd.f32 %v4005, %v4716
        %v4718 = vpop.f32.mrb[0].mxu0
        %v4719 = vadd.f32 %v4009, %v4718
        %v4720 = vpop.f32.mrb[0].mxu0
        %v4721 = vadd.f32 %v4005, %v4720
        %v4722 = vpop.f32.mrb[0].mxu0
        %v4723 = vadd.f32 %v4009, %v4722
        %4724 = vmatprep.mubr.bf16.mxu0 %v3859
        %4725 = vmatmul.mubr.bf16.gmra.mrb[0].mxu0 %v3858
        %v4726 = vpop.f32.mrb[0].mxu0
        %v4727 = vadd.f32 %v4005, %v4726
        %v4728 = vpop.f32.mrb[0].mxu0
        %v4729 = vadd.f32 %v4009, %v4728
        %v4730 = vpop.f32.mrb[0].mxu0
        %v4731 = vadd.f32 %v4005, %v4730
        %v4732 = vpop.f32.mrb[0].mxu0
        %v4733 = vadd.f32 %v4009, %v4732
        %4734 = vmatprep.mubr.bf16.mxu0 %v3861
        %4735 = vmatmul.mubr.bf16.gmra.mrb[0].mxu0 %v3860
        %v4736 = vpop.f32.mrb[0].mxu0
        %v4737 = vadd.f32 %v4005, %v4736
        %v4738 = vpop.f32.mrb[0].mxu0
        %v4739 = vadd.f32 %v4009, %v4738
        %v4740 = vpop.f32.mrb[0].mxu0
        %v4741 = vadd.f32 %v4005, %v4740
        %v4742 = vpop.f32.mrb[0].mxu0
        %v4743 = vadd.f32 %v4009, %v4742
        %4744 = vmatprep.mubr.bf16.mxu0 %v3863
        %4745 = vmatmul.mubr.bf16.gmra.mrb[0].mxu0 %v3862
        %v4746 = vpop.f32.mrb[0].mxu0
        %v4747 = vadd.f32 %v4005, %v4746
        %v4748 = vpop.f32.mrb[0].mxu0
        %v4749 = vadd.f32 %v4009, %v4748
        %v4750 = vpop.f32.mrb[0].mxu0
        %v4751 = vadd.f32 %v4005, %v4750
        %v4752 = vpop.f32.mrb[0].mxu0
        %v4753 = vadd.f32 %v4009, %v4752
        %4754 = vmatprep.mubr.bf16.mxu0 %v3865
        %4755 = vmatmul.mubr.bf16.gmra.mrb[0].mxu0 %v3864
        %v4756 = vpop.f32.mrb[0].mxu0
        %v4757 = vadd.f32 %v4005, %v4756
        %v4758 = vpop.f32.mrb[0].mxu0
        %v4759 = vadd.f32 %v4009, %v4758
        %v4760 = vpop.f32.mrb[0].mxu0
        %v4761 = vadd.f32 %v4005, %v4760
        %v4762 = vpop.f32.mrb[0].mxu0
        %v4763 = vadd.f32 %v4009, %v4762
        %4764 = vmatprep.mubr.bf16.mxu0 %v3867
        %4765 = vmatmul.mubr.bf16.gmra.mrb[0].mxu0 %v3866
        %v4766 = vpop.f32.mrb[0].mxu0
        %v4767 = vadd.f32 %v4005, %v4766
        %v4768 = vpop.f32.mrb[0].mxu0
        %v4769 = vadd.f32 %v4009, %v4768
        %v4770 = vpop.f32.mrb[0].mxu0
        %v4771 = vadd.f32 %v4005, %v4770
        %v4772 = vpop.f32.mrb[0].mxu0
        %v4773 = vadd.f32 %v4009, %v4772
        %4774 = vmatprep.mubr.bf16.mxu0 %v3869
        %4775 = vmatmul.mubr.bf16.gmra.mrb[0].mxu0 %v3868
        %v4776 = vpop.f32.mrb[0].mxu0
        %v4777 = vadd.f32 %v4005, %v4776
        %v4778 = vpop.f32.mrb[0].mxu0
        %v4779 = vadd.f32 %v4009, %v4778
        %v4780 = vpop.f32.mrb[0].mxu0
        %v4781 = vadd.f32 %v4005, %v4780
        %v4782 = vpop.f32.mrb[0].mxu0
        %v4783 = vadd.f32 %v4009, %v4782
        %4784 = vmatprep.mubr.bf16.mxu0 %v3871
        %4785 = vmatmul.mubr.bf16.gmra.mrb[0].mxu0 %v3870
        %v4786 = vpop.f32.mrb[0].mxu0
        %v4787 = vadd.f32 %v4005, %v4786
        %v4788 = vpop.f32.mrb[0].mxu0
        %v4789 = vadd.f32 %v4009, %v4788
        %v4790 = vpop.f32.mrb[0].mxu0
        %v4791 = vadd.f32 %v4005, %v4790
        %v4792 = vpop.f32.mrb[0].mxu0
        %v4793 = vadd.f32 %v4009, %v4792
        %4794 = vdwg.mxu0
        %4795 = vmatprep.subr.bf16.mxu0 %v4429
        %4796 = vmatpush1.bf16.msra.mxu0 %v4428
        %4797 = vmatprep.subr.bf16.mxu0 %v4437
        %4798 = vmatpush1.bf16.msra.mxu0 %v4436
        %4799 = vmatprep.subr.bf16.mxu0 %v4445
        %4800 = vmatpush1.bf16.msra.mxu0 %v4444
        %4801 = vmatprep.subr.bf16.mxu0 %v4453
        %4802 = vmatpush1.bf16.msra.mxu0 %v4452
        %4803 = vmatprep.subr.bf16.mxu0 %v4461
        %4804 = vmatpush1.bf16.msra.mxu0 %v4460
        %4805 = vmatprep.subr.bf16.mxu0 %v4469
        %4806 = vmatpush1.bf16.msra.mxu0 %v4468
        %4807 = vmatprep.subr.bf16.mxu0 %v4477
        %4808 = vmatpush1.bf16.msra.mxu0 %v4476
        %4809 = vmatprep.subr.bf16.mxu0 %v4485
        %4810 = vmatpush1.bf16.msra.mxu0 %v4484
        %4811 = vmatprep.subr.bf16.mxu0 %v4493
        %4812 = vmatpush1.bf16.msra.mxu0 %v4492
        %4813 = vmatprep.subr.bf16.mxu0 %v4501
        %4814 = vmatpush1.bf16.msra.mxu0 %v4500
        %4815 = vmatprep.subr.bf16.mxu0 %v4509
        %4816 = vmatpush1.bf16.msra.mxu0 %v4508
        %4817 = vmatprep.subr.bf16.mxu0 %v4517
        %4818 = vmatpush1.bf16.msra.mxu0 %v4516
        %4819 = vmatprep.subr.bf16.mxu0 %v4525
        %4820 = vmatpush1.bf16.msra.mxu0 %v4524
        %4821 = vmatprep.subr.bf16.mxu0 %v4533
        %4822 = vmatpush1.bf16.msra.mxu0 %v4532
        %4823 = vmatprep.subr.bf16.mxu0 %v4541
        %4824 = vmatpush1.bf16.msra.mxu0 %v4540
        %4825 = vmatprep.subr.bf16.mxu0 %v4549
        %4826 = vmatpush1.bf16.msra.mxu0 %v4548
        %4827 = vmatprep.mubr.bf16.mxu0 %v3857
        %4828 = vmatmul.mubr.bf16.gmra.mrb[0].mxu0 %v3856
        %v4829 = vpop.f32.mrb[0].mxu0
        %v4830 = vadd.f32 %v4013, %v4829
        %v4831 = vpop.f32.mrb[0].mxu0
        %v4832 = vadd.f32 %v4017, %v4831
        %v4833 = vpop.f32.mrb[0].mxu0
        %v4834 = vadd.f32 %v4013, %v4833
        %v4835 = vpop.f32.mrb[0].mxu0
        %v4836 = vadd.f32 %v4017, %v4835
        %4837 = vmatprep.mubr.bf16.mxu0 %v3859
        %4838 = vmatmul.mubr.bf16.gmra.mrb[0].mxu0 %v3858
        %v4839 = vpop.f32.mrb[0].mxu0
        %v4840 = vadd.f32 %v4013, %v4839
        %v4841 = vpop.f32.mrb[0].mxu0
        %v4842 = vadd.f32 %v4017, %v4841
        %v4843 = vpop.f32.mrb[0].mxu0
        %v4844 = vadd.f32 %v4013, %v4843
        %v4845 = vpop.f32.mrb[0].mxu0
        %v4846 = vadd.f32 %v4017, %v4845
        %4847 = vmatprep.mubr.bf16.mxu0 %v3861
        %4848 = vmatmul.mubr.bf16.gmra.mrb[0].mxu0 %v3860
        %v4849 = vpop.f32.mrb[0].mxu0
        %v4850 = vadd.f32 %v4013, %v4849
        %v4851 = vpop.f32.mrb[0].mxu0
        %v4852 = vadd.f32 %v4017, %v4851
        %v4853 = vpop.f32.mrb[0].mxu0
        %v4854 = vadd.f32 %v4013, %v4853
        %v4855 = vpop.f32.mrb[0].mxu0
        %v4856 = vadd.f32 %v4017, %v4855
        %4857 = vmatprep.mubr.bf16.mxu0 %v3863
        %4858 = vmatmul.mubr.bf16.gmra.mrb[0].mxu0 %v3862
        %v4859 = vpop.f32.mrb[0].mxu0
        %v4860 = vadd.f32 %v4013, %v4859
        %v4861 = vpop.f32.mrb[0].mxu0
        %v4862 = vadd.f32 %v4017, %v4861
        %v4863 = vpop.f32.mrb[0].mxu0
        %v4864 = vadd.f32 %v4013, %v4863
        %v4865 = vpop.f32.mrb[0].mxu0
        %v4866 = vadd.f32 %v4017, %v4865
        %4867 = vmatprep.mubr.bf16.mxu0 %v3865
        %4868 = vmatmul.mubr.bf16.gmra.mrb[0].mxu0 %v3864
        %v4869 = vpop.f32.mrb[0].mxu0
        %v4870 = vadd.f32 %v4013, %v4869
        %v4871 = vpop.f32.mrb[0].mxu0
        %v4872 = vadd.f32 %v4017, %v4871
        %v4873 = vpop.f32.mrb[0].mxu0
        %v4874 = vadd.f32 %v4013, %v4873
        %v4875 = vpop.f32.mrb[0].mxu0
        %v4876 = vadd.f32 %v4017, %v4875
        %4877 = vmatprep.mubr.bf16.mxu0 %v3867
        %4878 = vmatmul.mubr.bf16.gmra.mrb[0].mxu0 %v3866
        %v4879 = vpop.f32.mrb[0].mxu0
        %v4880 = vadd.f32 %v4013, %v4879
        %v4881 = vpop.f32.mrb[0].mxu0
        %v4882 = vadd.f32 %v4017, %v4881
        %v4883 = vpop.f32.mrb[0].mxu0
        %v4884 = vadd.f32 %v4013, %v4883
        %v4885 = vpop.f32.mrb[0].mxu0
        %v4886 = vadd.f32 %v4017, %v4885
        %4887 = vmatprep.mubr.bf16.mxu0 %v3869
        %4888 = vmatmul.mubr.bf16.gmra.mrb[0].mxu0 %v3868
        %v4889 = vpop.f32.mrb[0].mxu0
        %v4890 = vadd.f32 %v4013, %v4889
        %v4891 = vpop.f32.mrb[0].mxu0
        %v4892 = vadd.f32 %v4017, %v4891
        %v4893 = vpop.f32.mrb[0].mxu0
        %v4894 = vadd.f32 %v4013, %v4893
        %v4895 = vpop.f32.mrb[0].mxu0
        %v4896 = vadd.f32 %v4017, %v4895
        %4897 = vmatprep.mubr.bf16.mxu0 %v3871
        %4898 = vmatmul.mubr.bf16.gmra.mrb[0].mxu0 %v3870
        %v4899 = vpop.f32.mrb[0].mxu0
        %v4900 = vadd.f32 %v4013, %v4899
        %v4901 = vpop.f32.mrb[0].mxu0
        %v4902 = vadd.f32 %v4017, %v4901
        %v4903 = vpop.f32.mrb[0].mxu0
        %v4904 = vadd.f32 %v4013, %v4903
        %v4905 = vpop.f32.mrb[0].mxu0
        %v4906 = vadd.f32 %v4017, %v4905
        %4907 = vdwg.mxu0
        %4908 = vmatprep.subr.bf16.mxu0 %v4431
        %4909 = vmatpush1.bf16.msra.mxu0 %v4430
        %4910 = vmatprep.subr.bf16.mxu0 %v4439
        %4911 = vmatpush1.bf16.msra.mxu0 %v4438
        %4912 = vmatprep.subr.bf16.mxu0 %v4447
        %4913 = vmatpush1.bf16.msra.mxu0 %v4446
        %4914 = vmatprep.subr.bf16.mxu0 %v4455
        %4915 = vmatpush1.bf16.msra.mxu0 %v4454
        %4916 = vmatprep.subr.bf16.mxu0 %v4463
        %4917 = vmatpush1.bf16.msra.mxu0 %v4462
        %4918 = vmatprep.subr.bf16.mxu0 %v4471
        %4919 = vmatpush1.bf16.msra.mxu0 %v4470
        %4920 = vmatprep.subr.bf16.mxu0 %v4479
        %4921 = vmatpush1.bf16.msra.mxu0 %v4478
        %4922 = vmatprep.subr.bf16.mxu0 %v4487
        %4923 = vmatpush1.bf16.msra.mxu0 %v4486
        %4924 = vmatprep.subr.bf16.mxu0 %v4495
        %4925 = vmatpush1.bf16.msra.mxu0 %v4494
        %4926 = vmatprep.subr.bf16.mxu0 %v4503
        %4927 = vmatpush1.bf16.msra.mxu0 %v4502
        %4928 = vmatprep.subr.bf16.mxu0 %v4511
        %4929 = vmatpush1.bf16.msra.mxu0 %v4510
        %4930 = vmatprep.subr.bf16.mxu0 %v4519
        %4931 = vmatpush1.bf16.msra.mxu0 %v4518
        %4932 = vmatprep.subr.bf16.mxu0 %v4527
        %4933 = vmatpush1.bf16.msra.mxu0 %v4526
        %4934 = vmatprep.subr.bf16.mxu0 %v4535
        %4935 = vmatpush1.bf16.msra.mxu0 %v4534
        %4936 = vmatprep.subr.bf16.mxu0 %v4543
        %4937 = vmatpush1.bf16.msra.mxu0 %v4542
        %4938 = vmatprep.subr.bf16.mxu0 %v4551
        %4939 = vmatpush1.bf16.msra.mxu0 %v4550
        %4940 = vmatprep.mubr.bf16.mxu0 %v3857
        %4941 = vmatmul.mubr.bf16.gmra.mrb[0].mxu0 %v3856
        %v4942 = vpop.f32.mrb[0].mxu0
        %v4943 = vadd.f32 %v4021, %v4942
        %v4944 = vpop.f32.mrb[0].mxu0
        %v4945 = vadd.f32 %v4025, %v4944
        %v4946 = vpop.f32.mrb[0].mxu0
        %v4947 = vadd.f32 %v4021, %v4946
        %v4948 = vpop.f32.mrb[0].mxu0
        %v4949 = vadd.f32 %v4025, %v4948
        %4950 = vmatprep.mubr.bf16.mxu0 %v3859
        %4951 = vmatmul.mubr.bf16.gmra.mrb[0].mxu0 %v3858
        %v4952 = vpop.f32.mrb[0].mxu0
        %v4953 = vadd.f32 %v4021, %v4952
        %v4954 = vpop.f32.mrb[0].mxu0
        %v4955 = vadd.f32 %v4025, %v4954
        %v4956 = vpop.f32.mrb[0].mxu0
        %v4957 = vadd.f32 %v4021, %v4956
        %v4958 = vpop.f32.mrb[0].mxu0
        %v4959 = vadd.f32 %v4025, %v4958
        %4960 = vmatprep.mubr.bf16.mxu0 %v3861
        %4961 = vmatmul.mubr.bf16.gmra.mrb[0].mxu0 %v3860
        %v4962 = vpop.f32.mrb[0].mxu0
        %v4963 = vadd.f32 %v4021, %v4962
        %v4964 = vpop.f32.mrb[0].mxu0
        %v4965 = vadd.f32 %v4025, %v4964
        %v4966 = vpop.f32.mrb[0].mxu0
        %v4967 = vadd.f32 %v4021, %v4966
        %v4968 = vpop.f32.mrb[0].mxu0
        %v4969 = vadd.f32 %v4025, %v4968
        %4970 = vmatprep.mubr.bf16.mxu0 %v3863
        %4971 = vmatmul.mubr.bf16.gmra.mrb[0].mxu0 %v3862
        %v4972 = vpop.f32.mrb[0].mxu0
        %v4973 = vadd.f32 %v4021, %v4972
        %v4974 = vpop.f32.mrb[0].mxu0
        %v4975 = vadd.f32 %v4025, %v4974
        %v4976 = vpop.f32.mrb[0].mxu0
        %v4977 = vadd.f32 %v4021, %v4976
        %v4978 = vpop.f32.mrb[0].mxu0
        %v4979 = vadd.f32 %v4025, %v4978
        %4980 = vmatprep.mubr.bf16.mxu0 %v3865
        %4981 = vmatmul.mubr.bf16.gmra.mrb[0].mxu0 %v3864
        %v4982 = vpop.f32.mrb[0].mxu0
        %v4983 = vadd.f32 %v4021, %v4982
        %v4984 = vpop.f32.mrb[0].mxu0
        %v4985 = vadd.f32 %v4025, %v4984
        %v4986 = vpop.f32.mrb[0].mxu0
        %v4987 = vadd.f32 %v4021, %v4986
        %v4988 = vpop.f32.mrb[0].mxu0
        %v4989 = vadd.f32 %v4025, %v4988
        %4990 = vmatprep.mubr.bf16.mxu0 %v3867
        %4991 = vmatmul.mubr.bf16.gmra.mrb[0].mxu0 %v3866
        %v4992 = vpop.f32.mrb[0].mxu0
        %v4993 = vadd.f32 %v4021, %v4992
        %v4994 = vpop.f32.mrb[0].mxu0
        %v4995 = vadd.f32 %v4025, %v4994
        %v4996 = vpop.f32.mrb[0].mxu0
        %v4997 = vadd.f32 %v4021, %v4996
        %v4998 = vpop.f32.mrb[0].mxu0
        %v4999 = vadd.f32 %v4025, %v4998
        %5000 = vmatprep.mubr.bf16.mxu0 %v3869
        %5001 = vmatmul.mubr.bf16.gmra.mrb[0].mxu0 %v3868
        %v5002 = vpop.f32.mrb[0].mxu0
        %v5003 = vadd.f32 %v4021, %v5002
        %v5004 = vpop.f32.mrb[0].mxu0
        %v5005 = vadd.f32 %v4025, %v5004
        %v5006 = vpop.f32.mrb[0].mxu0
        %v5007 = vadd.f32 %v4021, %v5006
        %v5008 = vpop.f32.mrb[0].mxu0
        %v5009 = vadd.f32 %v4025, %v5008
        %5010 = vmatprep.mubr.bf16.mxu0 %v3871
        %5011 = vmatmul.mubr.bf16.gmra.mrb[0].mxu0 %v3870
        %v5012 = vpop.f32.mrb[0].mxu0
        %v5013 = vadd.f32 %v4021, %v5012
        %v5014 = vpop.f32.mrb[0].mxu0
        %v5015 = vadd.f32 %v4025, %v5014
        %v5016 = vpop.f32.mrb[0].mxu0
        %v5017 = vadd.f32 %v4021, %v5016
        %v5018 = vpop.f32.mrb[0].mxu0
        %v5019 = vadd.f32 %v4025, %v5018
        %5020 = vdwg.mxu0
        %5021 = vmatprep.subr.bf16.mxu0 %v4433
        %5022 = vmatpush1.bf16.msra.mxu0 %v4432
        %5023 = vmatprep.subr.bf16.mxu0 %v4441
        %5024 = vmatpush1.bf16.msra.mxu0 %v4440
        %5025 = vmatprep.subr.bf16.mxu0 %v4449
        %5026 = vmatpush1.bf16.msra.mxu0 %v4448
        %5027 = vmatprep.subr.bf16.mxu0 %v4457
        %5028 = vmatpush1.bf16.msra.mxu0 %v4456
        %5029 = vmatprep.subr.bf16.mxu0 %v4465
        %5030 = vmatpush1.bf16.msra.mxu0 %v4464
        %5031 = vmatprep.subr.bf16.mxu0 %v4473
        %5032 = vmatpush1.bf16.msra.mxu0 %v4472
        %5033 = vmatprep.subr.bf16.mxu0 %v4481
        %5034 = vmatpush1.bf16.msra.mxu0 %v4480
        %5035 = vmatprep.subr.bf16.mxu0 %v4489
        %5036 = vmatpush1.bf16.msra.mxu0 %v4488
        %5037 = vmatprep.subr.bf16.mxu0 %v4497
        %5038 = vmatpush1.bf16.msra.mxu0 %v4496
        %5039 = vmatprep.subr.bf16.mxu0 %v4505
        %5040 = vmatpush1.bf16.msra.mxu0 %v4504
        %5041 = vmatprep.subr.bf16.mxu0 %v4513
        %5042 = vmatpush1.bf16.msra.mxu0 %v4512
        %5043 = vmatprep.subr.bf16.mxu0 %v4521
        %5044 = vmatpush1.bf16.msra.mxu0 %v4520
        %5045 = vmatprep.subr.bf16.mxu0 %v4529
        %5046 = vmatpush1.bf16.msra.mxu0 %v4528
        %5047 = vmatprep.subr.bf16.mxu0 %v4537
        %5048 = vmatpush1.bf16.msra.mxu0 %v4536
        %5049 = vmatprep.subr.bf16.mxu0 %v4545
        %5050 = vmatpush1.bf16.msra.mxu0 %v4544
        %5051 = vmatprep.subr.bf16.mxu0 %v4553
        %5052 = vmatpush1.bf16.msra.mxu0 %v4552
        %5053 = vmatprep.mubr.bf16.mxu0 %v3857
        %5054 = vmatmul.mubr.bf16.gmra.mrb[0].mxu0 %v3856
        %v5055 = vpop.f32.mrb[0].mxu0
        %v5056 = vadd.f32 %v4029, %v5055
        %v5057 = vpop.f32.mrb[0].mxu0
        %v5058 = vadd.f32 %v4033, %v5057
        %v5059 = vpop.f32.mrb[0].mxu0
        %v5060 = vadd.f32 %v4029, %v5059
        %v5061 = vpop.f32.mrb[0].mxu0
        %v5062 = vadd.f32 %v4033, %v5061
        %5063 = vmatprep.mubr.bf16.mxu0 %v3859
        %5064 = vmatmul.mubr.bf16.gmra.mrb[0].mxu0 %v3858
        %v5065 = vpop.f32.mrb[0].mxu0
        %v5066 = vadd.f32 %v4029, %v5065
        %v5067 = vpop.f32.mrb[0].mxu0
        %v5068 = vadd.f32 %v4033, %v5067
        %v5069 = vpop.f32.mrb[0].mxu0
        %v5070 = vadd.f32 %v4029, %v5069
        %v5071 = vpop.f32.mrb[0].mxu0
        %v5072 = vadd.f32 %v4033, %v5071
        %5073 = vmatprep.mubr.bf16.mxu0 %v3861
        %5074 = vmatmul.mubr.bf16.gmra.mrb[0].mxu0 %v3860
        %v5075 = vpop.f32.mrb[0].mxu0
        %v5076 = vadd.f32 %v4029, %v5075
        %v5077 = vpop.f32.mrb[0].mxu0
        %v5078 = vadd.f32 %v4033, %v5077
        %v5079 = vpop.f32.mrb[0].mxu0
        %v5080 = vadd.f32 %v4029, %v5079
        %v5081 = vpop.f32.mrb[0].mxu0
        %v5082 = vadd.f32 %v4033, %v5081
        %5083 = vmatprep.mubr.bf16.mxu0 %v3863
        %5084 = vmatmul.mubr.bf16.gmra.mrb[0].mxu0 %v3862
        %v5085 = vpop.f32.mrb[0].mxu0
        %v5086 = vadd.f32 %v4029, %v5085
        %v5087 = vpop.f32.mrb[0].mxu0
        %v5088 = vadd.f32 %v4033, %v5087
        %v5089 = vpop.f32.mrb[0].mxu0
        %v5090 = vadd.f32 %v4029, %v5089
        %v5091 = vpop.f32.mrb[0].mxu0
        %v5092 = vadd.f32 %v4033, %v5091
        %5093 = vmatprep.mubr.bf16.mxu0 %v3865
        %5094 = vmatmul.mubr.bf16.gmra.mrb[0].mxu0 %v3864
        %v5095 = vpop.f32.mrb[0].mxu0
        %v5096 = vadd.f32 %v4029, %v5095
        %v5097 = vpop.f32.mrb[0].mxu0
        %v5098 = vadd.f32 %v4033, %v5097
        %v5099 = vpop.f32.mrb[0].mxu0
        %v5100 = vadd.f32 %v4029, %v5099
        %v5101 = vpop.f32.mrb[0].mxu0
        %v5102 = vadd.f32 %v4033, %v5101
        %5103 = vmatprep.mubr.bf16.mxu0 %v3867
        %5104 = vmatmul.mubr.bf16.gmra.mrb[0].mxu0 %v3866
        %v5105 = vpop.f32.mrb[0].mxu0
        %v5106 = vadd.f32 %v4029, %v5105
        %v5107 = vpop.f32.mrb[0].mxu0
        %v5108 = vadd.f32 %v4033, %v5107
        %v5109 = vpop.f32.mrb[0].mxu0
        %v5110 = vadd.f32 %v4029, %v5109
        %v5111 = vpop.f32.mrb[0].mxu0
        %v5112 = vadd.f32 %v4033, %v5111
        %5113 = vmatprep.mubr.bf16.mxu0 %v3869
        %5114 = vmatmul.mubr.bf16.gmra.mrb[0].mxu0 %v3868
        %v5115 = vpop.f32.mrb[0].mxu0
        %v5116 = vadd.f32 %v4029, %v5115
        %v5117 = vpop.f32.mrb[0].mxu0
        %v5118 = vadd.f32 %v4033, %v5117
        %v5119 = vpop.f32.mrb[0].mxu0
        %v5120 = vadd.f32 %v4029, %v5119
        %v5121 = vpop.f32.mrb[0].mxu0
        %v5122 = vadd.f32 %v4033, %v5121
        %5123 = vmatprep.mubr.bf16.mxu0 %v3871
        %5124 = vmatmul.mubr.bf16.gmra.mrb[0].mxu0 %v3870
        %v5125 = vpop.f32.mrb[0].mxu0
        %v5126 = vadd.f32 %v4029, %v5125
        %v5127 = vpop.f32.mrb[0].mxu0
        %v5128 = vadd.f32 %v4033, %v5127
        %v5129 = vpop.f32.mrb[0].mxu0
        %v5130 = vadd.f32 %v4029, %v5129
        %v5131 = vpop.f32.mrb[0].mxu0
        %v5132 = vadd.f32 %v4033, %v5131
        %5133 = vdwg.mxu0
        %v5134 = vmax.f32 %v4717, 0.0
        %v5135 = vmax.f32 %v4719, 0.0
        %v5136 = vmax.f32 %v4830, 0.0
        %v5137 = vmax.f32 %v4832, 0.0
        %v5138 = vmax.f32 %v4943, 0.0
        %v5139 = vmax.f32 %v4945, 0.0
        %v5140 = vmax.f32 %v5056, 0.0
        %v5141 = vmax.f32 %v5058, 0.0
        %v5142 = vmax.f32 %v4721, 0.0
        %v5143 = vmax.f32 %v4723, 0.0
        %v5144 = vmax.f32 %v4834, 0.0
        %v5145 = vmax.f32 %v4836, 0.0
        %v5146 = vmax.f32 %v4947, 0.0
        %v5147 = vmax.f32 %v4949, 0.0
        %v5148 = vmax.f32 %v5060, 0.0
        %v5149 = vmax.f32 %v5062, 0.0
        %v5150 = vmax.f32 %v4727, 0.0
        %v5151 = vmax.f32 %v4729, 0.0
        %v5152 = vmax.f32 %v4840, 0.0
        %v5153 = vmax.f32 %v4842, 0.0
        %v5154 = vmax.f32 %v4953, 0.0
        %v5155 = vmax.f32 %v4955, 0.0
        %v5156 = vmax.f32 %v5066, 0.0
        %v5157 = vmax.f32 %v5068, 0.0
        %v5158 = vmax.f32 %v4731, 0.0
        %v5159 = vmax.f32 %v4733, 0.0
        %v5160 = vmax.f32 %v4844, 0.0
        %v5161 = vmax.f32 %v4846, 0.0
        %v5162 = vmax.f32 %v4957, 0.0
        %v5163 = vmax.f32 %v4959, 0.0
        %v5164 = vmax.f32 %v5070, 0.0
        %v5165 = vmax.f32 %v5072, 0.0
        %v5166 = vmax.f32 %v4737, 0.0
        %v5167 = vmax.f32 %v4739, 0.0
        %v5168 = vmax.f32 %v4850, 0.0
        %v5169 = vmax.f32 %v4852, 0.0
        %v5170 = vmax.f32 %v4963, 0.0
        %v5171 = vmax.f32 %v4965, 0.0
        %v5172 = vmax.f32 %v5076, 0.0
        %v5173 = vmax.f32 %v5078, 0.0
        %v5174 = vmax.f32 %v4741, 0.0
        %v5175 = vmax.f32 %v4743, 0.0
        %v5176 = vmax.f32 %v4854, 0.0
        %v5177 = vmax.f32 %v4856, 0.0
        %v5178 = vmax.f32 %v4967, 0.0
        %v5179 = vmax.f32 %v4969, 0.0
        %v5180 = vmax.f32 %v5080, 0.0
        %v5181 = vmax.f32 %v5082, 0.0
        %v5182 = vmax.f32 %v4747, 0.0
        %v5183 = vmax.f32 %v4749, 0.0
        %v5184 = vmax.f32 %v4860, 0.0
        %v5185 = vmax.f32 %v4862, 0.0
        %v5186 = vmax.f32 %v4973, 0.0
        %v5187 = vmax.f32 %v4975, 0.0
        %v5188 = vmax.f32 %v5086, 0.0
        %v5189 = vmax.f32 %v5088, 0.0
        %v5190 = vmax.f32 %v4751, 0.0
        %v5191 = vmax.f32 %v4753, 0.0
        %v5192 = vmax.f32 %v4864, 0.0
        %v5193 = vmax.f32 %v4866, 0.0
        %v5194 = vmax.f32 %v4977, 0.0
        %v5195 = vmax.f32 %v4979, 0.0
        %v5196 = vmax.f32 %v5090, 0.0
        %v5197 = vmax.f32 %v5092, 0.0
        %v5198 = vmax.f32 %v4757, 0.0
        %v5199 = vmax.f32 %v4759, 0.0
        %v5200 = vmax.f32 %v4870, 0.0
        %v5201 = vmax.f32 %v4872, 0.0
        %v5202 = vmax.f32 %v4983, 0.0
        %v5203 = vmax.f32 %v4985, 0.0
        %v5204 = vmax.f32 %v5096, 0.0
        %v5205 = vmax.f32 %v5098, 0.0
        %v5206 = vmax.f32 %v4761, 0.0
        %v5207 = vmax.f32 %v4763, 0.0
        %v5208 = vmax.f32 %v4874, 0.0
        %v5209 = vmax.f32 %v4876, 0.0
        %v5210 = vmax.f32 %v4987, 0.0
        %v5211 = vmax.f32 %v4989, 0.0
        %v5212 = vmax.f32 %v5100, 0.0
        %v5213 = vmax.f32 %v5102, 0.0
        %v5214 = vmax.f32 %v4767, 0.0
        %v5215 = vmax.f32 %v4769, 0.0
        %v5216 = vmax.f32 %v4880, 0.0
        %v5217 = vmax.f32 %v4882, 0.0
        %v5218 = vmax.f32 %v4993, 0.0
        %v5219 = vmax.f32 %v4995, 0.0
        %v5220 = vmax.f32 %v5106, 0.0
        %v5221 = vmax.f32 %v5108, 0.0
        %v5222 = vmax.f32 %v4771, 0.0
        %v5223 = vmax.f32 %v4773, 0.0
        %v5224 = vmax.f32 %v4884, 0.0
        %v5225 = vmax.f32 %v4886, 0.0
        %v5226 = vmax.f32 %v4997, 0.0
        %v5227 = vmax.f32 %v4999, 0.0
        %v5228 = vmax.f32 %v5110, 0.0
        %v5229 = vmax.f32 %v5112, 0.0
        %v5230 = vmax.f32 %v4777, 0.0
        %v5231 = vmax.f32 %v4779, 0.0
        %v5232 = vmax.f32 %v4890, 0.0
        %v5233 = vmax.f32 %v4892, 0.0
        %v5234 = vmax.f32 %v5003, 0.0
        %v5235 = vmax.f32 %v5005, 0.0
        %v5236 = vmax.f32 %v5116, 0.0
        %v5237 = vmax.f32 %v5118, 0.0
        %v5238 = vmax.f32 %v4781, 0.0
        %v5239 = vmax.f32 %v4783, 0.0
        %v5240 = vmax.f32 %v4894, 0.0
        %v5241 = vmax.f32 %v4896, 0.0
        %v5242 = vmax.f32 %v5007, 0.0
        %v5243 = vmax.f32 %v5009, 0.0
        %v5244 = vmax.f32 %v5120, 0.0
        %v5245 = vmax.f32 %v5122, 0.0
        %v5246 = vmax.f32 %v4787, 0.0
        %v5247 = vmax.f32 %v4789, 0.0
        %v5248 = vmax.f32 %v4900, 0.0
        %v5249 = vmax.f32 %v4902, 0.0
        %v5250 = vmax.f32 %v5013, 0.0
        %v5251 = vmax.f32 %v5015, 0.0
        %v5252 = vmax.f32 %v5126, 0.0
        %v5253 = vmax.f32 %v5128, 0.0
        %v5254 = vmax.f32 %v4791, 0.0
        %v5255 = vmax.f32 %v4793, 0.0
        %v5256 = vmax.f32 %v4904, 0.0
        %v5257 = vmax.f32 %v4906, 0.0
        %v5258 = vmax.f32 %v5017, 0.0
        %v5259 = vmax.f32 %v5019, 0.0
        %v5260 = vmax.f32 %v5130, 0.0
        %v5261 = vmax.f32 %v5132, 0.0
        %v5262 = vpack.c.bf16 %v5142, %v5134
        %v5263 = vpack.c.bf16 %v5143, %v5135
        %v5264 = vpack.c.bf16 %v5144, %v5136
        %v5265 = vpack.c.bf16 %v5145, %v5137
        %v5266 = vpack.c.bf16 %v5146, %v5138
        %v5267 = vpack.c.bf16 %v5147, %v5139
        %v5268 = vpack.c.bf16 %v5148, %v5140
        %v5269 = vpack.c.bf16 %v5149, %v5141
        %v5270 = vpack.c.bf16 %v5158, %v5150
        %v5271 = vpack.c.bf16 %v5159, %v5151
        %v5272 = vpack.c.bf16 %v5160, %v5152
        %v5273 = vpack.c.bf16 %v5161, %v5153
        %v5274 = vpack.c.bf16 %v5162, %v5154
        %v5275 = vpack.c.bf16 %v5163, %v5155
        %v5276 = vpack.c.bf16 %v5164, %v5156
        %v5277 = vpack.c.bf16 %v5165, %v5157
        %v5278 = vpack.c.bf16 %v5174, %v5166
        %v5279 = vpack.c.bf16 %v5175, %v5167
        %v5280 = vpack.c.bf16 %v5176, %v5168
        %v5281 = vpack.c.bf16 %v5177, %v5169
        %v5282 = vpack.c.bf16 %v5178, %v5170
        %v5283 = vpack.c.bf16 %v5179, %v5171
        %v5284 = vpack.c.bf16 %v5180, %v5172
        %v5285 = vpack.c.bf16 %v5181, %v5173
        %v5286 = vpack.c.bf16 %v5190, %v5182
        %v5287 = vpack.c.bf16 %v5191, %v5183
        %v5288 = vpack.c.bf16 %v5192, %v5184
        %v5289 = vpack.c.bf16 %v5193, %v5185
        %v5290 = vpack.c.bf16 %v5194, %v5186
        %v5291 = vpack.c.bf16 %v5195, %v5187
        %v5292 = vpack.c.bf16 %v5196, %v5188
        %v5293 = vpack.c.bf16 %v5197, %v5189
        %v5294 = vpack.c.bf16 %v5206, %v5198
        %v5295 = vpack.c.bf16 %v5207, %v5199
        %v5296 = vpack.c.bf16 %v5208, %v5200
        %v5297 = vpack.c.bf16 %v5209, %v5201
        %v5298 = vpack.c.bf16 %v5210, %v5202
        %v5299 = vpack.c.bf16 %v5211, %v5203
        %v5300 = vpack.c.bf16 %v5212, %v5204
        %v5301 = vpack.c.bf16 %v5213, %v5205
        %v5302 = vpack.c.bf16 %v5222, %v5214
        %v5303 = vpack.c.bf16 %v5223, %v5215
        %v5304 = vpack.c.bf16 %v5224, %v5216
        %v5305 = vpack.c.bf16 %v5225, %v5217
        %v5306 = vpack.c.bf16 %v5226, %v5218
        %v5307 = vpack.c.bf16 %v5227, %v5219
        %v5308 = vpack.c.bf16 %v5228, %v5220
        %v5309 = vpack.c.bf16 %v5229, %v5221
        %v5310 = vpack.c.bf16 %v5238, %v5230
        %v5311 = vpack.c.bf16 %v5239, %v5231
        %v5312 = vpack.c.bf16 %v5240, %v5232
        %v5313 = vpack.c.bf16 %v5241, %v5233
        %v5314 = vpack.c.bf16 %v5242, %v5234
        %v5315 = vpack.c.bf16 %v5243, %v5235
        %v5316 = vpack.c.bf16 %v5244, %v5236
        %v5317 = vpack.c.bf16 %v5245, %v5237
        %v5318 = vpack.c.bf16 %v5254, %v5246
        %v5319 = vpack.c.bf16 %v5255, %v5247
        %v5320 = vpack.c.bf16 %v5256, %v5248
        %v5321 = vpack.c.bf16 %v5257, %v5249
        %v5322 = vpack.c.bf16 %v5258, %v5250
        %v5323 = vpack.c.bf16 %v5259, %v5251
        %v5324 = vpack.c.bf16 %v5260, %v5252
        %v5325 = vpack.c.bf16 %v5261, %v5253
        %v5326 = vld [vmem:[#allocation12] sm:$0xff]
        %v5327 = vld [vmem:[#allocation12 + $0x8] sm:$0xff]
        %v5328 = vld [vmem:[#allocation12 + $0x10] sm:$0xff]
        %v5329 = vld [vmem:[#allocation12 + $0x18] sm:$0xff]
        %v5330 = vld [vmem:[#allocation12 + $0x20] sm:$0xff]
        %v5331 = vld [vmem:[#allocation12 + $0x28] sm:$0xff]
        %v5332 = vld [vmem:[#allocation12 + $0x30] sm:$0xff]
        %v5333 = vld [vmem:[#allocation12 + $0x38] sm:$0xff]
        %v5334 = vld [vmem:[#allocation12 + $0x40] sm:$0xff]
        %v5335 = vld [vmem:[#allocation12 + $0x48] sm:$0xff]
        %v5336 = vld [vmem:[#allocation12 + $0x50] sm:$0xff]
        %v5337 = vld [vmem:[#allocation12 + $0x58] sm:$0xff]
        %v5338 = vld [vmem:[#allocation12 + $0x60] sm:$0xff]
        %v5339 = vld [vmem:[#allocation12 + $0x68] sm:$0xff]
        %v5340 = vld [vmem:[#allocation12 + $0x70] sm:$0xff]
        %v5341 = vld [vmem:[#allocation12 + $0x78] sm:$0xff]
        %v5342 = vld [vmem:[#allocation12 + $0x80] sm:$0xff]
        %v5343 = vld [vmem:[#allocation12 + $0x88] sm:$0xff]
        %v5344 = vld [vmem:[#allocation12 + $0x90] sm:$0xff]
        %v5345 = vld [vmem:[#allocation12 + $0x98] sm:$0xff]
        %v5346 = vld [vmem:[#allocation12 + $0xa0] sm:$0xff]
        %v5347 = vld [vmem:[#allocation12 + $0xa8] sm:$0xff]
        %v5348 = vld [vmem:[#allocation12 + $0xb0] sm:$0xff]
        %v5349 = vld [vmem:[#allocation12 + $0xb8] sm:$0xff]
        %v5350 = vld [vmem:[#allocation12 + $0xc0] sm:$0xff]
        %v5351 = vld [vmem:[#allocation12 + $0xc8] sm:$0xff]
        %v5352 = vld [vmem:[#allocation12 + $0xd0] sm:$0xff]
        %v5353 = vld [vmem:[#allocation12 + $0xd8] sm:$0xff]
        %v5354 = vld [vmem:[#allocation12 + $0xe0] sm:$0xff]
        %v5355 = vld [vmem:[#allocation12 + $0xe8] sm:$0xff]
        %v5356 = vld [vmem:[#allocation12 + $0xf0] sm:$0xff]
        %v5357 = vld [vmem:[#allocation12 + $0xf8] sm:$0xff]
        %v5358 = vld [vmem:[#allocation12 + $0x100] sm:$0xff]
        %v5359 = vld [vmem:[#allocation12 + $0x108] sm:$0xff]
        %v5360 = vld [vmem:[#allocation12 + $0x110] sm:$0xff]
        %v5361 = vld [vmem:[#allocation12 + $0x118] sm:$0xff]
        %v5362 = vld [vmem:[#allocation12 + $0x120] sm:$0xff]
        %v5363 = vld [vmem:[#allocation12 + $0x128] sm:$0xff]
        %v5364 = vld [vmem:[#allocation12 + $0x130] sm:$0xff]
        %v5365 = vld [vmem:[#allocation12 + $0x138] sm:$0xff]
        %v5366 = vld [vmem:[#allocation12 + $0x140] sm:$0xff]
        %v5367 = vld [vmem:[#allocation12 + $0x148] sm:$0xff]
        %v5368 = vld [vmem:[#allocation12 + $0x150] sm:$0xff]
        %v5369 = vld [vmem:[#allocation12 + $0x158] sm:$0xff]
        %v5370 = vld [vmem:[#allocation12 + $0x160] sm:$0xff]
        %v5371 = vld [vmem:[#allocation12 + $0x168] sm:$0xff]
        %v5372 = vld [vmem:[#allocation12 + $0x170] sm:$0xff]
        %v5373 = vld [vmem:[#allocation12 + $0x178] sm:$0xff]
        %v5374 = vld [vmem:[#allocation12 + $0x180] sm:$0xff]
        %v5375 = vld [vmem:[#allocation12 + $0x188] sm:$0xff]
        %v5376 = vld [vmem:[#allocation12 + $0x190] sm:$0xff]
        %v5377 = vld [vmem:[#allocation12 + $0x198] sm:$0xff]
        %v5378 = vld [vmem:[#allocation12 + $0x1a0] sm:$0xff]
        %v5379 = vld [vmem:[#allocation12 + $0x1a8] sm:$0xff]
        %v5380 = vld [vmem:[#allocation12 + $0x1b0] sm:$0xff]
        %v5381 = vld [vmem:[#allocation12 + $0x1b8] sm:$0xff]
        %v5382 = vld [vmem:[#allocation12 + $0x1c0] sm:$0xff]
        %v5383 = vld [vmem:[#allocation12 + $0x1c8] sm:$0xff]
        %v5384 = vld [vmem:[#allocation12 + $0x1d0] sm:$0xff]
        %v5385 = vld [vmem:[#allocation12 + $0x1d8] sm:$0xff]
        %v5386 = vld [vmem:[#allocation12 + $0x1e0] sm:$0xff]
        %v5387 = vld [vmem:[#allocation12 + $0x1e8] sm:$0xff]
        %v5388 = vld [vmem:[#allocation12 + $0x1f0] sm:$0xff]
        %v5389 = vld [vmem:[#allocation12 + $0x1f8] sm:$0xff]
        %v5390 = vld [vmem:[#allocation12 + $0x200] sm:$0xff]
        %v5391 = vld [vmem:[#allocation12 + $0x208] sm:$0xff]
        %v5392 = vld [vmem:[#allocation12 + $0x210] sm:$0xff]
        %v5393 = vld [vmem:[#allocation12 + $0x218] sm:$0xff]
        %v5394 = vld [vmem:[#allocation12 + $0x220] sm:$0xff]
        %v5395 = vld [vmem:[#allocation12 + $0x228] sm:$0xff]
        %v5396 = vld [vmem:[#allocation12 + $0x230] sm:$0xff]
        %v5397 = vld [vmem:[#allocation12 + $0x238] sm:$0xff]
        %v5398 = vld [vmem:[#allocation12 + $0x240] sm:$0xff]
        %v5399 = vld [vmem:[#allocation12 + $0x248] sm:$0xff]
        %v5400 = vld [vmem:[#allocation12 + $0x250] sm:$0xff]
        %v5401 = vld [vmem:[#allocation12 + $0x258] sm:$0xff]
        %v5402 = vld [vmem:[#allocation12 + $0x260] sm:$0xff]
        %v5403 = vld [vmem:[#allocation12 + $0x268] sm:$0xff]
        %v5404 = vld [vmem:[#allocation12 + $0x270] sm:$0xff]
        %v5405 = vld [vmem:[#allocation12 + $0x278] sm:$0xff]
        %v5406 = vld [vmem:[#allocation12 + $0x280] sm:$0xff]
        %v5407 = vld [vmem:[#allocation12 + $0x288] sm:$0xff]
        %v5408 = vld [vmem:[#allocation12 + $0x290] sm:$0xff]
        %v5409 = vld [vmem:[#allocation12 + $0x298] sm:$0xff]
        %v5410 = vld [vmem:[#allocation12 + $0x2a0] sm:$0xff]
        %v5411 = vld [vmem:[#allocation12 + $0x2a8] sm:$0xff]
        %v5412 = vld [vmem:[#allocation12 + $0x2b0] sm:$0xff]
        %v5413 = vld [vmem:[#allocation12 + $0x2b8] sm:$0xff]
        %v5414 = vld [vmem:[#allocation12 + $0x2c0] sm:$0xff]
        %v5415 = vld [vmem:[#allocation12 + $0x2c8] sm:$0xff]
        %v5416 = vld [vmem:[#allocation12 + $0x2d0] sm:$0xff]
        %v5417 = vld [vmem:[#allocation12 + $0x2d8] sm:$0xff]
        %v5418 = vld [vmem:[#allocation12 + $0x2e0] sm:$0xff]
        %v5419 = vld [vmem:[#allocation12 + $0x2e8] sm:$0xff]
        %v5420 = vld [vmem:[#allocation12 + $0x2f0] sm:$0xff]
        %v5421 = vld [vmem:[#allocation12 + $0x2f8] sm:$0xff]
        %v5422 = vld [vmem:[#allocation12 + $0x300] sm:$0xff]
        %v5423 = vld [vmem:[#allocation12 + $0x308] sm:$0xff]
        %v5424 = vld [vmem:[#allocation12 + $0x310] sm:$0xff]
        %v5425 = vld [vmem:[#allocation12 + $0x318] sm:$0xff]
        %v5426 = vld [vmem:[#allocation12 + $0x320] sm:$0xff]
        %v5427 = vld [vmem:[#allocation12 + $0x328] sm:$0xff]
        %v5428 = vld [vmem:[#allocation12 + $0x330] sm:$0xff]
        %v5429 = vld [vmem:[#allocation12 + $0x338] sm:$0xff]
        %v5430 = vld [vmem:[#allocation12 + $0x340] sm:$0xff]
        %v5431 = vld [vmem:[#allocation12 + $0x348] sm:$0xff]
        %v5432 = vld [vmem:[#allocation12 + $0x350] sm:$0xff]
        %v5433 = vld [vmem:[#allocation12 + $0x358] sm:$0xff]
        %v5434 = vld [vmem:[#allocation12 + $0x360] sm:$0xff]
        %v5435 = vld [vmem:[#allocation12 + $0x368] sm:$0xff]
        %v5436 = vld [vmem:[#allocation12 + $0x370] sm:$0xff]
        %v5437 = vld [vmem:[#allocation12 + $0x378] sm:$0xff]
        %v5438 = vld [vmem:[#allocation12 + $0x380] sm:$0xff]
        %v5439 = vld [vmem:[#allocation12 + $0x388] sm:$0xff]
        %v5440 = vld [vmem:[#allocation12 + $0x390] sm:$0xff]
        %v5441 = vld [vmem:[#allocation12 + $0x398] sm:$0xff]
        %v5442 = vld [vmem:[#allocation12 + $0x3a0] sm:$0xff]
        %v5443 = vld [vmem:[#allocation12 + $0x3a8] sm:$0xff]
        %v5444 = vld [vmem:[#allocation12 + $0x3b0] sm:$0xff]
        %v5445 = vld [vmem:[#allocation12 + $0x3b8] sm:$0xff]
        %v5446 = vld [vmem:[#allocation12 + $0x3c0] sm:$0xff]
        %v5447 = vld [vmem:[#allocation12 + $0x3c8] sm:$0xff]
        %v5448 = vld [vmem:[#allocation12 + $0x3d0] sm:$0xff]
        %v5449 = vld [vmem:[#allocation12 + $0x3d8] sm:$0xff]
        %v5450 = vld [vmem:[#allocation12 + $0x3e0] sm:$0xff]
        %v5451 = vld [vmem:[#allocation12 + $0x3e8] sm:$0xff]
        %v5452 = vld [vmem:[#allocation12 + $0x3f0] sm:$0xff]
        %v5453 = vld [vmem:[#allocation12 + $0x3f8] sm:$0xff]
        %v5454 = vld [vmem:[%s11] sm:$0x3]
        %v5456 = vlaneseq
        %v5457 = vshrl.u32 %v5456, 7
        %v5458 = vsub.s32 0, %v5457
        %v5459 = vrot.slane %v5454, %v5458
        %v5460 = vlaneseq
        %v5461 = vshrl.u32 %v5460, 7
        %v5462 = vsub.s32 1, %v5461
        %v5463 = vrot.slane %v5454, %v5462
        %v5594 = vunpack.c.l.b16 %v5326
        %v5595 = vunpack.c.h.b16 %v5326
        %v5596 = vunpack.c.l.b16 %v5327
        %v5597 = vunpack.c.h.b16 %v5327
        %v5598 = vunpack.c.l.b16 %v5328
        %v5599 = vunpack.c.h.b16 %v5328
        %v5600 = vunpack.c.l.b16 %v5329
        %v5601 = vunpack.c.h.b16 %v5329
        %v5602 = vunpack.c.l.b16 %v5330
        %v5603 = vunpack.c.h.b16 %v5330
        %v5604 = vunpack.c.l.b16 %v5331
        %v5605 = vunpack.c.h.b16 %v5331
        %v5606 = vunpack.c.l.b16 %v5332
        %v5607 = vunpack.c.h.b16 %v5332
        %v5608 = vunpack.c.l.b16 %v5333
        %v5609 = vunpack.c.h.b16 %v5333
        %v5610 = vunpack.c.l.b16 %v5334
        %v5611 = vunpack.c.h.b16 %v5334
        %v5612 = vunpack.c.l.b16 %v5335
        %v5613 = vunpack.c.h.b16 %v5335
        %v5614 = vunpack.c.l.b16 %v5336
        %v5615 = vunpack.c.h.b16 %v5336
        %v5616 = vunpack.c.l.b16 %v5337
        %v5617 = vunpack.c.h.b16 %v5337
        %v5618 = vunpack.c.l.b16 %v5338
        %v5619 = vunpack.c.h.b16 %v5338
        %v5620 = vunpack.c.l.b16 %v5339
        %v5621 = vunpack.c.h.b16 %v5339
        %v5622 = vunpack.c.l.b16 %v5340
        %v5623 = vunpack.c.h.b16 %v5340
        %v5624 = vunpack.c.l.b16 %v5341
        %v5625 = vunpack.c.h.b16 %v5341
        %v5626 = vunpack.c.l.b16 %v5342
        %v5627 = vunpack.c.h.b16 %v5342
        %v5628 = vunpack.c.l.b16 %v5343
        %v5629 = vunpack.c.h.b16 %v5343
        %v5630 = vunpack.c.l.b16 %v5344
        %v5631 = vunpack.c.h.b16 %v5344
        %v5632 = vunpack.c.l.b16 %v5345
        %v5633 = vunpack.c.h.b16 %v5345
        %v5634 = vunpack.c.l.b16 %v5346
        %v5635 = vunpack.c.h.b16 %v5346
        %v5636 = vunpack.c.l.b16 %v5347
        %v5637 = vunpack.c.h.b16 %v5347
        %v5638 = vunpack.c.l.b16 %v5348
        %v5639 = vunpack.c.h.b16 %v5348
        %v5640 = vunpack.c.l.b16 %v5349
        %v5641 = vunpack.c.h.b16 %v5349
        %v5642 = vunpack.c.l.b16 %v5350
        %v5643 = vunpack.c.h.b16 %v5350
        %v5644 = vunpack.c.l.b16 %v5351
        %v5645 = vunpack.c.h.b16 %v5351
        %v5646 = vunpack.c.l.b16 %v5352
        %v5647 = vunpack.c.h.b16 %v5352
        %v5648 = vunpack.c.l.b16 %v5353
        %v5649 = vunpack.c.h.b16 %v5353
        %v5650 = vunpack.c.l.b16 %v5354
        %v5651 = vunpack.c.h.b16 %v5354
        %v5652 = vunpack.c.l.b16 %v5355
        %v5653 = vunpack.c.h.b16 %v5355
        %v5654 = vunpack.c.l.b16 %v5356
        %v5655 = vunpack.c.h.b16 %v5356
        %v5656 = vunpack.c.l.b16 %v5357
        %v5657 = vunpack.c.h.b16 %v5357
        %v5658 = vunpack.c.l.b16 %v5358
        %v5659 = vunpack.c.h.b16 %v5358
        %v5660 = vunpack.c.l.b16 %v5359
        %v5661 = vunpack.c.h.b16 %v5359
        %v5662 = vunpack.c.l.b16 %v5360
        %v5663 = vunpack.c.h.b16 %v5360
        %v5664 = vunpack.c.l.b16 %v5361
        %v5665 = vunpack.c.h.b16 %v5361
        %v5666 = vunpack.c.l.b16 %v5362
        %v5667 = vunpack.c.h.b16 %v5362
        %v5668 = vunpack.c.l.b16 %v5363
        %v5669 = vunpack.c.h.b16 %v5363
        %v5670 = vunpack.c.l.b16 %v5364
        %v5671 = vunpack.c.h.b16 %v5364
        %v5672 = vunpack.c.l.b16 %v5365
        %v5673 = vunpack.c.h.b16 %v5365
        %v5674 = vunpack.c.l.b16 %v5366
        %v5675 = vunpack.c.h.b16 %v5366
        %v5676 = vunpack.c.l.b16 %v5367
        %v5677 = vunpack.c.h.b16 %v5367
        %v5678 = vunpack.c.l.b16 %v5368
        %v5679 = vunpack.c.h.b16 %v5368
        %v5680 = vunpack.c.l.b16 %v5369
        %v5681 = vunpack.c.h.b16 %v5369
        %v5682 = vunpack.c.l.b16 %v5370
        %v5683 = vunpack.c.h.b16 %v5370
        %v5684 = vunpack.c.l.b16 %v5371
        %v5685 = vunpack.c.h.b16 %v5371
        %v5686 = vunpack.c.l.b16 %v5372
        %v5687 = vunpack.c.h.b16 %v5372
        %v5688 = vunpack.c.l.b16 %v5373
        %v5689 = vunpack.c.h.b16 %v5373
        %v5690 = vunpack.c.l.b16 %v5374
        %v5691 = vunpack.c.h.b16 %v5374
        %v5692 = vunpack.c.l.b16 %v5375
        %v5693 = vunpack.c.h.b16 %v5375
        %v5694 = vunpack.c.l.b16 %v5376
        %v5695 = vunpack.c.h.b16 %v5376
        %v5696 = vunpack.c.l.b16 %v5377
        %v5697 = vunpack.c.h.b16 %v5377
        %v5698 = vunpack.c.l.b16 %v5378
        %v5699 = vunpack.c.h.b16 %v5378
        %v5700 = vunpack.c.l.b16 %v5379
        %v5701 = vunpack.c.h.b16 %v5379
        %v5702 = vunpack.c.l.b16 %v5380
        %v5703 = vunpack.c.h.b16 %v5380
        %v5704 = vunpack.c.l.b16 %v5381
        %v5705 = vunpack.c.h.b16 %v5381
        %v5706 = vunpack.c.l.b16 %v5382
        %v5707 = vunpack.c.h.b16 %v5382
        %v5708 = vunpack.c.l.b16 %v5383
        %v5709 = vunpack.c.h.b16 %v5383
        %v5710 = vunpack.c.l.b16 %v5384
        %v5711 = vunpack.c.h.b16 %v5384
        %v5712 = vunpack.c.l.b16 %v5385
        %v5713 = vunpack.c.h.b16 %v5385
        %v5714 = vunpack.c.l.b16 %v5386
        %v5715 = vunpack.c.h.b16 %v5386
        %v5716 = vunpack.c.l.b16 %v5387
        %v5717 = vunpack.c.h.b16 %v5387
        %v5718 = vunpack.c.l.b16 %v5388
        %v5719 = vunpack.c.h.b16 %v5388
        %v5720 = vunpack.c.l.b16 %v5389
        %v5721 = vunpack.c.h.b16 %v5389
        %v5722 = vunpack.c.l.b16 %v5390
        %v5723 = vunpack.c.h.b16 %v5390
        %v5724 = vunpack.c.l.b16 %v5391
        %v5725 = vunpack.c.h.b16 %v5391
        %v5726 = vunpack.c.l.b16 %v5392
        %v5727 = vunpack.c.h.b16 %v5392
        %v5728 = vunpack.c.l.b16 %v5393
        %v5729 = vunpack.c.h.b16 %v5393
        %v5730 = vunpack.c.l.b16 %v5394
        %v5731 = vunpack.c.h.b16 %v5394
        %v5732 = vunpack.c.l.b16 %v5395
        %v5733 = vunpack.c.h.b16 %v5395
        %v5734 = vunpack.c.l.b16 %v5396
        %v5735 = vunpack.c.h.b16 %v5396
        %v5736 = vunpack.c.l.b16 %v5397
        %v5737 = vunpack.c.h.b16 %v5397
        %v5738 = vunpack.c.l.b16 %v5398
        %v5739 = vunpack.c.h.b16 %v5398
        %v5740 = vunpack.c.l.b16 %v5399
        %v5741 = vunpack.c.h.b16 %v5399
        %v5742 = vunpack.c.l.b16 %v5400
        %v5743 = vunpack.c.h.b16 %v5400
        %v5744 = vunpack.c.l.b16 %v5401
        %v5745 = vunpack.c.h.b16 %v5401
        %v5746 = vunpack.c.l.b16 %v5402
        %v5747 = vunpack.c.h.b16 %v5402
        %v5748 = vunpack.c.l.b16 %v5403
        %v5749 = vunpack.c.h.b16 %v5403
        %v5750 = vunpack.c.l.b16 %v5404
        %v5751 = vunpack.c.h.b16 %v5404
        %v5752 = vunpack.c.l.b16 %v5405
        %v5753 = vunpack.c.h.b16 %v5405
        %v5754 = vunpack.c.l.b16 %v5406
        %v5755 = vunpack.c.h.b16 %v5406
        %v5756 = vunpack.c.l.b16 %v5407
        %v5757 = vunpack.c.h.b16 %v5407
        %v5758 = vunpack.c.l.b16 %v5408
        %v5759 = vunpack.c.h.b16 %v5408
        %v5760 = vunpack.c.l.b16 %v5409
        %v5761 = vunpack.c.h.b16 %v5409
        %v5762 = vunpack.c.l.b16 %v5410
        %v5763 = vunpack.c.h.b16 %v5410
        %v5764 = vunpack.c.l.b16 %v5411
        %v5765 = vunpack.c.h.b16 %v5411
        %v5766 = vunpack.c.l.b16 %v5412
        %v5767 = vunpack.c.h.b16 %v5412
        %v5768 = vunpack.c.l.b16 %v5413
        %v5769 = vunpack.c.h.b16 %v5413
        %v5770 = vunpack.c.l.b16 %v5414
        %v5771 = vunpack.c.h.b16 %v5414
        %v5772 = vunpack.c.l.b16 %v5415
        %v5773 = vunpack.c.h.b16 %v5415
        %v5774 = vunpack.c.l.b16 %v5416
        %v5775 = vunpack.c.h.b16 %v5416
        %v5776 = vunpack.c.l.b16 %v5417
        %v5777 = vunpack.c.h.b16 %v5417
        %v5778 = vunpack.c.l.b16 %v5418
        %v5779 = vunpack.c.h.b16 %v5418
        %v5780 = vunpack.c.l.b16 %v5419
        %v5781 = vunpack.c.h.b16 %v5419
        %v5782 = vunpack.c.l.b16 %v5420
        %v5783 = vunpack.c.h.b16 %v5420
        %v5784 = vunpack.c.l.b16 %v5421
        %v5785 = vunpack.c.h.b16 %v5421
        %v5786 = vunpack.c.l.b16 %v5422
        %v5787 = vunpack.c.h.b16 %v5422
        %v5788 = vunpack.c.l.b16 %v5423
        %v5789 = vunpack.c.h.b16 %v5423
        %v5790 = vunpack.c.l.b16 %v5424
        %v5791 = vunpack.c.h.b16 %v5424
        %v5792 = vunpack.c.l.b16 %v5425
        %v5793 = vunpack.c.h.b16 %v5425
        %v5794 = vunpack.c.l.b16 %v5426
        %v5795 = vunpack.c.h.b16 %v5426
        %v5796 = vunpack.c.l.b16 %v5427
        %v5797 = vunpack.c.h.b16 %v5427
        %v5798 = vunpack.c.l.b16 %v5428
        %v5799 = vunpack.c.h.b16 %v5428
        %v5800 = vunpack.c.l.b16 %v5429
        %v5801 = vunpack.c.h.b16 %v5429
        %v5802 = vunpack.c.l.b16 %v5430
        %v5803 = vunpack.c.h.b16 %v5430
        %v5804 = vunpack.c.l.b16 %v5431
        %v5805 = vunpack.c.h.b16 %v5431
        %v5806 = vunpack.c.l.b16 %v5432
        %v5807 = vunpack.c.h.b16 %v5432
        %v5808 = vunpack.c.l.b16 %v5433
        %v5809 = vunpack.c.h.b16 %v5433
        %v5810 = vunpack.c.l.b16 %v5434
        %v5811 = vunpack.c.h.b16 %v5434
        %v5812 = vunpack.c.l.b16 %v5435
        %v5813 = vunpack.c.h.b16 %v5435
        %v5814 = vunpack.c.l.b16 %v5436
        %v5815 = vunpack.c.h.b16 %v5436
        %v5816 = vunpack.c.l.b16 %v5437
        %v5817 = vunpack.c.h.b16 %v5437
        %v5818 = vunpack.c.l.b16 %v5438
        %v5819 = vunpack.c.h.b16 %v5438
        %v5820 = vunpack.c.l.b16 %v5439
        %v5821 = vunpack.c.h.b16 %v5439
        %v5822 = vunpack.c.l.b16 %v5440
        %v5823 = vunpack.c.h.b16 %v5440
        %v5824 = vunpack.c.l.b16 %v5441
        %v5825 = vunpack.c.h.b16 %v5441
        %v5826 = vunpack.c.l.b16 %v5442
        %v5827 = vunpack.c.h.b16 %v5442
        %v5828 = vunpack.c.l.b16 %v5443
        %v5829 = vunpack.c.h.b16 %v5443
        %v5830 = vunpack.c.l.b16 %v5444
        %v5831 = vunpack.c.h.b16 %v5444
        %v5832 = vunpack.c.l.b16 %v5445
        %v5833 = vunpack.c.h.b16 %v5445
        %v5834 = vunpack.c.l.b16 %v5446
        %v5835 = vunpack.c.h.b16 %v5446
        %v5836 = vunpack.c.l.b16 %v5447
        %v5837 = vunpack.c.h.b16 %v5447
        %v5838 = vunpack.c.l.b16 %v5448
        %v5839 = vunpack.c.h.b16 %v5448
        %v5840 = vunpack.c.l.b16 %v5449
        %v5841 = vunpack.c.h.b16 %v5449
        %v5842 = vunpack.c.l.b16 %v5450
        %v5843 = vunpack.c.h.b16 %v5450
        %v5844 = vunpack.c.l.b16 %v5451
        %v5845 = vunpack.c.h.b16 %v5451
        %v5846 = vunpack.c.l.b16 %v5452
        %v5847 = vunpack.c.h.b16 %v5452
        %v5848 = vunpack.c.l.b16 %v5453
        %v5849 = vunpack.c.h.b16 %v5453
        %v5850 = vpack.c.b16 %v5596, %v5594
        %v5851 = vpack.c.b16 %v5597, %v5595
        %v5852 = vpack.c.b16 %v5600, %v5598
        %v5853 = vpack.c.b16 %v5601, %v5599
        %v5854 = vpack.c.b16 %v5604, %v5602
        %v5855 = vpack.c.b16 %v5605, %v5603
        %v5856 = vpack.c.b16 %v5608, %v5606
        %v5857 = vpack.c.b16 %v5609, %v5607
        %v5858 = vpack.c.b16 %v5612, %v5610
        %v5859 = vpack.c.b16 %v5613, %v5611
        %v5860 = vpack.c.b16 %v5616, %v5614
        %v5861 = vpack.c.b16 %v5617, %v5615
        %v5862 = vpack.c.b16 %v5620, %v5618
        %v5863 = vpack.c.b16 %v5621, %v5619
        %v5864 = vpack.c.b16 %v5624, %v5622
        %v5865 = vpack.c.b16 %v5625, %v5623
        %v5866 = vpack.c.b16 %v5628, %v5626
        %v5867 = vpack.c.b16 %v5629, %v5627
        %v5868 = vpack.c.b16 %v5632, %v5630
        %v5869 = vpack.c.b16 %v5633, %v5631
        %v5870 = vpack.c.b16 %v5636, %v5634
        %v5871 = vpack.c.b16 %v5637, %v5635
        %v5872 = vpack.c.b16 %v5640, %v5638
        %v5873 = vpack.c.b16 %v5641, %v5639
        %v5874 = vpack.c.b16 %v5644, %v5642
        %v5875 = vpack.c.b16 %v5645, %v5643
        %v5876 = vpack.c.b16 %v5648, %v5646
        %v5877 = vpack.c.b16 %v5649, %v5647
        %v5878 = vpack.c.b16 %v5652, %v5650
        %v5879 = vpack.c.b16 %v5653, %v5651
        %v5880 = vpack.c.b16 %v5656, %v5654
        %v5881 = vpack.c.b16 %v5657, %v5655
        %v5882 = vpack.c.b16 %v5660, %v5658
        %v5883 = vpack.c.b16 %v5661, %v5659
        %v5884 = vpack.c.b16 %v5664, %v5662
        %v5885 = vpack.c.b16 %v5665, %v5663
        %v5886 = vpack.c.b16 %v5668, %v5666
        %v5887 = vpack.c.b16 %v5669, %v5667
        %v5888 = vpack.c.b16 %v5672, %v5670
        %v5889 = vpack.c.b16 %v5673, %v5671
        %v5890 = vpack.c.b16 %v5676, %v5674
        %v5891 = vpack.c.b16 %v5677, %v5675
        %v5892 = vpack.c.b16 %v5680, %v5678
        %v5893 = vpack.c.b16 %v5681, %v5679
        %v5894 = vpack.c.b16 %v5684, %v5682
        %v5895 = vpack.c.b16 %v5685, %v5683
        %v5896 = vpack.c.b16 %v5688, %v5686
        %v5897 = vpack.c.b16 %v5689, %v5687
        %v5898 = vpack.c.b16 %v5692, %v5690
        %v5899 = vpack.c.b16 %v5693, %v5691
        %v5900 = vpack.c.b16 %v5696, %v5694
        %v5901 = vpack.c.b16 %v5697, %v5695
        %v5902 = vpack.c.b16 %v5700, %v5698
        %v5903 = vpack.c.b16 %v5701, %v5699
        %v5904 = vpack.c.b16 %v5704, %v5702
        %v5905 = vpack.c.b16 %v5705, %v5703
        %v5906 = vpack.c.b16 %v5708, %v5706
        %v5907 = vpack.c.b16 %v5709, %v5707
        %v5908 = vpack.c.b16 %v5712, %v5710
        %v5909 = vpack.c.b16 %v5713, %v5711
        %v5910 = vpack.c.b16 %v5716, %v5714
        %v5911 = vpack.c.b16 %v5717, %v5715
        %v5912 = vpack.c.b16 %v5720, %v5718
        %v5913 = vpack.c.b16 %v5721, %v5719
        %v5914 = vpack.c.b16 %v5724, %v5722
        %v5915 = vpack.c.b16 %v5725, %v5723
        %v5916 = vpack.c.b16 %v5728, %v5726
        %v5917 = vpack.c.b16 %v5729, %v5727
        %v5918 = vpack.c.b16 %v5732, %v5730
        %v5919 = vpack.c.b16 %v5733, %v5731
        %v5920 = vpack.c.b16 %v5736, %v5734
        %v5921 = vpack.c.b16 %v5737, %v5735
        %v5922 = vpack.c.b16 %v5740, %v5738
        %v5923 = vpack.c.b16 %v5741, %v5739
        %v5924 = vpack.c.b16 %v5744, %v5742
        %v5925 = vpack.c.b16 %v5745, %v5743
        %v5926 = vpack.c.b16 %v5748, %v5746
        %v5927 = vpack.c.b16 %v5749, %v5747
        %v5928 = vpack.c.b16 %v5752, %v5750
        %v5929 = vpack.c.b16 %v5753, %v5751
        %v5930 = vpack.c.b16 %v5756, %v5754
        %v5931 = vpack.c.b16 %v5757, %v5755
        %v5932 = vpack.c.b16 %v5760, %v5758
        %v5933 = vpack.c.b16 %v5761, %v5759
        %v5934 = vpack.c.b16 %v5764, %v5762
        %v5935 = vpack.c.b16 %v5765, %v5763
        %v5936 = vpack.c.b16 %v5768, %v5766
        %v5937 = vpack.c.b16 %v5769, %v5767
        %v5938 = vpack.c.b16 %v5772, %v5770
        %v5939 = vpack.c.b16 %v5773, %v5771
        %v5940 = vpack.c.b16 %v5776, %v5774
        %v5941 = vpack.c.b16 %v5777, %v5775
        %v5942 = vpack.c.b16 %v5780, %v5778
        %v5943 = vpack.c.b16 %v5781, %v5779
        %v5944 = vpack.c.b16 %v5784, %v5782
        %v5945 = vpack.c.b16 %v5785, %v5783
        %v5946 = vpack.c.b16 %v5788, %v5786
        %v5947 = vpack.c.b16 %v5789, %v5787
        %v5948 = vpack.c.b16 %v5792, %v5790
        %v5949 = vpack.c.b16 %v5793, %v5791
        %v5950 = vpack.c.b16 %v5796, %v5794
        %v5951 = vpack.c.b16 %v5797, %v5795
        %v5952 = vpack.c.b16 %v5800, %v5798
        %v5953 = vpack.c.b16 %v5801, %v5799
        %v5954 = vpack.c.b16 %v5804, %v5802
        %v5955 = vpack.c.b16 %v5805, %v5803
        %v5956 = vpack.c.b16 %v5808, %v5806
        %v5957 = vpack.c.b16 %v5809, %v5807
        %v5958 = vpack.c.b16 %v5812, %v5810
        %v5959 = vpack.c.b16 %v5813, %v5811
        %v5960 = vpack.c.b16 %v5816, %v5814
        %v5961 = vpack.c.b16 %v5817, %v5815
        %v5962 = vpack.c.b16 %v5820, %v5818
        %v5963 = vpack.c.b16 %v5821, %v5819
        %v5964 = vpack.c.b16 %v5824, %v5822
        %v5965 = vpack.c.b16 %v5825, %v5823
        %v5966 = vpack.c.b16 %v5828, %v5826
        %v5967 = vpack.c.b16 %v5829, %v5827
        %v5968 = vpack.c.b16 %v5832, %v5830
        %v5969 = vpack.c.b16 %v5833, %v5831
        %v5970 = vpack.c.b16 %v5836, %v5834
        %v5971 = vpack.c.b16 %v5837, %v5835
        %v5972 = vpack.c.b16 %v5840, %v5838
        %v5973 = vpack.c.b16 %v5841, %v5839
        %v5974 = vpack.c.b16 %v5844, %v5842
        %v5975 = vpack.c.b16 %v5845, %v5843
        %v5976 = vpack.c.b16 %v5848, %v5846
        %v5977 = vpack.c.b16 %v5849, %v5847
        %6106 = vmatprep.subr.bf16.mxu0 %v5851
        %6107 = vmatpush1.bf16.msra.mxu0 %v5850
        %6108 = vmatprep.subr.bf16.mxu0 %v5853
        %6109 = vmatpush1.bf16.msra.mxu0 %v5852
        %6110 = vmatprep.subr.bf16.mxu0 %v5855
        %6111 = vmatpush1.bf16.msra.mxu0 %v5854
        %6112 = vmatprep.subr.bf16.mxu0 %v5857
        %6113 = vmatpush1.bf16.msra.mxu0 %v5856
        %6114 = vmatprep.subr.bf16.mxu0 %v5859
        %6115 = vmatpush1.bf16.msra.mxu0 %v5858
        %6116 = vmatprep.subr.bf16.mxu0 %v5861
        %6117 = vmatpush1.bf16.msra.mxu0 %v5860
        %6118 = vmatprep.subr.bf16.mxu0 %v5863
        %6119 = vmatpush1.bf16.msra.mxu0 %v5862
        %6120 = vmatprep.subr.bf16.mxu0 %v5865
        %6121 = vmatpush1.bf16.msra.mxu0 %v5864
        %6122 = vmatprep.subr.bf16.mxu0 %v5867
        %6123 = vmatpush1.bf16.msra.mxu0 %v5866
        %6124 = vmatprep.subr.bf16.mxu0 %v5869
        %6125 = vmatpush1.bf16.msra.mxu0 %v5868
        %6126 = vmatprep.subr.bf16.mxu0 %v5871
        %6127 = vmatpush1.bf16.msra.mxu0 %v5870
        %6128 = vmatprep.subr.bf16.mxu0 %v5873
        %6129 = vmatpush1.bf16.msra.mxu0 %v5872
        %6130 = vmatprep.subr.bf16.mxu0 %v5875
        %6131 = vmatpush1.bf16.msra.mxu0 %v5874
        %6132 = vmatprep.subr.bf16.mxu0 %v5877
        %6133 = vmatpush1.bf16.msra.mxu0 %v5876
        %6134 = vmatprep.subr.bf16.mxu0 %v5879
        %6135 = vmatpush1.bf16.msra.mxu0 %v5878
        %6136 = vmatprep.subr.bf16.mxu0 %v5881
        %6137 = vmatpush1.bf16.msra.mxu0 %v5880
        %6138 = vmatprep.mubr.bf16.mxu0 %v5263
        %6139 = vmatmul.mubr.bf16.gmra.mrb[0].mxu0 %v5262
        %v6140 = vpop.f32.mrb[0].mxu0
        %v6141 = vadd.f32 %v5459, %v6140
        %v6142 = vpop.f32.mrb[0].mxu0
        %v6143 = vadd.f32 %v5463, %v6142
        %v6144 = vpop.f32.mrb[0].mxu0
        %v6145 = vadd.f32 %v5459, %v6144
        %v6146 = vpop.f32.mrb[0].mxu0
        %v6147 = vadd.f32 %v5463, %v6146
        %6148 = vmatprep.mubr.bf16.mxu0 %v5271
        %6149 = vmatmul.mubr.bf16.gmra.mrb[0].mxu0 %v5270
        %v6150 = vpop.f32.mrb[0].mxu0
        %v6151 = vadd.f32 %v5459, %v6150
        %v6152 = vpop.f32.mrb[0].mxu0
        %v6153 = vadd.f32 %v5463, %v6152
        %v6154 = vpop.f32.mrb[0].mxu0
        %v6155 = vadd.f32 %v5459, %v6154
        %v6156 = vpop.f32.mrb[0].mxu0
        %v6157 = vadd.f32 %v5463, %v6156
        %6158 = vmatprep.mubr.bf16.mxu0 %v5279
        %6159 = vmatmul.mubr.bf16.gmra.mrb[0].mxu0 %v5278
        %v6160 = vpop.f32.mrb[0].mxu0
        %v6161 = vadd.f32 %v5459, %v6160
        %v6162 = vpop.f32.mrb[0].mxu0
        %v6163 = vadd.f32 %v5463, %v6162
        %v6164 = vpop.f32.mrb[0].mxu0
        %v6165 = vadd.f32 %v5459, %v6164
        %v6166 = vpop.f32.mrb[0].mxu0
        %v6167 = vadd.f32 %v5463, %v6166
        %6168 = vmatprep.mubr.bf16.mxu0 %v5287
        %6169 = vmatmul.mubr.bf16.gmra.mrb[0].mxu0 %v5286
        %v6170 = vpop.f32.mrb[0].mxu0
        %v6171 = vadd.f32 %v5459, %v6170
        %v6172 = vpop.f32.mrb[0].mxu0
        %v6173 = vadd.f32 %v5463, %v6172
        %v6174 = vpop.f32.mrb[0].mxu0
        %v6175 = vadd.f32 %v5459, %v6174
        %v6176 = vpop.f32.mrb[0].mxu0
        %v6177 = vadd.f32 %v5463, %v6176
        %6178 = vmatprep.mubr.bf16.mxu0 %v5295
        %6179 = vmatmul.mubr.bf16.gmra.mrb[0].mxu0 %v5294
        %v6180 = vpop.f32.mrb[0].mxu0
        %v6181 = vadd.f32 %v5459, %v6180
        %v6182 = vpop.f32.mrb[0].mxu0
        %v6183 = vadd.f32 %v5463, %v6182
        %v6184 = vpop.f32.mrb[0].mxu0
        %v6185 = vadd.f32 %v5459, %v6184
        %v6186 = vpop.f32.mrb[0].mxu0
        %v6187 = vadd.f32 %v5463, %v6186
        %6188 = vmatprep.mubr.bf16.mxu0 %v5303
        %6189 = vmatmul.mubr.bf16.gmra.mrb[0].mxu0 %v5302
        %v6190 = vpop.f32.mrb[0].mxu0
        %v6191 = vadd.f32 %v5459, %v6190
        %v6192 = vpop.f32.mrb[0].mxu0
        %v6193 = vadd.f32 %v5463, %v6192
        %v6194 = vpop.f32.mrb[0].mxu0
        %v6195 = vadd.f32 %v5459, %v6194
        %v6196 = vpop.f32.mrb[0].mxu0
        %v6197 = vadd.f32 %v5463, %v6196
        %6198 = vmatprep.mubr.bf16.mxu0 %v5311
        %6199 = vmatmul.mubr.bf16.gmra.mrb[0].mxu0 %v5310
        %v6200 = vpop.f32.mrb[0].mxu0
        %v6201 = vadd.f32 %v5459, %v6200
        %v6202 = vpop.f32.mrb[0].mxu0
        %v6203 = vadd.f32 %v5463, %v6202
        %v6204 = vpop.f32.mrb[0].mxu0
        %v6205 = vadd.f32 %v5459, %v6204
        %v6206 = vpop.f32.mrb[0].mxu0
        %v6207 = vadd.f32 %v5463, %v6206
        %6208 = vmatprep.mubr.bf16.mxu0 %v5319
        %6209 = vmatmul.mubr.bf16.gmra.mrb[0].mxu0 %v5318
        %v6210 = vpop.f32.mrb[0].mxu0
        %v6211 = vadd.f32 %v5459, %v6210
        %v6212 = vpop.f32.mrb[0].mxu0
        %v6213 = vadd.f32 %v5463, %v6212
        %v6214 = vpop.f32.mrb[0].mxu0
        %v6215 = vadd.f32 %v5459, %v6214
        %v6216 = vpop.f32.mrb[0].mxu0
        %v6217 = vadd.f32 %v5463, %v6216
        %6218 = vdwg.mxu0
        %6219 = vmatprep.subr.bf16.mxu0 %v5883
        %6220 = vmatpush1.bf16.msra.mxu0 %v5882
        %6221 = vmatprep.subr.bf16.mxu0 %v5885
        %6222 = vmatpush1.bf16.msra.mxu0 %v5884
        %6223 = vmatprep.subr.bf16.mxu0 %v5887
        %6224 = vmatpush1.bf16.msra.mxu0 %v5886
        %6225 = vmatprep.subr.bf16.mxu0 %v5889
        %6226 = vmatpush1.bf16.msra.mxu0 %v5888
        %6227 = vmatprep.subr.bf16.mxu0 %v5891
        %6228 = vmatpush1.bf16.msra.mxu0 %v5890
        %6229 = vmatprep.subr.bf16.mxu0 %v5893
        %6230 = vmatpush1.bf16.msra.mxu0 %v5892
        %6231 = vmatprep.subr.bf16.mxu0 %v5895
        %6232 = vmatpush1.bf16.msra.mxu0 %v5894
        %6233 = vmatprep.subr.bf16.mxu0 %v5897
        %6234 = vmatpush1.bf16.msra.mxu0 %v5896
        %6235 = vmatprep.subr.bf16.mxu0 %v5899
        %6236 = vmatpush1.bf16.msra.mxu0 %v5898
        %6237 = vmatprep.subr.bf16.mxu0 %v5901
        %6238 = vmatpush1.bf16.msra.mxu0 %v5900
        %6239 = vmatprep.subr.bf16.mxu0 %v5903
        %6240 = vmatpush1.bf16.msra.mxu0 %v5902
        %6241 = vmatprep.subr.bf16.mxu0 %v5905
        %6242 = vmatpush1.bf16.msra.mxu0 %v5904
        %6243 = vmatprep.subr.bf16.mxu0 %v5907
        %6244 = vmatpush1.bf16.msra.mxu0 %v5906
        %6245 = vmatprep.subr.bf16.mxu0 %v5909
        %6246 = vmatpush1.bf16.msra.mxu0 %v5908
        %6247 = vmatprep.subr.bf16.mxu0 %v5911
        %6248 = vmatpush1.bf16.msra.mxu0 %v5910
        %6249 = vmatprep.subr.bf16.mxu0 %v5913
        %6250 = vmatpush1.bf16.msra.mxu0 %v5912
        %6251 = vmatprep.mubr.bf16.mxu0 %v5265
        %6252 = vmatmul.mubr.bf16.gmra.mrb[0].mxu0 %v5264
        %v6253 = vpop.f32.mrb[0].mxu0
        %v6254 = vadd.f32 %v6141, %v6253
        %v6255 = vpop.f32.mrb[0].mxu0
        %v6256 = vadd.f32 %v6143, %v6255
        %v6257 = vpop.f32.mrb[0].mxu0
        %v6258 = vadd.f32 %v6145, %v6257
        %v6259 = vpop.f32.mrb[0].mxu0
        %v6260 = vadd.f32 %v6147, %v6259
        %6261 = vmatprep.mubr.bf16.mxu0 %v5273
        %6262 = vmatmul.mubr.bf16.gmra.mrb[0].mxu0 %v5272
        %v6263 = vpop.f32.mrb[0].mxu0
        %v6264 = vadd.f32 %v6151, %v6263
        %v6265 = vpop.f32.mrb[0].mxu0
        %v6266 = vadd.f32 %v6153, %v6265
        %v6267 = vpop.f32.mrb[0].mxu0
        %v6268 = vadd.f32 %v6155, %v6267
        %v6269 = vpop.f32.mrb[0].mxu0
        %v6270 = vadd.f32 %v6157, %v6269
        %6271 = vmatprep.mubr.bf16.mxu0 %v5281
        %6272 = vmatmul.mubr.bf16.gmra.mrb[0].mxu0 %v5280
        %v6273 = vpop.f32.mrb[0].mxu0
        %v6274 = vadd.f32 %v6161, %v6273
        %v6275 = vpop.f32.mrb[0].mxu0
        %v6276 = vadd.f32 %v6163, %v6275
        %v6277 = vpop.f32.mrb[0].mxu0
        %v6278 = vadd.f32 %v6165, %v6277
        %v6279 = vpop.f32.mrb[0].mxu0
        %v6280 = vadd.f32 %v6167, %v6279
        %6281 = vmatprep.mubr.bf16.mxu0 %v5289
        %6282 = vmatmul.mubr.bf16.gmra.mrb[0].mxu0 %v5288
        %v6283 = vpop.f32.mrb[0].mxu0
        %v6284 = vadd.f32 %v6171, %v6283
        %v6285 = vpop.f32.mrb[0].mxu0
        %v6286 = vadd.f32 %v6173, %v6285
        %v6287 = vpop.f32.mrb[0].mxu0
        %v6288 = vadd.f32 %v6175, %v6287
        %v6289 = vpop.f32.mrb[0].mxu0
        %v6290 = vadd.f32 %v6177, %v6289
        %6291 = vmatprep.mubr.bf16.mxu0 %v5297
        %6292 = vmatmul.mubr.bf16.gmra.mrb[0].mxu0 %v5296
        %v6293 = vpop.f32.mrb[0].mxu0
        %v6294 = vadd.f32 %v6181, %v6293
        %v6295 = vpop.f32.mrb[0].mxu0
        %v6296 = vadd.f32 %v6183, %v6295
        %v6297 = vpop.f32.mrb[0].mxu0
        %v6298 = vadd.f32 %v6185, %v6297
        %v6299 = vpop.f32.mrb[0].mxu0
        %v6300 = vadd.f32 %v6187, %v6299
        %6301 = vmatprep.mubr.bf16.mxu0 %v5305
        %6302 = vmatmul.mubr.bf16.gmra.mrb[0].mxu0 %v5304
        %v6303 = vpop.f32.mrb[0].mxu0
        %v6304 = vadd.f32 %v6191, %v6303
        %v6305 = vpop.f32.mrb[0].mxu0
        %v6306 = vadd.f32 %v6193, %v6305
        %v6307 = vpop.f32.mrb[0].mxu0
        %v6308 = vadd.f32 %v6195, %v6307
        %v6309 = vpop.f32.mrb[0].mxu0
        %v6310 = vadd.f32 %v6197, %v6309
        %6311 = vmatprep.mubr.bf16.mxu0 %v5313
        %6312 = vmatmul.mubr.bf16.gmra.mrb[0].mxu0 %v5312
        %v6313 = vpop.f32.mrb[0].mxu0
        %v6314 = vadd.f32 %v6201, %v6313
        %v6315 = vpop.f32.mrb[0].mxu0
        %v6316 = vadd.f32 %v6203, %v6315
        %v6317 = vpop.f32.mrb[0].mxu0
        %v6318 = vadd.f32 %v6205, %v6317
        %v6319 = vpop.f32.mrb[0].mxu0
        %v6320 = vadd.f32 %v6207, %v6319
        %6321 = vmatprep.mubr.bf16.mxu0 %v5321
        %6322 = vmatmul.mubr.bf16.gmra.mrb[0].mxu0 %v5320
        %v6323 = vpop.f32.mrb[0].mxu0
        %v6324 = vadd.f32 %v6211, %v6323
        %v6325 = vpop.f32.mrb[0].mxu0
        %v6326 = vadd.f32 %v6213, %v6325
        %v6327 = vpop.f32.mrb[0].mxu0
        %v6328 = vadd.f32 %v6215, %v6327
        %v6329 = vpop.f32.mrb[0].mxu0
        %v6330 = vadd.f32 %v6217, %v6329
        %6331 = vdwg.mxu0
        %6332 = vmatprep.subr.bf16.mxu0 %v5915
        %6333 = vmatpush1.bf16.msra.mxu0 %v5914
        %6334 = vmatprep.subr.bf16.mxu0 %v5917
        %6335 = vmatpush1.bf16.msra.mxu0 %v5916
        %6336 = vmatprep.subr.bf16.mxu0 %v5919
        %6337 = vmatpush1.bf16.msra.mxu0 %v5918
        %6338 = vmatprep.subr.bf16.mxu0 %v5921
        %6339 = vmatpush1.bf16.msra.mxu0 %v5920
        %6340 = vmatprep.subr.bf16.mxu0 %v5923
        %6341 = vmatpush1.bf16.msra.mxu0 %v5922
        %6342 = vmatprep.subr.bf16.mxu0 %v5925
        %6343 = vmatpush1.bf16.msra.mxu0 %v5924
        %6344 = vmatprep.subr.bf16.mxu0 %v5927
        %6345 = vmatpush1.bf16.msra.mxu0 %v5926
        %6346 = vmatprep.subr.bf16.mxu0 %v5929
        %6347 = vmatpush1.bf16.msra.mxu0 %v5928
        %6348 = vmatprep.subr.bf16.mxu0 %v5931
        %6349 = vmatpush1.bf16.msra.mxu0 %v5930
        %6350 = vmatprep.subr.bf16.mxu0 %v5933
        %6351 = vmatpush1.bf16.msra.mxu0 %v5932
        %6352 = vmatprep.subr.bf16.mxu0 %v5935
        %6353 = vmatpush1.bf16.msra.mxu0 %v5934
        %6354 = vmatprep.subr.bf16.mxu0 %v5937
        %6355 = vmatpush1.bf16.msra.mxu0 %v5936
        %6356 = vmatprep.subr.bf16.mxu0 %v5939
        %6357 = vmatpush1.bf16.msra.mxu0 %v5938
        %6358 = vmatprep.subr.bf16.mxu0 %v5941
        %6359 = vmatpush1.bf16.msra.mxu0 %v5940
        %6360 = vmatprep.subr.bf16.mxu0 %v5943
        %6361 = vmatpush1.bf16.msra.mxu0 %v5942
        %6362 = vmatprep.subr.bf16.mxu0 %v5945
        %6363 = vmatpush1.bf16.msra.mxu0 %v5944
        %6364 = vmatprep.mubr.bf16.mxu0 %v5267
        %6365 = vmatmul.mubr.bf16.gmra.mrb[0].mxu0 %v5266
        %v6366 = vpop.f32.mrb[0].mxu0
        %v6367 = vadd.f32 %v6254, %v6366
        %v6368 = vpop.f32.mrb[0].mxu0
        %v6369 = vadd.f32 %v6256, %v6368
        %v6370 = vpop.f32.mrb[0].mxu0
        %v6371 = vadd.f32 %v6258, %v6370
        %v6372 = vpop.f32.mrb[0].mxu0
        %v6373 = vadd.f32 %v6260, %v6372
        %6374 = vmatprep.mubr.bf16.mxu0 %v5275
        %6375 = vmatmul.mubr.bf16.gmra.mrb[0].mxu0 %v5274
        %v6376 = vpop.f32.mrb[0].mxu0
        %v6377 = vadd.f32 %v6264, %v6376
        %v6378 = vpop.f32.mrb[0].mxu0
        %v6379 = vadd.f32 %v6266, %v6378
        %v6380 = vpop.f32.mrb[0].mxu0
        %v6381 = vadd.f32 %v6268, %v6380
        %v6382 = vpop.f32.mrb[0].mxu0
        %v6383 = vadd.f32 %v6270, %v6382
        %6384 = vmatprep.mubr.bf16.mxu0 %v5283
        %6385 = vmatmul.mubr.bf16.gmra.mrb[0].mxu0 %v5282
        %v6386 = vpop.f32.mrb[0].mxu0
        %v6387 = vadd.f32 %v6274, %v6386
        %v6388 = vpop.f32.mrb[0].mxu0
        %v6389 = vadd.f32 %v6276, %v6388
        %v6390 = vpop.f32.mrb[0].mxu0
        %v6391 = vadd.f32 %v6278, %v6390
        %v6392 = vpop.f32.mrb[0].mxu0
        %v6393 = vadd.f32 %v6280, %v6392
        %6394 = vmatprep.mubr.bf16.mxu0 %v5291
        %6395 = vmatmul.mubr.bf16.gmra.mrb[0].mxu0 %v5290
        %v6396 = vpop.f32.mrb[0].mxu0
        %v6397 = vadd.f32 %v6284, %v6396
        %v6398 = vpop.f32.mrb[0].mxu0
        %v6399 = vadd.f32 %v6286, %v6398
        %v6400 = vpop.f32.mrb[0].mxu0
        %v6401 = vadd.f32 %v6288, %v6400
        %v6402 = vpop.f32.mrb[0].mxu0
        %v6403 = vadd.f32 %v6290, %v6402
        %6404 = vmatprep.mubr.bf16.mxu0 %v5299
        %6405 = vmatmul.mubr.bf16.gmra.mrb[0].mxu0 %v5298
        %v6406 = vpop.f32.mrb[0].mxu0
        %v6407 = vadd.f32 %v6294, %v6406
        %v6408 = vpop.f32.mrb[0].mxu0
        %v6409 = vadd.f32 %v6296, %v6408
        %v6410 = vpop.f32.mrb[0].mxu0
        %v6411 = vadd.f32 %v6298, %v6410
        %v6412 = vpop.f32.mrb[0].mxu0
        %v6413 = vadd.f32 %v6300, %v6412
        %6414 = vmatprep.mubr.bf16.mxu0 %v5307
        %6415 = vmatmul.mubr.bf16.gmra.mrb[0].mxu0 %v5306
        %v6416 = vpop.f32.mrb[0].mxu0
        %v6417 = vadd.f32 %v6304, %v6416
        %v6418 = vpop.f32.mrb[0].mxu0
        %v6419 = vadd.f32 %v6306, %v6418
        %v6420 = vpop.f32.mrb[0].mxu0
        %v6421 = vadd.f32 %v6308, %v6420
        %v6422 = vpop.f32.mrb[0].mxu0
        %v6423 = vadd.f32 %v6310, %v6422
        %6424 = vmatprep.mubr.bf16.mxu0 %v5315
        %6425 = vmatmul.mubr.bf16.gmra.mrb[0].mxu0 %v5314
        %v6426 = vpop.f32.mrb[0].mxu0
        %v6427 = vadd.f32 %v6314, %v6426
        %v6428 = vpop.f32.mrb[0].mxu0
        %v6429 = vadd.f32 %v6316, %v6428
        %v6430 = vpop.f32.mrb[0].mxu0
        %v6431 = vadd.f32 %v6318, %v6430
        %v6432 = vpop.f32.mrb[0].mxu0
        %v6433 = vadd.f32 %v6320, %v6432
        %6434 = vmatprep.mubr.bf16.mxu0 %v5323
        %6435 = vmatmul.mubr.bf16.gmra.mrb[0].mxu0 %v5322
        %v6436 = vpop.f32.mrb[0].mxu0
        %v6437 = vadd.f32 %v6324, %v6436
        %v6438 = vpop.f32.mrb[0].mxu0
        %v6439 = vadd.f32 %v6326, %v6438
        %v6440 = vpop.f32.mrb[0].mxu0
        %v6441 = vadd.f32 %v6328, %v6440
        %v6442 = vpop.f32.mrb[0].mxu0
        %v6443 = vadd.f32 %v6330, %v6442
        %6444 = vdwg.mxu0
        %6445 = vmatprep.subr.bf16.mxu0 %v5947
        %6446 = vmatpush1.bf16.msra.mxu0 %v5946
        %6447 = vmatprep.subr.bf16.mxu0 %v5949
        %6448 = vmatpush1.bf16.msra.mxu0 %v5948
        %6449 = vmatprep.subr.bf16.mxu0 %v5951
        %6450 = vmatpush1.bf16.msra.mxu0 %v5950
        %6451 = vmatprep.subr.bf16.mxu0 %v5953
        %6452 = vmatpush1.bf16.msra.mxu0 %v5952
        %6453 = vmatprep.subr.bf16.mxu0 %v5955
        %6454 = vmatpush1.bf16.msra.mxu0 %v5954
        %6455 = vmatprep.subr.bf16.mxu0 %v5957
        %6456 = vmatpush1.bf16.msra.mxu0 %v5956
        %6457 = vmatprep.subr.bf16.mxu0 %v5959
        %6458 = vmatpush1.bf16.msra.mxu0 %v5958
        %6459 = vmatprep.subr.bf16.mxu0 %v5961
        %6460 = vmatpush1.bf16.msra.mxu0 %v5960
        %6461 = vmatprep.subr.bf16.mxu0 %v5963
        %6462 = vmatpush1.bf16.msra.mxu0 %v5962
        %6463 = vmatprep.subr.bf16.mxu0 %v5965
        %6464 = vmatpush1.bf16.msra.mxu0 %v5964
        %6465 = vmatprep.subr.bf16.mxu0 %v5967
        %6466 = vmatpush1.bf16.msra.mxu0 %v5966
        %6467 = vmatprep.subr.bf16.mxu0 %v5969
        %6468 = vmatpush1.bf16.msra.mxu0 %v5968
        %6469 = vmatprep.subr.bf16.mxu0 %v5971
        %6470 = vmatpush1.bf16.msra.mxu0 %v5970
        %6471 = vmatprep.subr.bf16.mxu0 %v5973
        %6472 = vmatpush1.bf16.msra.mxu0 %v5972
        %6473 = vmatprep.subr.bf16.mxu0 %v5975
        %6474 = vmatpush1.bf16.msra.mxu0 %v5974
        %6475 = vmatprep.subr.bf16.mxu0 %v5977
        %6476 = vmatpush1.bf16.msra.mxu0 %v5976
        %6477 = vmatprep.mubr.bf16.mxu0 %v5269
        %6478 = vmatmul.mubr.bf16.gmra.mrb[0].mxu0 %v5268
        %v6479 = vpop.f32.mrb[0].mxu0
        %v6480 = vadd.f32 %v6367, %v6479
        %v6481 = vpop.f32.mrb[0].mxu0
        %v6482 = vadd.f32 %v6369, %v6481
        %v6483 = vpop.f32.mrb[0].mxu0
        %v6484 = vadd.f32 %v6371, %v6483
        %v6485 = vpop.f32.mrb[0].mxu0
        %v6486 = vadd.f32 %v6373, %v6485
        %6487 = vmatprep.mubr.bf16.mxu0 %v5277
        %6488 = vmatmul.mubr.bf16.gmra.mrb[0].mxu0 %v5276
        %v6489 = vpop.f32.mrb[0].mxu0
        %v6490 = vadd.f32 %v6377, %v6489
        %v6491 = vpop.f32.mrb[0].mxu0
        %v6492 = vadd.f32 %v6379, %v6491
        %v6493 = vpop.f32.mrb[0].mxu0
        %v6494 = vadd.f32 %v6381, %v6493
        %v6495 = vpop.f32.mrb[0].mxu0
        %v6496 = vadd.f32 %v6383, %v6495
        %6497 = vmatprep.mubr.bf16.mxu0 %v5285
        %6498 = vmatmul.mubr.bf16.gmra.mrb[0].mxu0 %v5284
        %v6499 = vpop.f32.mrb[0].mxu0
        %v6500 = vadd.f32 %v6387, %v6499
        %v6501 = vpop.f32.mrb[0].mxu0
        %v6502 = vadd.f32 %v6389, %v6501
        %v6503 = vpop.f32.mrb[0].mxu0
        %v6504 = vadd.f32 %v6391, %v6503
        %v6505 = vpop.f32.mrb[0].mxu0
        %v6506 = vadd.f32 %v6393, %v6505
        %6507 = vmatprep.mubr.bf16.mxu0 %v5293
        %6508 = vmatmul.mubr.bf16.gmra.mrb[0].mxu0 %v5292
        %v6509 = vpop.f32.mrb[0].mxu0
        %v6510 = vadd.f32 %v6397, %v6509
        %v6511 = vpop.f32.mrb[0].mxu0
        %v6512 = vadd.f32 %v6399, %v6511
        %v6513 = vpop.f32.mrb[0].mxu0
        %v6514 = vadd.f32 %v6401, %v6513
        %v6515 = vpop.f32.mrb[0].mxu0
        %v6516 = vadd.f32 %v6403, %v6515
        %6517 = vmatprep.mubr.bf16.mxu0 %v5301
        %6518 = vmatmul.mubr.bf16.gmra.mrb[0].mxu0 %v5300
        %v6519 = vpop.f32.mrb[0].mxu0
        %v6520 = vadd.f32 %v6407, %v6519
        %v6521 = vpop.f32.mrb[0].mxu0
        %v6522 = vadd.f32 %v6409, %v6521
        %v6523 = vpop.f32.mrb[0].mxu0
        %v6524 = vadd.f32 %v6411, %v6523
        %v6525 = vpop.f32.mrb[0].mxu0
        %v6526 = vadd.f32 %v6413, %v6525
        %6527 = vmatprep.mubr.bf16.mxu0 %v5309
        %6528 = vmatmul.mubr.bf16.gmra.mrb[0].mxu0 %v5308
        %v6529 = vpop.f32.mrb[0].mxu0
        %v6530 = vadd.f32 %v6417, %v6529
        %v6531 = vpop.f32.mrb[0].mxu0
        %v6532 = vadd.f32 %v6419, %v6531
        %v6533 = vpop.f32.mrb[0].mxu0
        %v6534 = vadd.f32 %v6421, %v6533
        %v6535 = vpop.f32.mrb[0].mxu0
        %v6536 = vadd.f32 %v6423, %v6535
        %6537 = vmatprep.mubr.bf16.mxu0 %v5317
        %6538 = vmatmul.mubr.bf16.gmra.mrb[0].mxu0 %v5316
        %v6539 = vpop.f32.mrb[0].mxu0
        %v6540 = vadd.f32 %v6427, %v6539
        %v6541 = vpop.f32.mrb[0].mxu0
        %v6542 = vadd.f32 %v6429, %v6541
        %v6543 = vpop.f32.mrb[0].mxu0
        %v6544 = vadd.f32 %v6431, %v6543
        %v6545 = vpop.f32.mrb[0].mxu0
        %v6546 = vadd.f32 %v6433, %v6545
        %6547 = vmatprep.mubr.bf16.mxu0 %v5325
        %6548 = vmatmul.mubr.bf16.gmra.mrb[0].mxu0 %v5324
        %v6549 = vpop.f32.mrb[0].mxu0
        %v6550 = vadd.f32 %v6437, %v6549
        %v6551 = vpop.f32.mrb[0].mxu0
        %v6552 = vadd.f32 %v6439, %v6551
        %v6553 = vpop.f32.mrb[0].mxu0
        %v6554 = vadd.f32 %v6441, %v6553
        %v6555 = vpop.f32.mrb[0].mxu0
        %v6556 = vadd.f32 %v6443, %v6555
        %6557 = vdwg.mxu0
        %v6558 = vadd.f32 %v3480, %v6480
        %v6559 = vadd.f32 %v3481, %v6482
        %v6560 = vadd.f32 %v3482, %v6484
        %v6561 = vadd.f32 %v3483, %v6486
        %v6562 = vadd.f32 %v3484, %v6490
        %v6563 = vadd.f32 %v3485, %v6492
        %v6564 = vadd.f32 %v3486, %v6494
        %v6565 = vadd.f32 %v3487, %v6496
        %v6566 = vadd.f32 %v3488, %v6500
        %v6567 = vadd.f32 %v3489, %v6502
        %v6568 = vadd.f32 %v3490, %v6504
        %v6569 = vadd.f32 %v3491, %v6506
        %v6570 = vadd.f32 %v3492, %v6510
        %v6571 = vadd.f32 %v3493, %v6512
        %v6572 = vadd.f32 %v3494, %v6514
        %v6573 = vadd.f32 %v3495, %v6516
        %v6574 = vadd.f32 %v3496, %v6520
        %v6575 = vadd.f32 %v3497, %v6522
        %v6576 = vadd.f32 %v3498, %v6524
        %v6577 = vadd.f32 %v3499, %v6526
        %v6578 = vadd.f32 %v3500, %v6530
        %v6579 = vadd.f32 %v3501, %v6532
        %v6580 = vadd.f32 %v3502, %v6534
        %v6581 = vadd.f32 %v3503, %v6536
        %v6582 = vadd.f32 %v3504, %v6540
        %v6583 = vadd.f32 %v3505, %v6542
        %v6584 = vadd.f32 %v3506, %v6544
        %v6585 = vadd.f32 %v3507, %v6546
        %v6586 = vadd.f32 %v3508, %v6550
        %v6587 = vadd.f32 %v3509, %v6552
        %v6588 = vadd.f32 %v3510, %v6554
        %v6589 = vadd.f32 %v3511, %v6556
        %6590 = vst [vmem:[%s508] sm:$0xff] %v6558
        %6591 = vst [vmem:[%s508 + $0x8] sm:$0xff] %v6559
        %6592 = vst [vmem:[%s508 + $0x10] sm:$0xff] %v6560
        %6593 = vst [vmem:[%s508 + $0x18] sm:$0xff] %v6561
        %6594 = vst [vmem:[%s508 + $0x20] sm:$0xff] %v6562
        %6595 = vst [vmem:[%s508 + $0x28] sm:$0xff] %v6563
        %6596 = vst [vmem:[%s508 + $0x30] sm:$0xff] %v6564
        %6597 = vst [vmem:[%s508 + $0x38] sm:$0xff] %v6565
        %6598 = vst [vmem:[%s508 + $0x40] sm:$0xff] %v6566
        %6599 = vst [vmem:[%s508 + $0x48] sm:$0xff] %v6567
        %6600 = vst [vmem:[%s508 + $0x50] sm:$0xff] %v6568
        %6601 = vst [vmem:[%s508 + $0x58] sm:$0xff] %v6569
        %6602 = vst [vmem:[%s508 + $0x60] sm:$0xff] %v6570
        %6603 = vst [vmem:[%s508 + $0x68] sm:$0xff] %v6571
        %6604 = vst [vmem:[%s508 + $0x70] sm:$0xff] %v6572
        %6605 = vst [vmem:[%s508 + $0x78] sm:$0xff] %v6573
        %6606 = vst [vmem:[%s508 + $0x80] sm:$0xff] %v6574
        %6607 = vst [vmem:[%s508 + $0x88] sm:$0xff] %v6575
        %6608 = vst [vmem:[%s508 + $0x90] sm:$0xff] %v6576
        %6609 = vst [vmem:[%s508 + $0x98] sm:$0xff] %v6577
        %6610 = vst [vmem:[%s508 + $0xa0] sm:$0xff] %v6578
        %6611 = vst [vmem:[%s508 + $0xa8] sm:$0xff] %v6579
        %6612 = vst [vmem:[%s508 + $0xb0] sm:$0xff] %v6580
        %6613 = vst [vmem:[%s508 + $0xb8] sm:$0xff] %v6581
        %6614 = vst [vmem:[%s508 + $0xc0] sm:$0xff] %v6582
        %6615 = vst [vmem:[%s508 + $0xc8] sm:$0xff] %v6583
        %6616 = vst [vmem:[%s508 + $0xd0] sm:$0xff] %v6584
        %6617 = vst [vmem:[%s508 + $0xd8] sm:$0xff] %v6585
        %6618 = vst [vmem:[%s508 + $0xe0] sm:$0xff] %v6586
        %6619 = vst [vmem:[%s508 + $0xe8] sm:$0xff] %v6587
        %6620 = vst [vmem:[%s508 + $0xf0] sm:$0xff] %v6588
        %6621 = vst [vmem:[%s508 + $0xf8] sm:$0xff] %v6589
        %s6622 = sand.u32 %s312, 1
        %s6623 = scalar_lea.sflag [#allocation6], %s6622
        %s6624 = sand.u32 %s312, 1
        %s6625 = smul.addr %s6624, 256
        %s6626 = scalar_lea.vmem [#allocation13], %s6625
        // Predicated region
        $region96: #{tpu_custom_call.1} parent=67 // pred_check
          %p6627 = pneg %p322
        $region97: #{tpu_custom_call.1} parent=67 // pred_check_branch
          %6629 = sbr.rel (%p6627) target = $region99
        $region98: #{tpu_custom_call.1} parent=67 // pred_region
          %s6630 = smul.u32 16, %s36
          %s6632 = ssub.s32 4096, 4096
          %6633 = vsyncadd %s6623, %s6632
          %s6634 = smul.addr %s6630, 2
          %s6635 = smul.addr %s35, 64
          %s6636 = sadd.s32 %s6634, %s6635
          %s6637 = smul.addr %s6636, 128
          %s6638 = scalar_lea.hbm %s12, %s6637
          %s6639 = sshll.u32 %s6626, 4
          %s6640 = int_to_ptr.vmem [resolvable:$true] %s6639
          %6645 = dma.vmem_to_hbm [thread:$0]  %s6640, 4096, %s6638, %s6623, 256, 256, 16
        $region99: #{tpu_custom_call.1} parent=67 // pred_fallthru
          _
      $region68: #{tpu_custom_call.1} parent=5 // pred_fallthru
        _
      %p6646 = scmp.le.s32.totalorder 2, %s26
      // Predicated region
      $region100: #{tpu_custom_call.1} parent=5 // pred_check
        %p6647 = pneg %p6646
      $region101: #{tpu_custom_call.1} parent=5 // pred_check_branch
        %6649 = sbr.rel (%p6647) target = $region103
      $region102: #{tpu_custom_call.1} parent=5 // pred_region
        %s6650 = ssub.s32 %s26, 2
        // Predicated region
        $region104: #{tpu_custom_call.1} parent=102 // pred_check
          %p6651 = pneg %p328
        $region105: #{tpu_custom_call.1} parent=102 // pred_check_branch
          %6653 = sbr.rel (%p6651) target = $region107
        $region106: #{tpu_custom_call.1} parent=102 // pred_region
          %s6654 = sand.u32 %s313, 1
          %s6655 = scalar_lea.sflag [#allocation6], %s6654
          %s6656 = sand.u32 %s313, 1
          %s6657 = smul.addr %s6656, 256
          %s6658 = scalar_lea.vmem [#allocation13], %s6657
          %6659 = dma.done %s6655, 4096
        $region107: #{tpu_custom_call.1} parent=102 // pred_fallthru
          _
      $region103: #{tpu_custom_call.1} parent=5 // pred_fallthru
        _
    $region6: #{tpu_custom_call.1} parent=1 // loop_footer
      %s30 = sadd.s32 1, %s26
    $region7: #{tpu_custom_call.1} parent=1 // loop_footer_branch
      %25 = sbr.rel target = $region3
    $region8: #{tpu_custom_call.1} parent=1 // loop_exit
      _
    %6660 = vsyncpa [#allocation5], 1
    %s6661 = scalar_lea.sflag [#allocation5], 1
    %6662 = vsyncpa %s6661, 1
    %6663 = vsyncpa [#allocation8], 1
    %6664 = vsyncpa [#allocation11], 1
    %6665 = vsyncpa [#allocation6], 1
    %s6666 = scalar_lea.sflag [#allocation6], 1
    %6667 = vsyncpa %s6666, 1

</llo_original>
